<compile_context>
chip_gen: v5e
topology: v5e:2x2
jax: 0.10.0
libtpu: 0.0.40
codegen_flags: <defaults>
</compile_context>

<pallas_src>
import functools

import jax
import jax.numpy as jnp
from jax.experimental import pallas as pl
from jax.experimental.pallas import tpu as pltpu

# ----- model hyper-parameters (from the PyTorch source) -----
N_EMBED = 64
NUM_HEADS = 6
HEAD_SIZE = N_EMBED // NUM_HEADS          # = 10 (6*10 = 60 != 64, faithful to source)
N_BLOCK_LAYER = 4
BLOCK_SIZE = 128                          # max context; we run T <= BLOCK_SIZE
LN_EPS = 1e-5                             # PyTorch nn.LayerNorm default

# ----- padded kernel layout -----
H_PAD = 8                                 # 6 real heads + 2 zero heads
HS_PAD = 16                               # 10 real dims + 6 zero dims
D_PAD = H_PAD * HS_PAD                    # 128 (dense lane slab)
VOCAB_PAD = 128                           # lane-dense padded lm_head / token table
COMPUTE_DTYPE = jnp.bfloat16              # MXU operand dtype (accumulate in f32)


def _layer_norm(x, gamma, beta, eps=LN_EPS):
    mean = jnp.mean(x, axis=-1, keepdims=True)
    var = jnp.mean((x - mean) ** 2, axis=-1, keepdims=True)
    return (x - mean) * jax.lax.rsqrt(var + eps) * gamma + beta


# ---------------------------------------------------------------------------
# Single fused Pallas kernel:
#   embed (one-hot gather + pos add)
#   -> 4 x (LN -> MHA -> +res -> LN -> FFN -> +res)
#   -> final LN -> lm_head (padded to 128 lanes)
# No grid: the whole (tiny) working set lives in VMEM for one invocation.
# ---------------------------------------------------------------------------
def model_kernel(idx_ref, tok_ref, pos_ref,
                 wqkv_ref, wp_ref, bp_ref,
                 ln1g_ref, ln1b_ref, ln2g_ref, ln2b_ref,
                 w1_ref, b1_ref, w2_ref, b2_ref,
                 lnfg_ref, lnfb_ref, wl_ref, bl_ref,
                 out_ref,
                 *, batch, seq, n_layers):
    cdt = COMPUTE_DTYPE
    n_rows = batch * seq

    # ---------------- fused embedding ----------------
    # Token gather as an exact one-hot matmul (f32 0/1 x f32 table -> exact rows).
    lane = jax.lax.broadcasted_iota(jnp.int32, (n_rows, VOCAB_PAD), 1)
    onehot = (lane == idx_ref[...]).astype(jnp.float32)                   # (N, 128)
    tok = jnp.dot(onehot, tok_ref[...], preferred_element_type=jnp.float32)  # (N, E)
    pos = pos_ref[...]                                                    # (T, E)
    x = (tok.reshape(batch, seq, N_EMBED) + pos[None, :, :]).reshape(n_rows, N_EMBED)

    # Causal mask built once, reused by every layer / head.
    row = jax.lax.broadcasted_iota(jnp.int32, (seq, seq), 0)
    col = jax.lax.broadcasted_iota(jnp.int32, (seq, seq), 1)
    causal = (col <= row)[None]                                           # (1, T, T)

    for l in range(n_layers):                       # static unroll over 4 blocks
        # ---------------- self-attention branch ----------------
        h1 = _layer_norm(x, ln1g_ref[l], ln1b_ref[l])                     # (N, E) f32
        # Fused Q|K|V projection for all (padded) heads: ONE (N,E)@(E,384) matmul.
        # Score scale is already folded into the Q weights.
        qkv = jnp.dot(h1.astype(cdt), wqkv_ref[l],
                      preferred_element_type=jnp.float32)                 # (N, 384) f32
        qkv = qkv.astype(cdt).reshape(batch, seq, 3 * D_PAD)              # one cast

        head_outs = []
        for h in range(H_PAD):                      # static unroll; 16-aligned slices
            q = qkv[:, :, h * HS_PAD:(h + 1) * HS_PAD]                    # (B, T, 16)
            k = qkv[:, :, D_PAD + h * HS_PAD: D_PAD + (h + 1) * HS_PAD]
            v = qkv[:, :, 2 * D_PAD + h * HS_PAD: 2 * D_PAD + (h + 1) * HS_PAD]
            s = jnp.einsum('bqd,bkd->bqk', q, k,
                           preferred_element_type=jnp.float32)            # (B, T, T)
            s = jnp.where(causal, s, -1e30)         # finite "-inf" (exact after exp)
            s = s - jnp.max(s, axis=-1, keepdims=True)
            p = jnp.exp(s)
            p = p * pl.reciprocal(jnp.sum(p, axis=-1, keepdims=True), approx=True)
            head_outs.append(
                jnp.einsum('bqk,bkd->bqd', p.astype(cdt), v,
                           preferred_element_type=jnp.float32))           # (B, T, 16)

        # Dense 128-lane concat (8 heads x 16) -> K=128 output projection.
        cat = jnp.concatenate(head_outs, axis=-1).reshape(n_rows, D_PAD).astype(cdt)
        sa = jnp.dot(cat, wp_ref[l],
                     preferred_element_type=jnp.float32) + bp_ref[l]      # (N, E)
        x = x + sa

        # ---------------- feed-forward branch ----------------
        h2 = _layer_norm(x, ln2g_ref[l], ln2b_ref[l])
        f = jnp.dot(h2.astype(cdt), w1_ref[l],
                    preferred_element_type=jnp.float32) + b1_ref[l]       # (N, 256)
        f = jnp.maximum(f, 0.0)
        f = jnp.dot(f.astype(cdt), w2_ref[l],
                    preferred_element_type=jnp.float32) + b2_ref[l]       # (N, E)
        x = x + f

    # ---------------- final LayerNorm + lm_head (lane-dense, padded) ----------------
    hf = _layer_norm(x, lnfg_ref[...], lnfb_ref[...])
    out_ref[...] = jnp.dot(hf.astype(cdt), wl_ref[...],
                           preferred_element_type=jnp.float32) + bl_ref[...]


# ---------------------------------------------------------------------------
# Parameter init (PyTorch-structured, deterministic synthetic weights)
# ---------------------------------------------------------------------------
def init_params(key, vocab_size):
    def nrm(k, shape, scale=0.02):
        return scale * jax.random.normal(k, shape, dtype=jnp.float32)

    keys = jax.random.split(key, 4 + N_BLOCK_LAYER)
    params = {
        "tok_emb": nrm(keys[0], (vocab_size, N_EMBED)),
        "pos_emb": nrm(keys[1], (BLOCK_SIZE, N_EMBED)),
        "lnf_g": jnp.ones((1, N_EMBED), jnp.float32),
        "lnf_b": jnp.zeros((1, N_EMBED), jnp.float32),
        "wl": nrm(keys[2], (N_EMBED, vocab_size)),
        "bl": jnp.zeros((1, vocab_size), jnp.float32),
        "blocks": [],
    }
    for l in range(N_BLOCK_LAYER):
        ks = jax.random.split(keys[4 + l], 8)
        params["blocks"].append({
            "ln1_g": jnp.ones((1, N_EMBED), jnp.float32),
            "ln1_b": jnp.zeros((1, N_EMBED), jnp.float32),
            "wq": nrm(ks[0], (NUM_HEADS, N_EMBED, HEAD_SIZE)),
            "wk": nrm(ks[1], (NUM_HEADS, N_EMBED, HEAD_SIZE)),
            "wv": nrm(ks[2], (NUM_HEADS, N_EMBED, HEAD_SIZE)),
            "wp": nrm(ks[3], (NUM_HEADS * HEAD_SIZE, N_EMBED)),
            "bp": jnp.zeros((1, N_EMBED), jnp.float32),
            "ln2_g": jnp.ones((1, N_EMBED), jnp.float32),
            "ln2_b": jnp.zeros((1, N_EMBED), jnp.float32),
            "w1": nrm(ks[4], (N_EMBED, 4 * N_EMBED)),
            "b1": jnp.zeros((1, 4 * N_EMBED), jnp.float32),
            "w2": nrm(ks[5], (4 * N_EMBED, N_EMBED)),
            "b2": jnp.zeros((1, N_EMBED), jnp.float32),
        })
    return params


def pack_params(p, vocab_size):
    """Pack PyTorch-structured params into fused / padded / layer-stacked operands."""
    cdt = COMPUTE_DTYPE
    scale = N_EMBED ** (-0.5)          # PyTorch source: C**-0.5 with C = n_embed

    def pad_heads(w, s=1.0):
        # (H, E, hs) -> (E, H_PAD*HS_PAD), head-major columns; padded cols/heads zero.
        buf = jnp.zeros((N_EMBED, H_PAD, HS_PAD), jnp.float32)
        buf = buf.at[:, :NUM_HEADS, :HEAD_SIZE].set(jnp.transpose(w, (1, 0, 2)) * s)
        return buf.reshape(N_EMBED, D_PAD)

    wqkv, wp, bp = [], [], []
    ln1g, ln1b, ln2g, ln2b = [], [], [], []
    w1, b1, w2, b2 = [], [], [], []
    for blk in p["blocks"]:
        wqkv.append(jnp.concatenate(
            [pad_heads(blk["wq"], scale),      # fold score scale into Q weights
             pad_heads(blk["wk"]),
             pad_heads(blk["wv"])], axis=1))   # (E, 3*128)
        # wp rows re-laid-out to the padded head-major concat order (zeros elsewhere).
        wp_r = blk["wp"].reshape(NUM_HEADS, HEAD_SIZE, N_EMBED)
        wp_pad = jnp.zeros((H_PAD, HS_PAD, N_EMBED), jnp.float32)
        wp_pad = wp_pad.at[:NUM_HEADS, :HEAD_SIZE, :].set(wp_r).reshape(D_PAD, N_EMBED)
        wp.append(wp_pad)
        bp.append(blk["bp"])
        ln1g.append(blk["ln1_g"]); ln1b.append(blk["ln1_b"])
        ln2g.append(blk["ln2_g"]); ln2b.append(blk["ln2_b"])
        w1.append(blk["w1"]); b1.append(blk["b1"])
        w2.append(blk["w2"]); b2.append(blk["b2"])

    stack = lambda xs: jnp.stack(xs, axis=0)
    tok_pad = jnp.zeros((VOCAB_PAD, N_EMBED), jnp.float32).at[:vocab_size].set(p["tok_emb"])
    wl_pad = jnp.zeros((N_EMBED, VOCAB_PAD), jnp.float32).at[:, :vocab_size].set(p["wl"])
    bl_pad = jnp.zeros((1, VOCAB_PAD), jnp.float32).at[:, :vocab_size].set(p["bl"])

    return dict(
        tok_emb=tok_pad,                               # (128, E)  f32 (exact gather)
        pos_emb=p["pos_emb"],                          # (128, E)  f32
        wqkv=stack(wqkv).astype(cdt),                  # (L, E, 384) bf16
        wp=stack(wp).astype(cdt),                      # (L, 128, E) bf16
        bp=stack(bp),                                  # (L, 1, E)   f32
        ln1g=stack(ln1g), ln1b=stack(ln1b),
        ln2g=stack(ln2g), ln2b=stack(ln2b),
        w1=stack(w1).astype(cdt), b1=stack(b1),        # (L, E, 4E) / (L, 1, 4E)
        w2=stack(w2).astype(cdt), b2=stack(b2),        # (L, 4E, E) / (L, 1, E)
        lnfg=p["lnf_g"], lnfb=p["lnf_b"],
        wl=wl_pad.astype(cdt), bl=bl_pad,              # (E, 128) bf16 / (1, 128) f32
    )


# ---------------------------------------------------------------------------
# Forward wrapper: ONE fused pallas_call (embedding gather included in-kernel).
# ---------------------------------------------------------------------------
def bigram_forward(idx, packed, vocab_size):
    B, T = idx.shape
    n = B * T
    idx2d = idx.reshape(n, 1).astype(jnp.int32)
    pos_t = packed["pos_emb"][:T]                      # static slice, (T, E)

    kernel = functools.partial(model_kernel, batch=B, seq=T, n_layers=N_BLOCK_LAYER)
    operands = (idx2d, packed["tok_emb"], pos_t,
                packed["wqkv"], packed["wp"], packed["bp"],
                packed["ln1g"], packed["ln1b"], packed["ln2g"], packed["ln2b"],
                packed["w1"], packed["b1"], packed["w2"], packed["b2"],
                packed["lnfg"], packed["lnfb"], packed["wl"], packed["bl"])
    out = pl.pallas_call(
        kernel,
        out_shape=jax.ShapeDtypeStruct((n, VOCAB_PAD), jnp.float32),
        in_specs=[pl.BlockSpec(memory_space=pltpu.MemorySpace.VMEM)] * len(operands),
        out_specs=pl.BlockSpec(memory_space=pltpu.MemorySpace.VMEM),
    )(*operands)
    return out.reshape(B, T, VOCAB_PAD)[:, :, :vocab_size]


# ---------------------------------------------------------------------------
# Pure-JAX reference (unfused, f32) for a correctness cross-check.
# ---------------------------------------------------------------------------
def reference_forward(idx, params, vocab_size):
    B, T = idx.shape
    x = params["tok_emb"][idx] + params["pos_emb"][:T][None]
    tril = jnp.tril(jnp.ones((T, T), dtype=bool))
    for blk in params["blocks"]:
        h = _layer_norm(x, blk["ln1_g"], blk["ln1_b"])
        heads = []
        for hh in range(NUM_HEADS):
            q = h @ blk["wq"][hh]
            k = h @ blk["wk"][hh]
            v = h @ blk["wv"][hh]
            w = (q @ jnp.swapaxes(k, -1, -2)) * (N_EMBED ** (-0.5))
            w = jnp.where(tril, w, -jnp.inf)
            w = jax.nn.softmax(w, axis=-1)
            heads.append(w @ v)
        x = x + (jnp.concatenate(heads, axis=-1) @ blk["wp"] + blk["bp"])
        h2 = _layer_norm(x, blk["ln2_g"], blk["ln2_b"])
        f = jnp.maximum(h2 @ blk["w1"] + blk["b1"], 0.0) @ blk["w2"] + blk["b2"]
        x = x + f
    x = _layer_norm(x, params["lnf_g"], params["lnf_b"])
    return x @ params["wl"] + params["bl"]


if __name__ == "__main__":
    vocab_size = 65
    B, T = 2, 8

    key = jax.random.PRNGKey(0)
    k_params, k_idx = jax.random.split(key)
    params = init_params(k_params, vocab_size)
    packed = pack_params(params, vocab_size)
    idx = jax.random.randint(k_idx, (B, T), 0, vocab_size, dtype=jnp.int32)

    logits = bigram_forward(idx, packed, vocab_size)
    logits = jax.block_until_ready(logits)

    assert logits.shape == (B, T, vocab_size)
    assert bool(jnp.all(jnp.isfinite(logits)))

    # Tolerance covers bf16 MXU operands + pl.reciprocal(approx=True) softmax norm.
    ref = reference_forward(idx, params, vocab_size)
    max_err = float(jnp.max(jnp.abs(logits - ref)))
    assert max_err < 5e-2, f"kernel/reference mismatch: max abs err = {max_err}"

    print("KERNEL_OK")
</pallas_src>

<mosaic_0001>
module attributes {stable_mosaic.version = 11 : i64} {
  func.func @model_kernel(%arg0: memref<16x1xi32, #tpu.memory_space<vmem>>, %arg1: memref<128x64xf32, #tpu.memory_space<vmem>>, %arg2: memref<8x64xf32, #tpu.memory_space<vmem>>, %arg3: memref<4x64x384xbf16, #tpu.memory_space<vmem>>, %arg4: memref<4x128x64xbf16, #tpu.memory_space<vmem>>, %arg5: memref<4x1x64xf32, #tpu.memory_space<vmem>>, %arg6: memref<4x1x64xf32, #tpu.memory_space<vmem>>, %arg7: memref<4x1x64xf32, #tpu.memory_space<vmem>>, %arg8: memref<4x1x64xf32, #tpu.memory_space<vmem>>, %arg9: memref<4x1x64xf32, #tpu.memory_space<vmem>>, %arg10: memref<4x64x256xbf16, #tpu.memory_space<vmem>>, %arg11: memref<4x1x256xf32, #tpu.memory_space<vmem>>, %arg12: memref<4x256x64xbf16, #tpu.memory_space<vmem>>, %arg13: memref<4x1x64xf32, #tpu.memory_space<vmem>>, %arg14: memref<1x64xf32, #tpu.memory_space<vmem>>, %arg15: memref<1x64xf32, #tpu.memory_space<vmem>>, %arg16: memref<64x128xbf16, #tpu.memory_space<vmem>>, %arg17: memref<1x128xf32, #tpu.memory_space<vmem>>, %arg18: memref<16x128xf32, #tpu.memory_space<vmem>>) attributes {dimension_semantics = [], scalar_prefetch = 0 : i64, scratch_operands = 0 : i64, tpu.core_type = #tpu.core_type<tc>} {
    %0 = tpu.iota {dimensions = array<i32: 1>} : vector<16x128xi32>
    %c0 = arith.constant 0 : index
    %c0_0 = arith.constant 0 : index
    %1 = vector.load %arg0[%c0, %c0_0] : memref<16x1xi32, #tpu.memory_space<vmem>>, vector<16x1xi32>
    %2 = vector.broadcast %1 : vector<16x1xi32> to vector<16x128xi32>
    %3 = arith.cmpi eq, %0, %2 : vector<16x128xi32>
    %4 = arith.extui %3 : vector<16x128xi1> to vector<16x128xi32>
    %5 = arith.sitofp %4 : vector<16x128xi32> to vector<16x128xf32>
    %c0_1 = arith.constant 0 : index
    %c0_2 = arith.constant 0 : index
    %6 = vector.load %arg1[%c0_1, %c0_2] : memref<128x64xf32, #tpu.memory_space<vmem>>, vector<128x64xf32>
    %cst = arith.constant dense<0.000000e+00> : vector<16x64xf32>
    %7 = tpu.matmul %5, %6, %cst {dimension_numbers = #tpu.dot_dimension_numbers<[1], [0], [0], [1], [0, 0, 1, 1], [], []>} : vector<16x128xf32>, vector<128x64xf32>, vector<16x64xf32> -> vector<16x64xf32>
    %c0_3 = arith.constant 0 : index
    %c0_4 = arith.constant 0 : index
    %8 = vector.load %arg2[%c0_3, %c0_4] : memref<8x64xf32, #tpu.memory_space<vmem>>, vector<8x64xf32>
    %9 = vector.shape_cast %7 : vector<16x64xf32> to vector<2x8x64xf32>
    %10 = vector.shape_cast %8 : vector<8x64xf32> to vector<1x8x64xf32>
    %11 = vector.broadcast %10 : vector<1x8x64xf32> to vector<2x8x64xf32>
    %12 = arith.addf %9, %11 : vector<2x8x64xf32>
    %13 = vector.shape_cast %12 : vector<2x8x64xf32> to vector<16x64xf32>
    %14 = tpu.iota {dimensions = array<i32: 0>} : vector<8x8xi32>
    %15 = tpu.iota {dimensions = array<i32: 1>} : vector<8x8xi32>
    %16 = arith.cmpi sle, %15, %14 : vector<8x8xi32>
    %17 = vector.shape_cast %16 : vector<8x8xi1> to vector<1x8x8xi1>
    %c0_5 = arith.constant 0 : index
    %c0_6 = arith.constant 0 : index
    %c0_7 = arith.constant 0 : index
    %18 = vector.load %arg6[%c0_5, %c0_6, %c0_7] : memref<4x1x64xf32, #tpu.memory_space<vmem>>, vector<1x1x64xf32>
    %19 = vector.shape_cast %18 : vector<1x1x64xf32> to vector<1x64xf32>
    %c0_8 = arith.constant 0 : index
    %c0_9 = arith.constant 0 : index
    %c0_10 = arith.constant 0 : index
    %20 = vector.load %arg7[%c0_8, %c0_9, %c0_10] : memref<4x1x64xf32, #tpu.memory_space<vmem>>, vector<1x1x64xf32>
    %21 = vector.shape_cast %20 : vector<1x1x64xf32> to vector<1x64xf32>
    %cst_11 = arith.constant dense<0.000000e+00> : vector<16xf32>
    %22 = vector.multi_reduction <add>, %13, %cst_11 [1] : vector<16x64xf32> to vector<16xf32>
    %23 = vector.shape_cast %22 : vector<16xf32> to vector<16x1xf32>
    %cst_12 = arith.constant 6.400000e+01 : f32
    %24 = vector.broadcast %cst_12 : f32 to vector<16x1xf32>
    %25 = arith.divf %23, %24 : vector<16x1xf32>
    %26 = vector.broadcast %25 : vector<16x1xf32> to vector<16x64xf32>
    %27 = arith.subf %13, %26 : vector<16x64xf32>
    %28 = arith.mulf %27, %27 : vector<16x64xf32>
    %cst_13 = arith.constant dense<0.000000e+00> : vector<16xf32>
    %29 = vector.multi_reduction <add>, %28, %cst_13 [1] : vector<16x64xf32> to vector<16xf32>
    %30 = vector.shape_cast %29 : vector<16xf32> to vector<16x1xf32>
    %cst_14 = arith.constant 6.400000e+01 : f32
    %31 = vector.broadcast %cst_14 : f32 to vector<16x1xf32>
    %32 = arith.divf %30, %31 : vector<16x1xf32>
    %33 = vector.broadcast %25 : vector<16x1xf32> to vector<16x64xf32>
    %34 = arith.subf %13, %33 : vector<16x64xf32>
    %cst_15 = arith.constant 9.99999974E-6 : f32
    %35 = vector.broadcast %cst_15 : f32 to vector<16x1xf32>
    %36 = arith.addf %32, %35 : vector<16x1xf32>
    %37 = math.rsqrt %36 : vector<16x1xf32>
    %38 = vector.broadcast %37 : vector<16x1xf32> to vector<16x64xf32>
    %39 = arith.mulf %34, %38 : vector<16x64xf32>
    %40 = vector.broadcast %19 : vector<1x64xf32> to vector<16x64xf32>
    %41 = arith.mulf %39, %40 : vector<16x64xf32>
    %42 = vector.broadcast %21 : vector<1x64xf32> to vector<16x64xf32>
    %43 = arith.addf %41, %42 : vector<16x64xf32>
    %44 = arith.truncf %43 : vector<16x64xf32> to vector<16x64xbf16>
    %c0_16 = arith.constant 0 : index
    %c0_17 = arith.constant 0 : index
    %c0_18 = arith.constant 0 : index
    %45 = vector.load %arg3[%c0_16, %c0_17, %c0_18] : memref<4x64x384xbf16, #tpu.memory_space<vmem>>, vector<1x64x384xbf16>
    %46 = vector.shape_cast %45 : vector<1x64x384xbf16> to vector<64x384xbf16>
    %cst_19 = arith.constant dense<0.000000e+00> : vector<16x384xf32>
    %47 = tpu.matmul %44, %46, %cst_19 {dimension_numbers = #tpu.dot_dimension_numbers<[1], [0], [0], [1], [0, 0, 1, 1], [], []>} : vector<16x64xbf16>, vector<64x384xbf16>, vector<16x384xf32> -> vector<16x384xf32>
    %48 = arith.truncf %47 : vector<16x384xf32> to vector<16x384xbf16>
    %49 = vector.shape_cast %48 : vector<16x384xbf16> to vector<2x8x384xbf16>
    %50 = vector.extract_strided_slice %49 {offsets = [0, 0, 0], sizes = [2, 8, 16], strides = [1, 1, 1]} : vector<2x8x384xbf16> to vector<2x8x16xbf16>
    %51 = vector.extract_strided_slice %49 {offsets = [0, 0, 128], sizes = [2, 8, 16], strides = [1, 1, 1]} : vector<2x8x384xbf16> to vector<2x8x16xbf16>
    %52 = vector.extract_strided_slice %49 {offsets = [0, 0, 256], sizes = [2, 8, 16], strides = [1, 1, 1]} : vector<2x8x384xbf16> to vector<2x8x16xbf16>
    "tpu.trace_start"() <{level = 10 : i32, message = "bqd,bkd->bqk"}> : () -> ()
    %cst_20 = arith.constant dense<0.000000e+00> : vector<2x8x8xf32>
    %53 = tpu.matmul %50, %51, %cst_20 {dimension_numbers = #tpu.dot_dimension_numbers<[2], [2], [1], [1], [0, 0, 0, 1, 1, 1], [0], [0]>} : vector<2x8x16xbf16>, vector<2x8x16xbf16>, vector<2x8x8xf32> -> vector<2x8x8xf32>
    %cst_21 = arith.constant -1.000000e+30 : f32
    "tpu.trace_stop"() : () -> ()
    %54 = vector.shape_cast %17 : vector<1x8x8xi1> to vector<1x8x8xi1>
    %55 = vector.broadcast %54 : vector<1x8x8xi1> to vector<2x8x8xi1>
    %56 = vector.broadcast %cst_21 : f32 to vector<2x8x8xf32>
    %57 = arith.select %55, %53, %56 : vector<2x8x8xi1>, vector<2x8x8xf32>
    %cst_22 = arith.constant dense<0xFF800000> : vector<2x8xf32>
    %58 = vector.multi_reduction <maximumf>, %57, %cst_22 [2] : vector<2x8x8xf32> to vector<2x8xf32>
    %59 = vector.shape_cast %58 : vector<2x8xf32> to vector<2x8x1xf32>
    %60 = vector.broadcast %59 : vector<2x8x1xf32> to vector<2x8x8xf32>
    %61 = arith.subf %57, %60 : vector<2x8x8xf32>
    %62 = math.exp %61 : vector<2x8x8xf32>
    %cst_23 = arith.constant dense<0.000000e+00> : vector<2x8xf32>
    %63 = vector.multi_reduction <add>, %62, %cst_23 [2] : vector<2x8x8xf32> to vector<2x8xf32>
    %64 = vector.shape_cast %63 : vector<2x8xf32> to vector<2x8x1xf32>
    %65 = tpu.reciprocal %64 {approx = true} : vector<2x8x1xf32> -> vector<2x8x1xf32>
    %66 = vector.broadcast %65 : vector<2x8x1xf32> to vector<2x8x8xf32>
    %67 = arith.mulf %62, %66 : vector<2x8x8xf32>
    %68 = arith.truncf %67 : vector<2x8x8xf32> to vector<2x8x8xbf16>
    "tpu.trace_start"() <{level = 10 : i32, message = "bqk,bkd->bqd"}> : () -> ()
    %cst_24 = arith.constant dense<0.000000e+00> : vector<2x8x16xf32>
    %69 = tpu.matmul %68, %52, %cst_24 {dimension_numbers = #tpu.dot_dimension_numbers<[2], [1], [1], [2], [0, 0, 0, 1, 1, 2], [0], [0]>} : vector<2x8x8xbf16>, vector<2x8x16xbf16>, vector<2x8x16xf32> -> vector<2x8x16xf32>
    "tpu.trace_stop"() : () -> ()
    %70 = vector.extract_strided_slice %49 {offsets = [0, 0, 16], sizes = [2, 8, 16], strides = [1, 1, 1]} : vector<2x8x384xbf16> to vector<2x8x16xbf16>
    %71 = vector.extract_strided_slice %49 {offsets = [0, 0, 144], sizes = [2, 8, 16], strides = [1, 1, 1]} : vector<2x8x384xbf16> to vector<2x8x16xbf16>
    %72 = vector.extract_strided_slice %49 {offsets = [0, 0, 272], sizes = [2, 8, 16], strides = [1, 1, 1]} : vector<2x8x384xbf16> to vector<2x8x16xbf16>
    "tpu.trace_start"() <{level = 10 : i32, message = "bqd,bkd->bqk"}> : () -> ()
    %cst_25 = arith.constant dense<0.000000e+00> : vector<2x8x8xf32>
    %73 = tpu.matmul %70, %71, %cst_25 {dimension_numbers = #tpu.dot_dimension_numbers<[2], [2], [1], [1], [0, 0, 0, 1, 1, 1], [0], [0]>} : vector<2x8x16xbf16>, vector<2x8x16xbf16>, vector<2x8x8xf32> -> vector<2x8x8xf32>
    %cst_26 = arith.constant -1.000000e+30 : f32
    "tpu.trace_stop"() : () -> ()
    %74 = vector.shape_cast %17 : vector<1x8x8xi1> to vector<1x8x8xi1>
    %75 = vector.broadcast %74 : vector<1x8x8xi1> to vector<2x8x8xi1>
    %76 = vector.broadcast %cst_26 : f32 to vector<2x8x8xf32>
    %77 = arith.select %75, %73, %76 : vector<2x8x8xi1>, vector<2x8x8xf32>
    %cst_27 = arith.constant dense<0xFF800000> : vector<2x8xf32>
    %78 = vector.multi_reduction <maximumf>, %77, %cst_27 [2] : vector<2x8x8xf32> to vector<2x8xf32>
    %79 = vector.shape_cast %78 : vector<2x8xf32> to vector<2x8x1xf32>
    %80 = vector.broadcast %79 : vector<2x8x1xf32> to vector<2x8x8xf32>
    %81 = arith.subf %77, %80 : vector<2x8x8xf32>
    %82 = math.exp %81 : vector<2x8x8xf32>
    %cst_28 = arith.constant dense<0.000000e+00> : vector<2x8xf32>
    %83 = vector.multi_reduction <add>, %82, %cst_28 [2] : vector<2x8x8xf32> to vector<2x8xf32>
    %84 = vector.shape_cast %83 : vector<2x8xf32> to vector<2x8x1xf32>
    %85 = tpu.reciprocal %84 {approx = true} : vector<2x8x1xf32> -> vector<2x8x1xf32>
    %86 = vector.broadcast %85 : vector<2x8x1xf32> to vector<2x8x8xf32>
    %87 = arith.mulf %82, %86 : vector<2x8x8xf32>
    %88 = arith.truncf %87 : vector<2x8x8xf32> to vector<2x8x8xbf16>
    "tpu.trace_start"() <{level = 10 : i32, message = "bqk,bkd->bqd"}> : () -> ()
    %cst_29 = arith.constant dense<0.000000e+00> : vector<2x8x16xf32>
    %89 = tpu.matmul %88, %72, %cst_29 {dimension_numbers = #tpu.dot_dimension_numbers<[2], [1], [1], [2], [0, 0, 0, 1, 1, 2], [0], [0]>} : vector<2x8x8xbf16>, vector<2x8x16xbf16>, vector<2x8x16xf32> -> vector<2x8x16xf32>
    "tpu.trace_stop"() : () -> ()
    %90 = vector.extract_strided_slice %49 {offsets = [0, 0, 32], sizes = [2, 8, 16], strides = [1, 1, 1]} : vector<2x8x384xbf16> to vector<2x8x16xbf16>
    %91 = vector.extract_strided_slice %49 {offsets = [0, 0, 160], sizes = [2, 8, 16], strides = [1, 1, 1]} : vector<2x8x384xbf16> to vector<2x8x16xbf16>
    %92 = vector.extract_strided_slice %49 {offsets = [0, 0, 288], sizes = [2, 8, 16], strides = [1, 1, 1]} : vector<2x8x384xbf16> to vector<2x8x16xbf16>
    "tpu.trace_start"() <{level = 10 : i32, message = "bqd,bkd->bqk"}> : () -> ()
    %cst_30 = arith.constant dense<0.000000e+00> : vector<2x8x8xf32>
    %93 = tpu.matmul %90, %91, %cst_30 {dimension_numbers = #tpu.dot_dimension_numbers<[2], [2], [1], [1], [0, 0, 0, 1, 1, 1], [0], [0]>} : vector<2x8x16xbf16>, vector<2x8x16xbf16>, vector<2x8x8xf32> -> vector<2x8x8xf32>
    %cst_31 = arith.constant -1.000000e+30 : f32
    "tpu.trace_stop"() : () -> ()
    %94 = vector.shape_cast %17 : vector<1x8x8xi1> to vector<1x8x8xi1>
    %95 = vector.broadcast %94 : vector<1x8x8xi1> to vector<2x8x8xi1>
    %96 = vector.broadcast %cst_31 : f32 to vector<2x8x8xf32>
    %97 = arith.select %95, %93, %96 : vector<2x8x8xi1>, vector<2x8x8xf32>
    %cst_32 = arith.constant dense<0xFF800000> : vector<2x8xf32>
    %98 = vector.multi_reduction <maximumf>, %97, %cst_32 [2] : vector<2x8x8xf32> to vector<2x8xf32>
    %99 = vector.shape_cast %98 : vector<2x8xf32> to vector<2x8x1xf32>
    %100 = vector.broadcast %99 : vector<2x8x1xf32> to vector<2x8x8xf32>
    %101 = arith.subf %97, %100 : vector<2x8x8xf32>
    %102 = math.exp %101 : vector<2x8x8xf32>
    %cst_33 = arith.constant dense<0.000000e+00> : vector<2x8xf32>
    %103 = vector.multi_reduction <add>, %102, %cst_33 [2] : vector<2x8x8xf32> to vector<2x8xf32>
    %104 = vector.shape_cast %103 : vector<2x8xf32> to vector<2x8x1xf32>
    %105 = tpu.reciprocal %104 {approx = true} : vector<2x8x1xf32> -> vector<2x8x1xf32>
    %106 = vector.broadcast %105 : vector<2x8x1xf32> to vector<2x8x8xf32>
    %107 = arith.mulf %102, %106 : vector<2x8x8xf32>
    %108 = arith.truncf %107 : vector<2x8x8xf32> to vector<2x8x8xbf16>
    "tpu.trace_start"() <{level = 10 : i32, message = "bqk,bkd->bqd"}> : () -> ()
    %cst_34 = arith.constant dense<0.000000e+00> : vector<2x8x16xf32>
    %109 = tpu.matmul %108, %92, %cst_34 {dimension_numbers = #tpu.dot_dimension_numbers<[2], [1], [1], [2], [0, 0, 0, 1, 1, 2], [0], [0]>} : vector<2x8x8xbf16>, vector<2x8x16xbf16>, vector<2x8x16xf32> -> vector<2x8x16xf32>
    "tpu.trace_stop"() : () -> ()
    %110 = vector.extract_strided_slice %49 {offsets = [0, 0, 48], sizes = [2, 8, 16], strides = [1, 1, 1]} : vector<2x8x384xbf16> to vector<2x8x16xbf16>
    %111 = vector.extract_strided_slice %49 {offsets = [0, 0, 176], sizes = [2, 8, 16], strides = [1, 1, 1]} : vector<2x8x384xbf16> to vector<2x8x16xbf16>
    %112 = vector.extract_strided_slice %49 {offsets = [0, 0, 304], sizes = [2, 8, 16], strides = [1, 1, 1]} : vector<2x8x384xbf16> to vector<2x8x16xbf16>
    "tpu.trace_start"() <{level = 10 : i32, message = "bqd,bkd->bqk"}> : () -> ()
    %cst_35 = arith.constant dense<0.000000e+00> : vector<2x8x8xf32>
    %113 = tpu.matmul %110, %111, %cst_35 {dimension_numbers = #tpu.dot_dimension_numbers<[2], [2], [1], [1], [0, 0, 0, 1, 1, 1], [0], [0]>} : vector<2x8x16xbf16>, vector<2x8x16xbf16>, vector<2x8x8xf32> -> vector<2x8x8xf32>
    %cst_36 = arith.constant -1.000000e+30 : f32
    "tpu.trace_stop"() : () -> ()
    %114 = vector.shape_cast %17 : vector<1x8x8xi1> to vector<1x8x8xi1>
    %115 = vector.broadcast %114 : vector<1x8x8xi1> to vector<2x8x8xi1>
    %116 = vector.broadcast %cst_36 : f32 to vector<2x8x8xf32>
    %117 = arith.select %115, %113, %116 : vector<2x8x8xi1>, vector<2x8x8xf32>
    %cst_37 = arith.constant dense<0xFF800000> : vector<2x8xf32>
    %118 = vector.multi_reduction <maximumf>, %117, %cst_37 [2] : vector<2x8x8xf32> to vector<2x8xf32>
    %119 = vector.shape_cast %118 : vector<2x8xf32> to vector<2x8x1xf32>
    %120 = vector.broadcast %119 : vector<2x8x1xf32> to vector<2x8x8xf32>
    %121 = arith.subf %117, %120 : vector<2x8x8xf32>
    %122 = math.exp %121 : vector<2x8x8xf32>
    %cst_38 = arith.constant dense<0.000000e+00> : vector<2x8xf32>
    %123 = vector.multi_reduction <add>, %122, %cst_38 [2] : vector<2x8x8xf32> to vector<2x8xf32>
    %124 = vector.shape_cast %123 : vector<2x8xf32> to vector<2x8x1xf32>
    %125 = tpu.reciprocal %124 {approx = true} : vector<2x8x1xf32> -> vector<2x8x1xf32>
    %126 = vector.broadcast %125 : vector<2x8x1xf32> to vector<2x8x8xf32>
    %127 = arith.mulf %122, %126 : vector<2x8x8xf32>
    %128 = arith.truncf %127 : vector<2x8x8xf32> to vector<2x8x8xbf16>
    "tpu.trace_start"() <{level = 10 : i32, message = "bqk,bkd->bqd"}> : () -> ()
    %cst_39 = arith.constant dense<0.000000e+00> : vector<2x8x16xf32>
    %129 = tpu.matmul %128, %112, %cst_39 {dimension_numbers = #tpu.dot_dimension_numbers<[2], [1], [1], [2], [0, 0, 0, 1, 1, 2], [0], [0]>} : vector<2x8x8xbf16>, vector<2x8x16xbf16>, vector<2x8x16xf32> -> vector<2x8x16xf32>
    "tpu.trace_stop"() : () -> ()
    %130 = vector.extract_strided_slice %49 {offsets = [0, 0, 64], sizes = [2, 8, 16], strides = [1, 1, 1]} : vector<2x8x384xbf16> to vector<2x8x16xbf16>
    %131 = vector.extract_strided_slice %49 {offsets = [0, 0, 192], sizes = [2, 8, 16], strides = [1, 1, 1]} : vector<2x8x384xbf16> to vector<2x8x16xbf16>
    %132 = vector.extract_strided_slice %49 {offsets = [0, 0, 320], sizes = [2, 8, 16], strides = [1, 1, 1]} : vector<2x8x384xbf16> to vector<2x8x16xbf16>
    "tpu.trace_start"() <{level = 10 : i32, message = "bqd,bkd->bqk"}> : () -> ()
    %cst_40 = arith.constant dense<0.000000e+00> : vector<2x8x8xf32>
    %133 = tpu.matmul %130, %131, %cst_40 {dimension_numbers = #tpu.dot_dimension_numbers<[2], [2], [1], [1], [0, 0, 0, 1, 1, 1], [0], [0]>} : vector<2x8x16xbf16>, vector<2x8x16xbf16>, vector<2x8x8xf32> -> vector<2x8x8xf32>
    %cst_41 = arith.constant -1.000000e+30 : f32
    "tpu.trace_stop"() : () -> ()
    %134 = vector.shape_cast %17 : vector<1x8x8xi1> to vector<1x8x8xi1>
    %135 = vector.broadcast %134 : vector<1x8x8xi1> to vector<2x8x8xi1>
    %136 = vector.broadcast %cst_41 : f32 to vector<2x8x8xf32>
    %137 = arith.select %135, %133, %136 : vector<2x8x8xi1>, vector<2x8x8xf32>
    %cst_42 = arith.constant dense<0xFF800000> : vector<2x8xf32>
    %138 = vector.multi_reduction <maximumf>, %137, %cst_42 [2] : vector<2x8x8xf32> to vector<2x8xf32>
    %139 = vector.shape_cast %138 : vector<2x8xf32> to vector<2x8x1xf32>
    %140 = vector.broadcast %139 : vector<2x8x1xf32> to vector<2x8x8xf32>
    %141 = arith.subf %137, %140 : vector<2x8x8xf32>
    %142 = math.exp %141 : vector<2x8x8xf32>
    %cst_43 = arith.constant dense<0.000000e+00> : vector<2x8xf32>
    %143 = vector.multi_reduction <add>, %142, %cst_43 [2] : vector<2x8x8xf32> to vector<2x8xf32>
    %144 = vector.shape_cast %143 : vector<2x8xf32> to vector<2x8x1xf32>
    %145 = tpu.reciprocal %144 {approx = true} : vector<2x8x1xf32> -> vector<2x8x1xf32>
    %146 = vector.broadcast %145 : vector<2x8x1xf32> to vector<2x8x8xf32>
    %147 = arith.mulf %142, %146 : vector<2x8x8xf32>
    %148 = arith.truncf %147 : vector<2x8x8xf32> to vector<2x8x8xbf16>
    "tpu.trace_start"() <{level = 10 : i32, message = "bqk,bkd->bqd"}> : () -> ()
    %cst_44 = arith.constant dense<0.000000e+00> : vector<2x8x16xf32>
    %149 = tpu.matmul %148, %132, %cst_44 {dimension_numbers = #tpu.dot_dimension_numbers<[2], [1], [1], [2], [0, 0, 0, 1, 1, 2], [0], [0]>} : vector<2x8x8xbf16>, vector<2x8x16xbf16>, vector<2x8x16xf32> -> vector<2x8x16xf32>
    "tpu.trace_stop"() : () -> ()
    %150 = vector.extract_strided_slice %49 {offsets = [0, 0, 80], sizes = [2, 8, 16], strides = [1, 1, 1]} : vector<2x8x384xbf16> to vector<2x8x16xbf16>
    %151 = vector.extract_strided_slice %49 {offsets = [0, 0, 208], sizes = [2, 8, 16], strides = [1, 1, 1]} : vector<2x8x384xbf16> to vector<2x8x16xbf16>
    %152 = vector.extract_strided_slice %49 {offsets = [0, 0, 336], sizes = [2, 8, 16], strides = [1, 1, 1]} : vector<2x8x384xbf16> to vector<2x8x16xbf16>
    "tpu.trace_start"() <{level = 10 : i32, message = "bqd,bkd->bqk"}> : () -> ()
    %cst_45 = arith.constant dense<0.000000e+00> : vector<2x8x8xf32>
    %153 = tpu.matmul %150, %151, %cst_45 {dimension_numbers = #tpu.dot_dimension_numbers<[2], [2], [1], [1], [0, 0, 0, 1, 1, 1], [0], [0]>} : vector<2x8x16xbf16>, vector<2x8x16xbf16>, vector<2x8x8xf32> -> vector<2x8x8xf32>
    %cst_46 = arith.constant -1.000000e+30 : f32
    "tpu.trace_stop"() : () -> ()
    %154 = vector.shape_cast %17 : vector<1x8x8xi1> to vector<1x8x8xi1>
    %155 = vector.broadcast %154 : vector<1x8x8xi1> to vector<2x8x8xi1>
    %156 = vector.broadcast %cst_46 : f32 to vector<2x8x8xf32>
    %157 = arith.select %155, %153, %156 : vector<2x8x8xi1>, vector<2x8x8xf32>
    %cst_47 = arith.constant dense<0xFF800000> : vector<2x8xf32>
    %158 = vector.multi_reduction <maximumf>, %157, %cst_47 [2] : vector<2x8x8xf32> to vector<2x8xf32>
    %159 = vector.shape_cast %158 : vector<2x8xf32> to vector<2x8x1xf32>
    %160 = vector.broadcast %159 : vector<2x8x1xf32> to vector<2x8x8xf32>
    %161 = arith.subf %157, %160 : vector<2x8x8xf32>
    %162 = math.exp %161 : vector<2x8x8xf32>
    %cst_48 = arith.constant dense<0.000000e+00> : vector<2x8xf32>
    %163 = vector.multi_reduction <add>, %162, %cst_48 [2] : vector<2x8x8xf32> to vector<2x8xf32>
    %164 = vector.shape_cast %163 : vector<2x8xf32> to vector<2x8x1xf32>
    %165 = tpu.reciprocal %164 {approx = true} : vector<2x8x1xf32> -> vector<2x8x1xf32>
    %166 = vector.broadcast %165 : vector<2x8x1xf32> to vector<2x8x8xf32>
    %167 = arith.mulf %162, %166 : vector<2x8x8xf32>
    %168 = arith.truncf %167 : vector<2x8x8xf32> to vector<2x8x8xbf16>
    "tpu.trace_start"() <{level = 10 : i32, message = "bqk,bkd->bqd"}> : () -> ()
    %cst_49 = arith.constant dense<0.000000e+00> : vector<2x8x16xf32>
    %169 = tpu.matmul %168, %152, %cst_49 {dimension_numbers = #tpu.dot_dimension_numbers<[2], [1], [1], [2], [0, 0, 0, 1, 1, 2], [0], [0]>} : vector<2x8x8xbf16>, vector<2x8x16xbf16>, vector<2x8x16xf32> -> vector<2x8x16xf32>
    "tpu.trace_stop"() : () -> ()
    %170 = vector.extract_strided_slice %49 {offsets = [0, 0, 96], sizes = [2, 8, 16], strides = [1, 1, 1]} : vector<2x8x384xbf16> to vector<2x8x16xbf16>
    %171 = vector.extract_strided_slice %49 {offsets = [0, 0, 224], sizes = [2, 8, 16], strides = [1, 1, 1]} : vector<2x8x384xbf16> to vector<2x8x16xbf16>
    %172 = vector.extract_strided_slice %49 {offsets = [0, 0, 352], sizes = [2, 8, 16], strides = [1, 1, 1]} : vector<2x8x384xbf16> to vector<2x8x16xbf16>
    "tpu.trace_start"() <{level = 10 : i32, message = "bqd,bkd->bqk"}> : () -> ()
    %cst_50 = arith.constant dense<0.000000e+00> : vector<2x8x8xf32>
    %173 = tpu.matmul %170, %171, %cst_50 {dimension_numbers = #tpu.dot_dimension_numbers<[2], [2], [1], [1], [0, 0, 0, 1, 1, 1], [0], [0]>} : vector<2x8x16xbf16>, vector<2x8x16xbf16>, vector<2x8x8xf32> -> vector<2x8x8xf32>
    %cst_51 = arith.constant -1.000000e+30 : f32
    "tpu.trace_stop"() : () -> ()
    %174 = vector.shape_cast %17 : vector<1x8x8xi1> to vector<1x8x8xi1>
    %175 = vector.broadcast %174 : vector<1x8x8xi1> to vector<2x8x8xi1>
    %176 = vector.broadcast %cst_51 : f32 to vector<2x8x8xf32>
    %177 = arith.select %175, %173, %176 : vector<2x8x8xi1>, vector<2x8x8xf32>
    %cst_52 = arith.constant dense<0xFF800000> : vector<2x8xf32>
    %178 = vector.multi_reduction <maximumf>, %177, %cst_52 [2] : vector<2x8x8xf32> to vector<2x8xf32>
    %179 = vector.shape_cast %178 : vector<2x8xf32> to vector<2x8x1xf32>
    %180 = vector.broadcast %179 : vector<2x8x1xf32> to vector<2x8x8xf32>
    %181 = arith.subf %177, %180 : vector<2x8x8xf32>
    %182 = math.exp %181 : vector<2x8x8xf32>
    %cst_53 = arith.constant dense<0.000000e+00> : vector<2x8xf32>
    %183 = vector.multi_reduction <add>, %182, %cst_53 [2] : vector<2x8x8xf32> to vector<2x8xf32>
    %184 = vector.shape_cast %183 : vector<2x8xf32> to vector<2x8x1xf32>
    %185 = tpu.reciprocal %184 {approx = true} : vector<2x8x1xf32> -> vector<2x8x1xf32>
    %186 = vector.broadcast %185 : vector<2x8x1xf32> to vector<2x8x8xf32>
    %187 = arith.mulf %182, %186 : vector<2x8x8xf32>
    %188 = arith.truncf %187 : vector<2x8x8xf32> to vector<2x8x8xbf16>
    "tpu.trace_start"() <{level = 10 : i32, message = "bqk,bkd->bqd"}> : () -> ()
    %cst_54 = arith.constant dense<0.000000e+00> : vector<2x8x16xf32>
    %189 = tpu.matmul %188, %172, %cst_54 {dimension_numbers = #tpu.dot_dimension_numbers<[2], [1], [1], [2], [0, 0, 0, 1, 1, 2], [0], [0]>} : vector<2x8x8xbf16>, vector<2x8x16xbf16>, vector<2x8x16xf32> -> vector<2x8x16xf32>
    "tpu.trace_stop"() : () -> ()
    %190 = vector.extract_strided_slice %49 {offsets = [0, 0, 112], sizes = [2, 8, 16], strides = [1, 1, 1]} : vector<2x8x384xbf16> to vector<2x8x16xbf16>
    %191 = vector.extract_strided_slice %49 {offsets = [0, 0, 240], sizes = [2, 8, 16], strides = [1, 1, 1]} : vector<2x8x384xbf16> to vector<2x8x16xbf16>
    %192 = vector.extract_strided_slice %49 {offsets = [0, 0, 368], sizes = [2, 8, 16], strides = [1, 1, 1]} : vector<2x8x384xbf16> to vector<2x8x16xbf16>
    "tpu.trace_start"() <{level = 10 : i32, message = "bqd,bkd->bqk"}> : () -> ()
    %cst_55 = arith.constant dense<0.000000e+00> : vector<2x8x8xf32>
    %193 = tpu.matmul %190, %191, %cst_55 {dimension_numbers = #tpu.dot_dimension_numbers<[2], [2], [1], [1], [0, 0, 0, 1, 1, 1], [0], [0]>} : vector<2x8x16xbf16>, vector<2x8x16xbf16>, vector<2x8x8xf32> -> vector<2x8x8xf32>
    %cst_56 = arith.constant -1.000000e+30 : f32
    "tpu.trace_stop"() : () -> ()
    %194 = vector.shape_cast %17 : vector<1x8x8xi1> to vector<1x8x8xi1>
    %195 = vector.broadcast %194 : vector<1x8x8xi1> to vector<2x8x8xi1>
    %196 = vector.broadcast %cst_56 : f32 to vector<2x8x8xf32>
    %197 = arith.select %195, %193, %196 : vector<2x8x8xi1>, vector<2x8x8xf32>
    %cst_57 = arith.constant dense<0xFF800000> : vector<2x8xf32>
    %198 = vector.multi_reduction <maximumf>, %197, %cst_57 [2] : vector<2x8x8xf32> to vector<2x8xf32>
    %199 = vector.shape_cast %198 : vector<2x8xf32> to vector<2x8x1xf32>
    %200 = vector.broadcast %199 : vector<2x8x1xf32> to vector<2x8x8xf32>
    %201 = arith.subf %197, %200 : vector<2x8x8xf32>
    %202 = math.exp %201 : vector<2x8x8xf32>
    %cst_58 = arith.constant dense<0.000000e+00> : vector<2x8xf32>
    %203 = vector.multi_reduction <add>, %202, %cst_58 [2] : vector<2x8x8xf32> to vector<2x8xf32>
    %204 = vector.shape_cast %203 : vector<2x8xf32> to vector<2x8x1xf32>
    %205 = tpu.reciprocal %204 {approx = true} : vector<2x8x1xf32> -> vector<2x8x1xf32>
    %206 = vector.broadcast %205 : vector<2x8x1xf32> to vector<2x8x8xf32>
    %207 = arith.mulf %202, %206 : vector<2x8x8xf32>
    %208 = arith.truncf %207 : vector<2x8x8xf32> to vector<2x8x8xbf16>
    "tpu.trace_start"() <{level = 10 : i32, message = "bqk,bkd->bqd"}> : () -> ()
    %cst_59 = arith.constant dense<0.000000e+00> : vector<2x8x16xf32>
    %209 = tpu.matmul %208, %192, %cst_59 {dimension_numbers = #tpu.dot_dimension_numbers<[2], [1], [1], [2], [0, 0, 0, 1, 1, 2], [0], [0]>} : vector<2x8x8xbf16>, vector<2x8x16xbf16>, vector<2x8x16xf32> -> vector<2x8x16xf32>
    "tpu.trace_stop"() : () -> ()
    %210 = tpu.concatenate %69, %89, %109, %129, %149, %169, %189, %209 in 2 : vector<2x8x16xf32>, vector<2x8x16xf32>, vector<2x8x16xf32>, vector<2x8x16xf32>, vector<2x8x16xf32>, vector<2x8x16xf32>, vector<2x8x16xf32>, vector<2x8x16xf32> -> vector<2x8x128xf32>
    %211 = vector.shape_cast %210 : vector<2x8x128xf32> to vector<16x128xf32>
    %212 = arith.truncf %211 : vector<16x128xf32> to vector<16x128xbf16>
    %c0_60 = arith.constant 0 : index
    %c0_61 = arith.constant 0 : index
    %c0_62 = arith.constant 0 : index
    %213 = vector.load %arg4[%c0_60, %c0_61, %c0_62] : memref<4x128x64xbf16, #tpu.memory_space<vmem>>, vector<1x128x64xbf16>
    %214 = vector.shape_cast %213 : vector<1x128x64xbf16> to vector<128x64xbf16>
    %cst_63 = arith.constant dense<0.000000e+00> : vector<16x64xf32>
    %215 = tpu.matmul %212, %214, %cst_63 {dimension_numbers = #tpu.dot_dimension_numbers<[1], [0], [0], [1], [0, 0, 1, 1], [], []>} : vector<16x128xbf16>, vector<128x64xbf16>, vector<16x64xf32> -> vector<16x64xf32>
    %c0_64 = arith.constant 0 : index
    %c0_65 = arith.constant 0 : index
    %c0_66 = arith.constant 0 : index
    %216 = vector.load %arg5[%c0_64, %c0_65, %c0_66] : memref<4x1x64xf32, #tpu.memory_space<vmem>>, vector<1x1x64xf32>
    %217 = vector.shape_cast %216 : vector<1x1x64xf32> to vector<1x64xf32>
    %218 = vector.broadcast %217 : vector<1x64xf32> to vector<16x64xf32>
    %219 = arith.addf %215, %218 : vector<16x64xf32>
    %220 = arith.addf %13, %219 : vector<16x64xf32>
    %c0_67 = arith.constant 0 : index
    %c0_68 = arith.constant 0 : index
    %c0_69 = arith.constant 0 : index
    %221 = vector.load %arg8[%c0_67, %c0_68, %c0_69] : memref<4x1x64xf32, #tpu.memory_space<vmem>>, vector<1x1x64xf32>
    %222 = vector.shape_cast %221 : vector<1x1x64xf32> to vector<1x64xf32>
    %c0_70 = arith.constant 0 : index
    %c0_71 = arith.constant 0 : index
    %c0_72 = arith.constant 0 : index
    %223 = vector.load %arg9[%c0_70, %c0_71, %c0_72] : memref<4x1x64xf32, #tpu.memory_space<vmem>>, vector<1x1x64xf32>
    %224 = vector.shape_cast %223 : vector<1x1x64xf32> to vector<1x64xf32>
    %cst_73 = arith.constant dense<0.000000e+00> : vector<16xf32>
    %225 = vector.multi_reduction <add>, %220, %cst_73 [1] : vector<16x64xf32> to vector<16xf32>
    %226 = vector.shape_cast %225 : vector<16xf32> to vector<16x1xf32>
    %cst_74 = arith.constant 6.400000e+01 : f32
    %227 = vector.broadcast %cst_74 : f32 to vector<16x1xf32>
    %228 = arith.divf %226, %227 : vector<16x1xf32>
    %229 = vector.broadcast %228 : vector<16x1xf32> to vector<16x64xf32>
    %230 = arith.subf %220, %229 : vector<16x64xf32>
    %231 = arith.mulf %230, %230 : vector<16x64xf32>
    %cst_75 = arith.constant dense<0.000000e+00> : vector<16xf32>
    %232 = vector.multi_reduction <add>, %231, %cst_75 [1] : vector<16x64xf32> to vector<16xf32>
    %233 = vector.shape_cast %232 : vector<16xf32> to vector<16x1xf32>
    %cst_76 = arith.constant 6.400000e+01 : f32
    %234 = vector.broadcast %cst_76 : f32 to vector<16x1xf32>
    %235 = arith.divf %233, %234 : vector<16x1xf32>
    %236 = vector.broadcast %228 : vector<16x1xf32> to vector<16x64xf32>
    %237 = arith.subf %220, %236 : vector<16x64xf32>
    %cst_77 = arith.constant 9.99999974E-6 : f32
    %238 = vector.broadcast %cst_77 : f32 to vector<16x1xf32>
    %239 = arith.addf %235, %238 : vector<16x1xf32>
    %240 = math.rsqrt %239 : vector<16x1xf32>
    %241 = vector.broadcast %240 : vector<16x1xf32> to vector<16x64xf32>
    %242 = arith.mulf %237, %241 : vector<16x64xf32>
    %243 = vector.broadcast %222 : vector<1x64xf32> to vector<16x64xf32>
    %244 = arith.mulf %242, %243 : vector<16x64xf32>
    %245 = vector.broadcast %224 : vector<1x64xf32> to vector<16x64xf32>
    %246 = arith.addf %244, %245 : vector<16x64xf32>
    %247 = arith.truncf %246 : vector<16x64xf32> to vector<16x64xbf16>
    %c0_78 = arith.constant 0 : index
    %c0_79 = arith.constant 0 : index
    %c0_80 = arith.constant 0 : index
    %248 = vector.load %arg10[%c0_78, %c0_79, %c0_80] : memref<4x64x256xbf16, #tpu.memory_space<vmem>>, vector<1x64x256xbf16>
    %249 = vector.shape_cast %248 : vector<1x64x256xbf16> to vector<64x256xbf16>
    %cst_81 = arith.constant dense<0.000000e+00> : vector<16x256xf32>
    %250 = tpu.matmul %247, %249, %cst_81 {dimension_numbers = #tpu.dot_dimension_numbers<[1], [0], [0], [1], [0, 0, 1, 1], [], []>} : vector<16x64xbf16>, vector<64x256xbf16>, vector<16x256xf32> -> vector<16x256xf32>
    %c0_82 = arith.constant 0 : index
    %c0_83 = arith.constant 0 : index
    %c0_84 = arith.constant 0 : index
    %251 = vector.load %arg11[%c0_82, %c0_83, %c0_84] : memref<4x1x256xf32, #tpu.memory_space<vmem>>, vector<1x1x256xf32>
    %252 = vector.shape_cast %251 : vector<1x1x256xf32> to vector<1x256xf32>
    %253 = vector.broadcast %252 : vector<1x256xf32> to vector<16x256xf32>
    %254 = arith.addf %250, %253 : vector<16x256xf32>
    %cst_85 = arith.constant 0.000000e+00 : f32
    %255 = vector.broadcast %cst_85 : f32 to vector<16x256xf32>
    %256 = arith.maximumf %254, %255 : vector<16x256xf32>
    %257 = arith.truncf %256 : vector<16x256xf32> to vector<16x256xbf16>
    %c0_86 = arith.constant 0 : index
    %c0_87 = arith.constant 0 : index
    %c0_88 = arith.constant 0 : index
    %258 = vector.load %arg12[%c0_86, %c0_87, %c0_88] : memref<4x256x64xbf16, #tpu.memory_space<vmem>>, vector<1x256x64xbf16>
    %259 = vector.shape_cast %258 : vector<1x256x64xbf16> to vector<256x64xbf16>
    %cst_89 = arith.constant dense<0.000000e+00> : vector<16x64xf32>
    %260 = tpu.matmul %257, %259, %cst_89 {dimension_numbers = #tpu.dot_dimension_numbers<[1], [0], [0], [1], [0, 0, 1, 1], [], []>} : vector<16x256xbf16>, vector<256x64xbf16>, vector<16x64xf32> -> vector<16x64xf32>
    %c0_90 = arith.constant 0 : index
    %c0_91 = arith.constant 0 : index
    %c0_92 = arith.constant 0 : index
    %261 = vector.load %arg13[%c0_90, %c0_91, %c0_92] : memref<4x1x64xf32, #tpu.memory_space<vmem>>, vector<1x1x64xf32>
    %262 = vector.shape_cast %261 : vector<1x1x64xf32> to vector<1x64xf32>
    %263 = vector.broadcast %262 : vector<1x64xf32> to vector<16x64xf32>
    %264 = arith.addf %260, %263 : vector<16x64xf32>
    %265 = arith.addf %220, %264 : vector<16x64xf32>
    %c1 = arith.constant 1 : index
    %c0_93 = arith.constant 0 : index
    %c0_94 = arith.constant 0 : index
    %266 = vector.load %arg6[%c1, %c0_93, %c0_94] : memref<4x1x64xf32, #tpu.memory_space<vmem>>, vector<1x1x64xf32>
    %267 = vector.shape_cast %266 : vector<1x1x64xf32> to vector<1x64xf32>
    %c1_95 = arith.constant 1 : index
    %c0_96 = arith.constant 0 : index
    %c0_97 = arith.constant 0 : index
    %268 = vector.load %arg7[%c1_95, %c0_96, %c0_97] : memref<4x1x64xf32, #tpu.memory_space<vmem>>, vector<1x1x64xf32>
    %269 = vector.shape_cast %268 : vector<1x1x64xf32> to vector<1x64xf32>
    %cst_98 = arith.constant dense<0.000000e+00> : vector<16xf32>
    %270 = vector.multi_reduction <add>, %265, %cst_98 [1] : vector<16x64xf32> to vector<16xf32>
    %271 = vector.shape_cast %270 : vector<16xf32> to vector<16x1xf32>
    %cst_99 = arith.constant 6.400000e+01 : f32
    %272 = vector.broadcast %cst_99 : f32 to vector<16x1xf32>
    %273 = arith.divf %271, %272 : vector<16x1xf32>
    %274 = vector.broadcast %273 : vector<16x1xf32> to vector<16x64xf32>
    %275 = arith.subf %265, %274 : vector<16x64xf32>
    %276 = arith.mulf %275, %275 : vector<16x64xf32>
    %cst_100 = arith.constant dense<0.000000e+00> : vector<16xf32>
    %277 = vector.multi_reduction <add>, %276, %cst_100 [1] : vector<16x64xf32> to vector<16xf32>
    %278 = vector.shape_cast %277 : vector<16xf32> to vector<16x1xf32>
    %cst_101 = arith.constant 6.400000e+01 : f32
    %279 = vector.broadcast %cst_101 : f32 to vector<16x1xf32>
    %280 = arith.divf %278, %279 : vector<16x1xf32>
    %281 = vector.broadcast %273 : vector<16x1xf32> to vector<16x64xf32>
    %282 = arith.subf %265, %281 : vector<16x64xf32>
    %cst_102 = arith.constant 9.99999974E-6 : f32
    %283 = vector.broadcast %cst_102 : f32 to vector<16x1xf32>
    %284 = arith.addf %280, %283 : vector<16x1xf32>
    %285 = math.rsqrt %284 : vector<16x1xf32>
    %286 = vector.broadcast %285 : vector<16x1xf32> to vector<16x64xf32>
    %287 = arith.mulf %282, %286 : vector<16x64xf32>
    %288 = vector.broadcast %267 : vector<1x64xf32> to vector<16x64xf32>
    %289 = arith.mulf %287, %288 : vector<16x64xf32>
    %290 = vector.broadcast %269 : vector<1x64xf32> to vector<16x64xf32>
    %291 = arith.addf %289, %290 : vector<16x64xf32>
    %292 = arith.truncf %291 : vector<16x64xf32> to vector<16x64xbf16>
    %c1_103 = arith.constant 1 : index
    %c0_104 = arith.constant 0 : index
    %c0_105 = arith.constant 0 : index
    %293 = vector.load %arg3[%c1_103, %c0_104, %c0_105] : memref<4x64x384xbf16, #tpu.memory_space<vmem>>, vector<1x64x384xbf16>
    %294 = vector.shape_cast %293 : vector<1x64x384xbf16> to vector<64x384xbf16>
    %cst_106 = arith.constant dense<0.000000e+00> : vector<16x384xf32>
    %295 = tpu.matmul %292, %294, %cst_106 {dimension_numbers = #tpu.dot_dimension_numbers<[1], [0], [0], [1], [0, 0, 1, 1], [], []>} : vector<16x64xbf16>, vector<64x384xbf16>, vector<16x384xf32> -> vector<16x384xf32>
    %296 = arith.truncf %295 : vector<16x384xf32> to vector<16x384xbf16>
    %297 = vector.shape_cast %296 : vector<16x384xbf16> to vector<2x8x384xbf16>
    %298 = vector.extract_strided_slice %297 {offsets = [0, 0, 0], sizes = [2, 8, 16], strides = [1, 1, 1]} : vector<2x8x384xbf16> to vector<2x8x16xbf16>
    %299 = vector.extract_strided_slice %297 {offsets = [0, 0, 128], sizes = [2, 8, 16], strides = [1, 1, 1]} : vector<2x8x384xbf16> to vector<2x8x16xbf16>
    %300 = vector.extract_strided_slice %297 {offsets = [0, 0, 256], sizes = [2, 8, 16], strides = [1, 1, 1]} : vector<2x8x384xbf16> to vector<2x8x16xbf16>
    "tpu.trace_start"() <{level = 10 : i32, message = "bqd,bkd->bqk"}> : () -> ()
    %cst_107 = arith.constant dense<0.000000e+00> : vector<2x8x8xf32>
    %301 = tpu.matmul %298, %299, %cst_107 {dimension_numbers = #tpu.dot_dimension_numbers<[2], [2], [1], [1], [0, 0, 0, 1, 1, 1], [0], [0]>} : vector<2x8x16xbf16>, vector<2x8x16xbf16>, vector<2x8x8xf32> -> vector<2x8x8xf32>
    %cst_108 = arith.constant -1.000000e+30 : f32
    "tpu.trace_stop"() : () -> ()
    %302 = vector.shape_cast %17 : vector<1x8x8xi1> to vector<1x8x8xi1>
    %303 = vector.broadcast %302 : vector<1x8x8xi1> to vector<2x8x8xi1>
    %304 = vector.broadcast %cst_108 : f32 to vector<2x8x8xf32>
    %305 = arith.select %303, %301, %304 : vector<2x8x8xi1>, vector<2x8x8xf32>
    %cst_109 = arith.constant dense<0xFF800000> : vector<2x8xf32>
    %306 = vector.multi_reduction <maximumf>, %305, %cst_109 [2] : vector<2x8x8xf32> to vector<2x8xf32>
    %307 = vector.shape_cast %306 : vector<2x8xf32> to vector<2x8x1xf32>
    %308 = vector.broadcast %307 : vector<2x8x1xf32> to vector<2x8x8xf32>
    %309 = arith.subf %305, %308 : vector<2x8x8xf32>
    %310 = math.exp %309 : vector<2x8x8xf32>
    %cst_110 = arith.constant dense<0.000000e+00> : vector<2x8xf32>
    %311 = vector.multi_reduction <add>, %310, %cst_110 [2] : vector<2x8x8xf32> to vector<2x8xf32>
    %312 = vector.shape_cast %311 : vector<2x8xf32> to vector<2x8x1xf32>
    %313 = tpu.reciprocal %312 {approx = true} : vector<2x8x1xf32> -> vector<2x8x1xf32>
    %314 = vector.broadcast %313 : vector<2x8x1xf32> to vector<2x8x8xf32>
    %315 = arith.mulf %310, %314 : vector<2x8x8xf32>
    %316 = arith.truncf %315 : vector<2x8x8xf32> to vector<2x8x8xbf16>
    "tpu.trace_start"() <{level = 10 : i32, message = "bqk,bkd->bqd"}> : () -> ()
    %cst_111 = arith.constant dense<0.000000e+00> : vector<2x8x16xf32>
    %317 = tpu.matmul %316, %300, %cst_111 {dimension_numbers = #tpu.dot_dimension_numbers<[2], [1], [1], [2], [0, 0, 0, 1, 1, 2], [0], [0]>} : vector<2x8x8xbf16>, vector<2x8x16xbf16>, vector<2x8x16xf32> -> vector<2x8x16xf32>
    "tpu.trace_stop"() : () -> ()
    %318 = vector.extract_strided_slice %297 {offsets = [0, 0, 16], sizes = [2, 8, 16], strides = [1, 1, 1]} : vector<2x8x384xbf16> to vector<2x8x16xbf16>
    %319 = vector.extract_strided_slice %297 {offsets = [0, 0, 144], sizes = [2, 8, 16], strides = [1, 1, 1]} : vector<2x8x384xbf16> to vector<2x8x16xbf16>
    %320 = vector.extract_strided_slice %297 {offsets = [0, 0, 272], sizes = [2, 8, 16], strides = [1, 1, 1]} : vector<2x8x384xbf16> to vector<2x8x16xbf16>
    "tpu.trace_start"() <{level = 10 : i32, message = "bqd,bkd->bqk"}> : () -> ()
    %cst_112 = arith.constant dense<0.000000e+00> : vector<2x8x8xf32>
    %321 = tpu.matmul %318, %319, %cst_112 {dimension_numbers = #tpu.dot_dimension_numbers<[2], [2], [1], [1], [0, 0, 0, 1, 1, 1], [0], [0]>} : vector<2x8x16xbf16>, vector<2x8x16xbf16>, vector<2x8x8xf32> -> vector<2x8x8xf32>
    %cst_113 = arith.constant -1.000000e+30 : f32
    "tpu.trace_stop"() : () -> ()
    %322 = vector.shape_cast %17 : vector<1x8x8xi1> to vector<1x8x8xi1>
    %323 = vector.broadcast %322 : vector<1x8x8xi1> to vector<2x8x8xi1>
    %324 = vector.broadcast %cst_113 : f32 to vector<2x8x8xf32>
    %325 = arith.select %323, %321, %324 : vector<2x8x8xi1>, vector<2x8x8xf32>
    %cst_114 = arith.constant dense<0xFF800000> : vector<2x8xf32>
    %326 = vector.multi_reduction <maximumf>, %325, %cst_114 [2] : vector<2x8x8xf32> to vector<2x8xf32>
    %327 = vector.shape_cast %326 : vector<2x8xf32> to vector<2x8x1xf32>
    %328 = vector.broadcast %327 : vector<2x8x1xf32> to vector<2x8x8xf32>
    %329 = arith.subf %325, %328 : vector<2x8x8xf32>
    %330 = math.exp %329 : vector<2x8x8xf32>
    %cst_115 = arith.constant dense<0.000000e+00> : vector<2x8xf32>
    %331 = vector.multi_reduction <add>, %330, %cst_115 [2] : vector<2x8x8xf32> to vector<2x8xf32>
    %332 = vector.shape_cast %331 : vector<2x8xf32> to vector<2x8x1xf32>
    %333 = tpu.reciprocal %332 {approx = true} : vector<2x8x1xf32> -> vector<2x8x1xf32>
    %334 = vector.broadcast %333 : vector<2x8x1xf32> to vector<2x8x8xf32>
    %335 = arith.mulf %330, %334 : vector<2x8x8xf32>
    %336 = arith.truncf %335 : vector<2x8x8xf32> to vector<2x8x8xbf16>
    "tpu.trace_start"() <{level = 10 : i32, message = "bqk,bkd->bqd"}> : () -> ()
    %cst_116 = arith.constant dense<0.000000e+00> : vector<2x8x16xf32>
    %337 = tpu.matmul %336, %320, %cst_116 {dimension_numbers = #tpu.dot_dimension_numbers<[2], [1], [1], [2], [0, 0, 0, 1, 1, 2], [0], [0]>} : vector<2x8x8xbf16>, vector<2x8x16xbf16>, vector<2x8x16xf32> -> vector<2x8x16xf32>
    "tpu.trace_stop"() : () -> ()
    %338 = vector.extract_strided_slice %297 {offsets = [0, 0, 32], sizes = [2, 8, 16], strides = [1, 1, 1]} : vector<2x8x384xbf16> to vector<2x8x16xbf16>
    %339 = vector.extract_strided_slice %297 {offsets = [0, 0, 160], sizes = [2, 8, 16], strides = [1, 1, 1]} : vector<2x8x384xbf16> to vector<2x8x16xbf16>
    %340 = vector.extract_strided_slice %297 {offsets = [0, 0, 288], sizes = [2, 8, 16], strides = [1, 1, 1]} : vector<2x8x384xbf16> to vector<2x8x16xbf16>
    "tpu.trace_start"() <{level = 10 : i32, message = "bqd,bkd->bqk"}> : () -> ()
    %cst_117 = arith.constant dense<0.000000e+00> : vector<2x8x8xf32>
    %341 = tpu.matmul %338, %339, %cst_117 {dimension_numbers = #tpu.dot_dimension_numbers<[2], [2], [1], [1], [0, 0, 0, 1, 1, 1], [0], [0]>} : vector<2x8x16xbf16>, vector<2x8x16xbf16>, vector<2x8x8xf32> -> vector<2x8x8xf32>
    %cst_118 = arith.constant -1.000000e+30 : f32
    "tpu.trace_stop"() : () -> ()
    %342 = vector.shape_cast %17 : vector<1x8x8xi1> to vector<1x8x8xi1>
    %343 = vector.broadcast %342 : vector<1x8x8xi1> to vector<2x8x8xi1>
    %344 = vector.broadcast %cst_118 : f32 to vector<2x8x8xf32>
    %345 = arith.select %343, %341, %344 : vector<2x8x8xi1>, vector<2x8x8xf32>
    %cst_119 = arith.constant dense<0xFF800000> : vector<2x8xf32>
    %346 = vector.multi_reduction <maximumf>, %345, %cst_119 [2] : vector<2x8x8xf32> to vector<2x8xf32>
    %347 = vector.shape_cast %346 : vector<2x8xf32> to vector<2x8x1xf32>
    %348 = vector.broadcast %347 : vector<2x8x1xf32> to vector<2x8x8xf32>
    %349 = arith.subf %345, %348 : vector<2x8x8xf32>
    %350 = math.exp %349 : vector<2x8x8xf32>
    %cst_120 = arith.constant dense<0.000000e+00> : vector<2x8xf32>
    %351 = vector.multi_reduction <add>, %350, %cst_120 [2] : vector<2x8x8xf32> to vector<2x8xf32>
    %352 = vector.shape_cast %351 : vector<2x8xf32> to vector<2x8x1xf32>
    %353 = tpu.reciprocal %352 {approx = true} : vector<2x8x1xf32> -> vector<2x8x1xf32>
    %354 = vector.broadcast %353 : vector<2x8x1xf32> to vector<2x8x8xf32>
    %355 = arith.mulf %350, %354 : vector<2x8x8xf32>
    %356 = arith.truncf %355 : vector<2x8x8xf32> to vector<2x8x8xbf16>
    "tpu.trace_start"() <{level = 10 : i32, message = "bqk,bkd->bqd"}> : () -> ()
    %cst_121 = arith.constant dense<0.000000e+00> : vector<2x8x16xf32>
    %357 = tpu.matmul %356, %340, %cst_121 {dimension_numbers = #tpu.dot_dimension_numbers<[2], [1], [1], [2], [0, 0, 0, 1, 1, 2], [0], [0]>} : vector<2x8x8xbf16>, vector<2x8x16xbf16>, vector<2x8x16xf32> -> vector<2x8x16xf32>
    "tpu.trace_stop"() : () -> ()
    %358 = vector.extract_strided_slice %297 {offsets = [0, 0, 48], sizes = [2, 8, 16], strides = [1, 1, 1]} : vector<2x8x384xbf16> to vector<2x8x16xbf16>
    %359 = vector.extract_strided_slice %297 {offsets = [0, 0, 176], sizes = [2, 8, 16], strides = [1, 1, 1]} : vector<2x8x384xbf16> to vector<2x8x16xbf16>
    %360 = vector.extract_strided_slice %297 {offsets = [0, 0, 304], sizes = [2, 8, 16], strides = [1, 1, 1]} : vector<2x8x384xbf16> to vector<2x8x16xbf16>
    "tpu.trace_start"() <{level = 10 : i32, message = "bqd,bkd->bqk"}> : () -> ()
    %cst_122 = arith.constant dense<0.000000e+00> : vector<2x8x8xf32>
    %361 = tpu.matmul %358, %359, %cst_122 {dimension_numbers = #tpu.dot_dimension_numbers<[2], [2], [1], [1], [0, 0, 0, 1, 1, 1], [0], [0]>} : vector<2x8x16xbf16>, vector<2x8x16xbf16>, vector<2x8x8xf32> -> vector<2x8x8xf32>
    %cst_123 = arith.constant -1.000000e+30 : f32
    "tpu.trace_stop"() : () -> ()
    %362 = vector.shape_cast %17 : vector<1x8x8xi1> to vector<1x8x8xi1>
    %363 = vector.broadcast %362 : vector<1x8x8xi1> to vector<2x8x8xi1>
    %364 = vector.broadcast %cst_123 : f32 to vector<2x8x8xf32>
    %365 = arith.select %363, %361, %364 : vector<2x8x8xi1>, vector<2x8x8xf32>
    %cst_124 = arith.constant dense<0xFF800000> : vector<2x8xf32>
    %366 = vector.multi_reduction <maximumf>, %365, %cst_124 [2] : vector<2x8x8xf32> to vector<2x8xf32>
    %367 = vector.shape_cast %366 : vector<2x8xf32> to vector<2x8x1xf32>
    %368 = vector.broadcast %367 : vector<2x8x1xf32> to vector<2x8x8xf32>
    %369 = arith.subf %365, %368 : vector<2x8x8xf32>
    %370 = math.exp %369 : vector<2x8x8xf32>
    %cst_125 = arith.constant dense<0.000000e+00> : vector<2x8xf32>
    %371 = vector.multi_reduction <add>, %370, %cst_125 [2] : vector<2x8x8xf32> to vector<2x8xf32>
    %372 = vector.shape_cast %371 : vector<2x8xf32> to vector<2x8x1xf32>
    %373 = tpu.reciprocal %372 {approx = true} : vector<2x8x1xf32> -> vector<2x8x1xf32>
    %374 = vector.broadcast %373 : vector<2x8x1xf32> to vector<2x8x8xf32>
    %375 = arith.mulf %370, %374 : vector<2x8x8xf32>
    %376 = arith.truncf %375 : vector<2x8x8xf32> to vector<2x8x8xbf16>
    "tpu.trace_start"() <{level = 10 : i32, message = "bqk,bkd->bqd"}> : () -> ()
    %cst_126 = arith.constant dense<0.000000e+00> : vector<2x8x16xf32>
    %377 = tpu.matmul %376, %360, %cst_126 {dimension_numbers = #tpu.dot_dimension_numbers<[2], [1], [1], [2], [0, 0, 0, 1, 1, 2], [0], [0]>} : vector<2x8x8xbf16>, vector<2x8x16xbf16>, vector<2x8x16xf32> -> vector<2x8x16xf32>
    "tpu.trace_stop"() : () -> ()
    %378 = vector.extract_strided_slice %297 {offsets = [0, 0, 64], sizes = [2, 8, 16], strides = [1, 1, 1]} : vector<2x8x384xbf16> to vector<2x8x16xbf16>
    %379 = vector.extract_strided_slice %297 {offsets = [0, 0, 192], sizes = [2, 8, 16], strides = [1, 1, 1]} : vector<2x8x384xbf16> to vector<2x8x16xbf16>
    %380 = vector.extract_strided_slice %297 {offsets = [0, 0, 320], sizes = [2, 8, 16], strides = [1, 1, 1]} : vector<2x8x384xbf16> to vector<2x8x16xbf16>
    "tpu.trace_start"() <{level = 10 : i32, message = "bqd,bkd->bqk"}> : () -> ()
    %cst_127 = arith.constant dense<0.000000e+00> : vector<2x8x8xf32>
    %381 = tpu.matmul %378, %379, %cst_127 {dimension_numbers = #tpu.dot_dimension_numbers<[2], [2], [1], [1], [0, 0, 0, 1, 1, 1], [0], [0]>} : vector<2x8x16xbf16>, vector<2x8x16xbf16>, vector<2x8x8xf32> -> vector<2x8x8xf32>
    %cst_128 = arith.constant -1.000000e+30 : f32
    "tpu.trace_stop"() : () -> ()
    %382 = vector.shape_cast %17 : vector<1x8x8xi1> to vector<1x8x8xi1>
    %383 = vector.broadcast %382 : vector<1x8x8xi1> to vector<2x8x8xi1>
    %384 = vector.broadcast %cst_128 : f32 to vector<2x8x8xf32>
    %385 = arith.select %383, %381, %384 : vector<2x8x8xi1>, vector<2x8x8xf32>
    %cst_129 = arith.constant dense<0xFF800000> : vector<2x8xf32>
    %386 = vector.multi_reduction <maximumf>, %385, %cst_129 [2] : vector<2x8x8xf32> to vector<2x8xf32>
    %387 = vector.shape_cast %386 : vector<2x8xf32> to vector<2x8x1xf32>
    %388 = vector.broadcast %387 : vector<2x8x1xf32> to vector<2x8x8xf32>
    %389 = arith.subf %385, %388 : vector<2x8x8xf32>
    %390 = math.exp %389 : vector<2x8x8xf32>
    %cst_130 = arith.constant dense<0.000000e+00> : vector<2x8xf32>
    %391 = vector.multi_reduction <add>, %390, %cst_130 [2] : vector<2x8x8xf32> to vector<2x8xf32>
    %392 = vector.shape_cast %391 : vector<2x8xf32> to vector<2x8x1xf32>
    %393 = tpu.reciprocal %392 {approx = true} : vector<2x8x1xf32> -> vector<2x8x1xf32>
    %394 = vector.broadcast %393 : vector<2x8x1xf32> to vector<2x8x8xf32>
    %395 = arith.mulf %390, %394 : vector<2x8x8xf32>
    %396 = arith.truncf %395 : vector<2x8x8xf32> to vector<2x8x8xbf16>
    "tpu.trace_start"() <{level = 10 : i32, message = "bqk,bkd->bqd"}> : () -> ()
    %cst_131 = arith.constant dense<0.000000e+00> : vector<2x8x16xf32>
    %397 = tpu.matmul %396, %380, %cst_131 {dimension_numbers = #tpu.dot_dimension_numbers<[2], [1], [1], [2], [0, 0, 0, 1, 1, 2], [0], [0]>} : vector<2x8x8xbf16>, vector<2x8x16xbf16>, vector<2x8x16xf32> -> vector<2x8x16xf32>
    "tpu.trace_stop"() : () -> ()
    %398 = vector.extract_strided_slice %297 {offsets = [0, 0, 80], sizes = [2, 8, 16], strides = [1, 1, 1]} : vector<2x8x384xbf16> to vector<2x8x16xbf16>
    %399 = vector.extract_strided_slice %297 {offsets = [0, 0, 208], sizes = [2, 8, 16], strides = [1, 1, 1]} : vector<2x8x384xbf16> to vector<2x8x16xbf16>
    %400 = vector.extract_strided_slice %297 {offsets = [0, 0, 336], sizes = [2, 8, 16], strides = [1, 1, 1]} : vector<2x8x384xbf16> to vector<2x8x16xbf16>
    "tpu.trace_start"() <{level = 10 : i32, message = "bqd,bkd->bqk"}> : () -> ()
    %cst_132 = arith.constant dense<0.000000e+00> : vector<2x8x8xf32>
    %401 = tpu.matmul %398, %399, %cst_132 {dimension_numbers = #tpu.dot_dimension_numbers<[2], [2], [1], [1], [0, 0, 0, 1, 1, 1], [0], [0]>} : vector<2x8x16xbf16>, vector<2x8x16xbf16>, vector<2x8x8xf32> -> vector<2x8x8xf32>
    %cst_133 = arith.constant -1.000000e+30 : f32
    "tpu.trace_stop"() : () -> ()
    %402 = vector.shape_cast %17 : vector<1x8x8xi1> to vector<1x8x8xi1>
    %403 = vector.broadcast %402 : vector<1x8x8xi1> to vector<2x8x8xi1>
    %404 = vector.broadcast %cst_133 : f32 to vector<2x8x8xf32>
    %405 = arith.select %403, %401, %404 : vector<2x8x8xi1>, vector<2x8x8xf32>
    %cst_134 = arith.constant dense<0xFF800000> : vector<2x8xf32>
    %406 = vector.multi_reduction <maximumf>, %405, %cst_134 [2] : vector<2x8x8xf32> to vector<2x8xf32>
    %407 = vector.shape_cast %406 : vector<2x8xf32> to vector<2x8x1xf32>
    %408 = vector.broadcast %407 : vector<2x8x1xf32> to vector<2x8x8xf32>
    %409 = arith.subf %405, %408 : vector<2x8x8xf32>
    %410 = math.exp %409 : vector<2x8x8xf32>
    %cst_135 = arith.constant dense<0.000000e+00> : vector<2x8xf32>
    %411 = vector.multi_reduction <add>, %410, %cst_135 [2] : vector<2x8x8xf32> to vector<2x8xf32>
    %412 = vector.shape_cast %411 : vector<2x8xf32> to vector<2x8x1xf32>
    %413 = tpu.reciprocal %412 {approx = true} : vector<2x8x1xf32> -> vector<2x8x1xf32>
    %414 = vector.broadcast %413 : vector<2x8x1xf32> to vector<2x8x8xf32>
    %415 = arith.mulf %410, %414 : vector<2x8x8xf32>
    %416 = arith.truncf %415 : vector<2x8x8xf32> to vector<2x8x8xbf16>
    "tpu.trace_start"() <{level = 10 : i32, message = "bqk,bkd->bqd"}> : () -> ()
    %cst_136 = arith.constant dense<0.000000e+00> : vector<2x8x16xf32>
    %417 = tpu.matmul %416, %400, %cst_136 {dimension_numbers = #tpu.dot_dimension_numbers<[2], [1], [1], [2], [0, 0, 0, 1, 1, 2], [0], [0]>} : vector<2x8x8xbf16>, vector<2x8x16xbf16>, vector<2x8x16xf32> -> vector<2x8x16xf32>
    "tpu.trace_stop"() : () -> ()
    %418 = vector.extract_strided_slice %297 {offsets = [0, 0, 96], sizes = [2, 8, 16], strides = [1, 1, 1]} : vector<2x8x384xbf16> to vector<2x8x16xbf16>
    %419 = vector.extract_strided_slice %297 {offsets = [0, 0, 224], sizes = [2, 8, 16], strides = [1, 1, 1]} : vector<2x8x384xbf16> to vector<2x8x16xbf16>
    %420 = vector.extract_strided_slice %297 {offsets = [0, 0, 352], sizes = [2, 8, 16], strides = [1, 1, 1]} : vector<2x8x384xbf16> to vector<2x8x16xbf16>
    "tpu.trace_start"() <{level = 10 : i32, message = "bqd,bkd->bqk"}> : () -> ()
    %cst_137 = arith.constant dense<0.000000e+00> : vector<2x8x8xf32>
    %421 = tpu.matmul %418, %419, %cst_137 {dimension_numbers = #tpu.dot_dimension_numbers<[2], [2], [1], [1], [0, 0, 0, 1, 1, 1], [0], [0]>} : vector<2x8x16xbf16>, vector<2x8x16xbf16>, vector<2x8x8xf32> -> vector<2x8x8xf32>
    %cst_138 = arith.constant -1.000000e+30 : f32
    "tpu.trace_stop"() : () -> ()
    %422 = vector.shape_cast %17 : vector<1x8x8xi1> to vector<1x8x8xi1>
    %423 = vector.broadcast %422 : vector<1x8x8xi1> to vector<2x8x8xi1>
    %424 = vector.broadcast %cst_138 : f32 to vector<2x8x8xf32>
    %425 = arith.select %423, %421, %424 : vector<2x8x8xi1>, vector<2x8x8xf32>
    %cst_139 = arith.constant dense<0xFF800000> : vector<2x8xf32>
    %426 = vector.multi_reduction <maximumf>, %425, %cst_139 [2] : vector<2x8x8xf32> to vector<2x8xf32>
    %427 = vector.shape_cast %426 : vector<2x8xf32> to vector<2x8x1xf32>
    %428 = vector.broadcast %427 : vector<2x8x1xf32> to vector<2x8x8xf32>
    %429 = arith.subf %425, %428 : vector<2x8x8xf32>
    %430 = math.exp %429 : vector<2x8x8xf32>
    %cst_140 = arith.constant dense<0.000000e+00> : vector<2x8xf32>
    %431 = vector.multi_reduction <add>, %430, %cst_140 [2] : vector<2x8x8xf32> to vector<2x8xf32>
    %432 = vector.shape_cast %431 : vector<2x8xf32> to vector<2x8x1xf32>
    %433 = tpu.reciprocal %432 {approx = true} : vector<2x8x1xf32> -> vector<2x8x1xf32>
    %434 = vector.broadcast %433 : vector<2x8x1xf32> to vector<2x8x8xf32>
    %435 = arith.mulf %430, %434 : vector<2x8x8xf32>
    %436 = arith.truncf %435 : vector<2x8x8xf32> to vector<2x8x8xbf16>
    "tpu.trace_start"() <{level = 10 : i32, message = "bqk,bkd->bqd"}> : () -> ()
    %cst_141 = arith.constant dense<0.000000e+00> : vector<2x8x16xf32>
    %437 = tpu.matmul %436, %420, %cst_141 {dimension_numbers = #tpu.dot_dimension_numbers<[2], [1], [1], [2], [0, 0, 0, 1, 1, 2], [0], [0]>} : vector<2x8x8xbf16>, vector<2x8x16xbf16>, vector<2x8x16xf32> -> vector<2x8x16xf32>
    "tpu.trace_stop"() : () -> ()
    %438 = vector.extract_strided_slice %297 {offsets = [0, 0, 112], sizes = [2, 8, 16], strides = [1, 1, 1]} : vector<2x8x384xbf16> to vector<2x8x16xbf16>
    %439 = vector.extract_strided_slice %297 {offsets = [0, 0, 240], sizes = [2, 8, 16], strides = [1, 1, 1]} : vector<2x8x384xbf16> to vector<2x8x16xbf16>
    %440 = vector.extract_strided_slice %297 {offsets = [0, 0, 368], sizes = [2, 8, 16], strides = [1, 1, 1]} : vector<2x8x384xbf16> to vector<2x8x16xbf16>
    "tpu.trace_start"() <{level = 10 : i32, message = "bqd,bkd->bqk"}> : () -> ()
    %cst_142 = arith.constant dense<0.000000e+00> : vector<2x8x8xf32>
    %441 = tpu.matmul %438, %439, %cst_142 {dimension_numbers = #tpu.dot_dimension_numbers<[2], [2], [1], [1], [0, 0, 0, 1, 1, 1], [0], [0]>} : vector<2x8x16xbf16>, vector<2x8x16xbf16>, vector<2x8x8xf32> -> vector<2x8x8xf32>
    %cst_143 = arith.constant -1.000000e+30 : f32
    "tpu.trace_stop"() : () -> ()
    %442 = vector.shape_cast %17 : vector<1x8x8xi1> to vector<1x8x8xi1>
    %443 = vector.broadcast %442 : vector<1x8x8xi1> to vector<2x8x8xi1>
    %444 = vector.broadcast %cst_143 : f32 to vector<2x8x8xf32>
    %445 = arith.select %443, %441, %444 : vector<2x8x8xi1>, vector<2x8x8xf32>
    %cst_144 = arith.constant dense<0xFF800000> : vector<2x8xf32>
    %446 = vector.multi_reduction <maximumf>, %445, %cst_144 [2] : vector<2x8x8xf32> to vector<2x8xf32>
    %447 = vector.shape_cast %446 : vector<2x8xf32> to vector<2x8x1xf32>
    %448 = vector.broadcast %447 : vector<2x8x1xf32> to vector<2x8x8xf32>
    %449 = arith.subf %445, %448 : vector<2x8x8xf32>
    %450 = math.exp %449 : vector<2x8x8xf32>
    %cst_145 = arith.constant dense<0.000000e+00> : vector<2x8xf32>
    %451 = vector.multi_reduction <add>, %450, %cst_145 [2] : vector<2x8x8xf32> to vector<2x8xf32>
    %452 = vector.shape_cast %451 : vector<2x8xf32> to vector<2x8x1xf32>
    %453 = tpu.reciprocal %452 {approx = true} : vector<2x8x1xf32> -> vector<2x8x1xf32>
    %454 = vector.broadcast %453 : vector<2x8x1xf32> to vector<2x8x8xf32>
    %455 = arith.mulf %450, %454 : vector<2x8x8xf32>
    %456 = arith.truncf %455 : vector<2x8x8xf32> to vector<2x8x8xbf16>
    "tpu.trace_start"() <{level = 10 : i32, message = "bqk,bkd->bqd"}> : () -> ()
    %cst_146 = arith.constant dense<0.000000e+00> : vector<2x8x16xf32>
    %457 = tpu.matmul %456, %440, %cst_146 {dimension_numbers = #tpu.dot_dimension_numbers<[2], [1], [1], [2], [0, 0, 0, 1, 1, 2], [0], [0]>} : vector<2x8x8xbf16>, vector<2x8x16xbf16>, vector<2x8x16xf32> -> vector<2x8x16xf32>
    "tpu.trace_stop"() : () -> ()
    %458 = tpu.concatenate %317, %337, %357, %377, %397, %417, %437, %457 in 2 : vector<2x8x16xf32>, vector<2x8x16xf32>, vector<2x8x16xf32>, vector<2x8x16xf32>, vector<2x8x16xf32>, vector<2x8x16xf32>, vector<2x8x16xf32>, vector<2x8x16xf32> -> vector<2x8x128xf32>
    %459 = vector.shape_cast %458 : vector<2x8x128xf32> to vector<16x128xf32>
    %460 = arith.truncf %459 : vector<16x128xf32> to vector<16x128xbf16>
    %c1_147 = arith.constant 1 : index
    %c0_148 = arith.constant 0 : index
    %c0_149 = arith.constant 0 : index
    %461 = vector.load %arg4[%c1_147, %c0_148, %c0_149] : memref<4x128x64xbf16, #tpu.memory_space<vmem>>, vector<1x128x64xbf16>
    %462 = vector.shape_cast %461 : vector<1x128x64xbf16> to vector<128x64xbf16>
    %cst_150 = arith.constant dense<0.000000e+00> : vector<16x64xf32>
    %463 = tpu.matmul %460, %462, %cst_150 {dimension_numbers = #tpu.dot_dimension_numbers<[1], [0], [0], [1], [0, 0, 1, 1], [], []>} : vector<16x128xbf16>, vector<128x64xbf16>, vector<16x64xf32> -> vector<16x64xf32>
    %c1_151 = arith.constant 1 : index
    %c0_152 = arith.constant 0 : index
    %c0_153 = arith.constant 0 : index
    %464 = vector.load %arg5[%c1_151, %c0_152, %c0_153] : memref<4x1x64xf32, #tpu.memory_space<vmem>>, vector<1x1x64xf32>
    %465 = vector.shape_cast %464 : vector<1x1x64xf32> to vector<1x64xf32>
    %466 = vector.broadcast %465 : vector<1x64xf32> to vector<16x64xf32>
    %467 = arith.addf %463, %466 : vector<16x64xf32>
    %468 = arith.addf %265, %467 : vector<16x64xf32>
    %c1_154 = arith.constant 1 : index
    %c0_155 = arith.constant 0 : index
    %c0_156 = arith.constant 0 : index
    %469 = vector.load %arg8[%c1_154, %c0_155, %c0_156] : memref<4x1x64xf32, #tpu.memory_space<vmem>>, vector<1x1x64xf32>
    %470 = vector.shape_cast %469 : vector<1x1x64xf32> to vector<1x64xf32>
    %c1_157 = arith.constant 1 : index
    %c0_158 = arith.constant 0 : index
    %c0_159 = arith.constant 0 : index
    %471 = vector.load %arg9[%c1_157, %c0_158, %c0_159] : memref<4x1x64xf32, #tpu.memory_space<vmem>>, vector<1x1x64xf32>
    %472 = vector.shape_cast %471 : vector<1x1x64xf32> to vector<1x64xf32>
    %cst_160 = arith.constant dense<0.000000e+00> : vector<16xf32>
    %473 = vector.multi_reduction <add>, %468, %cst_160 [1] : vector<16x64xf32> to vector<16xf32>
    %474 = vector.shape_cast %473 : vector<16xf32> to vector<16x1xf32>
    %cst_161 = arith.constant 6.400000e+01 : f32
    %475 = vector.broadcast %cst_161 : f32 to vector<16x1xf32>
    %476 = arith.divf %474, %475 : vector<16x1xf32>
    %477 = vector.broadcast %476 : vector<16x1xf32> to vector<16x64xf32>
    %478 = arith.subf %468, %477 : vector<16x64xf32>
    %479 = arith.mulf %478, %478 : vector<16x64xf32>
    %cst_162 = arith.constant dense<0.000000e+00> : vector<16xf32>
    %480 = vector.multi_reduction <add>, %479, %cst_162 [1] : vector<16x64xf32> to vector<16xf32>
    %481 = vector.shape_cast %480 : vector<16xf32> to vector<16x1xf32>
    %cst_163 = arith.constant 6.400000e+01 : f32
    %482 = vector.broadcast %cst_163 : f32 to vector<16x1xf32>
    %483 = arith.divf %481, %482 : vector<16x1xf32>
    %484 = vector.broadcast %476 : vector<16x1xf32> to vector<16x64xf32>
    %485 = arith.subf %468, %484 : vector<16x64xf32>
    %cst_164 = arith.constant 9.99999974E-6 : f32
    %486 = vector.broadcast %cst_164 : f32 to vector<16x1xf32>
    %487 = arith.addf %483, %486 : vector<16x1xf32>
    %488 = math.rsqrt %487 : vector<16x1xf32>
    %489 = vector.broadcast %488 : vector<16x1xf32> to vector<16x64xf32>
    %490 = arith.mulf %485, %489 : vector<16x64xf32>
    %491 = vector.broadcast %470 : vector<1x64xf32> to vector<16x64xf32>
    %492 = arith.mulf %490, %491 : vector<16x64xf32>
    %493 = vector.broadcast %472 : vector<1x64xf32> to vector<16x64xf32>
    %494 = arith.addf %492, %493 : vector<16x64xf32>
    %495 = arith.truncf %494 : vector<16x64xf32> to vector<16x64xbf16>
    %c1_165 = arith.constant 1 : index
    %c0_166 = arith.constant 0 : index
    %c0_167 = arith.constant 0 : index
    %496 = vector.load %arg10[%c1_165, %c0_166, %c0_167] : memref<4x64x256xbf16, #tpu.memory_space<vmem>>, vector<1x64x256xbf16>
    %497 = vector.shape_cast %496 : vector<1x64x256xbf16> to vector<64x256xbf16>
    %cst_168 = arith.constant dense<0.000000e+00> : vector<16x256xf32>
    %498 = tpu.matmul %495, %497, %cst_168 {dimension_numbers = #tpu.dot_dimension_numbers<[1], [0], [0], [1], [0, 0, 1, 1], [], []>} : vector<16x64xbf16>, vector<64x256xbf16>, vector<16x256xf32> -> vector<16x256xf32>
    %c1_169 = arith.constant 1 : index
    %c0_170 = arith.constant 0 : index
    %c0_171 = arith.constant 0 : index
    %499 = vector.load %arg11[%c1_169, %c0_170, %c0_171] : memref<4x1x256xf32, #tpu.memory_space<vmem>>, vector<1x1x256xf32>
    %500 = vector.shape_cast %499 : vector<1x1x256xf32> to vector<1x256xf32>
    %501 = vector.broadcast %500 : vector<1x256xf32> to vector<16x256xf32>
    %502 = arith.addf %498, %501 : vector<16x256xf32>
    %cst_172 = arith.constant 0.000000e+00 : f32
    %503 = vector.broadcast %cst_172 : f32 to vector<16x256xf32>
    %504 = arith.maximumf %502, %503 : vector<16x256xf32>
    %505 = arith.truncf %504 : vector<16x256xf32> to vector<16x256xbf16>
    %c1_173 = arith.constant 1 : index
    %c0_174 = arith.constant 0 : index
    %c0_175 = arith.constant 0 : index
    %506 = vector.load %arg12[%c1_173, %c0_174, %c0_175] : memref<4x256x64xbf16, #tpu.memory_space<vmem>>, vector<1x256x64xbf16>
    %507 = vector.shape_cast %506 : vector<1x256x64xbf16> to vector<256x64xbf16>
    %cst_176 = arith.constant dense<0.000000e+00> : vector<16x64xf32>
    %508 = tpu.matmul %505, %507, %cst_176 {dimension_numbers = #tpu.dot_dimension_numbers<[1], [0], [0], [1], [0, 0, 1, 1], [], []>} : vector<16x256xbf16>, vector<256x64xbf16>, vector<16x64xf32> -> vector<16x64xf32>
    %c1_177 = arith.constant 1 : index
    %c0_178 = arith.constant 0 : index
    %c0_179 = arith.constant 0 : index
    %509 = vector.load %arg13[%c1_177, %c0_178, %c0_179] : memref<4x1x64xf32, #tpu.memory_space<vmem>>, vector<1x1x64xf32>
    %510 = vector.shape_cast %509 : vector<1x1x64xf32> to vector<1x64xf32>
    %511 = vector.broadcast %510 : vector<1x64xf32> to vector<16x64xf32>
    %512 = arith.addf %508, %511 : vector<16x64xf32>
    %513 = arith.addf %468, %512 : vector<16x64xf32>
    %c2 = arith.constant 2 : index
    %c0_180 = arith.constant 0 : index
    %c0_181 = arith.constant 0 : index
    %514 = vector.load %arg6[%c2, %c0_180, %c0_181] : memref<4x1x64xf32, #tpu.memory_space<vmem>>, vector<1x1x64xf32>
    %515 = vector.shape_cast %514 : vector<1x1x64xf32> to vector<1x64xf32>
    %c2_182 = arith.constant 2 : index
    %c0_183 = arith.constant 0 : index
    %c0_184 = arith.constant 0 : index
    %516 = vector.load %arg7[%c2_182, %c0_183, %c0_184] : memref<4x1x64xf32, #tpu.memory_space<vmem>>, vector<1x1x64xf32>
    %517 = vector.shape_cast %516 : vector<1x1x64xf32> to vector<1x64xf32>
    %cst_185 = arith.constant dense<0.000000e+00> : vector<16xf32>
    %518 = vector.multi_reduction <add>, %513, %cst_185 [1] : vector<16x64xf32> to vector<16xf32>
    %519 = vector.shape_cast %518 : vector<16xf32> to vector<16x1xf32>
    %cst_186 = arith.constant 6.400000e+01 : f32
    %520 = vector.broadcast %cst_186 : f32 to vector<16x1xf32>
    %521 = arith.divf %519, %520 : vector<16x1xf32>
    %522 = vector.broadcast %521 : vector<16x1xf32> to vector<16x64xf32>
    %523 = arith.subf %513, %522 : vector<16x64xf32>
    %524 = arith.mulf %523, %523 : vector<16x64xf32>
    %cst_187 = arith.constant dense<0.000000e+00> : vector<16xf32>
    %525 = vector.multi_reduction <add>, %524, %cst_187 [1] : vector<16x64xf32> to vector<16xf32>
    %526 = vector.shape_cast %525 : vector<16xf32> to vector<16x1xf32>
    %cst_188 = arith.constant 6.400000e+01 : f32
    %527 = vector.broadcast %cst_188 : f32 to vector<16x1xf32>
    %528 = arith.divf %526, %527 : vector<16x1xf32>
    %529 = vector.broadcast %521 : vector<16x1xf32> to vector<16x64xf32>
    %530 = arith.subf %513, %529 : vector<16x64xf32>
    %cst_189 = arith.constant 9.99999974E-6 : f32
    %531 = vector.broadcast %cst_189 : f32 to vector<16x1xf32>
    %532 = arith.addf %528, %531 : vector<16x1xf32>
    %533 = math.rsqrt %532 : vector<16x1xf32>
    %534 = vector.broadcast %533 : vector<16x1xf32> to vector<16x64xf32>
    %535 = arith.mulf %530, %534 : vector<16x64xf32>
    %536 = vector.broadcast %515 : vector<1x64xf32> to vector<16x64xf32>
    %537 = arith.mulf %535, %536 : vector<16x64xf32>
    %538 = vector.broadcast %517 : vector<1x64xf32> to vector<16x64xf32>
    %539 = arith.addf %537, %538 : vector<16x64xf32>
    %540 = arith.truncf %539 : vector<16x64xf32> to vector<16x64xbf16>
    %c2_190 = arith.constant 2 : index
    %c0_191 = arith.constant 0 : index
    %c0_192 = arith.constant 0 : index
    %541 = vector.load %arg3[%c2_190, %c0_191, %c0_192] : memref<4x64x384xbf16, #tpu.memory_space<vmem>>, vector<1x64x384xbf16>
    %542 = vector.shape_cast %541 : vector<1x64x384xbf16> to vector<64x384xbf16>
    %cst_193 = arith.constant dense<0.000000e+00> : vector<16x384xf32>
    %543 = tpu.matmul %540, %542, %cst_193 {dimension_numbers = #tpu.dot_dimension_numbers<[1], [0], [0], [1], [0, 0, 1, 1], [], []>} : vector<16x64xbf16>, vector<64x384xbf16>, vector<16x384xf32> -> vector<16x384xf32>
    %544 = arith.truncf %543 : vector<16x384xf32> to vector<16x384xbf16>
    %545 = vector.shape_cast %544 : vector<16x384xbf16> to vector<2x8x384xbf16>
    %546 = vector.extract_strided_slice %545 {offsets = [0, 0, 0], sizes = [2, 8, 16], strides = [1, 1, 1]} : vector<2x8x384xbf16> to vector<2x8x16xbf16>
    %547 = vector.extract_strided_slice %545 {offsets = [0, 0, 128], sizes = [2, 8, 16], strides = [1, 1, 1]} : vector<2x8x384xbf16> to vector<2x8x16xbf16>
    %548 = vector.extract_strided_slice %545 {offsets = [0, 0, 256], sizes = [2, 8, 16], strides = [1, 1, 1]} : vector<2x8x384xbf16> to vector<2x8x16xbf16>
    "tpu.trace_start"() <{level = 10 : i32, message = "bqd,bkd->bqk"}> : () -> ()
    %cst_194 = arith.constant dense<0.000000e+00> : vector<2x8x8xf32>
    %549 = tpu.matmul %546, %547, %cst_194 {dimension_numbers = #tpu.dot_dimension_numbers<[2], [2], [1], [1], [0, 0, 0, 1, 1, 1], [0], [0]>} : vector<2x8x16xbf16>, vector<2x8x16xbf16>, vector<2x8x8xf32> -> vector<2x8x8xf32>
    %cst_195 = arith.constant -1.000000e+30 : f32
    "tpu.trace_stop"() : () -> ()
    %550 = vector.shape_cast %17 : vector<1x8x8xi1> to vector<1x8x8xi1>
    %551 = vector.broadcast %550 : vector<1x8x8xi1> to vector<2x8x8xi1>
    %552 = vector.broadcast %cst_195 : f32 to vector<2x8x8xf32>
    %553 = arith.select %551, %549, %552 : vector<2x8x8xi1>, vector<2x8x8xf32>
    %cst_196 = arith.constant dense<0xFF800000> : vector<2x8xf32>
    %554 = vector.multi_reduction <maximumf>, %553, %cst_196 [2] : vector<2x8x8xf32> to vector<2x8xf32>
    %555 = vector.shape_cast %554 : vector<2x8xf32> to vector<2x8x1xf32>
    %556 = vector.broadcast %555 : vector<2x8x1xf32> to vector<2x8x8xf32>
    %557 = arith.subf %553, %556 : vector<2x8x8xf32>
    %558 = math.exp %557 : vector<2x8x8xf32>
    %cst_197 = arith.constant dense<0.000000e+00> : vector<2x8xf32>
    %559 = vector.multi_reduction <add>, %558, %cst_197 [2] : vector<2x8x8xf32> to vector<2x8xf32>
    %560 = vector.shape_cast %559 : vector<2x8xf32> to vector<2x8x1xf32>
    %561 = tpu.reciprocal %560 {approx = true} : vector<2x8x1xf32> -> vector<2x8x1xf32>
    %562 = vector.broadcast %561 : vector<2x8x1xf32> to vector<2x8x8xf32>
    %563 = arith.mulf %558, %562 : vector<2x8x8xf32>
    %564 = arith.truncf %563 : vector<2x8x8xf32> to vector<2x8x8xbf16>
    "tpu.trace_start"() <{level = 10 : i32, message = "bqk,bkd->bqd"}> : () -> ()
    %cst_198 = arith.constant dense<0.000000e+00> : vector<2x8x16xf32>
    %565 = tpu.matmul %564, %548, %cst_198 {dimension_numbers = #tpu.dot_dimension_numbers<[2], [1], [1], [2], [0, 0, 0, 1, 1, 2], [0], [0]>} : vector<2x8x8xbf16>, vector<2x8x16xbf16>, vector<2x8x16xf32> -> vector<2x8x16xf32>
    "tpu.trace_stop"() : () -> ()
    %566 = vector.extract_strided_slice %545 {offsets = [0, 0, 16], sizes = [2, 8, 16], strides = [1, 1, 1]} : vector<2x8x384xbf16> to vector<2x8x16xbf16>
    %567 = vector.extract_strided_slice %545 {offsets = [0, 0, 144], sizes = [2, 8, 16], strides = [1, 1, 1]} : vector<2x8x384xbf16> to vector<2x8x16xbf16>
    %568 = vector.extract_strided_slice %545 {offsets = [0, 0, 272], sizes = [2, 8, 16], strides = [1, 1, 1]} : vector<2x8x384xbf16> to vector<2x8x16xbf16>
    "tpu.trace_start"() <{level = 10 : i32, message = "bqd,bkd->bqk"}> : () -> ()
    %cst_199 = arith.constant dense<0.000000e+00> : vector<2x8x8xf32>
    %569 = tpu.matmul %566, %567, %cst_199 {dimension_numbers = #tpu.dot_dimension_numbers<[2], [2], [1], [1], [0, 0, 0, 1, 1, 1], [0], [0]>} : vector<2x8x16xbf16>, vector<2x8x16xbf16>, vector<2x8x8xf32> -> vector<2x8x8xf32>
    %cst_200 = arith.constant -1.000000e+30 : f32
    "tpu.trace_stop"() : () -> ()
    %570 = vector.shape_cast %17 : vector<1x8x8xi1> to vector<1x8x8xi1>
    %571 = vector.broadcast %570 : vector<1x8x8xi1> to vector<2x8x8xi1>
    %572 = vector.broadcast %cst_200 : f32 to vector<2x8x8xf32>
    %573 = arith.select %571, %569, %572 : vector<2x8x8xi1>, vector<2x8x8xf32>
    %cst_201 = arith.constant dense<0xFF800000> : vector<2x8xf32>
    %574 = vector.multi_reduction <maximumf>, %573, %cst_201 [2] : vector<2x8x8xf32> to vector<2x8xf32>
    %575 = vector.shape_cast %574 : vector<2x8xf32> to vector<2x8x1xf32>
    %576 = vector.broadcast %575 : vector<2x8x1xf32> to vector<2x8x8xf32>
    %577 = arith.subf %573, %576 : vector<2x8x8xf32>
    %578 = math.exp %577 : vector<2x8x8xf32>
    %cst_202 = arith.constant dense<0.000000e+00> : vector<2x8xf32>
    %579 = vector.multi_reduction <add>, %578, %cst_202 [2] : vector<2x8x8xf32> to vector<2x8xf32>
    %580 = vector.shape_cast %579 : vector<2x8xf32> to vector<2x8x1xf32>
    %581 = tpu.reciprocal %580 {approx = true} : vector<2x8x1xf32> -> vector<2x8x1xf32>
    %582 = vector.broadcast %581 : vector<2x8x1xf32> to vector<2x8x8xf32>
    %583 = arith.mulf %578, %582 : vector<2x8x8xf32>
    %584 = arith.truncf %583 : vector<2x8x8xf32> to vector<2x8x8xbf16>
    "tpu.trace_start"() <{level = 10 : i32, message = "bqk,bkd->bqd"}> : () -> ()
    %cst_203 = arith.constant dense<0.000000e+00> : vector<2x8x16xf32>
    %585 = tpu.matmul %584, %568, %cst_203 {dimension_numbers = #tpu.dot_dimension_numbers<[2], [1], [1], [2], [0, 0, 0, 1, 1, 2], [0], [0]>} : vector<2x8x8xbf16>, vector<2x8x16xbf16>, vector<2x8x16xf32> -> vector<2x8x16xf32>
    "tpu.trace_stop"() : () -> ()
    %586 = vector.extract_strided_slice %545 {offsets = [0, 0, 32], sizes = [2, 8, 16], strides = [1, 1, 1]} : vector<2x8x384xbf16> to vector<2x8x16xbf16>
    %587 = vector.extract_strided_slice %545 {offsets = [0, 0, 160], sizes = [2, 8, 16], strides = [1, 1, 1]} : vector<2x8x384xbf16> to vector<2x8x16xbf16>
    %588 = vector.extract_strided_slice %545 {offsets = [0, 0, 288], sizes = [2, 8, 16], strides = [1, 1, 1]} : vector<2x8x384xbf16> to vector<2x8x16xbf16>
    "tpu.trace_start"() <{level = 10 : i32, message = "bqd,bkd->bqk"}> : () -> ()
    %cst_204 = arith.constant dense<0.000000e+00> : vector<2x8x8xf32>
    %589 = tpu.matmul %586, %587, %cst_204 {dimension_numbers = #tpu.dot_dimension_numbers<[2], [2], [1], [1], [0, 0, 0, 1, 1, 1], [0], [0]>} : vector<2x8x16xbf16>, vector<2x8x16xbf16>, vector<2x8x8xf32> -> vector<2x8x8xf32>
    %cst_205 = arith.constant -1.000000e+30 : f32
    "tpu.trace_stop"() : () -> ()
    %590 = vector.shape_cast %17 : vector<1x8x8xi1> to vector<1x8x8xi1>
    %591 = vector.broadcast %590 : vector<1x8x8xi1> to vector<2x8x8xi1>
    %592 = vector.broadcast %cst_205 : f32 to vector<2x8x8xf32>
    %593 = arith.select %591, %589, %592 : vector<2x8x8xi1>, vector<2x8x8xf32>
    %cst_206 = arith.constant dense<0xFF800000> : vector<2x8xf32>
    %594 = vector.multi_reduction <maximumf>, %593, %cst_206 [2] : vector<2x8x8xf32> to vector<2x8xf32>
    %595 = vector.shape_cast %594 : vector<2x8xf32> to vector<2x8x1xf32>
    %596 = vector.broadcast %595 : vector<2x8x1xf32> to vector<2x8x8xf32>
    %597 = arith.subf %593, %596 : vector<2x8x8xf32>
    %598 = math.exp %597 : vector<2x8x8xf32>
    %cst_207 = arith.constant dense<0.000000e+00> : vector<2x8xf32>
    %599 = vector.multi_reduction <add>, %598, %cst_207 [2] : vector<2x8x8xf32> to vector<2x8xf32>
    %600 = vector.shape_cast %599 : vector<2x8xf32> to vector<2x8x1xf32>
    %601 = tpu.reciprocal %600 {approx = true} : vector<2x8x1xf32> -> vector<2x8x1xf32>
    %602 = vector.broadcast %601 : vector<2x8x1xf32> to vector<2x8x8xf32>
    %603 = arith.mulf %598, %602 : vector<2x8x8xf32>
    %604 = arith.truncf %603 : vector<2x8x8xf32> to vector<2x8x8xbf16>
    "tpu.trace_start"() <{level = 10 : i32, message = "bqk,bkd->bqd"}> : () -> ()
    %cst_208 = arith.constant dense<0.000000e+00> : vector<2x8x16xf32>
    %605 = tpu.matmul %604, %588, %cst_208 {dimension_numbers = #tpu.dot_dimension_numbers<[2], [1], [1], [2], [0, 0, 0, 1, 1, 2], [0], [0]>} : vector<2x8x8xbf16>, vector<2x8x16xbf16>, vector<2x8x16xf32> -> vector<2x8x16xf32>
    "tpu.trace_stop"() : () -> ()
    %606 = vector.extract_strided_slice %545 {offsets = [0, 0, 48], sizes = [2, 8, 16], strides = [1, 1, 1]} : vector<2x8x384xbf16> to vector<2x8x16xbf16>
    %607 = vector.extract_strided_slice %545 {offsets = [0, 0, 176], sizes = [2, 8, 16], strides = [1, 1, 1]} : vector<2x8x384xbf16> to vector<2x8x16xbf16>
    %608 = vector.extract_strided_slice %545 {offsets = [0, 0, 304], sizes = [2, 8, 16], strides = [1, 1, 1]} : vector<2x8x384xbf16> to vector<2x8x16xbf16>
    "tpu.trace_start"() <{level = 10 : i32, message = "bqd,bkd->bqk"}> : () -> ()
    %cst_209 = arith.constant dense<0.000000e+00> : vector<2x8x8xf32>
    %609 = tpu.matmul %606, %607, %cst_209 {dimension_numbers = #tpu.dot_dimension_numbers<[2], [2], [1], [1], [0, 0, 0, 1, 1, 1], [0], [0]>} : vector<2x8x16xbf16>, vector<2x8x16xbf16>, vector<2x8x8xf32> -> vector<2x8x8xf32>
    %cst_210 = arith.constant -1.000000e+30 : f32
    "tpu.trace_stop"() : () -> ()
    %610 = vector.shape_cast %17 : vector<1x8x8xi1> to vector<1x8x8xi1>
    %611 = vector.broadcast %610 : vector<1x8x8xi1> to vector<2x8x8xi1>
    %612 = vector.broadcast %cst_210 : f32 to vector<2x8x8xf32>
    %613 = arith.select %611, %609, %612 : vector<2x8x8xi1>, vector<2x8x8xf32>
    %cst_211 = arith.constant dense<0xFF800000> : vector<2x8xf32>
    %614 = vector.multi_reduction <maximumf>, %613, %cst_211 [2] : vector<2x8x8xf32> to vector<2x8xf32>
    %615 = vector.shape_cast %614 : vector<2x8xf32> to vector<2x8x1xf32>
    %616 = vector.broadcast %615 : vector<2x8x1xf32> to vector<2x8x8xf32>
    %617 = arith.subf %613, %616 : vector<2x8x8xf32>
    %618 = math.exp %617 : vector<2x8x8xf32>
    %cst_212 = arith.constant dense<0.000000e+00> : vector<2x8xf32>
    %619 = vector.multi_reduction <add>, %618, %cst_212 [2] : vector<2x8x8xf32> to vector<2x8xf32>
    %620 = vector.shape_cast %619 : vector<2x8xf32> to vector<2x8x1xf32>
    %621 = tpu.reciprocal %620 {approx = true} : vector<2x8x1xf32> -> vector<2x8x1xf32>
    %622 = vector.broadcast %621 : vector<2x8x1xf32> to vector<2x8x8xf32>
    %623 = arith.mulf %618, %622 : vector<2x8x8xf32>
    %624 = arith.truncf %623 : vector<2x8x8xf32> to vector<2x8x8xbf16>
    "tpu.trace_start"() <{level = 10 : i32, message = "bqk,bkd->bqd"}> : () -> ()
    %cst_213 = arith.constant dense<0.000000e+00> : vector<2x8x16xf32>
    %625 = tpu.matmul %624, %608, %cst_213 {dimension_numbers = #tpu.dot_dimension_numbers<[2], [1], [1], [2], [0, 0, 0, 1, 1, 2], [0], [0]>} : vector<2x8x8xbf16>, vector<2x8x16xbf16>, vector<2x8x16xf32> -> vector<2x8x16xf32>
    "tpu.trace_stop"() : () -> ()
    %626 = vector.extract_strided_slice %545 {offsets = [0, 0, 64], sizes = [2, 8, 16], strides = [1, 1, 1]} : vector<2x8x384xbf16> to vector<2x8x16xbf16>
    %627 = vector.extract_strided_slice %545 {offsets = [0, 0, 192], sizes = [2, 8, 16], strides = [1, 1, 1]} : vector<2x8x384xbf16> to vector<2x8x16xbf16>
    %628 = vector.extract_strided_slice %545 {offsets = [0, 0, 320], sizes = [2, 8, 16], strides = [1, 1, 1]} : vector<2x8x384xbf16> to vector<2x8x16xbf16>
    "tpu.trace_start"() <{level = 10 : i32, message = "bqd,bkd->bqk"}> : () -> ()
    %cst_214 = arith.constant dense<0.000000e+00> : vector<2x8x8xf32>
    %629 = tpu.matmul %626, %627, %cst_214 {dimension_numbers = #tpu.dot_dimension_numbers<[2], [2], [1], [1], [0, 0, 0, 1, 1, 1], [0], [0]>} : vector<2x8x16xbf16>, vector<2x8x16xbf16>, vector<2x8x8xf32> -> vector<2x8x8xf32>
    %cst_215 = arith.constant -1.000000e+30 : f32
    "tpu.trace_stop"() : () -> ()
    %630 = vector.shape_cast %17 : vector<1x8x8xi1> to vector<1x8x8xi1>
    %631 = vector.broadcast %630 : vector<1x8x8xi1> to vector<2x8x8xi1>
    %632 = vector.broadcast %cst_215 : f32 to vector<2x8x8xf32>
    %633 = arith.select %631, %629, %632 : vector<2x8x8xi1>, vector<2x8x8xf32>
    %cst_216 = arith.constant dense<0xFF800000> : vector<2x8xf32>
    %634 = vector.multi_reduction <maximumf>, %633, %cst_216 [2] : vector<2x8x8xf32> to vector<2x8xf32>
    %635 = vector.shape_cast %634 : vector<2x8xf32> to vector<2x8x1xf32>
    %636 = vector.broadcast %635 : vector<2x8x1xf32> to vector<2x8x8xf32>
    %637 = arith.subf %633, %636 : vector<2x8x8xf32>
    %638 = math.exp %637 : vector<2x8x8xf32>
    %cst_217 = arith.constant dense<0.000000e+00> : vector<2x8xf32>
    %639 = vector.multi_reduction <add>, %638, %cst_217 [2] : vector<2x8x8xf32> to vector<2x8xf32>
    %640 = vector.shape_cast %639 : vector<2x8xf32> to vector<2x8x1xf32>
    %641 = tpu.reciprocal %640 {approx = true} : vector<2x8x1xf32> -> vector<2x8x1xf32>
    %642 = vector.broadcast %641 : vector<2x8x1xf32> to vector<2x8x8xf32>
    %643 = arith.mulf %638, %642 : vector<2x8x8xf32>
    %644 = arith.truncf %643 : vector<2x8x8xf32> to vector<2x8x8xbf16>
    "tpu.trace_start"() <{level = 10 : i32, message = "bqk,bkd->bqd"}> : () -> ()
    %cst_218 = arith.constant dense<0.000000e+00> : vector<2x8x16xf32>
    %645 = tpu.matmul %644, %628, %cst_218 {dimension_numbers = #tpu.dot_dimension_numbers<[2], [1], [1], [2], [0, 0, 0, 1, 1, 2], [0], [0]>} : vector<2x8x8xbf16>, vector<2x8x16xbf16>, vector<2x8x16xf32> -> vector<2x8x16xf32>
    "tpu.trace_stop"() : () -> ()
    %646 = vector.extract_strided_slice %545 {offsets = [0, 0, 80], sizes = [2, 8, 16], strides = [1, 1, 1]} : vector<2x8x384xbf16> to vector<2x8x16xbf16>
    %647 = vector.extract_strided_slice %545 {offsets = [0, 0, 208], sizes = [2, 8, 16], strides = [1, 1, 1]} : vector<2x8x384xbf16> to vector<2x8x16xbf16>
    %648 = vector.extract_strided_slice %545 {offsets = [0, 0, 336], sizes = [2, 8, 16], strides = [1, 1, 1]} : vector<2x8x384xbf16> to vector<2x8x16xbf16>
    "tpu.trace_start"() <{level = 10 : i32, message = "bqd,bkd->bqk"}> : () -> ()
    %cst_219 = arith.constant dense<0.000000e+00> : vector<2x8x8xf32>
    %649 = tpu.matmul %646, %647, %cst_219 {dimension_numbers = #tpu.dot_dimension_numbers<[2], [2], [1], [1], [0, 0, 0, 1, 1, 1], [0], [0]>} : vector<2x8x16xbf16>, vector<2x8x16xbf16>, vector<2x8x8xf32> -> vector<2x8x8xf32>
    %cst_220 = arith.constant -1.000000e+30 : f32
    "tpu.trace_stop"() : () -> ()
    %650 = vector.shape_cast %17 : vector<1x8x8xi1> to vector<1x8x8xi1>
    %651 = vector.broadcast %650 : vector<1x8x8xi1> to vector<2x8x8xi1>
    %652 = vector.broadcast %cst_220 : f32 to vector<2x8x8xf32>
    %653 = arith.select %651, %649, %652 : vector<2x8x8xi1>, vector<2x8x8xf32>
    %cst_221 = arith.constant dense<0xFF800000> : vector<2x8xf32>
    %654 = vector.multi_reduction <maximumf>, %653, %cst_221 [2] : vector<2x8x8xf32> to vector<2x8xf32>
    %655 = vector.shape_cast %654 : vector<2x8xf32> to vector<2x8x1xf32>
    %656 = vector.broadcast %655 : vector<2x8x1xf32> to vector<2x8x8xf32>
    %657 = arith.subf %653, %656 : vector<2x8x8xf32>
    %658 = math.exp %657 : vector<2x8x8xf32>
    %cst_222 = arith.constant dense<0.000000e+00> : vector<2x8xf32>
    %659 = vector.multi_reduction <add>, %658, %cst_222 [2] : vector<2x8x8xf32> to vector<2x8xf32>
    %660 = vector.shape_cast %659 : vector<2x8xf32> to vector<2x8x1xf32>
    %661 = tpu.reciprocal %660 {approx = true} : vector<2x8x1xf32> -> vector<2x8x1xf32>
    %662 = vector.broadcast %661 : vector<2x8x1xf32> to vector<2x8x8xf32>
    %663 = arith.mulf %658, %662 : vector<2x8x8xf32>
    %664 = arith.truncf %663 : vector<2x8x8xf32> to vector<2x8x8xbf16>
    "tpu.trace_start"() <{level = 10 : i32, message = "bqk,bkd->bqd"}> : () -> ()
    %cst_223 = arith.constant dense<0.000000e+00> : vector<2x8x16xf32>
    %665 = tpu.matmul %664, %648, %cst_223 {dimension_numbers = #tpu.dot_dimension_numbers<[2], [1], [1], [2], [0, 0, 0, 1, 1, 2], [0], [0]>} : vector<2x8x8xbf16>, vector<2x8x16xbf16>, vector<2x8x16xf32> -> vector<2x8x16xf32>
    "tpu.trace_stop"() : () -> ()
    %666 = vector.extract_strided_slice %545 {offsets = [0, 0, 96], sizes = [2, 8, 16], strides = [1, 1, 1]} : vector<2x8x384xbf16> to vector<2x8x16xbf16>
    %667 = vector.extract_strided_slice %545 {offsets = [0, 0, 224], sizes = [2, 8, 16], strides = [1, 1, 1]} : vector<2x8x384xbf16> to vector<2x8x16xbf16>
    %668 = vector.extract_strided_slice %545 {offsets = [0, 0, 352], sizes = [2, 8, 16], strides = [1, 1, 1]} : vector<2x8x384xbf16> to vector<2x8x16xbf16>
    "tpu.trace_start"() <{level = 10 : i32, message = "bqd,bkd->bqk"}> : () -> ()
    %cst_224 = arith.constant dense<0.000000e+00> : vector<2x8x8xf32>
    %669 = tpu.matmul %666, %667, %cst_224 {dimension_numbers = #tpu.dot_dimension_numbers<[2], [2], [1], [1], [0, 0, 0, 1, 1, 1], [0], [0]>} : vector<2x8x16xbf16>, vector<2x8x16xbf16>, vector<2x8x8xf32> -> vector<2x8x8xf32>
    %cst_225 = arith.constant -1.000000e+30 : f32
    "tpu.trace_stop"() : () -> ()
    %670 = vector.shape_cast %17 : vector<1x8x8xi1> to vector<1x8x8xi1>
    %671 = vector.broadcast %670 : vector<1x8x8xi1> to vector<2x8x8xi1>
    %672 = vector.broadcast %cst_225 : f32 to vector<2x8x8xf32>
    %673 = arith.select %671, %669, %672 : vector<2x8x8xi1>, vector<2x8x8xf32>
    %cst_226 = arith.constant dense<0xFF800000> : vector<2x8xf32>
    %674 = vector.multi_reduction <maximumf>, %673, %cst_226 [2] : vector<2x8x8xf32> to vector<2x8xf32>
    %675 = vector.shape_cast %674 : vector<2x8xf32> to vector<2x8x1xf32>
    %676 = vector.broadcast %675 : vector<2x8x1xf32> to vector<2x8x8xf32>
    %677 = arith.subf %673, %676 : vector<2x8x8xf32>
    %678 = math.exp %677 : vector<2x8x8xf32>
    %cst_227 = arith.constant dense<0.000000e+00> : vector<2x8xf32>
    %679 = vector.multi_reduction <add>, %678, %cst_227 [2] : vector<2x8x8xf32> to vector<2x8xf32>
    %680 = vector.shape_cast %679 : vector<2x8xf32> to vector<2x8x1xf32>
    %681 = tpu.reciprocal %680 {approx = true} : vector<2x8x1xf32> -> vector<2x8x1xf32>
    %682 = vector.broadcast %681 : vector<2x8x1xf32> to vector<2x8x8xf32>
    %683 = arith.mulf %678, %682 : vector<2x8x8xf32>
    %684 = arith.truncf %683 : vector<2x8x8xf32> to vector<2x8x8xbf16>
    "tpu.trace_start"() <{level = 10 : i32, message = "bqk,bkd->bqd"}> : () -> ()
    %cst_228 = arith.constant dense<0.000000e+00> : vector<2x8x16xf32>
    %685 = tpu.matmul %684, %668, %cst_228 {dimension_numbers = #tpu.dot_dimension_numbers<[2], [1], [1], [2], [0, 0, 0, 1, 1, 2], [0], [0]>} : vector<2x8x8xbf16>, vector<2x8x16xbf16>, vector<2x8x16xf32> -> vector<2x8x16xf32>
    "tpu.trace_stop"() : () -> ()
    %686 = vector.extract_strided_slice %545 {offsets = [0, 0, 112], sizes = [2, 8, 16], strides = [1, 1, 1]} : vector<2x8x384xbf16> to vector<2x8x16xbf16>
    %687 = vector.extract_strided_slice %545 {offsets = [0, 0, 240], sizes = [2, 8, 16], strides = [1, 1, 1]} : vector<2x8x384xbf16> to vector<2x8x16xbf16>
    %688 = vector.extract_strided_slice %545 {offsets = [0, 0, 368], sizes = [2, 8, 16], strides = [1, 1, 1]} : vector<2x8x384xbf16> to vector<2x8x16xbf16>
    "tpu.trace_start"() <{level = 10 : i32, message = "bqd,bkd->bqk"}> : () -> ()
    %cst_229 = arith.constant dense<0.000000e+00> : vector<2x8x8xf32>
    %689 = tpu.matmul %686, %687, %cst_229 {dimension_numbers = #tpu.dot_dimension_numbers<[2], [2], [1], [1], [0, 0, 0, 1, 1, 1], [0], [0]>} : vector<2x8x16xbf16>, vector<2x8x16xbf16>, vector<2x8x8xf32> -> vector<2x8x8xf32>
    %cst_230 = arith.constant -1.000000e+30 : f32
    "tpu.trace_stop"() : () -> ()
    %690 = vector.shape_cast %17 : vector<1x8x8xi1> to vector<1x8x8xi1>
    %691 = vector.broadcast %690 : vector<1x8x8xi1> to vector<2x8x8xi1>
    %692 = vector.broadcast %cst_230 : f32 to vector<2x8x8xf32>
    %693 = arith.select %691, %689, %692 : vector<2x8x8xi1>, vector<2x8x8xf32>
    %cst_231 = arith.constant dense<0xFF800000> : vector<2x8xf32>
    %694 = vector.multi_reduction <maximumf>, %693, %cst_231 [2] : vector<2x8x8xf32> to vector<2x8xf32>
    %695 = vector.shape_cast %694 : vector<2x8xf32> to vector<2x8x1xf32>
    %696 = vector.broadcast %695 : vector<2x8x1xf32> to vector<2x8x8xf32>
    %697 = arith.subf %693, %696 : vector<2x8x8xf32>
    %698 = math.exp %697 : vector<2x8x8xf32>
    %cst_232 = arith.constant dense<0.000000e+00> : vector<2x8xf32>
    %699 = vector.multi_reduction <add>, %698, %cst_232 [2] : vector<2x8x8xf32> to vector<2x8xf32>
    %700 = vector.shape_cast %699 : vector<2x8xf32> to vector<2x8x1xf32>
    %701 = tpu.reciprocal %700 {approx = true} : vector<2x8x1xf32> -> vector<2x8x1xf32>
    %702 = vector.broadcast %701 : vector<2x8x1xf32> to vector<2x8x8xf32>
    %703 = arith.mulf %698, %702 : vector<2x8x8xf32>
    %704 = arith.truncf %703 : vector<2x8x8xf32> to vector<2x8x8xbf16>
    "tpu.trace_start"() <{level = 10 : i32, message = "bqk,bkd->bqd"}> : () -> ()
    %cst_233 = arith.constant dense<0.000000e+00> : vector<2x8x16xf32>
    %705 = tpu.matmul %704, %688, %cst_233 {dimension_numbers = #tpu.dot_dimension_numbers<[2], [1], [1], [2], [0, 0, 0, 1, 1, 2], [0], [0]>} : vector<2x8x8xbf16>, vector<2x8x16xbf16>, vector<2x8x16xf32> -> vector<2x8x16xf32>
    "tpu.trace_stop"() : () -> ()
    %706 = tpu.concatenate %565, %585, %605, %625, %645, %665, %685, %705 in 2 : vector<2x8x16xf32>, vector<2x8x16xf32>, vector<2x8x16xf32>, vector<2x8x16xf32>, vector<2x8x16xf32>, vector<2x8x16xf32>, vector<2x8x16xf32>, vector<2x8x16xf32> -> vector<2x8x128xf32>
    %707 = vector.shape_cast %706 : vector<2x8x128xf32> to vector<16x128xf32>
    %708 = arith.truncf %707 : vector<16x128xf32> to vector<16x128xbf16>
    %c2_234 = arith.constant 2 : index
    %c0_235 = arith.constant 0 : index
    %c0_236 = arith.constant 0 : index
    %709 = vector.load %arg4[%c2_234, %c0_235, %c0_236] : memref<4x128x64xbf16, #tpu.memory_space<vmem>>, vector<1x128x64xbf16>
    %710 = vector.shape_cast %709 : vector<1x128x64xbf16> to vector<128x64xbf16>
    %cst_237 = arith.constant dense<0.000000e+00> : vector<16x64xf32>
    %711 = tpu.matmul %708, %710, %cst_237 {dimension_numbers = #tpu.dot_dimension_numbers<[1], [0], [0], [1], [0, 0, 1, 1], [], []>} : vector<16x128xbf16>, vector<128x64xbf16>, vector<16x64xf32> -> vector<16x64xf32>
    %c2_238 = arith.constant 2 : index
    %c0_239 = arith.constant 0 : index
    %c0_240 = arith.constant 0 : index
    %712 = vector.load %arg5[%c2_238, %c0_239, %c0_240] : memref<4x1x64xf32, #tpu.memory_space<vmem>>, vector<1x1x64xf32>
    %713 = vector.shape_cast %712 : vector<1x1x64xf32> to vector<1x64xf32>
    %714 = vector.broadcast %713 : vector<1x64xf32> to vector<16x64xf32>
    %715 = arith.addf %711, %714 : vector<16x64xf32>
    %716 = arith.addf %513, %715 : vector<16x64xf32>
    %c2_241 = arith.constant 2 : index
    %c0_242 = arith.constant 0 : index
    %c0_243 = arith.constant 0 : index
    %717 = vector.load %arg8[%c2_241, %c0_242, %c0_243] : memref<4x1x64xf32, #tpu.memory_space<vmem>>, vector<1x1x64xf32>
    %718 = vector.shape_cast %717 : vector<1x1x64xf32> to vector<1x64xf32>
    %c2_244 = arith.constant 2 : index
    %c0_245 = arith.constant 0 : index
    %c0_246 = arith.constant 0 : index
    %719 = vector.load %arg9[%c2_244, %c0_245, %c0_246] : memref<4x1x64xf32, #tpu.memory_space<vmem>>, vector<1x1x64xf32>
    %720 = vector.shape_cast %719 : vector<1x1x64xf32> to vector<1x64xf32>
    %cst_247 = arith.constant dense<0.000000e+00> : vector<16xf32>
    %721 = vector.multi_reduction <add>, %716, %cst_247 [1] : vector<16x64xf32> to vector<16xf32>
    %722 = vector.shape_cast %721 : vector<16xf32> to vector<16x1xf32>
    %cst_248 = arith.constant 6.400000e+01 : f32
    %723 = vector.broadcast %cst_248 : f32 to vector<16x1xf32>
    %724 = arith.divf %722, %723 : vector<16x1xf32>
    %725 = vector.broadcast %724 : vector<16x1xf32> to vector<16x64xf32>
    %726 = arith.subf %716, %725 : vector<16x64xf32>
    %727 = arith.mulf %726, %726 : vector<16x64xf32>
    %cst_249 = arith.constant dense<0.000000e+00> : vector<16xf32>
    %728 = vector.multi_reduction <add>, %727, %cst_249 [1] : vector<16x64xf32> to vector<16xf32>
    %729 = vector.shape_cast %728 : vector<16xf32> to vector<16x1xf32>
    %cst_250 = arith.constant 6.400000e+01 : f32
    %730 = vector.broadcast %cst_250 : f32 to vector<16x1xf32>
    %731 = arith.divf %729, %730 : vector<16x1xf32>
    %732 = vector.broadcast %724 : vector<16x1xf32> to vector<16x64xf32>
    %733 = arith.subf %716, %732 : vector<16x64xf32>
    %cst_251 = arith.constant 9.99999974E-6 : f32
    %734 = vector.broadcast %cst_251 : f32 to vector<16x1xf32>
    %735 = arith.addf %731, %734 : vector<16x1xf32>
    %736 = math.rsqrt %735 : vector<16x1xf32>
    %737 = vector.broadcast %736 : vector<16x1xf32> to vector<16x64xf32>
    %738 = arith.mulf %733, %737 : vector<16x64xf32>
    %739 = vector.broadcast %718 : vector<1x64xf32> to vector<16x64xf32>
    %740 = arith.mulf %738, %739 : vector<16x64xf32>
    %741 = vector.broadcast %720 : vector<1x64xf32> to vector<16x64xf32>
    %742 = arith.addf %740, %741 : vector<16x64xf32>
    %743 = arith.truncf %742 : vector<16x64xf32> to vector<16x64xbf16>
    %c2_252 = arith.constant 2 : index
    %c0_253 = arith.constant 0 : index
    %c0_254 = arith.constant 0 : index
    %744 = vector.load %arg10[%c2_252, %c0_253, %c0_254] : memref<4x64x256xbf16, #tpu.memory_space<vmem>>, vector<1x64x256xbf16>
    %745 = vector.shape_cast %744 : vector<1x64x256xbf16> to vector<64x256xbf16>
    %cst_255 = arith.constant dense<0.000000e+00> : vector<16x256xf32>
    %746 = tpu.matmul %743, %745, %cst_255 {dimension_numbers = #tpu.dot_dimension_numbers<[1], [0], [0], [1], [0, 0, 1, 1], [], []>} : vector<16x64xbf16>, vector<64x256xbf16>, vector<16x256xf32> -> vector<16x256xf32>
    %c2_256 = arith.constant 2 : index
    %c0_257 = arith.constant 0 : index
    %c0_258 = arith.constant 0 : index
    %747 = vector.load %arg11[%c2_256, %c0_257, %c0_258] : memref<4x1x256xf32, #tpu.memory_space<vmem>>, vector<1x1x256xf32>
    %748 = vector.shape_cast %747 : vector<1x1x256xf32> to vector<1x256xf32>
    %749 = vector.broadcast %748 : vector<1x256xf32> to vector<16x256xf32>
    %750 = arith.addf %746, %749 : vector<16x256xf32>
    %cst_259 = arith.constant 0.000000e+00 : f32
    %751 = vector.broadcast %cst_259 : f32 to vector<16x256xf32>
    %752 = arith.maximumf %750, %751 : vector<16x256xf32>
    %753 = arith.truncf %752 : vector<16x256xf32> to vector<16x256xbf16>
    %c2_260 = arith.constant 2 : index
    %c0_261 = arith.constant 0 : index
    %c0_262 = arith.constant 0 : index
    %754 = vector.load %arg12[%c2_260, %c0_261, %c0_262] : memref<4x256x64xbf16, #tpu.memory_space<vmem>>, vector<1x256x64xbf16>
    %755 = vector.shape_cast %754 : vector<1x256x64xbf16> to vector<256x64xbf16>
    %cst_263 = arith.constant dense<0.000000e+00> : vector<16x64xf32>
    %756 = tpu.matmul %753, %755, %cst_263 {dimension_numbers = #tpu.dot_dimension_numbers<[1], [0], [0], [1], [0, 0, 1, 1], [], []>} : vector<16x256xbf16>, vector<256x64xbf16>, vector<16x64xf32> -> vector<16x64xf32>
    %c2_264 = arith.constant 2 : index
    %c0_265 = arith.constant 0 : index
    %c0_266 = arith.constant 0 : index
    %757 = vector.load %arg13[%c2_264, %c0_265, %c0_266] : memref<4x1x64xf32, #tpu.memory_space<vmem>>, vector<1x1x64xf32>
    %758 = vector.shape_cast %757 : vector<1x1x64xf32> to vector<1x64xf32>
    %759 = vector.broadcast %758 : vector<1x64xf32> to vector<16x64xf32>
    %760 = arith.addf %756, %759 : vector<16x64xf32>
    %761 = arith.addf %716, %760 : vector<16x64xf32>
    %c3 = arith.constant 3 : index
    %c0_267 = arith.constant 0 : index
    %c0_268 = arith.constant 0 : index
    %762 = vector.load %arg6[%c3, %c0_267, %c0_268] : memref<4x1x64xf32, #tpu.memory_space<vmem>>, vector<1x1x64xf32>
    %763 = vector.shape_cast %762 : vector<1x1x64xf32> to vector<1x64xf32>
    %c3_269 = arith.constant 3 : index
    %c0_270 = arith.constant 0 : index
    %c0_271 = arith.constant 0 : index
    %764 = vector.load %arg7[%c3_269, %c0_270, %c0_271] : memref<4x1x64xf32, #tpu.memory_space<vmem>>, vector<1x1x64xf32>
    %765 = vector.shape_cast %764 : vector<1x1x64xf32> to vector<1x64xf32>
    %cst_272 = arith.constant dense<0.000000e+00> : vector<16xf32>
    %766 = vector.multi_reduction <add>, %761, %cst_272 [1] : vector<16x64xf32> to vector<16xf32>
    %767 = vector.shape_cast %766 : vector<16xf32> to vector<16x1xf32>
    %cst_273 = arith.constant 6.400000e+01 : f32
    %768 = vector.broadcast %cst_273 : f32 to vector<16x1xf32>
    %769 = arith.divf %767, %768 : vector<16x1xf32>
    %770 = vector.broadcast %769 : vector<16x1xf32> to vector<16x64xf32>
    %771 = arith.subf %761, %770 : vector<16x64xf32>
    %772 = arith.mulf %771, %771 : vector<16x64xf32>
    %cst_274 = arith.constant dense<0.000000e+00> : vector<16xf32>
    %773 = vector.multi_reduction <add>, %772, %cst_274 [1] : vector<16x64xf32> to vector<16xf32>
    %774 = vector.shape_cast %773 : vector<16xf32> to vector<16x1xf32>
    %cst_275 = arith.constant 6.400000e+01 : f32
    %775 = vector.broadcast %cst_275 : f32 to vector<16x1xf32>
    %776 = arith.divf %774, %775 : vector<16x1xf32>
    %777 = vector.broadcast %769 : vector<16x1xf32> to vector<16x64xf32>
    %778 = arith.subf %761, %777 : vector<16x64xf32>
    %cst_276 = arith.constant 9.99999974E-6 : f32
    %779 = vector.broadcast %cst_276 : f32 to vector<16x1xf32>
    %780 = arith.addf %776, %779 : vector<16x1xf32>
    %781 = math.rsqrt %780 : vector<16x1xf32>
    %782 = vector.broadcast %781 : vector<16x1xf32> to vector<16x64xf32>
    %783 = arith.mulf %778, %782 : vector<16x64xf32>
    %784 = vector.broadcast %763 : vector<1x64xf32> to vector<16x64xf32>
    %785 = arith.mulf %783, %784 : vector<16x64xf32>
    %786 = vector.broadcast %765 : vector<1x64xf32> to vector<16x64xf32>
    %787 = arith.addf %785, %786 : vector<16x64xf32>
    %788 = arith.truncf %787 : vector<16x64xf32> to vector<16x64xbf16>
    %c3_277 = arith.constant 3 : index
    %c0_278 = arith.constant 0 : index
    %c0_279 = arith.constant 0 : index
    %789 = vector.load %arg3[%c3_277, %c0_278, %c0_279] : memref<4x64x384xbf16, #tpu.memory_space<vmem>>, vector<1x64x384xbf16>
    %790 = vector.shape_cast %789 : vector<1x64x384xbf16> to vector<64x384xbf16>
    %cst_280 = arith.constant dense<0.000000e+00> : vector<16x384xf32>
    %791 = tpu.matmul %788, %790, %cst_280 {dimension_numbers = #tpu.dot_dimension_numbers<[1], [0], [0], [1], [0, 0, 1, 1], [], []>} : vector<16x64xbf16>, vector<64x384xbf16>, vector<16x384xf32> -> vector<16x384xf32>
    %792 = arith.truncf %791 : vector<16x384xf32> to vector<16x384xbf16>
    %793 = vector.shape_cast %792 : vector<16x384xbf16> to vector<2x8x384xbf16>
    %794 = vector.extract_strided_slice %793 {offsets = [0, 0, 0], sizes = [2, 8, 16], strides = [1, 1, 1]} : vector<2x8x384xbf16> to vector<2x8x16xbf16>
    %795 = vector.extract_strided_slice %793 {offsets = [0, 0, 128], sizes = [2, 8, 16], strides = [1, 1, 1]} : vector<2x8x384xbf16> to vector<2x8x16xbf16>
    %796 = vector.extract_strided_slice %793 {offsets = [0, 0, 256], sizes = [2, 8, 16], strides = [1, 1, 1]} : vector<2x8x384xbf16> to vector<2x8x16xbf16>
    "tpu.trace_start"() <{level = 10 : i32, message = "bqd,bkd->bqk"}> : () -> ()
    %cst_281 = arith.constant dense<0.000000e+00> : vector<2x8x8xf32>
    %797 = tpu.matmul %794, %795, %cst_281 {dimension_numbers = #tpu.dot_dimension_numbers<[2], [2], [1], [1], [0, 0, 0, 1, 1, 1], [0], [0]>} : vector<2x8x16xbf16>, vector<2x8x16xbf16>, vector<2x8x8xf32> -> vector<2x8x8xf32>
    %cst_282 = arith.constant -1.000000e+30 : f32
    "tpu.trace_stop"() : () -> ()
    %798 = vector.shape_cast %17 : vector<1x8x8xi1> to vector<1x8x8xi1>
    %799 = vector.broadcast %798 : vector<1x8x8xi1> to vector<2x8x8xi1>
    %800 = vector.broadcast %cst_282 : f32 to vector<2x8x8xf32>
    %801 = arith.select %799, %797, %800 : vector<2x8x8xi1>, vector<2x8x8xf32>
    %cst_283 = arith.constant dense<0xFF800000> : vector<2x8xf32>
    %802 = vector.multi_reduction <maximumf>, %801, %cst_283 [2] : vector<2x8x8xf32> to vector<2x8xf32>
    %803 = vector.shape_cast %802 : vector<2x8xf32> to vector<2x8x1xf32>
    %804 = vector.broadcast %803 : vector<2x8x1xf32> to vector<2x8x8xf32>
    %805 = arith.subf %801, %804 : vector<2x8x8xf32>
    %806 = math.exp %805 : vector<2x8x8xf32>
    %cst_284 = arith.constant dense<0.000000e+00> : vector<2x8xf32>
    %807 = vector.multi_reduction <add>, %806, %cst_284 [2] : vector<2x8x8xf32> to vector<2x8xf32>
    %808 = vector.shape_cast %807 : vector<2x8xf32> to vector<2x8x1xf32>
    %809 = tpu.reciprocal %808 {approx = true} : vector<2x8x1xf32> -> vector<2x8x1xf32>
    %810 = vector.broadcast %809 : vector<2x8x1xf32> to vector<2x8x8xf32>
    %811 = arith.mulf %806, %810 : vector<2x8x8xf32>
    %812 = arith.truncf %811 : vector<2x8x8xf32> to vector<2x8x8xbf16>
    "tpu.trace_start"() <{level = 10 : i32, message = "bqk,bkd->bqd"}> : () -> ()
    %cst_285 = arith.constant dense<0.000000e+00> : vector<2x8x16xf32>
    %813 = tpu.matmul %812, %796, %cst_285 {dimension_numbers = #tpu.dot_dimension_numbers<[2], [1], [1], [2], [0, 0, 0, 1, 1, 2], [0], [0]>} : vector<2x8x8xbf16>, vector<2x8x16xbf16>, vector<2x8x16xf32> -> vector<2x8x16xf32>
    "tpu.trace_stop"() : () -> ()
    %814 = vector.extract_strided_slice %793 {offsets = [0, 0, 16], sizes = [2, 8, 16], strides = [1, 1, 1]} : vector<2x8x384xbf16> to vector<2x8x16xbf16>
    %815 = vector.extract_strided_slice %793 {offsets = [0, 0, 144], sizes = [2, 8, 16], strides = [1, 1, 1]} : vector<2x8x384xbf16> to vector<2x8x16xbf16>
    %816 = vector.extract_strided_slice %793 {offsets = [0, 0, 272], sizes = [2, 8, 16], strides = [1, 1, 1]} : vector<2x8x384xbf16> to vector<2x8x16xbf16>
    "tpu.trace_start"() <{level = 10 : i32, message = "bqd,bkd->bqk"}> : () -> ()
    %cst_286 = arith.constant dense<0.000000e+00> : vector<2x8x8xf32>
    %817 = tpu.matmul %814, %815, %cst_286 {dimension_numbers = #tpu.dot_dimension_numbers<[2], [2], [1], [1], [0, 0, 0, 1, 1, 1], [0], [0]>} : vector<2x8x16xbf16>, vector<2x8x16xbf16>, vector<2x8x8xf32> -> vector<2x8x8xf32>
    %cst_287 = arith.constant -1.000000e+30 : f32
    "tpu.trace_stop"() : () -> ()
    %818 = vector.shape_cast %17 : vector<1x8x8xi1> to vector<1x8x8xi1>
    %819 = vector.broadcast %818 : vector<1x8x8xi1> to vector<2x8x8xi1>
    %820 = vector.broadcast %cst_287 : f32 to vector<2x8x8xf32>
    %821 = arith.select %819, %817, %820 : vector<2x8x8xi1>, vector<2x8x8xf32>
    %cst_288 = arith.constant dense<0xFF800000> : vector<2x8xf32>
    %822 = vector.multi_reduction <maximumf>, %821, %cst_288 [2] : vector<2x8x8xf32> to vector<2x8xf32>
    %823 = vector.shape_cast %822 : vector<2x8xf32> to vector<2x8x1xf32>
    %824 = vector.broadcast %823 : vector<2x8x1xf32> to vector<2x8x8xf32>
    %825 = arith.subf %821, %824 : vector<2x8x8xf32>
    %826 = math.exp %825 : vector<2x8x8xf32>
    %cst_289 = arith.constant dense<0.000000e+00> : vector<2x8xf32>
    %827 = vector.multi_reduction <add>, %826, %cst_289 [2] : vector<2x8x8xf32> to vector<2x8xf32>
    %828 = vector.shape_cast %827 : vector<2x8xf32> to vector<2x8x1xf32>
    %829 = tpu.reciprocal %828 {approx = true} : vector<2x8x1xf32> -> vector<2x8x1xf32>
    %830 = vector.broadcast %829 : vector<2x8x1xf32> to vector<2x8x8xf32>
    %831 = arith.mulf %826, %830 : vector<2x8x8xf32>
    %832 = arith.truncf %831 : vector<2x8x8xf32> to vector<2x8x8xbf16>
    "tpu.trace_start"() <{level = 10 : i32, message = "bqk,bkd->bqd"}> : () -> ()
    %cst_290 = arith.constant dense<0.000000e+00> : vector<2x8x16xf32>
    %833 = tpu.matmul %832, %816, %cst_290 {dimension_numbers = #tpu.dot_dimension_numbers<[2], [1], [1], [2], [0, 0, 0, 1, 1, 2], [0], [0]>} : vector<2x8x8xbf16>, vector<2x8x16xbf16>, vector<2x8x16xf32> -> vector<2x8x16xf32>
    "tpu.trace_stop"() : () -> ()
    %834 = vector.extract_strided_slice %793 {offsets = [0, 0, 32], sizes = [2, 8, 16], strides = [1, 1, 1]} : vector<2x8x384xbf16> to vector<2x8x16xbf16>
    %835 = vector.extract_strided_slice %793 {offsets = [0, 0, 160], sizes = [2, 8, 16], strides = [1, 1, 1]} : vector<2x8x384xbf16> to vector<2x8x16xbf16>
    %836 = vector.extract_strided_slice %793 {offsets = [0, 0, 288], sizes = [2, 8, 16], strides = [1, 1, 1]} : vector<2x8x384xbf16> to vector<2x8x16xbf16>
    "tpu.trace_start"() <{level = 10 : i32, message = "bqd,bkd->bqk"}> : () -> ()
    %cst_291 = arith.constant dense<0.000000e+00> : vector<2x8x8xf32>
    %837 = tpu.matmul %834, %835, %cst_291 {dimension_numbers = #tpu.dot_dimension_numbers<[2], [2], [1], [1], [0, 0, 0, 1, 1, 1], [0], [0]>} : vector<2x8x16xbf16>, vector<2x8x16xbf16>, vector<2x8x8xf32> -> vector<2x8x8xf32>
    %cst_292 = arith.constant -1.000000e+30 : f32
    "tpu.trace_stop"() : () -> ()
    %838 = vector.shape_cast %17 : vector<1x8x8xi1> to vector<1x8x8xi1>
    %839 = vector.broadcast %838 : vector<1x8x8xi1> to vector<2x8x8xi1>
    %840 = vector.broadcast %cst_292 : f32 to vector<2x8x8xf32>
    %841 = arith.select %839, %837, %840 : vector<2x8x8xi1>, vector<2x8x8xf32>
    %cst_293 = arith.constant dense<0xFF800000> : vector<2x8xf32>
    %842 = vector.multi_reduction <maximumf>, %841, %cst_293 [2] : vector<2x8x8xf32> to vector<2x8xf32>
    %843 = vector.shape_cast %842 : vector<2x8xf32> to vector<2x8x1xf32>
    %844 = vector.broadcast %843 : vector<2x8x1xf32> to vector<2x8x8xf32>
    %845 = arith.subf %841, %844 : vector<2x8x8xf32>
    %846 = math.exp %845 : vector<2x8x8xf32>
    %cst_294 = arith.constant dense<0.000000e+00> : vector<2x8xf32>
    %847 = vector.multi_reduction <add>, %846, %cst_294 [2] : vector<2x8x8xf32> to vector<2x8xf32>
    %848 = vector.shape_cast %847 : vector<2x8xf32> to vector<2x8x1xf32>
    %849 = tpu.reciprocal %848 {approx = true} : vector<2x8x1xf32> -> vector<2x8x1xf32>
    %850 = vector.broadcast %849 : vector<2x8x1xf32> to vector<2x8x8xf32>
    %851 = arith.mulf %846, %850 : vector<2x8x8xf32>
    %852 = arith.truncf %851 : vector<2x8x8xf32> to vector<2x8x8xbf16>
    "tpu.trace_start"() <{level = 10 : i32, message = "bqk,bkd->bqd"}> : () -> ()
    %cst_295 = arith.constant dense<0.000000e+00> : vector<2x8x16xf32>
    %853 = tpu.matmul %852, %836, %cst_295 {dimension_numbers = #tpu.dot_dimension_numbers<[2], [1], [1], [2], [0, 0, 0, 1, 1, 2], [0], [0]>} : vector<2x8x8xbf16>, vector<2x8x16xbf16>, vector<2x8x16xf32> -> vector<2x8x16xf32>
    "tpu.trace_stop"() : () -> ()
    %854 = vector.extract_strided_slice %793 {offsets = [0, 0, 48], sizes = [2, 8, 16], strides = [1, 1, 1]} : vector<2x8x384xbf16> to vector<2x8x16xbf16>
    %855 = vector.extract_strided_slice %793 {offsets = [0, 0, 176], sizes = [2, 8, 16], strides = [1, 1, 1]} : vector<2x8x384xbf16> to vector<2x8x16xbf16>
    %856 = vector.extract_strided_slice %793 {offsets = [0, 0, 304], sizes = [2, 8, 16], strides = [1, 1, 1]} : vector<2x8x384xbf16> to vector<2x8x16xbf16>
    "tpu.trace_start"() <{level = 10 : i32, message = "bqd,bkd->bqk"}> : () -> ()
    %cst_296 = arith.constant dense<0.000000e+00> : vector<2x8x8xf32>
    %857 = tpu.matmul %854, %855, %cst_296 {dimension_numbers = #tpu.dot_dimension_numbers<[2], [2], [1], [1], [0, 0, 0, 1, 1, 1], [0], [0]>} : vector<2x8x16xbf16>, vector<2x8x16xbf16>, vector<2x8x8xf32> -> vector<2x8x8xf32>
    %cst_297 = arith.constant -1.000000e+30 : f32
    "tpu.trace_stop"() : () -> ()
    %858 = vector.shape_cast %17 : vector<1x8x8xi1> to vector<1x8x8xi1>
    %859 = vector.broadcast %858 : vector<1x8x8xi1> to vector<2x8x8xi1>
    %860 = vector.broadcast %cst_297 : f32 to vector<2x8x8xf32>
    %861 = arith.select %859, %857, %860 : vector<2x8x8xi1>, vector<2x8x8xf32>
    %cst_298 = arith.constant dense<0xFF800000> : vector<2x8xf32>
    %862 = vector.multi_reduction <maximumf>, %861, %cst_298 [2] : vector<2x8x8xf32> to vector<2x8xf32>
    %863 = vector.shape_cast %862 : vector<2x8xf32> to vector<2x8x1xf32>
    %864 = vector.broadcast %863 : vector<2x8x1xf32> to vector<2x8x8xf32>
    %865 = arith.subf %861, %864 : vector<2x8x8xf32>
    %866 = math.exp %865 : vector<2x8x8xf32>
    %cst_299 = arith.constant dense<0.000000e+00> : vector<2x8xf32>
    %867 = vector.multi_reduction <add>, %866, %cst_299 [2] : vector<2x8x8xf32> to vector<2x8xf32>
    %868 = vector.shape_cast %867 : vector<2x8xf32> to vector<2x8x1xf32>
    %869 = tpu.reciprocal %868 {approx = true} : vector<2x8x1xf32> -> vector<2x8x1xf32>
    %870 = vector.broadcast %869 : vector<2x8x1xf32> to vector<2x8x8xf32>
    %871 = arith.mulf %866, %870 : vector<2x8x8xf32>
    %872 = arith.truncf %871 : vector<2x8x8xf32> to vector<2x8x8xbf16>
    "tpu.trace_start"() <{level = 10 : i32, message = "bqk,bkd->bqd"}> : () -> ()
    %cst_300 = arith.constant dense<0.000000e+00> : vector<2x8x16xf32>
    %873 = tpu.matmul %872, %856, %cst_300 {dimension_numbers = #tpu.dot_dimension_numbers<[2], [1], [1], [2], [0, 0, 0, 1, 1, 2], [0], [0]>} : vector<2x8x8xbf16>, vector<2x8x16xbf16>, vector<2x8x16xf32> -> vector<2x8x16xf32>
    "tpu.trace_stop"() : () -> ()
    %874 = vector.extract_strided_slice %793 {offsets = [0, 0, 64], sizes = [2, 8, 16], strides = [1, 1, 1]} : vector<2x8x384xbf16> to vector<2x8x16xbf16>
    %875 = vector.extract_strided_slice %793 {offsets = [0, 0, 192], sizes = [2, 8, 16], strides = [1, 1, 1]} : vector<2x8x384xbf16> to vector<2x8x16xbf16>
    %876 = vector.extract_strided_slice %793 {offsets = [0, 0, 320], sizes = [2, 8, 16], strides = [1, 1, 1]} : vector<2x8x384xbf16> to vector<2x8x16xbf16>
    "tpu.trace_start"() <{level = 10 : i32, message = "bqd,bkd->bqk"}> : () -> ()
    %cst_301 = arith.constant dense<0.000000e+00> : vector<2x8x8xf32>
    %877 = tpu.matmul %874, %875, %cst_301 {dimension_numbers = #tpu.dot_dimension_numbers<[2], [2], [1], [1], [0, 0, 0, 1, 1, 1], [0], [0]>} : vector<2x8x16xbf16>, vector<2x8x16xbf16>, vector<2x8x8xf32> -> vector<2x8x8xf32>
    %cst_302 = arith.constant -1.000000e+30 : f32
    "tpu.trace_stop"() : () -> ()
    %878 = vector.shape_cast %17 : vector<1x8x8xi1> to vector<1x8x8xi1>
    %879 = vector.broadcast %878 : vector<1x8x8xi1> to vector<2x8x8xi1>
    %880 = vector.broadcast %cst_302 : f32 to vector<2x8x8xf32>
    %881 = arith.select %879, %877, %880 : vector<2x8x8xi1>, vector<2x8x8xf32>
    %cst_303 = arith.constant dense<0xFF800000> : vector<2x8xf32>
    %882 = vector.multi_reduction <maximumf>, %881, %cst_303 [2] : vector<2x8x8xf32> to vector<2x8xf32>
    %883 = vector.shape_cast %882 : vector<2x8xf32> to vector<2x8x1xf32>
    %884 = vector.broadcast %883 : vector<2x8x1xf32> to vector<2x8x8xf32>
    %885 = arith.subf %881, %884 : vector<2x8x8xf32>
    %886 = math.exp %885 : vector<2x8x8xf32>
    %cst_304 = arith.constant dense<0.000000e+00> : vector<2x8xf32>
    %887 = vector.multi_reduction <add>, %886, %cst_304 [2] : vector<2x8x8xf32> to vector<2x8xf32>
    %888 = vector.shape_cast %887 : vector<2x8xf32> to vector<2x8x1xf32>
    %889 = tpu.reciprocal %888 {approx = true} : vector<2x8x1xf32> -> vector<2x8x1xf32>
    %890 = vector.broadcast %889 : vector<2x8x1xf32> to vector<2x8x8xf32>
    %891 = arith.mulf %886, %890 : vector<2x8x8xf32>
    %892 = arith.truncf %891 : vector<2x8x8xf32> to vector<2x8x8xbf16>
    "tpu.trace_start"() <{level = 10 : i32, message = "bqk,bkd->bqd"}> : () -> ()
    %cst_305 = arith.constant dense<0.000000e+00> : vector<2x8x16xf32>
    %893 = tpu.matmul %892, %876, %cst_305 {dimension_numbers = #tpu.dot_dimension_numbers<[2], [1], [1], [2], [0, 0, 0, 1, 1, 2], [0], [0]>} : vector<2x8x8xbf16>, vector<2x8x16xbf16>, vector<2x8x16xf32> -> vector<2x8x16xf32>
    "tpu.trace_stop"() : () -> ()
    %894 = vector.extract_strided_slice %793 {offsets = [0, 0, 80], sizes = [2, 8, 16], strides = [1, 1, 1]} : vector<2x8x384xbf16> to vector<2x8x16xbf16>
    %895 = vector.extract_strided_slice %793 {offsets = [0, 0, 208], sizes = [2, 8, 16], strides = [1, 1, 1]} : vector<2x8x384xbf16> to vector<2x8x16xbf16>
    %896 = vector.extract_strided_slice %793 {offsets = [0, 0, 336], sizes = [2, 8, 16], strides = [1, 1, 1]} : vector<2x8x384xbf16> to vector<2x8x16xbf16>
    "tpu.trace_start"() <{level = 10 : i32, message = "bqd,bkd->bqk"}> : () -> ()
    %cst_306 = arith.constant dense<0.000000e+00> : vector<2x8x8xf32>
    %897 = tpu.matmul %894, %895, %cst_306 {dimension_numbers = #tpu.dot_dimension_numbers<[2], [2], [1], [1], [0, 0, 0, 1, 1, 1], [0], [0]>} : vector<2x8x16xbf16>, vector<2x8x16xbf16>, vector<2x8x8xf32> -> vector<2x8x8xf32>
    %cst_307 = arith.constant -1.000000e+30 : f32
    "tpu.trace_stop"() : () -> ()
    %898 = vector.shape_cast %17 : vector<1x8x8xi1> to vector<1x8x8xi1>
    %899 = vector.broadcast %898 : vector<1x8x8xi1> to vector<2x8x8xi1>
    %900 = vector.broadcast %cst_307 : f32 to vector<2x8x8xf32>
    %901 = arith.select %899, %897, %900 : vector<2x8x8xi1>, vector<2x8x8xf32>
    %cst_308 = arith.constant dense<0xFF800000> : vector<2x8xf32>
    %902 = vector.multi_reduction <maximumf>, %901, %cst_308 [2] : vector<2x8x8xf32> to vector<2x8xf32>
    %903 = vector.shape_cast %902 : vector<2x8xf32> to vector<2x8x1xf32>
    %904 = vector.broadcast %903 : vector<2x8x1xf32> to vector<2x8x8xf32>
    %905 = arith.subf %901, %904 : vector<2x8x8xf32>
    %906 = math.exp %905 : vector<2x8x8xf32>
    %cst_309 = arith.constant dense<0.000000e+00> : vector<2x8xf32>
    %907 = vector.multi_reduction <add>, %906, %cst_309 [2] : vector<2x8x8xf32> to vector<2x8xf32>
    %908 = vector.shape_cast %907 : vector<2x8xf32> to vector<2x8x1xf32>
    %909 = tpu.reciprocal %908 {approx = true} : vector<2x8x1xf32> -> vector<2x8x1xf32>
    %910 = vector.broadcast %909 : vector<2x8x1xf32> to vector<2x8x8xf32>
    %911 = arith.mulf %906, %910 : vector<2x8x8xf32>
    %912 = arith.truncf %911 : vector<2x8x8xf32> to vector<2x8x8xbf16>
    "tpu.trace_start"() <{level = 10 : i32, message = "bqk,bkd->bqd"}> : () -> ()
    %cst_310 = arith.constant dense<0.000000e+00> : vector<2x8x16xf32>
    %913 = tpu.matmul %912, %896, %cst_310 {dimension_numbers = #tpu.dot_dimension_numbers<[2], [1], [1], [2], [0, 0, 0, 1, 1, 2], [0], [0]>} : vector<2x8x8xbf16>, vector<2x8x16xbf16>, vector<2x8x16xf32> -> vector<2x8x16xf32>
    "tpu.trace_stop"() : () -> ()
    %914 = vector.extract_strided_slice %793 {offsets = [0, 0, 96], sizes = [2, 8, 16], strides = [1, 1, 1]} : vector<2x8x384xbf16> to vector<2x8x16xbf16>
    %915 = vector.extract_strided_slice %793 {offsets = [0, 0, 224], sizes = [2, 8, 16], strides = [1, 1, 1]} : vector<2x8x384xbf16> to vector<2x8x16xbf16>
    %916 = vector.extract_strided_slice %793 {offsets = [0, 0, 352], sizes = [2, 8, 16], strides = [1, 1, 1]} : vector<2x8x384xbf16> to vector<2x8x16xbf16>
    "tpu.trace_start"() <{level = 10 : i32, message = "bqd,bkd->bqk"}> : () -> ()
    %cst_311 = arith.constant dense<0.000000e+00> : vector<2x8x8xf32>
    %917 = tpu.matmul %914, %915, %cst_311 {dimension_numbers = #tpu.dot_dimension_numbers<[2], [2], [1], [1], [0, 0, 0, 1, 1, 1], [0], [0]>} : vector<2x8x16xbf16>, vector<2x8x16xbf16>, vector<2x8x8xf32> -> vector<2x8x8xf32>
    %cst_312 = arith.constant -1.000000e+30 : f32
    "tpu.trace_stop"() : () -> ()
    %918 = vector.shape_cast %17 : vector<1x8x8xi1> to vector<1x8x8xi1>
    %919 = vector.broadcast %918 : vector<1x8x8xi1> to vector<2x8x8xi1>
    %920 = vector.broadcast %cst_312 : f32 to vector<2x8x8xf32>
    %921 = arith.select %919, %917, %920 : vector<2x8x8xi1>, vector<2x8x8xf32>
    %cst_313 = arith.constant dense<0xFF800000> : vector<2x8xf32>
    %922 = vector.multi_reduction <maximumf>, %921, %cst_313 [2] : vector<2x8x8xf32> to vector<2x8xf32>
    %923 = vector.shape_cast %922 : vector<2x8xf32> to vector<2x8x1xf32>
    %924 = vector.broadcast %923 : vector<2x8x1xf32> to vector<2x8x8xf32>
    %925 = arith.subf %921, %924 : vector<2x8x8xf32>
    %926 = math.exp %925 : vector<2x8x8xf32>
    %cst_314 = arith.constant dense<0.000000e+00> : vector<2x8xf32>
    %927 = vector.multi_reduction <add>, %926, %cst_314 [2] : vector<2x8x8xf32> to vector<2x8xf32>
    %928 = vector.shape_cast %927 : vector<2x8xf32> to vector<2x8x1xf32>
    %929 = tpu.reciprocal %928 {approx = true} : vector<2x8x1xf32> -> vector<2x8x1xf32>
    %930 = vector.broadcast %929 : vector<2x8x1xf32> to vector<2x8x8xf32>
    %931 = arith.mulf %926, %930 : vector<2x8x8xf32>
    %932 = arith.truncf %931 : vector<2x8x8xf32> to vector<2x8x8xbf16>
    "tpu.trace_start"() <{level = 10 : i32, message = "bqk,bkd->bqd"}> : () -> ()
    %cst_315 = arith.constant dense<0.000000e+00> : vector<2x8x16xf32>
    %933 = tpu.matmul %932, %916, %cst_315 {dimension_numbers = #tpu.dot_dimension_numbers<[2], [1], [1], [2], [0, 0, 0, 1, 1, 2], [0], [0]>} : vector<2x8x8xbf16>, vector<2x8x16xbf16>, vector<2x8x16xf32> -> vector<2x8x16xf32>
    "tpu.trace_stop"() : () -> ()
    %934 = vector.extract_strided_slice %793 {offsets = [0, 0, 112], sizes = [2, 8, 16], strides = [1, 1, 1]} : vector<2x8x384xbf16> to vector<2x8x16xbf16>
    %935 = vector.extract_strided_slice %793 {offsets = [0, 0, 240], sizes = [2, 8, 16], strides = [1, 1, 1]} : vector<2x8x384xbf16> to vector<2x8x16xbf16>
    %936 = vector.extract_strided_slice %793 {offsets = [0, 0, 368], sizes = [2, 8, 16], strides = [1, 1, 1]} : vector<2x8x384xbf16> to vector<2x8x16xbf16>
    "tpu.trace_start"() <{level = 10 : i32, message = "bqd,bkd->bqk"}> : () -> ()
    %cst_316 = arith.constant dense<0.000000e+00> : vector<2x8x8xf32>
    %937 = tpu.matmul %934, %935, %cst_316 {dimension_numbers = #tpu.dot_dimension_numbers<[2], [2], [1], [1], [0, 0, 0, 1, 1, 1], [0], [0]>} : vector<2x8x16xbf16>, vector<2x8x16xbf16>, vector<2x8x8xf32> -> vector<2x8x8xf32>
    %cst_317 = arith.constant -1.000000e+30 : f32
    "tpu.trace_stop"() : () -> ()
    %938 = vector.shape_cast %17 : vector<1x8x8xi1> to vector<1x8x8xi1>
    %939 = vector.broadcast %938 : vector<1x8x8xi1> to vector<2x8x8xi1>
    %940 = vector.broadcast %cst_317 : f32 to vector<2x8x8xf32>
    %941 = arith.select %939, %937, %940 : vector<2x8x8xi1>, vector<2x8x8xf32>
    %cst_318 = arith.constant dense<0xFF800000> : vector<2x8xf32>
    %942 = vector.multi_reduction <maximumf>, %941, %cst_318 [2] : vector<2x8x8xf32> to vector<2x8xf32>
    %943 = vector.shape_cast %942 : vector<2x8xf32> to vector<2x8x1xf32>
    %944 = vector.broadcast %943 : vector<2x8x1xf32> to vector<2x8x8xf32>
    %945 = arith.subf %941, %944 : vector<2x8x8xf32>
    %946 = math.exp %945 : vector<2x8x8xf32>
    %cst_319 = arith.constant dense<0.000000e+00> : vector<2x8xf32>
    %947 = vector.multi_reduction <add>, %946, %cst_319 [2] : vector<2x8x8xf32> to vector<2x8xf32>
    %948 = vector.shape_cast %947 : vector<2x8xf32> to vector<2x8x1xf32>
    %949 = tpu.reciprocal %948 {approx = true} : vector<2x8x1xf32> -> vector<2x8x1xf32>
    %950 = vector.broadcast %949 : vector<2x8x1xf32> to vector<2x8x8xf32>
    %951 = arith.mulf %946, %950 : vector<2x8x8xf32>
    %952 = arith.truncf %951 : vector<2x8x8xf32> to vector<2x8x8xbf16>
    "tpu.trace_start"() <{level = 10 : i32, message = "bqk,bkd->bqd"}> : () -> ()
    %cst_320 = arith.constant dense<0.000000e+00> : vector<2x8x16xf32>
    %953 = tpu.matmul %952, %936, %cst_320 {dimension_numbers = #tpu.dot_dimension_numbers<[2], [1], [1], [2], [0, 0, 0, 1, 1, 2], [0], [0]>} : vector<2x8x8xbf16>, vector<2x8x16xbf16>, vector<2x8x16xf32> -> vector<2x8x16xf32>
    "tpu.trace_stop"() : () -> ()
    %954 = tpu.concatenate %813, %833, %853, %873, %893, %913, %933, %953 in 2 : vector<2x8x16xf32>, vector<2x8x16xf32>, vector<2x8x16xf32>, vector<2x8x16xf32>, vector<2x8x16xf32>, vector<2x8x16xf32>, vector<2x8x16xf32>, vector<2x8x16xf32> -> vector<2x8x128xf32>
    %955 = vector.shape_cast %954 : vector<2x8x128xf32> to vector<16x128xf32>
    %956 = arith.truncf %955 : vector<16x128xf32> to vector<16x128xbf16>
    %c3_321 = arith.constant 3 : index
    %c0_322 = arith.constant 0 : index
    %c0_323 = arith.constant 0 : index
    %957 = vector.load %arg4[%c3_321, %c0_322, %c0_323] : memref<4x128x64xbf16, #tpu.memory_space<vmem>>, vector<1x128x64xbf16>
    %958 = vector.shape_cast %957 : vector<1x128x64xbf16> to vector<128x64xbf16>
    %cst_324 = arith.constant dense<0.000000e+00> : vector<16x64xf32>
    %959 = tpu.matmul %956, %958, %cst_324 {dimension_numbers = #tpu.dot_dimension_numbers<[1], [0], [0], [1], [0, 0, 1, 1], [], []>} : vector<16x128xbf16>, vector<128x64xbf16>, vector<16x64xf32> -> vector<16x64xf32>
    %c3_325 = arith.constant 3 : index
    %c0_326 = arith.constant 0 : index
    %c0_327 = arith.constant 0 : index
    %960 = vector.load %arg5[%c3_325, %c0_326, %c0_327] : memref<4x1x64xf32, #tpu.memory_space<vmem>>, vector<1x1x64xf32>
    %961 = vector.shape_cast %960 : vector<1x1x64xf32> to vector<1x64xf32>
    %962 = vector.broadcast %961 : vector<1x64xf32> to vector<16x64xf32>
    %963 = arith.addf %959, %962 : vector<16x64xf32>
    %964 = arith.addf %761, %963 : vector<16x64xf32>
    %c3_328 = arith.constant 3 : index
    %c0_329 = arith.constant 0 : index
    %c0_330 = arith.constant 0 : index
    %965 = vector.load %arg8[%c3_328, %c0_329, %c0_330] : memref<4x1x64xf32, #tpu.memory_space<vmem>>, vector<1x1x64xf32>
    %966 = vector.shape_cast %965 : vector<1x1x64xf32> to vector<1x64xf32>
    %c3_331 = arith.constant 3 : index
    %c0_332 = arith.constant 0 : index
    %c0_333 = arith.constant 0 : index
    %967 = vector.load %arg9[%c3_331, %c0_332, %c0_333] : memref<4x1x64xf32, #tpu.memory_space<vmem>>, vector<1x1x64xf32>
    %968 = vector.shape_cast %967 : vector<1x1x64xf32> to vector<1x64xf32>
    %cst_334 = arith.constant dense<0.000000e+00> : vector<16xf32>
    %969 = vector.multi_reduction <add>, %964, %cst_334 [1] : vector<16x64xf32> to vector<16xf32>
    %970 = vector.shape_cast %969 : vector<16xf32> to vector<16x1xf32>
    %cst_335 = arith.constant 6.400000e+01 : f32
    %971 = vector.broadcast %cst_335 : f32 to vector<16x1xf32>
    %972 = arith.divf %970, %971 : vector<16x1xf32>
    %973 = vector.broadcast %972 : vector<16x1xf32> to vector<16x64xf32>
    %974 = arith.subf %964, %973 : vector<16x64xf32>
    %975 = arith.mulf %974, %974 : vector<16x64xf32>
    %cst_336 = arith.constant dense<0.000000e+00> : vector<16xf32>
    %976 = vector.multi_reduction <add>, %975, %cst_336 [1] : vector<16x64xf32> to vector<16xf32>
    %977 = vector.shape_cast %976 : vector<16xf32> to vector<16x1xf32>
    %cst_337 = arith.constant 6.400000e+01 : f32
    %978 = vector.broadcast %cst_337 : f32 to vector<16x1xf32>
    %979 = arith.divf %977, %978 : vector<16x1xf32>
    %980 = vector.broadcast %972 : vector<16x1xf32> to vector<16x64xf32>
    %981 = arith.subf %964, %980 : vector<16x64xf32>
    %cst_338 = arith.constant 9.99999974E-6 : f32
    %982 = vector.broadcast %cst_338 : f32 to vector<16x1xf32>
    %983 = arith.addf %979, %982 : vector<16x1xf32>
    %984 = math.rsqrt %983 : vector<16x1xf32>
    %985 = vector.broadcast %984 : vector<16x1xf32> to vector<16x64xf32>
    %986 = arith.mulf %981, %985 : vector<16x64xf32>
    %987 = vector.broadcast %966 : vector<1x64xf32> to vector<16x64xf32>
    %988 = arith.mulf %986, %987 : vector<16x64xf32>
    %989 = vector.broadcast %968 : vector<1x64xf32> to vector<16x64xf32>
    %990 = arith.addf %988, %989 : vector<16x64xf32>
    %991 = arith.truncf %990 : vector<16x64xf32> to vector<16x64xbf16>
    %c3_339 = arith.constant 3 : index
    %c0_340 = arith.constant 0 : index
    %c0_341 = arith.constant 0 : index
    %992 = vector.load %arg10[%c3_339, %c0_340, %c0_341] : memref<4x64x256xbf16, #tpu.memory_space<vmem>>, vector<1x64x256xbf16>
    %993 = vector.shape_cast %992 : vector<1x64x256xbf16> to vector<64x256xbf16>
    %cst_342 = arith.constant dense<0.000000e+00> : vector<16x256xf32>
    %994 = tpu.matmul %991, %993, %cst_342 {dimension_numbers = #tpu.dot_dimension_numbers<[1], [0], [0], [1], [0, 0, 1, 1], [], []>} : vector<16x64xbf16>, vector<64x256xbf16>, vector<16x256xf32> -> vector<16x256xf32>
    %c3_343 = arith.constant 3 : index
    %c0_344 = arith.constant 0 : index
    %c0_345 = arith.constant 0 : index
    %995 = vector.load %arg11[%c3_343, %c0_344, %c0_345] : memref<4x1x256xf32, #tpu.memory_space<vmem>>, vector<1x1x256xf32>
    %996 = vector.shape_cast %995 : vector<1x1x256xf32> to vector<1x256xf32>
    %997 = vector.broadcast %996 : vector<1x256xf32> to vector<16x256xf32>
    %998 = arith.addf %994, %997 : vector<16x256xf32>
    %cst_346 = arith.constant 0.000000e+00 : f32
    %999 = vector.broadcast %cst_346 : f32 to vector<16x256xf32>
    %1000 = arith.maximumf %998, %999 : vector<16x256xf32>
    %1001 = arith.truncf %1000 : vector<16x256xf32> to vector<16x256xbf16>
    %c3_347 = arith.constant 3 : index
    %c0_348 = arith.constant 0 : index
    %c0_349 = arith.constant 0 : index
    %1002 = vector.load %arg12[%c3_347, %c0_348, %c0_349] : memref<4x256x64xbf16, #tpu.memory_space<vmem>>, vector<1x256x64xbf16>
    %1003 = vector.shape_cast %1002 : vector<1x256x64xbf16> to vector<256x64xbf16>
    %cst_350 = arith.constant dense<0.000000e+00> : vector<16x64xf32>
    %1004 = tpu.matmul %1001, %1003, %cst_350 {dimension_numbers = #tpu.dot_dimension_numbers<[1], [0], [0], [1], [0, 0, 1, 1], [], []>} : vector<16x256xbf16>, vector<256x64xbf16>, vector<16x64xf32> -> vector<16x64xf32>
    %c3_351 = arith.constant 3 : index
    %c0_352 = arith.constant 0 : index
    %c0_353 = arith.constant 0 : index
    %1005 = vector.load %arg13[%c3_351, %c0_352, %c0_353] : memref<4x1x64xf32, #tpu.memory_space<vmem>>, vector<1x1x64xf32>
    %1006 = vector.shape_cast %1005 : vector<1x1x64xf32> to vector<1x64xf32>
    %1007 = vector.broadcast %1006 : vector<1x64xf32> to vector<16x64xf32>
    %1008 = arith.addf %1004, %1007 : vector<16x64xf32>
    %1009 = arith.addf %964, %1008 : vector<16x64xf32>
    %c0_354 = arith.constant 0 : index
    %c0_355 = arith.constant 0 : index
    %1010 = vector.load %arg14[%c0_354, %c0_355] : memref<1x64xf32, #tpu.memory_space<vmem>>, vector<1x64xf32>
    %c0_356 = arith.constant 0 : index
    %c0_357 = arith.constant 0 : index
    %1011 = vector.load %arg15[%c0_356, %c0_357] : memref<1x64xf32, #tpu.memory_space<vmem>>, vector<1x64xf32>
    %cst_358 = arith.constant dense<0.000000e+00> : vector<16xf32>
    %1012 = vector.multi_reduction <add>, %1009, %cst_358 [1] : vector<16x64xf32> to vector<16xf32>
    %1013 = vector.shape_cast %1012 : vector<16xf32> to vector<16x1xf32>
    %cst_359 = arith.constant 6.400000e+01 : f32
    %1014 = vector.broadcast %cst_359 : f32 to vector<16x1xf32>
    %1015 = arith.divf %1013, %1014 : vector<16x1xf32>
    %1016 = vector.broadcast %1015 : vector<16x1xf32> to vector<16x64xf32>
    %1017 = arith.subf %1009, %1016 : vector<16x64xf32>
    %1018 = arith.mulf %1017, %1017 : vector<16x64xf32>
    %cst_360 = arith.constant dense<0.000000e+00> : vector<16xf32>
    %1019 = vector.multi_reduction <add>, %1018, %cst_360 [1] : vector<16x64xf32> to vector<16xf32>
    %1020 = vector.shape_cast %1019 : vector<16xf32> to vector<16x1xf32>
    %cst_361 = arith.constant 6.400000e+01 : f32
    %1021 = vector.broadcast %cst_361 : f32 to vector<16x1xf32>
    %1022 = arith.divf %1020, %1021 : vector<16x1xf32>
    %1023 = vector.broadcast %1015 : vector<16x1xf32> to vector<16x64xf32>
    %1024 = arith.subf %1009, %1023 : vector<16x64xf32>
    %cst_362 = arith.constant 9.99999974E-6 : f32
    %1025 = vector.broadcast %cst_362 : f32 to vector<16x1xf32>
    %1026 = arith.addf %1022, %1025 : vector<16x1xf32>
    %1027 = math.rsqrt %1026 : vector<16x1xf32>
    %1028 = vector.broadcast %1027 : vector<16x1xf32> to vector<16x64xf32>
    %1029 = arith.mulf %1024, %1028 : vector<16x64xf32>
    %1030 = vector.broadcast %1010 : vector<1x64xf32> to vector<16x64xf32>
    %1031 = arith.mulf %1029, %1030 : vector<16x64xf32>
    %1032 = vector.broadcast %1011 : vector<1x64xf32> to vector<16x64xf32>
    %1033 = arith.addf %1031, %1032 : vector<16x64xf32>
    %1034 = arith.truncf %1033 : vector<16x64xf32> to vector<16x64xbf16>
    %c0_363 = arith.constant 0 : index
    %c0_364 = arith.constant 0 : index
    %1035 = vector.load %arg16[%c0_363, %c0_364] : memref<64x128xbf16, #tpu.memory_space<vmem>>, vector<64x128xbf16>
    %cst_365 = arith.constant dense<0.000000e+00> : vector<16x128xf32>
    %1036 = tpu.matmul %1034, %1035, %cst_365 {dimension_numbers = #tpu.dot_dimension_numbers<[1], [0], [0], [1], [0, 0, 1, 1], [], []>} : vector<16x64xbf16>, vector<64x128xbf16>, vector<16x128xf32> -> vector<16x128xf32>
    %c0_366 = arith.constant 0 : index
    %c0_367 = arith.constant 0 : index
    %1037 = vector.load %arg17[%c0_366, %c0_367] : memref<1x128xf32, #tpu.memory_space<vmem>>, vector<1x128xf32>
    %1038 = vector.broadcast %1037 : vector<1x128xf32> to vector<16x128xf32>
    %1039 = arith.addf %1036, %1038 : vector<16x128xf32>
    %c0_368 = arith.constant 0 : index
    %c0_369 = arith.constant 0 : index
    %1040 = vector.load %arg18[%c0_368, %c0_369] : memref<16x128xf32, #tpu.memory_space<vmem>>, vector<16x128xf32>
    tpu.vector_store %arg18[%c0_368, %c0_369], %1039 {strides = array<i32>} : memref<16x128xf32, #tpu.memory_space<vmem>>, vector<16x128xf32>,
    return
  }
}

</mosaic_0001>

<llo_original>
// kernel: tpu_custom_call.1
$region0: #{tpu_custom_call.1}
  #allocation0 [shape = 'u32[]', space=smem, size = 0x4, offset = 0x4, fixed_abs, tag = 'smem constant byte address 0x4 - core index']
  #allocation1 [shape = 'u32[72,128]{1,0:T(1,128)}', space=vmem, size = 0x9000, scoped, tag = 'internal scratch']
  %s0 = inlined_call_operand.vmem [shape: s32[16,1], index: 0, kind: input, shape index: {}]
  %s1 = inlined_call_operand.vmem [shape: f32[128,64], index: 1, kind: input, shape index: {}]
  %s2 = inlined_call_operand.vmem [shape: f32[8,64], index: 2, kind: input, shape index: {}]
  %s3 = inlined_call_operand.vmem [shape: bf16[4,64,384], index: 3, kind: input, shape index: {}]
  %s4 = inlined_call_operand.vmem [shape: bf16[4,128,64], index: 4, kind: input, shape index: {}]
  %s5 = inlined_call_operand.vmem [shape: f32[4,1,64], index: 5, kind: input, shape index: {}]
  %s6 = inlined_call_operand.vmem [shape: f32[4,1,64], index: 6, kind: input, shape index: {}]
  %s7 = inlined_call_operand.vmem [shape: f32[4,1,64], index: 7, kind: input, shape index: {}]
  %s8 = inlined_call_operand.vmem [shape: f32[4,1,64], index: 8, kind: input, shape index: {}]
  %s9 = inlined_call_operand.vmem [shape: f32[4,1,64], index: 9, kind: input, shape index: {}]
  %s10 = inlined_call_operand.vmem [shape: bf16[4,64,256], index: 10, kind: input, shape index: {}]
  %s11 = inlined_call_operand.vmem [shape: f32[4,1,256], index: 11, kind: input, shape index: {}]
  %s12 = inlined_call_operand.vmem [shape: bf16[4,256,64], index: 12, kind: input, shape index: {}]
  %s13 = inlined_call_operand.vmem [shape: f32[4,1,64], index: 13, kind: input, shape index: {}]
  %s14 = inlined_call_operand.vmem [shape: f32[1,64], index: 14, kind: input, shape index: {}]
  %s15 = inlined_call_operand.vmem [shape: f32[1,64], index: 15, kind: input, shape index: {}]
  %s16 = inlined_call_operand.vmem [shape: bf16[64,128], index: 16, kind: input, shape index: {}]
  %s17 = inlined_call_operand.vmem [shape: f32[1,128], index: 17, kind: input, shape index: {}]
  %s18 = inlined_call_operand.hbm [shape: f32[16,128], index: 18, kind: output, shape index: {}]
  %s19 = sld [smem:[#allocation0]]
  $region82: #{tpu_custom_call.1} parent=0
    _
  %s21 = ssub.s32 1, %s19
  %s22 = scalar_select 0, %s21, %s19
  $region1: #{tpu_custom_call.1} parent=0
    #allocation2 [shape = 'u8[8192]{0}', space=vmem, size = 0x2000, scoped, tag = 'output window, operand 0, single buffered']
    #allocation3 [shape = 's32[1]{0}', space=sflag, size = 0x4, scoped, tag = 'scoped memory for tpu_custom_call.1']
    %23 = vsyncpa [#allocation3], 0
    // Predicated region
    $region2: #{tpu_custom_call.1} parent=1 // pred_check
      _
    $region3: #{tpu_custom_call.1} parent=1 // pred_check_branch
      %25 = sbr.rel (0) target = $region5
    $region4: #{tpu_custom_call.1} parent=1 // pred_region
      _
    $region5: #{tpu_custom_call.1} parent=1 // pred_fallthru
      _
    // Predicated region
    $region6: #{tpu_custom_call.1} parent=1 // pred_check
      _
    $region7: #{tpu_custom_call.1} parent=1 // pred_check_branch
      %27 = sbr.rel (0) target = $region9
    $region8: #{tpu_custom_call.1} parent=1 // pred_region
      _
    $region9: #{tpu_custom_call.1} parent=1 // pred_fallthru
      _
    // Predicated region
    $region10: #{tpu_custom_call.1} parent=1 // pred_check
      _
    $region11: #{tpu_custom_call.1} parent=1 // pred_check_branch
      %29 = sbr.rel (0) target = $region13
    $region12: #{tpu_custom_call.1} parent=1 // pred_region
      _
    $region13: #{tpu_custom_call.1} parent=1 // pred_fallthru
      _
    // Predicated region
    $region14: #{tpu_custom_call.1} parent=1 // pred_check
      _
    $region15: #{tpu_custom_call.1} parent=1 // pred_check_branch
      %31 = sbr.rel (0) target = $region17
    $region16: #{tpu_custom_call.1} parent=1 // pred_region
      _
    $region17: #{tpu_custom_call.1} parent=1 // pred_fallthru
      _
    // Predicated region
    $region18: #{tpu_custom_call.1} parent=1 // pred_check
      _
    $region19: #{tpu_custom_call.1} parent=1 // pred_check_branch
      %33 = sbr.rel (0) target = $region21
    $region20: #{tpu_custom_call.1} parent=1 // pred_region
      _
    $region21: #{tpu_custom_call.1} parent=1 // pred_fallthru
      _
    // Predicated region
    $region22: #{tpu_custom_call.1} parent=1 // pred_check
      _
    $region23: #{tpu_custom_call.1} parent=1 // pred_check_branch
      %35 = sbr.rel (0) target = $region25
    $region24: #{tpu_custom_call.1} parent=1 // pred_region
      _
    $region25: #{tpu_custom_call.1} parent=1 // pred_fallthru
      _
    // Predicated region
    $region26: #{tpu_custom_call.1} parent=1 // pred_check
      _
    $region27: #{tpu_custom_call.1} parent=1 // pred_check_branch
      %37 = sbr.rel (0) target = $region29
    $region28: #{tpu_custom_call.1} parent=1 // pred_region
      _
    $region29: #{tpu_custom_call.1} parent=1 // pred_fallthru
      _
    // Predicated region
    $region30: #{tpu_custom_call.1} parent=1 // pred_check
      _
    $region31: #{tpu_custom_call.1} parent=1 // pred_check_branch
      %39 = sbr.rel (0) target = $region33
    $region32: #{tpu_custom_call.1} parent=1 // pred_region
      _
    $region33: #{tpu_custom_call.1} parent=1 // pred_fallthru
      _
    // Predicated region
    $region34: #{tpu_custom_call.1} parent=1 // pred_check
      _
    $region35: #{tpu_custom_call.1} parent=1 // pred_check_branch
      %41 = sbr.rel (0) target = $region37
    $region36: #{tpu_custom_call.1} parent=1 // pred_region
      _
    $region37: #{tpu_custom_call.1} parent=1 // pred_fallthru
      _
    // Predicated region
    $region38: #{tpu_custom_call.1} parent=1 // pred_check
      _
    $region39: #{tpu_custom_call.1} parent=1 // pred_check_branch
      %43 = sbr.rel (0) target = $region41
    $region40: #{tpu_custom_call.1} parent=1 // pred_region
      _
    $region41: #{tpu_custom_call.1} parent=1 // pred_fallthru
      _
    // Predicated region
    $region42: #{tpu_custom_call.1} parent=1 // pred_check
      _
    $region43: #{tpu_custom_call.1} parent=1 // pred_check_branch
      %45 = sbr.rel (0) target = $region45
    $region44: #{tpu_custom_call.1} parent=1 // pred_region
      _
    $region45: #{tpu_custom_call.1} parent=1 // pred_fallthru
      _
    // Predicated region
    $region46: #{tpu_custom_call.1} parent=1 // pred_check
      _
    $region47: #{tpu_custom_call.1} parent=1 // pred_check_branch
      %47 = sbr.rel (0) target = $region49
    $region48: #{tpu_custom_call.1} parent=1 // pred_region
      _
    $region49: #{tpu_custom_call.1} parent=1 // pred_fallthru
      _
    // Predicated region
    $region50: #{tpu_custom_call.1} parent=1 // pred_check
      _
    $region51: #{tpu_custom_call.1} parent=1 // pred_check_branch
      %49 = sbr.rel (0) target = $region53
    $region52: #{tpu_custom_call.1} parent=1 // pred_region
      _
    $region53: #{tpu_custom_call.1} parent=1 // pred_fallthru
      _
    // Predicated region
    $region54: #{tpu_custom_call.1} parent=1 // pred_check
      _
    $region55: #{tpu_custom_call.1} parent=1 // pred_check_branch
      %51 = sbr.rel (0) target = $region57
    $region56: #{tpu_custom_call.1} parent=1 // pred_region
      _
    $region57: #{tpu_custom_call.1} parent=1 // pred_fallthru
      _
    // Predicated region
    $region58: #{tpu_custom_call.1} parent=1 // pred_check
      _
    $region59: #{tpu_custom_call.1} parent=1 // pred_check_branch
      %53 = sbr.rel (0) target = $region61
    $region60: #{tpu_custom_call.1} parent=1 // pred_region
      _
    $region61: #{tpu_custom_call.1} parent=1 // pred_fallthru
      _
    // Predicated region
    $region62: #{tpu_custom_call.1} parent=1 // pred_check
      _
    $region63: #{tpu_custom_call.1} parent=1 // pred_check_branch
      %55 = sbr.rel (0) target = $region65
    $region64: #{tpu_custom_call.1} parent=1 // pred_region
      _
    $region65: #{tpu_custom_call.1} parent=1 // pred_fallthru
      _
    // Predicated region
    $region66: #{tpu_custom_call.1} parent=1 // pred_check
      _
    $region67: #{tpu_custom_call.1} parent=1 // pred_check_branch
      %57 = sbr.rel (0) target = $region69
    $region68: #{tpu_custom_call.1} parent=1 // pred_region
      _
    $region69: #{tpu_custom_call.1} parent=1 // pred_fallthru
      _
    // Predicated region
    $region70: #{tpu_custom_call.1} parent=1 // pred_check
      _
    $region71: #{tpu_custom_call.1} parent=1 // pred_check_branch
      %59 = sbr.rel (0) target = $region73
    $region72: #{tpu_custom_call.1} parent=1 // pred_region
      _
    $region73: #{tpu_custom_call.1} parent=1 // pred_fallthru
      _
    %v61 = vlaneseq
    %v62 = vand.u32 %v61, 127
    %v63 = vld [vmem:[%s0] sm:$0xff]
    %v64 = vld [vmem:[%s0 + $0x8] sm:$0xff]
    %65 = vset.pattern.permute.xlu0 0
    %66 = vperm.xlu0 %65, %v63
    %v67 = vpop.permute.xlu0 %66
    %68 = vset.pattern.permute.xlu0 0
    %69 = vperm.xlu0 %68, %v64
    %v70 = vpop.permute.xlu0 %69
    %vm71 = vcmp.eq.s32.totalorder %v62, %v67
    %vm72 = vcmp.eq.s32.totalorder %v62, %v70
    %v73 = vsel %vm71, 1, 0
    %v74 = vsel %vm72, 1, 0
    %v75 = vcvt.s32.f32 %v73
    %v76 = vcvt.s32.f32 %v74
    %v77 = vld [vmem:[%s1] sm:$0xff]
    %v78 = vld [vmem:[%s1 + $0x8] sm:$0xff]
    %v79 = vld [vmem:[%s1 + $0x10] sm:$0xff]
    %v80 = vld [vmem:[%s1 + $0x18] sm:$0xff]
    %v81 = vld [vmem:[%s1 + $0x20] sm:$0xff]
    %v82 = vld [vmem:[%s1 + $0x28] sm:$0xff]
    %v83 = vld [vmem:[%s1 + $0x30] sm:$0xff]
    %v84 = vld [vmem:[%s1 + $0x38] sm:$0xff]
    %v85 = vld [vmem:[%s1 + $0x40] sm:$0xff]
    %v86 = vld [vmem:[%s1 + $0x48] sm:$0xff]
    %v87 = vld [vmem:[%s1 + $0x50] sm:$0xff]
    %v88 = vld [vmem:[%s1 + $0x58] sm:$0xff]
    %v89 = vld [vmem:[%s1 + $0x60] sm:$0xff]
    %v90 = vld [vmem:[%s1 + $0x68] sm:$0xff]
    %v91 = vld [vmem:[%s1 + $0x70] sm:$0xff]
    %v92 = vld [vmem:[%s1 + $0x78] sm:$0xff]
    %93 = vmatpush.msra.mxu0 %v92
    %94 = vmatpush.msra.mxu0 %v91
    %95 = vmatpush.msra.mxu0 %v90
    %96 = vmatpush.msra.mxu0 %v89
    %97 = vmatpush.msra.mxu0 %v88
    %98 = vmatpush.msra.mxu0 %v87
    %99 = vmatpush.msra.mxu0 %v86
    %100 = vmatpush.msra.mxu0 %v85
    %101 = vmatpush.msra.mxu0 %v84
    %102 = vmatpush.msra.mxu0 %v83
    %103 = vmatpush.msra.mxu0 %v82
    %104 = vmatpush.msra.mxu0 %v81
    %105 = vmatpush.msra.mxu0 %v80
    %106 = vmatpush.msra.mxu0 %v79
    %107 = vmatpush.msra.mxu0 %v78
    %108 = vmatpush.msra.mxu0 %v77
    %109 = vmatmul.f32.gmra.mxu0 %v75
    %v110 = vpop.f32.mrf.mxu0
    %v111 = vadd.f32 0.0, %v110
    %112 = vmatmul.f32.gmra.mxu0 %v76
    %v113 = vpop.f32.mrf.mxu0
    %v114 = vadd.f32 0.0, %v113
    %115 = vdwg.mxu0
    %v116 = vld [vmem:[%s2] sm:$0xff]
    %v117 = vadd.f32 %v111, %v116
    %v118 = vadd.f32 %v114, %v116
    %v119 = vlaneseq
    %v120 = vshrl.u32 %v119, 7
    %vm121 = vcmp.le.s32.totalorder %v62, %v120
    %v122 = vld [vmem:[%s6] sm:$0x1]
    %v123 = vld [vmem:[%s7] sm:$0x1]
    %vm124 = vcmask 523264
    %v125 = vsel %vm124, %v117, 0.0
    %126 = vadd.xlane.f32.xlu0 %v125
    %v127 = vpop.xlane.xlu0 %126
    %v128 = vsel %vm124, %v118, 0.0
    %129 = vadd.xlane.f32.xlu0 %v128
    %v130 = vpop.xlane.xlu0 %129
    %v131 = vrcp.pop 64.0
    %v132 = vmul.f32 64.0, %v131
    %v133 = vsub.f32 1.0, %v132
    %v134 = vmul.f32 %v131, %v133
    %v135 = vadd.f32 %v131, %v134
    %vm136 = vweird.f32 %v131
    %v137 = vsel %vm136, %v131, %v135
    %v138 = vmul.f32 %v127, %v137
    %v139 = vmul.f32 %v130, %v137
    %v140 = vsub.f32 %v117, %v138
    %v141 = vsub.f32 %v118, %v139
    %v142 = vmul.f32 %v140, %v140
    %v143 = vmul.f32 %v141, %v141
    %v144 = vsel %vm124, %v142, 0.0
    %145 = vadd.xlane.f32.xlu0 %v144
    %v146 = vpop.xlane.xlu0 %145
    %v147 = vsel %vm124, %v143, 0.0
    %148 = vadd.xlane.f32.xlu0 %v147
    %v149 = vpop.xlane.xlu0 %148
    %v150 = vmul.f32 %v146, %v137
    %v151 = vmul.f32 %v149, %v137
    %v152 = vadd.f32 %v150, 1e-05
    %v153 = vadd.f32 %v151, 1e-05
    %v154 = vrsqrt.pop %v152
    %v155 = vmul.f32 %v154, %v152
    %v156 = vmul.f32 %v155, %v154
    %v157 = vmul.f32 0.5, %v156
    %v158 = vsub.f32 1.5, %v157
    %v159 = vmul.f32 %v154, %v158
    %vm160 = vweird.f32 %v152
    %vm161 = vweird.f32 %v154
    %vm162 = vmor %vm160, %vm161
    %v163 = vsel %vm162, %v154, %v159
    %v164 = vrsqrt.pop %v153
    %v165 = vmul.f32 %v164, %v153
    %v166 = vmul.f32 %v165, %v164
    %v167 = vmul.f32 0.5, %v166
    %v168 = vsub.f32 1.5, %v167
    %v169 = vmul.f32 %v164, %v168
    %vm170 = vweird.f32 %v153
    %vm171 = vweird.f32 %v164
    %vm172 = vmor %vm170, %vm171
    %v173 = vsel %vm172, %v164, %v169
    %v174 = vmul.f32 %v140, %v163
    %v175 = vmul.f32 %v141, %v173
    %v177 = vperm.slane %v122, 0
    %v179 = vmul.f32 %v174, %v177
    %v180 = vmul.f32 %v175, %v177
    %v182 = vperm.slane %v123, 0
    %v184 = vadd.f32 %v179, %v182
    %v185 = vadd.f32 %v180, %v182
    %v186 = vpack.c.bf16 %v185, %v184
    %v187 = vld [vmem:[%s3] sm:$0xff]
    %v188 = vld [vmem:[%s3 + $0x8] sm:$0xf]
    %v189 = vld [vmem:[%s3 + $0xc] sm:$0xff]
    %v190 = vld [vmem:[%s3 + $0x14] sm:$0xf]
    %v191 = vld [vmem:[%s3 + $0x18] sm:$0xff]
    %v192 = vld [vmem:[%s3 + $0x20] sm:$0xf]
    %v193 = vld [vmem:[%s3 + $0x24] sm:$0xff]
    %v194 = vld [vmem:[%s3 + $0x2c] sm:$0xf]
    %v195 = vld [vmem:[%s3 + $0x30] sm:$0xff]
    %v196 = vld [vmem:[%s3 + $0x38] sm:$0xf]
    %v197 = vld [vmem:[%s3 + $0x3c] sm:$0xff]
    %v198 = vld [vmem:[%s3 + $0x44] sm:$0xf]
    %v199 = vld [vmem:[%s3 + $0x48] sm:$0xff]
    %v200 = vld [vmem:[%s3 + $0x50] sm:$0xf]
    %v201 = vld [vmem:[%s3 + $0x54] sm:$0xff]
    %v202 = vld [vmem:[%s3 + $0x5c] sm:$0xf]
    %v219 = vunpack.c.l.b16 %v187
    %v220 = vunpack.c.h.b16 %v187
    %v221 = vunpack.c.l.b16 %v188
    %v222 = vunpack.c.l.b16 %v189
    %v223 = vunpack.c.h.b16 %v189
    %v224 = vunpack.c.l.b16 %v190
    %v225 = vunpack.c.l.b16 %v191
    %v226 = vunpack.c.h.b16 %v191
    %v227 = vunpack.c.l.b16 %v192
    %v228 = vunpack.c.l.b16 %v193
    %v229 = vunpack.c.h.b16 %v193
    %v230 = vunpack.c.l.b16 %v194
    %v231 = vunpack.c.l.b16 %v195
    %v232 = vunpack.c.h.b16 %v195
    %v233 = vunpack.c.l.b16 %v196
    %v234 = vunpack.c.l.b16 %v197
    %v235 = vunpack.c.h.b16 %v197
    %v236 = vunpack.c.l.b16 %v198
    %v237 = vunpack.c.l.b16 %v199
    %v238 = vunpack.c.h.b16 %v199
    %v239 = vunpack.c.l.b16 %v200
    %v240 = vunpack.c.l.b16 %v201
    %v241 = vunpack.c.h.b16 %v201
    %v242 = vunpack.c.l.b16 %v202
    %v243 = vpack.c.b16 %v222, %v219
    %v244 = vpack.c.b16 %v223, %v220
    %v245 = vpack.c.b16 %v224, %v221
    %v246 = vpack.c.b16 %v228, %v225
    %v247 = vpack.c.b16 %v229, %v226
    %v248 = vpack.c.b16 %v230, %v227
    %v249 = vpack.c.b16 %v234, %v231
    %v250 = vpack.c.b16 %v235, %v232
    %v251 = vpack.c.b16 %v236, %v233
    %v252 = vpack.c.b16 %v240, %v237
    %v253 = vpack.c.b16 %v241, %v238
    %v254 = vpack.c.b16 %v242, %v239
    %v268 = vsel %vm124, %v186, 0
    %270 = vmatpush.bf16.msra.mxu0 0
    %271 = vmatpush.bf16.msra.mxu0 0
    %272 = vmatpush.bf16.msra.mxu0 0
    %273 = vmatpush.bf16.msra.mxu0 0
    %274 = vmatpush.bf16.msra.mxu0 %v252
    %275 = vmatpush.bf16.msra.mxu0 %v249
    %276 = vmatpush.bf16.msra.mxu0 %v246
    %277 = vmatpush.bf16.msra.mxu0 %v243
    %278 = vmatmul.bf16.gmra.mxu0 %v268
    %v279 = vpop.f32.mrf.mxu0
    %v280 = vadd.f32 0.0, %v279
    %v281 = vpop.f32.mrf.mxu0
    %v282 = vadd.f32 0.0, %v281
    %283 = vdwg.mxu0
    %284 = vmatpush.bf16.msra.mxu0 0
    %285 = vmatpush.bf16.msra.mxu0 0
    %286 = vmatpush.bf16.msra.mxu0 0
    %287 = vmatpush.bf16.msra.mxu0 0
    %288 = vmatpush.bf16.msra.mxu0 %v253
    %289 = vmatpush.bf16.msra.mxu0 %v250
    %290 = vmatpush.bf16.msra.mxu0 %v247
    %291 = vmatpush.bf16.msra.mxu0 %v244
    %292 = vmatmul.bf16.gmra.mxu0 %v268
    %v293 = vpop.f32.mrf.mxu0
    %v294 = vadd.f32 0.0, %v293
    %v295 = vpop.f32.mrf.mxu0
    %v296 = vadd.f32 0.0, %v295
    %297 = vdwg.mxu0
    %298 = vmatpush.bf16.msra.mxu0 0
    %299 = vmatpush.bf16.msra.mxu0 0
    %300 = vmatpush.bf16.msra.mxu0 0
    %301 = vmatpush.bf16.msra.mxu0 0
    %302 = vmatpush.bf16.msra.mxu0 %v254
    %303 = vmatpush.bf16.msra.mxu0 %v251
    %304 = vmatpush.bf16.msra.mxu0 %v248
    %305 = vmatpush.bf16.msra.mxu0 %v245
    %306 = vmatmul.bf16.gmra.mxu0 %v268
    %v307 = vpop.f32.mrf.mxu0
    %v308 = vadd.f32 0.0, %v307
    %v309 = vpop.f32.mrf.mxu0
    %v310 = vadd.f32 0.0, %v309
    %311 = vdwg.mxu0
    %v312 = vpack.c.bf16 %v294, %v280
    %v313 = vpack.c.bf16 %v308, %v308
    %v314 = vpack.c.bf16 %v296, %v282
    %v315 = vpack.c.bf16 %v310, %v310
    %v317 = vrot.slane %v312, 4
    %vm318 = vcmask 130048
    %v320 = vsel %vm318, %v312, 0
    %v323 = vsel %vm318, %v317, 0
    %325 = vmatpush.bf16.xpose.msra.mxu0 0
    %326 = vmatpush.bf16.xpose.msra.mxu0 0
    %327 = vmatpush.bf16.xpose.msra.mxu0 0
    %328 = vmatpush.bf16.xpose.msra.mxu0 0
    %329 = vmatpush.bf16.xpose.msra.mxu0 0
    %330 = vmatpush.bf16.xpose.msra.mxu0 0
    %331 = vmatpush.bf16.xpose.msra.mxu0 0
    %332 = vmatpush.bf16.xpose.msra.mxu0 %v323
    %333 = vmatmul.bf16.gmra.mxu0 %v320
    %v334 = vpop.f32.mrf.mxu0
    %v335 = vadd.f32 0.0, %v334
    %v336 = vpop.f32.mrf.mxu0
    %337 = vdwg.mxu0
    %v339 = vrot.slane %v314, 4
    %v341 = vsel %vm318, %v314, 0
    %v344 = vsel %vm318, %v339, 0
    %346 = vmatpush.bf16.xpose.msra.mxu0 0
    %347 = vmatpush.bf16.xpose.msra.mxu0 0
    %348 = vmatpush.bf16.xpose.msra.mxu0 0
    %349 = vmatpush.bf16.xpose.msra.mxu0 0
    %350 = vmatpush.bf16.xpose.msra.mxu0 0
    %351 = vmatpush.bf16.xpose.msra.mxu0 0
    %352 = vmatpush.bf16.xpose.msra.mxu0 0
    %353 = vmatpush.bf16.xpose.msra.mxu0 %v344
    %354 = vmatmul.bf16.gmra.mxu0 %v341
    %v355 = vpop.f32.mrf.mxu0
    %v356 = vadd.f32 0.0, %v355
    %v357 = vpop.f32.mrf.mxu0
    %358 = vdwg.mxu0
    %v359 = vsel %vm121, 1, 0
    %vm360 = vcmp.eq.s32.totalorder %v359, 1
    %v361 = vsel %vm360, %v335, -1e+30
    %v362 = vsel %vm360, %v356, -1e+30
    %vm363 = vcmask 64512
    %v364 = vsel %vm363, %v361, -inf
    %365 = vmax.xlane.f32.xlu0 %v364
    %v366 = vpop.xlane.xlu0 %365
    %v367 = vsel %vm363, %v362, -inf
    %368 = vmax.xlane.f32.xlu0 %v367
    %v369 = vpop.xlane.xlu0 %368
    %v370 = vsub.f32 %v361, %v366
    %v371 = vsub.f32 %v362, %v369
    %v372 = vmul.f32 %v370, 1.442695
    %v373 = vpow.pop %v372
    %v374 = vmul.f32 %v371, 1.442695
    %v375 = vpow.pop %v374
    %v376 = vsel %vm363, %v373, 0.0
    %377 = vadd.xlane.f32.xlu0 %v376
    %v378 = vpop.xlane.xlu0 %377
    %v379 = vsel %vm363, %v375, 0.0
    %380 = vadd.xlane.f32.xlu0 %v379
    %v381 = vpop.xlane.xlu0 %380
    %v382 = vrcp.pop %v378
    %v383 = vrcp.pop %v381
    %v384 = vmul.f32 %v373, %v382
    %v385 = vmul.f32 %v375, %v383
    %v386 = vpack.c.bf16 %v384, %v384
    %v387 = vpack.c.bf16 %v385, %v385
    %v389 = vsel %vm363, %v386, 0
    %vm391 = vcmask 1043456
    %v393 = vsel %vm391, %v313, 0
    %395 = vmatpush.bf16.msra.mxu0 0
    %396 = vmatpush.bf16.msra.mxu0 0
    %397 = vmatpush.bf16.msra.mxu0 0
    %398 = vmatpush.bf16.msra.mxu0 0
    %399 = vmatpush.bf16.msra.mxu0 0
    %400 = vmatpush.bf16.msra.mxu0 0
    %401 = vmatpush.bf16.msra.mxu0 0
    %402 = vmatpush.bf16.msra.mxu0 %v393
    %403 = vmatmul.bf16.gmra.mxu0 %v389
    %v404 = vpop.f32.mrf.mxu0
    %v405 = vadd.f32 0.0, %v404
    %v406 = vpop.f32.mrf.mxu0
    %407 = vdwg.mxu0
    %v409 = vsel %vm363, %v387, 0
    %v412 = vsel %vm391, %v315, 0
    %414 = vmatpush.bf16.msra.mxu0 0
    %415 = vmatpush.bf16.msra.mxu0 0
    %416 = vmatpush.bf16.msra.mxu0 0
    %417 = vmatpush.bf16.msra.mxu0 0
    %418 = vmatpush.bf16.msra.mxu0 0
    %419 = vmatpush.bf16.msra.mxu0 0
    %420 = vmatpush.bf16.msra.mxu0 0
    %421 = vmatpush.bf16.msra.mxu0 %v412
    %422 = vmatmul.bf16.gmra.mxu0 %v409
    %v423 = vpop.f32.mrf.mxu0
    %v424 = vadd.f32 0.0, %v423
    %v425 = vpop.f32.mrf.mxu0
    %426 = vdwg.mxu0
    %427 = vrot.lane.b32.xlu0 %v312, 112
    %v428 = vpop.permute.xlu0 %427
    %v429 = vrot.slane %v428, 4
    %v430 = vunpack.c.l.b16 %v312
    %v431 = vpack.c.b16 %v430, %v430
    %432 = vrot.lane.b32.xlu0 %v431, 112
    %v433 = vpop.permute.xlu0 %432
    %v435 = vsel %vm318, %v433, 0
    %v438 = vsel %vm318, %v429, 0
    %440 = vmatpush.bf16.xpose.msra.mxu0 0
    %441 = vmatpush.bf16.xpose.msra.mxu0 0
    %442 = vmatpush.bf16.xpose.msra.mxu0 0
    %443 = vmatpush.bf16.xpose.msra.mxu0 0
    %444 = vmatpush.bf16.xpose.msra.mxu0 0
    %445 = vmatpush.bf16.xpose.msra.mxu0 0
    %446 = vmatpush.bf16.xpose.msra.mxu0 0
    %447 = vmatpush.bf16.xpose.msra.mxu0 %v438
    %448 = vmatmul.bf16.gmra.mxu0 %v435
    %v449 = vpop.f32.mrf.mxu0
    %v450 = vadd.f32 0.0, %v449
    %v451 = vpop.f32.mrf.mxu0
    %452 = vdwg.mxu0
    %453 = vrot.lane.b32.xlu0 %v314, 112
    %v454 = vpop.permute.xlu0 %453
    %v455 = vrot.slane %v454, 4
    %v456 = vunpack.c.l.b16 %v314
    %v457 = vpack.c.b16 %v456, %v456
    %458 = vrot.lane.b32.xlu0 %v457, 112
    %v459 = vpop.permute.xlu0 %458
    %v461 = vsel %vm318, %v459, 0
    %v464 = vsel %vm318, %v455, 0
    %466 = vmatpush.bf16.xpose.msra.mxu0 0
    %467 = vmatpush.bf16.xpose.msra.mxu0 0
    %468 = vmatpush.bf16.xpose.msra.mxu0 0
    %469 = vmatpush.bf16.xpose.msra.mxu0 0
    %470 = vmatpush.bf16.xpose.msra.mxu0 0
    %471 = vmatpush.bf16.xpose.msra.mxu0 0
    %472 = vmatpush.bf16.xpose.msra.mxu0 0
    %473 = vmatpush.bf16.xpose.msra.mxu0 %v464
    %474 = vmatmul.bf16.gmra.mxu0 %v461
    %v475 = vpop.f32.mrf.mxu0
    %v476 = vadd.f32 0.0, %v475
    %v477 = vpop.f32.mrf.mxu0
    %478 = vdwg.mxu0
    %v479 = vsel %vm360, %v450, -1e+30
    %v480 = vsel %vm360, %v476, -1e+30
    %v481 = vsel %vm363, %v479, -inf
    %482 = vmax.xlane.f32.xlu0 %v481
    %v483 = vpop.xlane.xlu0 %482
    %v484 = vsel %vm363, %v480, -inf
    %485 = vmax.xlane.f32.xlu0 %v484
    %v486 = vpop.xlane.xlu0 %485
    %v487 = vsub.f32 %v479, %v483
    %v488 = vsub.f32 %v480, %v486
    %v489 = vmul.f32 %v487, 1.442695
    %v490 = vpow.pop %v489
    %v491 = vmul.f32 %v488, 1.442695
    %v492 = vpow.pop %v491
    %v493 = vsel %vm363, %v490, 0.0
    %494 = vadd.xlane.f32.xlu0 %v493
    %v495 = vpop.xlane.xlu0 %494
    %v496 = vsel %vm363, %v492, 0.0
    %497 = vadd.xlane.f32.xlu0 %v496
    %v498 = vpop.xlane.xlu0 %497
    %v499 = vrcp.pop %v495
    %v500 = vrcp.pop %v498
    %v501 = vmul.f32 %v490, %v499
    %v502 = vmul.f32 %v492, %v500
    %v503 = vpack.c.bf16 %v501, %v501
    %v504 = vpack.c.bf16 %v502, %v502
    %v506 = vunpack.c.l.b16 %v313
    %v507 = vpack.c.b16 %v506, %v506
    %508 = vrot.lane.b32.xlu0 %v507, 112
    %v509 = vpop.permute.xlu0 %508
    %v511 = vsel %vm363, %v503, 0
    %v514 = vsel %vm391, %v509, 0
    %516 = vmatpush.bf16.msra.mxu0 0
    %517 = vmatpush.bf16.msra.mxu0 0
    %518 = vmatpush.bf16.msra.mxu0 0
    %519 = vmatpush.bf16.msra.mxu0 0
    %520 = vmatpush.bf16.msra.mxu0 0
    %521 = vmatpush.bf16.msra.mxu0 0
    %522 = vmatpush.bf16.msra.mxu0 0
    %523 = vmatpush.bf16.msra.mxu0 %v514
    %524 = vmatmul.bf16.gmra.mxu0 %v511
    %v525 = vpop.f32.mrf.mxu0
    %v526 = vadd.f32 0.0, %v525
    %v527 = vpop.f32.mrf.mxu0
    %528 = vdwg.mxu0
    %v530 = vunpack.c.l.b16 %v315
    %v531 = vpack.c.b16 %v530, %v530
    %532 = vrot.lane.b32.xlu0 %v531, 112
    %v533 = vpop.permute.xlu0 %532
    %v535 = vsel %vm363, %v504, 0
    %v538 = vsel %vm391, %v533, 0
    %540 = vmatpush.bf16.msra.mxu0 0
    %541 = vmatpush.bf16.msra.mxu0 0
    %542 = vmatpush.bf16.msra.mxu0 0
    %543 = vmatpush.bf16.msra.mxu0 0
    %544 = vmatpush.bf16.msra.mxu0 0
    %545 = vmatpush.bf16.msra.mxu0 0
    %546 = vmatpush.bf16.msra.mxu0 0
    %547 = vmatpush.bf16.msra.mxu0 %v538
    %548 = vmatmul.bf16.gmra.mxu0 %v535
    %v549 = vpop.f32.mrf.mxu0
    %v550 = vadd.f32 0.0, %v549
    %v551 = vpop.f32.mrf.mxu0
    %552 = vdwg.mxu0
    %553 = vrot.lane.b32.xlu0 %v312, 96
    %v554 = vpop.permute.xlu0 %553
    %v555 = vrot.slane %v554, 4
    %556 = vrot.lane.b32.xlu0 %v431, 96
    %v557 = vpop.permute.xlu0 %556
    %v559 = vsel %vm318, %v557, 0
    %v562 = vsel %vm318, %v555, 0
    %564 = vmatpush.bf16.xpose.msra.mxu0 0
    %565 = vmatpush.bf16.xpose.msra.mxu0 0
    %566 = vmatpush.bf16.xpose.msra.mxu0 0
    %567 = vmatpush.bf16.xpose.msra.mxu0 0
    %568 = vmatpush.bf16.xpose.msra.mxu0 0
    %569 = vmatpush.bf16.xpose.msra.mxu0 0
    %570 = vmatpush.bf16.xpose.msra.mxu0 0
    %571 = vmatpush.bf16.xpose.msra.mxu0 %v562
    %572 = vmatmul.bf16.gmra.mxu0 %v559
    %v573 = vpop.f32.mrf.mxu0
    %v574 = vadd.f32 0.0, %v573
    %v575 = vpop.f32.mrf.mxu0
    %576 = vdwg.mxu0
    %577 = vrot.lane.b32.xlu0 %v314, 96
    %v578 = vpop.permute.xlu0 %577
    %v579 = vrot.slane %v578, 4
    %580 = vrot.lane.b32.xlu0 %v457, 96
    %v581 = vpop.permute.xlu0 %580
    %v583 = vsel %vm318, %v581, 0
    %v586 = vsel %vm318, %v579, 0
    %588 = vmatpush.bf16.xpose.msra.mxu0 0
    %589 = vmatpush.bf16.xpose.msra.mxu0 0
    %590 = vmatpush.bf16.xpose.msra.mxu0 0
    %591 = vmatpush.bf16.xpose.msra.mxu0 0
    %592 = vmatpush.bf16.xpose.msra.mxu0 0
    %593 = vmatpush.bf16.xpose.msra.mxu0 0
    %594 = vmatpush.bf16.xpose.msra.mxu0 0
    %595 = vmatpush.bf16.xpose.msra.mxu0 %v586
    %596 = vmatmul.bf16.gmra.mxu0 %v583
    %v597 = vpop.f32.mrf.mxu0
    %v598 = vadd.f32 0.0, %v597
    %v599 = vpop.f32.mrf.mxu0
    %600 = vdwg.mxu0
    %v601 = vsel %vm360, %v574, -1e+30
    %v602 = vsel %vm360, %v598, -1e+30
    %v603 = vsel %vm363, %v601, -inf
    %604 = vmax.xlane.f32.xlu0 %v603
    %v605 = vpop.xlane.xlu0 %604
    %v606 = vsel %vm363, %v602, -inf
    %607 = vmax.xlane.f32.xlu0 %v606
    %v608 = vpop.xlane.xlu0 %607
    %v609 = vsub.f32 %v601, %v605
    %v610 = vsub.f32 %v602, %v608
    %v611 = vmul.f32 %v609, 1.442695
    %v612 = vpow.pop %v611
    %v613 = vmul.f32 %v610, 1.442695
    %v614 = vpow.pop %v613
    %v615 = vsel %vm363, %v612, 0.0
    %616 = vadd.xlane.f32.xlu0 %v615
    %v617 = vpop.xlane.xlu0 %616
    %v618 = vsel %vm363, %v614, 0.0
    %619 = vadd.xlane.f32.xlu0 %v618
    %v620 = vpop.xlane.xlu0 %619
    %v621 = vrcp.pop %v617
    %v622 = vrcp.pop %v620
    %v623 = vmul.f32 %v612, %v621
    %v624 = vmul.f32 %v614, %v622
    %v625 = vpack.c.bf16 %v623, %v623
    %v626 = vpack.c.bf16 %v624, %v624
    %627 = vrot.lane.b32.xlu0 %v507, 96
    %v628 = vpop.permute.xlu0 %627
    %v630 = vsel %vm363, %v625, 0
    %v633 = vsel %vm391, %v628, 0
    %635 = vmatpush.bf16.msra.mxu0 0
    %636 = vmatpush.bf16.msra.mxu0 0
    %637 = vmatpush.bf16.msra.mxu0 0
    %638 = vmatpush.bf16.msra.mxu0 0
    %639 = vmatpush.bf16.msra.mxu0 0
    %640 = vmatpush.bf16.msra.mxu0 0
    %641 = vmatpush.bf16.msra.mxu0 0
    %642 = vmatpush.bf16.msra.mxu0 %v633
    %643 = vmatmul.bf16.gmra.mxu0 %v630
    %v644 = vpop.f32.mrf.mxu0
    %v645 = vadd.f32 0.0, %v644
    %v646 = vpop.f32.mrf.mxu0
    %647 = vdwg.mxu0
    %648 = vrot.lane.b32.xlu0 %v531, 96
    %v649 = vpop.permute.xlu0 %648
    %v651 = vsel %vm363, %v626, 0
    %v654 = vsel %vm391, %v649, 0
    %656 = vmatpush.bf16.msra.mxu0 0
    %657 = vmatpush.bf16.msra.mxu0 0
    %658 = vmatpush.bf16.msra.mxu0 0
    %659 = vmatpush.bf16.msra.mxu0 0
    %660 = vmatpush.bf16.msra.mxu0 0
    %661 = vmatpush.bf16.msra.mxu0 0
    %662 = vmatpush.bf16.msra.mxu0 0
    %663 = vmatpush.bf16.msra.mxu0 %v654
    %664 = vmatmul.bf16.gmra.mxu0 %v651
    %v665 = vpop.f32.mrf.mxu0
    %v666 = vadd.f32 0.0, %v665
    %v667 = vpop.f32.mrf.mxu0
    %668 = vdwg.mxu0
    %669 = vrot.lane.b32.xlu0 %v312, 80
    %v670 = vpop.permute.xlu0 %669
    %v671 = vrot.slane %v670, 4
    %672 = vrot.lane.b32.xlu0 %v431, 80
    %v673 = vpop.permute.xlu0 %672
    %v675 = vsel %vm318, %v673, 0
    %v678 = vsel %vm318, %v671, 0
    %680 = vmatpush.bf16.xpose.msra.mxu0 0
    %681 = vmatpush.bf16.xpose.msra.mxu0 0
    %682 = vmatpush.bf16.xpose.msra.mxu0 0
    %683 = vmatpush.bf16.xpose.msra.mxu0 0
    %684 = vmatpush.bf16.xpose.msra.mxu0 0
    %685 = vmatpush.bf16.xpose.msra.mxu0 0
    %686 = vmatpush.bf16.xpose.msra.mxu0 0
    %687 = vmatpush.bf16.xpose.msra.mxu0 %v678
    %688 = vmatmul.bf16.gmra.mxu0 %v675
    %v689 = vpop.f32.mrf.mxu0
    %v690 = vadd.f32 0.0, %v689
    %v691 = vpop.f32.mrf.mxu0
    %692 = vdwg.mxu0
    %693 = vrot.lane.b32.xlu0 %v314, 80
    %v694 = vpop.permute.xlu0 %693
    %v695 = vrot.slane %v694, 4
    %696 = vrot.lane.b32.xlu0 %v457, 80
    %v697 = vpop.permute.xlu0 %696
    %v699 = vsel %vm318, %v697, 0
    %v702 = vsel %vm318, %v695, 0
    %704 = vmatpush.bf16.xpose.msra.mxu0 0
    %705 = vmatpush.bf16.xpose.msra.mxu0 0
    %706 = vmatpush.bf16.xpose.msra.mxu0 0
    %707 = vmatpush.bf16.xpose.msra.mxu0 0
    %708 = vmatpush.bf16.xpose.msra.mxu0 0
    %709 = vmatpush.bf16.xpose.msra.mxu0 0
    %710 = vmatpush.bf16.xpose.msra.mxu0 0
    %711 = vmatpush.bf16.xpose.msra.mxu0 %v702
    %712 = vmatmul.bf16.gmra.mxu0 %v699
    %v713 = vpop.f32.mrf.mxu0
    %v714 = vadd.f32 0.0, %v713
    %v715 = vpop.f32.mrf.mxu0
    %716 = vdwg.mxu0
    %v717 = vsel %vm360, %v690, -1e+30
    %v718 = vsel %vm360, %v714, -1e+30
    %v719 = vsel %vm363, %v717, -inf
    %720 = vmax.xlane.f32.xlu0 %v719
    %v721 = vpop.xlane.xlu0 %720
    %v722 = vsel %vm363, %v718, -inf
    %723 = vmax.xlane.f32.xlu0 %v722
    %v724 = vpop.xlane.xlu0 %723
    %v725 = vsub.f32 %v717, %v721
    %v726 = vsub.f32 %v718, %v724
    %v727 = vmul.f32 %v725, 1.442695
    %v728 = vpow.pop %v727
    %v729 = vmul.f32 %v726, 1.442695
    %v730 = vpow.pop %v729
    %v731 = vsel %vm363, %v728, 0.0
    %732 = vadd.xlane.f32.xlu0 %v731
    %v733 = vpop.xlane.xlu0 %732
    %v734 = vsel %vm363, %v730, 0.0
    %735 = vadd.xlane.f32.xlu0 %v734
    %v736 = vpop.xlane.xlu0 %735
    %v737 = vrcp.pop %v733
    %v738 = vrcp.pop %v736
    %v739 = vmul.f32 %v728, %v737
    %v740 = vmul.f32 %v730, %v738
    %v741 = vpack.c.bf16 %v739, %v739
    %v742 = vpack.c.bf16 %v740, %v740
    %743 = vrot.lane.b32.xlu0 %v507, 80
    %v744 = vpop.permute.xlu0 %743
    %v746 = vsel %vm363, %v741, 0
    %v749 = vsel %vm391, %v744, 0
    %751 = vmatpush.bf16.msra.mxu0 0
    %752 = vmatpush.bf16.msra.mxu0 0
    %753 = vmatpush.bf16.msra.mxu0 0
    %754 = vmatpush.bf16.msra.mxu0 0
    %755 = vmatpush.bf16.msra.mxu0 0
    %756 = vmatpush.bf16.msra.mxu0 0
    %757 = vmatpush.bf16.msra.mxu0 0
    %758 = vmatpush.bf16.msra.mxu0 %v749
    %759 = vmatmul.bf16.gmra.mxu0 %v746
    %v760 = vpop.f32.mrf.mxu0
    %v761 = vadd.f32 0.0, %v760
    %v762 = vpop.f32.mrf.mxu0
    %763 = vdwg.mxu0
    %764 = vrot.lane.b32.xlu0 %v531, 80
    %v765 = vpop.permute.xlu0 %764
    %v767 = vsel %vm363, %v742, 0
    %v770 = vsel %vm391, %v765, 0
    %772 = vmatpush.bf16.msra.mxu0 0
    %773 = vmatpush.bf16.msra.mxu0 0
    %774 = vmatpush.bf16.msra.mxu0 0
    %775 = vmatpush.bf16.msra.mxu0 0
    %776 = vmatpush.bf16.msra.mxu0 0
    %777 = vmatpush.bf16.msra.mxu0 0
    %778 = vmatpush.bf16.msra.mxu0 0
    %779 = vmatpush.bf16.msra.mxu0 %v770
    %780 = vmatmul.bf16.gmra.mxu0 %v767
    %v781 = vpop.f32.mrf.mxu0
    %v782 = vadd.f32 0.0, %v781
    %v783 = vpop.f32.mrf.mxu0
    %784 = vdwg.mxu0
    %785 = vrot.lane.b32.xlu0 %v312, 64
    %v786 = vpop.permute.xlu0 %785
    %v787 = vrot.slane %v786, 4
    %788 = vrot.lane.b32.xlu0 %v431, 64
    %v789 = vpop.permute.xlu0 %788
    %v791 = vsel %vm318, %v789, 0
    %v794 = vsel %vm318, %v787, 0
    %796 = vmatpush.bf16.xpose.msra.mxu0 0
    %797 = vmatpush.bf16.xpose.msra.mxu0 0
    %798 = vmatpush.bf16.xpose.msra.mxu0 0
    %799 = vmatpush.bf16.xpose.msra.mxu0 0
    %800 = vmatpush.bf16.xpose.msra.mxu0 0
    %801 = vmatpush.bf16.xpose.msra.mxu0 0
    %802 = vmatpush.bf16.xpose.msra.mxu0 0
    %803 = vmatpush.bf16.xpose.msra.mxu0 %v794
    %804 = vmatmul.bf16.gmra.mxu0 %v791
    %v805 = vpop.f32.mrf.mxu0
    %v806 = vadd.f32 0.0, %v805
    %v807 = vpop.f32.mrf.mxu0
    %808 = vdwg.mxu0
    %809 = vrot.lane.b32.xlu0 %v314, 64
    %v810 = vpop.permute.xlu0 %809
    %v811 = vrot.slane %v810, 4
    %812 = vrot.lane.b32.xlu0 %v457, 64
    %v813 = vpop.permute.xlu0 %812
    %v815 = vsel %vm318, %v813, 0
    %v818 = vsel %vm318, %v811, 0
    %820 = vmatpush.bf16.xpose.msra.mxu0 0
    %821 = vmatpush.bf16.xpose.msra.mxu0 0
    %822 = vmatpush.bf16.xpose.msra.mxu0 0
    %823 = vmatpush.bf16.xpose.msra.mxu0 0
    %824 = vmatpush.bf16.xpose.msra.mxu0 0
    %825 = vmatpush.bf16.xpose.msra.mxu0 0
    %826 = vmatpush.bf16.xpose.msra.mxu0 0
    %827 = vmatpush.bf16.xpose.msra.mxu0 %v818
    %828 = vmatmul.bf16.gmra.mxu0 %v815
    %v829 = vpop.f32.mrf.mxu0
    %v830 = vadd.f32 0.0, %v829
    %v831 = vpop.f32.mrf.mxu0
    %832 = vdwg.mxu0
    %v833 = vsel %vm360, %v806, -1e+30
    %v834 = vsel %vm360, %v830, -1e+30
    %v835 = vsel %vm363, %v833, -inf
    %836 = vmax.xlane.f32.xlu0 %v835
    %v837 = vpop.xlane.xlu0 %836
    %v838 = vsel %vm363, %v834, -inf
    %839 = vmax.xlane.f32.xlu0 %v838
    %v840 = vpop.xlane.xlu0 %839
    %v841 = vsub.f32 %v833, %v837
    %v842 = vsub.f32 %v834, %v840
    %v843 = vmul.f32 %v841, 1.442695
    %v844 = vpow.pop %v843
    %v845 = vmul.f32 %v842, 1.442695
    %v846 = vpow.pop %v845
    %v847 = vsel %vm363, %v844, 0.0
    %848 = vadd.xlane.f32.xlu0 %v847
    %v849 = vpop.xlane.xlu0 %848
    %v850 = vsel %vm363, %v846, 0.0
    %851 = vadd.xlane.f32.xlu0 %v850
    %v852 = vpop.xlane.xlu0 %851
    %v853 = vrcp.pop %v849
    %v854 = vrcp.pop %v852
    %v855 = vmul.f32 %v844, %v853
    %v856 = vmul.f32 %v846, %v854
    %v857 = vpack.c.bf16 %v855, %v855
    %v858 = vpack.c.bf16 %v856, %v856
    %859 = vrot.lane.b32.xlu0 %v507, 64
    %v860 = vpop.permute.xlu0 %859
    %v862 = vsel %vm363, %v857, 0
    %v865 = vsel %vm391, %v860, 0
    %867 = vmatpush.bf16.msra.mxu0 0
    %868 = vmatpush.bf16.msra.mxu0 0
    %869 = vmatpush.bf16.msra.mxu0 0
    %870 = vmatpush.bf16.msra.mxu0 0
    %871 = vmatpush.bf16.msra.mxu0 0
    %872 = vmatpush.bf16.msra.mxu0 0
    %873 = vmatpush.bf16.msra.mxu0 0
    %874 = vmatpush.bf16.msra.mxu0 %v865
    %875 = vmatmul.bf16.gmra.mxu0 %v862
    %v876 = vpop.f32.mrf.mxu0
    %v877 = vadd.f32 0.0, %v876
    %v878 = vpop.f32.mrf.mxu0
    %879 = vdwg.mxu0
    %880 = vrot.lane.b32.xlu0 %v531, 64
    %v881 = vpop.permute.xlu0 %880
    %v883 = vsel %vm363, %v858, 0
    %v886 = vsel %vm391, %v881, 0
    %888 = vmatpush.bf16.msra.mxu0 0
    %889 = vmatpush.bf16.msra.mxu0 0
    %890 = vmatpush.bf16.msra.mxu0 0
    %891 = vmatpush.bf16.msra.mxu0 0
    %892 = vmatpush.bf16.msra.mxu0 0
    %893 = vmatpush.bf16.msra.mxu0 0
    %894 = vmatpush.bf16.msra.mxu0 0
    %895 = vmatpush.bf16.msra.mxu0 %v886
    %896 = vmatmul.bf16.gmra.mxu0 %v883
    %v897 = vpop.f32.mrf.mxu0
    %v898 = vadd.f32 0.0, %v897
    %v899 = vpop.f32.mrf.mxu0
    %900 = vdwg.mxu0
    %901 = vrot.lane.b32.xlu0 %v312, 48
    %v902 = vpop.permute.xlu0 %901
    %v903 = vrot.slane %v902, 4
    %904 = vrot.lane.b32.xlu0 %v431, 48
    %v905 = vpop.permute.xlu0 %904
    %v907 = vsel %vm318, %v905, 0
    %v910 = vsel %vm318, %v903, 0
    %912 = vmatpush.bf16.xpose.msra.mxu0 0
    %913 = vmatpush.bf16.xpose.msra.mxu0 0
    %914 = vmatpush.bf16.xpose.msra.mxu0 0
    %915 = vmatpush.bf16.xpose.msra.mxu0 0
    %916 = vmatpush.bf16.xpose.msra.mxu0 0
    %917 = vmatpush.bf16.xpose.msra.mxu0 0
    %918 = vmatpush.bf16.xpose.msra.mxu0 0
    %919 = vmatpush.bf16.xpose.msra.mxu0 %v910
    %920 = vmatmul.bf16.gmra.mxu0 %v907
    %v921 = vpop.f32.mrf.mxu0
    %v922 = vadd.f32 0.0, %v921
    %v923 = vpop.f32.mrf.mxu0
    %924 = vdwg.mxu0
    %925 = vrot.lane.b32.xlu0 %v314, 48
    %v926 = vpop.permute.xlu0 %925
    %v927 = vrot.slane %v926, 4
    %928 = vrot.lane.b32.xlu0 %v457, 48
    %v929 = vpop.permute.xlu0 %928
    %v931 = vsel %vm318, %v929, 0
    %v934 = vsel %vm318, %v927, 0
    %936 = vmatpush.bf16.xpose.msra.mxu0 0
    %937 = vmatpush.bf16.xpose.msra.mxu0 0
    %938 = vmatpush.bf16.xpose.msra.mxu0 0
    %939 = vmatpush.bf16.xpose.msra.mxu0 0
    %940 = vmatpush.bf16.xpose.msra.mxu0 0
    %941 = vmatpush.bf16.xpose.msra.mxu0 0
    %942 = vmatpush.bf16.xpose.msra.mxu0 0
    %943 = vmatpush.bf16.xpose.msra.mxu0 %v934
    %944 = vmatmul.bf16.gmra.mxu0 %v931
    %v945 = vpop.f32.mrf.mxu0
    %v946 = vadd.f32 0.0, %v945
    %v947 = vpop.f32.mrf.mxu0
    %948 = vdwg.mxu0
    %v949 = vsel %vm360, %v922, -1e+30
    %v950 = vsel %vm360, %v946, -1e+30
    %v951 = vsel %vm363, %v949, -inf
    %952 = vmax.xlane.f32.xlu0 %v951
    %v953 = vpop.xlane.xlu0 %952
    %v954 = vsel %vm363, %v950, -inf
    %955 = vmax.xlane.f32.xlu0 %v954
    %v956 = vpop.xlane.xlu0 %955
    %v957 = vsub.f32 %v949, %v953
    %v958 = vsub.f32 %v950, %v956
    %v959 = vmul.f32 %v957, 1.442695
    %v960 = vpow.pop %v959
    %v961 = vmul.f32 %v958, 1.442695
    %v962 = vpow.pop %v961
    %v963 = vsel %vm363, %v960, 0.0
    %964 = vadd.xlane.f32.xlu0 %v963
    %v965 = vpop.xlane.xlu0 %964
    %v966 = vsel %vm363, %v962, 0.0
    %967 = vadd.xlane.f32.xlu0 %v966
    %v968 = vpop.xlane.xlu0 %967
    %v969 = vrcp.pop %v965
    %v970 = vrcp.pop %v968
    %v971 = vmul.f32 %v960, %v969
    %v972 = vmul.f32 %v962, %v970
    %v973 = vpack.c.bf16 %v971, %v971
    %v974 = vpack.c.bf16 %v972, %v972
    %975 = vrot.lane.b32.xlu0 %v507, 48
    %v976 = vpop.permute.xlu0 %975
    %v978 = vsel %vm363, %v973, 0
    %v981 = vsel %vm391, %v976, 0
    %983 = vmatpush.bf16.msra.mxu0 0
    %984 = vmatpush.bf16.msra.mxu0 0
    %985 = vmatpush.bf16.msra.mxu0 0
    %986 = vmatpush.bf16.msra.mxu0 0
    %987 = vmatpush.bf16.msra.mxu0 0
    %988 = vmatpush.bf16.msra.mxu0 0
    %989 = vmatpush.bf16.msra.mxu0 0
    %990 = vmatpush.bf16.msra.mxu0 %v981
    %991 = vmatmul.bf16.gmra.mxu0 %v978
    %v992 = vpop.f32.mrf.mxu0
    %v993 = vadd.f32 0.0, %v992
    %v994 = vpop.f32.mrf.mxu0
    %995 = vdwg.mxu0
    %996 = vrot.lane.b32.xlu0 %v531, 48
    %v997 = vpop.permute.xlu0 %996
    %v999 = vsel %vm363, %v974, 0
    %v1002 = vsel %vm391, %v997, 0
    %1004 = vmatpush.bf16.msra.mxu0 0
    %1005 = vmatpush.bf16.msra.mxu0 0
    %1006 = vmatpush.bf16.msra.mxu0 0
    %1007 = vmatpush.bf16.msra.mxu0 0
    %1008 = vmatpush.bf16.msra.mxu0 0
    %1009 = vmatpush.bf16.msra.mxu0 0
    %1010 = vmatpush.bf16.msra.mxu0 0
    %1011 = vmatpush.bf16.msra.mxu0 %v1002
    %1012 = vmatmul.bf16.gmra.mxu0 %v999
    %v1013 = vpop.f32.mrf.mxu0
    %v1014 = vadd.f32 0.0, %v1013
    %v1015 = vpop.f32.mrf.mxu0
    %1016 = vdwg.mxu0
    %1017 = vrot.lane.b32.xlu0 %v312, 32
    %v1018 = vpop.permute.xlu0 %1017
    %v1019 = vrot.slane %v1018, 4
    %1020 = vrot.lane.b32.xlu0 %v431, 32
    %v1021 = vpop.permute.xlu0 %1020
    %v1023 = vsel %vm318, %v1021, 0
    %v1026 = vsel %vm318, %v1019, 0
    %1028 = vmatpush.bf16.xpose.msra.mxu0 0
    %1029 = vmatpush.bf16.xpose.msra.mxu0 0
    %1030 = vmatpush.bf16.xpose.msra.mxu0 0
    %1031 = vmatpush.bf16.xpose.msra.mxu0 0
    %1032 = vmatpush.bf16.xpose.msra.mxu0 0
    %1033 = vmatpush.bf16.xpose.msra.mxu0 0
    %1034 = vmatpush.bf16.xpose.msra.mxu0 0
    %1035 = vmatpush.bf16.xpose.msra.mxu0 %v1026
    %1036 = vmatmul.bf16.gmra.mxu0 %v1023
    %v1037 = vpop.f32.mrf.mxu0
    %v1038 = vadd.f32 0.0, %v1037
    %v1039 = vpop.f32.mrf.mxu0
    %1040 = vdwg.mxu0
    %1041 = vrot.lane.b32.xlu0 %v314, 32
    %v1042 = vpop.permute.xlu0 %1041
    %v1043 = vrot.slane %v1042, 4
    %1044 = vrot.lane.b32.xlu0 %v457, 32
    %v1045 = vpop.permute.xlu0 %1044
    %v1047 = vsel %vm318, %v1045, 0
    %v1050 = vsel %vm318, %v1043, 0
    %1052 = vmatpush.bf16.xpose.msra.mxu0 0
    %1053 = vmatpush.bf16.xpose.msra.mxu0 0
    %1054 = vmatpush.bf16.xpose.msra.mxu0 0
    %1055 = vmatpush.bf16.xpose.msra.mxu0 0
    %1056 = vmatpush.bf16.xpose.msra.mxu0 0
    %1057 = vmatpush.bf16.xpose.msra.mxu0 0
    %1058 = vmatpush.bf16.xpose.msra.mxu0 0
    %1059 = vmatpush.bf16.xpose.msra.mxu0 %v1050
    %1060 = vmatmul.bf16.gmra.mxu0 %v1047
    %v1061 = vpop.f32.mrf.mxu0
    %v1062 = vadd.f32 0.0, %v1061
    %v1063 = vpop.f32.mrf.mxu0
    %1064 = vdwg.mxu0
    %v1065 = vsel %vm360, %v1038, -1e+30
    %v1066 = vsel %vm360, %v1062, -1e+30
    %v1067 = vsel %vm363, %v1065, -inf
    %1068 = vmax.xlane.f32.xlu0 %v1067
    %v1069 = vpop.xlane.xlu0 %1068
    %v1070 = vsel %vm363, %v1066, -inf
    %1071 = vmax.xlane.f32.xlu0 %v1070
    %v1072 = vpop.xlane.xlu0 %1071
    %v1073 = vsub.f32 %v1065, %v1069
    %v1074 = vsub.f32 %v1066, %v1072
    %v1075 = vmul.f32 %v1073, 1.442695
    %v1076 = vpow.pop %v1075
    %v1077 = vmul.f32 %v1074, 1.442695
    %v1078 = vpow.pop %v1077
    %v1079 = vsel %vm363, %v1076, 0.0
    %1080 = vadd.xlane.f32.xlu0 %v1079
    %v1081 = vpop.xlane.xlu0 %1080
    %v1082 = vsel %vm363, %v1078, 0.0
    %1083 = vadd.xlane.f32.xlu0 %v1082
    %v1084 = vpop.xlane.xlu0 %1083
    %v1085 = vrcp.pop %v1081
    %v1086 = vrcp.pop %v1084
    %v1087 = vmul.f32 %v1076, %v1085
    %v1088 = vmul.f32 %v1078, %v1086
    %v1089 = vpack.c.bf16 %v1087, %v1087
    %v1090 = vpack.c.bf16 %v1088, %v1088
    %1091 = vrot.lane.b32.xlu0 %v507, 32
    %v1092 = vpop.permute.xlu0 %1091
    %v1094 = vsel %vm363, %v1089, 0
    %v1097 = vsel %vm391, %v1092, 0
    %1099 = vmatpush.bf16.msra.mxu0 0
    %1100 = vmatpush.bf16.msra.mxu0 0
    %1101 = vmatpush.bf16.msra.mxu0 0
    %1102 = vmatpush.bf16.msra.mxu0 0
    %1103 = vmatpush.bf16.msra.mxu0 0
    %1104 = vmatpush.bf16.msra.mxu0 0
    %1105 = vmatpush.bf16.msra.mxu0 0
    %1106 = vmatpush.bf16.msra.mxu0 %v1097
    %1107 = vmatmul.bf16.gmra.mxu0 %v1094
    %v1108 = vpop.f32.mrf.mxu0
    %v1109 = vadd.f32 0.0, %v1108
    %v1110 = vpop.f32.mrf.mxu0
    %1111 = vdwg.mxu0
    %1112 = vrot.lane.b32.xlu0 %v531, 32
    %v1113 = vpop.permute.xlu0 %1112
    %v1115 = vsel %vm363, %v1090, 0
    %v1118 = vsel %vm391, %v1113, 0
    %1120 = vmatpush.bf16.msra.mxu0 0
    %1121 = vmatpush.bf16.msra.mxu0 0
    %1122 = vmatpush.bf16.msra.mxu0 0
    %1123 = vmatpush.bf16.msra.mxu0 0
    %1124 = vmatpush.bf16.msra.mxu0 0
    %1125 = vmatpush.bf16.msra.mxu0 0
    %1126 = vmatpush.bf16.msra.mxu0 0
    %1127 = vmatpush.bf16.msra.mxu0 %v1118
    %1128 = vmatmul.bf16.gmra.mxu0 %v1115
    %v1129 = vpop.f32.mrf.mxu0
    %v1130 = vadd.f32 0.0, %v1129
    %v1131 = vpop.f32.mrf.mxu0
    %1132 = vdwg.mxu0
    %1133 = vrot.lane.b32.xlu0 %v312, 16
    %v1134 = vpop.permute.xlu0 %1133
    %v1135 = vrot.slane %v1134, 4
    %1136 = vrot.lane.b32.xlu0 %v431, 16
    %v1137 = vpop.permute.xlu0 %1136
    %v1139 = vsel %vm318, %v1137, 0
    %v1142 = vsel %vm318, %v1135, 0
    %1144 = vmatpush.bf16.xpose.msra.mxu0 0
    %1145 = vmatpush.bf16.xpose.msra.mxu0 0
    %1146 = vmatpush.bf16.xpose.msra.mxu0 0
    %1147 = vmatpush.bf16.xpose.msra.mxu0 0
    %1148 = vmatpush.bf16.xpose.msra.mxu0 0
    %1149 = vmatpush.bf16.xpose.msra.mxu0 0
    %1150 = vmatpush.bf16.xpose.msra.mxu0 0
    %1151 = vmatpush.bf16.xpose.msra.mxu0 %v1142
    %1152 = vmatmul.bf16.gmra.mxu0 %v1139
    %v1153 = vpop.f32.mrf.mxu0
    %v1154 = vadd.f32 0.0, %v1153
    %v1155 = vpop.f32.mrf.mxu0
    %1156 = vdwg.mxu0
    %1157 = vrot.lane.b32.xlu0 %v314, 16
    %v1158 = vpop.permute.xlu0 %1157
    %v1159 = vrot.slane %v1158, 4
    %1160 = vrot.lane.b32.xlu0 %v457, 16
    %v1161 = vpop.permute.xlu0 %1160
    %v1163 = vsel %vm318, %v1161, 0
    %v1166 = vsel %vm318, %v1159, 0
    %1168 = vmatpush.bf16.xpose.msra.mxu0 0
    %1169 = vmatpush.bf16.xpose.msra.mxu0 0
    %1170 = vmatpush.bf16.xpose.msra.mxu0 0
    %1171 = vmatpush.bf16.xpose.msra.mxu0 0
    %1172 = vmatpush.bf16.xpose.msra.mxu0 0
    %1173 = vmatpush.bf16.xpose.msra.mxu0 0
    %1174 = vmatpush.bf16.xpose.msra.mxu0 0
    %1175 = vmatpush.bf16.xpose.msra.mxu0 %v1166
    %1176 = vmatmul.bf16.gmra.mxu0 %v1163
    %v1177 = vpop.f32.mrf.mxu0
    %v1178 = vadd.f32 0.0, %v1177
    %v1179 = vpop.f32.mrf.mxu0
    %1180 = vdwg.mxu0
    %v1181 = vsel %vm360, %v1154, -1e+30
    %v1182 = vsel %vm360, %v1178, -1e+30
    %v1183 = vsel %vm363, %v1181, -inf
    %1184 = vmax.xlane.f32.xlu0 %v1183
    %v1185 = vpop.xlane.xlu0 %1184
    %v1186 = vsel %vm363, %v1182, -inf
    %1187 = vmax.xlane.f32.xlu0 %v1186
    %v1188 = vpop.xlane.xlu0 %1187
    %v1189 = vsub.f32 %v1181, %v1185
    %v1190 = vsub.f32 %v1182, %v1188
    %v1191 = vmul.f32 %v1189, 1.442695
    %v1192 = vpow.pop %v1191
    %v1193 = vmul.f32 %v1190, 1.442695
    %v1194 = vpow.pop %v1193
    %v1195 = vsel %vm363, %v1192, 0.0
    %1196 = vadd.xlane.f32.xlu0 %v1195
    %v1197 = vpop.xlane.xlu0 %1196
    %v1198 = vsel %vm363, %v1194, 0.0
    %1199 = vadd.xlane.f32.xlu0 %v1198
    %v1200 = vpop.xlane.xlu0 %1199
    %v1201 = vrcp.pop %v1197
    %v1202 = vrcp.pop %v1200
    %v1203 = vmul.f32 %v1192, %v1201
    %v1204 = vmul.f32 %v1194, %v1202
    %v1205 = vpack.c.bf16 %v1203, %v1203
    %v1206 = vpack.c.bf16 %v1204, %v1204
    %1207 = vrot.lane.b32.xlu0 %v507, 16
    %v1208 = vpop.permute.xlu0 %1207
    %v1210 = vsel %vm363, %v1205, 0
    %v1213 = vsel %vm391, %v1208, 0
    %1215 = vmatpush.bf16.msra.mxu0 0
    %1216 = vmatpush.bf16.msra.mxu0 0
    %1217 = vmatpush.bf16.msra.mxu0 0
    %1218 = vmatpush.bf16.msra.mxu0 0
    %1219 = vmatpush.bf16.msra.mxu0 0
    %1220 = vmatpush.bf16.msra.mxu0 0
    %1221 = vmatpush.bf16.msra.mxu0 0
    %1222 = vmatpush.bf16.msra.mxu0 %v1213
    %1223 = vmatmul.bf16.gmra.mxu0 %v1210
    %v1224 = vpop.f32.mrf.mxu0
    %v1225 = vadd.f32 0.0, %v1224
    %v1226 = vpop.f32.mrf.mxu0
    %1227 = vdwg.mxu0
    %1228 = vrot.lane.b32.xlu0 %v531, 16
    %v1229 = vpop.permute.xlu0 %1228
    %v1231 = vsel %vm363, %v1206, 0
    %v1234 = vsel %vm391, %v1229, 0
    %1236 = vmatpush.bf16.msra.mxu0 0
    %1237 = vmatpush.bf16.msra.mxu0 0
    %1238 = vmatpush.bf16.msra.mxu0 0
    %1239 = vmatpush.bf16.msra.mxu0 0
    %1240 = vmatpush.bf16.msra.mxu0 0
    %1241 = vmatpush.bf16.msra.mxu0 0
    %1242 = vmatpush.bf16.msra.mxu0 0
    %1243 = vmatpush.bf16.msra.mxu0 %v1234
    %1244 = vmatmul.bf16.gmra.mxu0 %v1231
    %v1245 = vpop.f32.mrf.mxu0
    %v1246 = vadd.f32 0.0, %v1245
    %v1247 = vpop.f32.mrf.mxu0
    %1248 = vdwg.mxu0
    %1251 = vrot.lane.b32.xlu0 %v526, 16
    %v1252 = vpop.permute.xlu0 %1251
    %1253 = vrot.lane.b32.xlu0 %v550, 16
    %v1254 = vpop.permute.xlu0 %1253
    %1259 = vrot.lane.b32.xlu0 %v645, 32
    %v1260 = vpop.permute.xlu0 %1259
    %1261 = vrot.lane.b32.xlu0 %v666, 32
    %v1262 = vpop.permute.xlu0 %1261
    %1267 = vrot.lane.b32.xlu0 %v761, 48
    %v1268 = vpop.permute.xlu0 %1267
    %1269 = vrot.lane.b32.xlu0 %v782, 48
    %v1270 = vpop.permute.xlu0 %1269
    %1275 = vrot.lane.b32.xlu0 %v877, 64
    %v1276 = vpop.permute.xlu0 %1275
    %1277 = vrot.lane.b32.xlu0 %v898, 64
    %v1278 = vpop.permute.xlu0 %1277
    %1283 = vrot.lane.b32.xlu0 %v993, 80
    %v1284 = vpop.permute.xlu0 %1283
    %1285 = vrot.lane.b32.xlu0 %v1014, 80
    %v1286 = vpop.permute.xlu0 %1285
    %1291 = vrot.lane.b32.xlu0 %v1109, 96
    %v1292 = vpop.permute.xlu0 %1291
    %1293 = vrot.lane.b32.xlu0 %v1130, 96
    %v1294 = vpop.permute.xlu0 %1293
    %1299 = vrot.lane.b32.xlu0 %v1225, 112
    %v1300 = vpop.permute.xlu0 %1299
    %1301 = vrot.lane.b32.xlu0 %v1246, 112
    %v1302 = vpop.permute.xlu0 %1301
    %v1305 = vsel %vm318, %v405, %v1252
    %v1306 = vsel %vm318, %v424, %v1254
    %vm1307 = vcmask 261120
    %v1308 = vsel %vm1307, %v1305, %v1260
    %v1309 = vsel %vm1307, %v1306, %v1262
    %vm1310 = vcmask 392192
    %v1311 = vsel %vm1310, %v1308, %v1268
    %v1312 = vsel %vm1310, %v1309, %v1270
    %v1313 = vsel %vm124, %v1311, %v1276
    %v1314 = vsel %vm124, %v1312, %v1278
    %vm1315 = vcmask 654336
    %v1316 = vsel %vm1315, %v1313, %v1284
    %v1317 = vsel %vm1315, %v1314, %v1286
    %vm1318 = vcmask 785408
    %v1319 = vsel %vm1318, %v1316, %v1292
    %v1320 = vsel %vm1318, %v1317, %v1294
    %vm1321 = vcmask 916480
    %v1322 = vsel %vm1321, %v1319, %v1300
    %v1323 = vsel %vm1321, %v1320, %v1302
    %v1324 = vpack.c.bf16 %v1323, %v1322
    %v1325 = vld [vmem:[%s4] sm:$0xf]
    %v1326 = vld [vmem:[%s4 + $0x4] sm:$0xf]
    %v1327 = vld [vmem:[%s4 + $0x8] sm:$0xf]
    %v1328 = vld [vmem:[%s4 + $0xc] sm:$0xf]
    %v1329 = vld [vmem:[%s4 + $0x10] sm:$0xf]
    %v1330 = vld [vmem:[%s4 + $0x14] sm:$0xf]
    %v1331 = vld [vmem:[%s4 + $0x18] sm:$0xf]
    %v1332 = vld [vmem:[%s4 + $0x1c] sm:$0xf]
    %v1333 = vld [vmem:[%s4 + $0x20] sm:$0xf]
    %v1334 = vld [vmem:[%s4 + $0x24] sm:$0xf]
    %v1335 = vld [vmem:[%s4 + $0x28] sm:$0xf]
    %v1336 = vld [vmem:[%s4 + $0x2c] sm:$0xf]
    %v1337 = vld [vmem:[%s4 + $0x30] sm:$0xf]
    %v1338 = vld [vmem:[%s4 + $0x34] sm:$0xf]
    %v1339 = vld [vmem:[%s4 + $0x38] sm:$0xf]
    %v1340 = vld [vmem:[%s4 + $0x3c] sm:$0xf]
    %v1341 = vld [vmem:[%s5] sm:$0x1]
    %v1343 = vperm.slane %v1341, 0
    %v1361 = vunpack.c.l.b16 %v1325
    %v1362 = vunpack.c.l.b16 %v1326
    %v1363 = vunpack.c.l.b16 %v1327
    %v1364 = vunpack.c.l.b16 %v1328
    %v1365 = vunpack.c.l.b16 %v1329
    %v1366 = vunpack.c.l.b16 %v1330
    %v1367 = vunpack.c.l.b16 %v1331
    %v1368 = vunpack.c.l.b16 %v1332
    %v1369 = vunpack.c.l.b16 %v1333
    %v1370 = vunpack.c.l.b16 %v1334
    %v1371 = vunpack.c.l.b16 %v1335
    %v1372 = vunpack.c.l.b16 %v1336
    %v1373 = vunpack.c.l.b16 %v1337
    %v1374 = vunpack.c.l.b16 %v1338
    %v1375 = vunpack.c.l.b16 %v1339
    %v1376 = vunpack.c.l.b16 %v1340
    %v1377 = vpack.c.b16 %v1362, %v1361
    %v1378 = vpack.c.b16 %v1364, %v1363
    %v1379 = vpack.c.b16 %v1366, %v1365
    %v1380 = vpack.c.b16 %v1368, %v1367
    %v1381 = vpack.c.b16 %v1370, %v1369
    %v1382 = vpack.c.b16 %v1372, %v1371
    %v1383 = vpack.c.b16 %v1374, %v1373
    %v1384 = vpack.c.b16 %v1376, %v1375
    %1393 = vmatpush.bf16.msra.mxu0 %v1384
    %1394 = vmatpush.bf16.msra.mxu0 %v1383
    %1395 = vmatpush.bf16.msra.mxu0 %v1382
    %1396 = vmatpush.bf16.msra.mxu0 %v1381
    %1397 = vmatpush.bf16.msra.mxu0 %v1380
    %1398 = vmatpush.bf16.msra.mxu0 %v1379
    %1399 = vmatpush.bf16.msra.mxu0 %v1378
    %1400 = vmatpush.bf16.msra.mxu0 %v1377
    %1401 = vmatmul.bf16.gmra.mxu0 %v1324
    %v1402 = vpop.f32.mrf.mxu0
    %v1403 = vadd.f32 %v1343, %v1402
    %v1404 = vpop.f32.mrf.mxu0
    %v1405 = vadd.f32 %v1343, %v1404
    %1406 = vdwg.mxu0
    %v1407 = vadd.f32 %v117, %v1403
    %v1408 = vadd.f32 %v118, %v1405
    %v1409 = vld [vmem:[%s8] sm:$0x1]
    %v1410 = vld [vmem:[%s9] sm:$0x1]
    %v1411 = vsel %vm124, %v1407, 0.0
    %1412 = vadd.xlane.f32.xlu0 %v1411
    %v1413 = vpop.xlane.xlu0 %1412
    %v1414 = vsel %vm124, %v1408, 0.0
    %1415 = vadd.xlane.f32.xlu0 %v1414
    %v1416 = vpop.xlane.xlu0 %1415
    %v1417 = vmul.f32 %v1413, %v137
    %v1418 = vmul.f32 %v1416, %v137
    %v1419 = vsub.f32 %v1407, %v1417
    %v1420 = vsub.f32 %v1408, %v1418
    %v1421 = vmul.f32 %v1419, %v1419
    %v1422 = vmul.f32 %v1420, %v1420
    %v1423 = vsel %vm124, %v1421, 0.0
    %1424 = vadd.xlane.f32.xlu0 %v1423
    %v1425 = vpop.xlane.xlu0 %1424
    %v1426 = vsel %vm124, %v1422, 0.0
    %1427 = vadd.xlane.f32.xlu0 %v1426
    %v1428 = vpop.xlane.xlu0 %1427
    %v1429 = vmul.f32 %v1425, %v137
    %v1430 = vmul.f32 %v1428, %v137
    %v1431 = vadd.f32 %v1429, 1e-05
    %v1432 = vadd.f32 %v1430, 1e-05
    %v1433 = vrsqrt.pop %v1431
    %v1434 = vmul.f32 %v1433, %v1431
    %v1435 = vmul.f32 %v1434, %v1433
    %v1436 = vmul.f32 0.5, %v1435
    %v1437 = vsub.f32 1.5, %v1436
    %v1438 = vmul.f32 %v1433, %v1437
    %vm1439 = vweird.f32 %v1431
    %vm1440 = vweird.f32 %v1433
    %vm1441 = vmor %vm1439, %vm1440
    %v1442 = vsel %vm1441, %v1433, %v1438
    %v1443 = vrsqrt.pop %v1432
    %v1444 = vmul.f32 %v1443, %v1432
    %v1445 = vmul.f32 %v1444, %v1443
    %v1446 = vmul.f32 0.5, %v1445
    %v1447 = vsub.f32 1.5, %v1446
    %v1448 = vmul.f32 %v1443, %v1447
    %vm1449 = vweird.f32 %v1432
    %vm1450 = vweird.f32 %v1443
    %vm1451 = vmor %vm1449, %vm1450
    %v1452 = vsel %vm1451, %v1443, %v1448
    %v1453 = vmul.f32 %v1419, %v1442
    %v1454 = vmul.f32 %v1420, %v1452
    %v1456 = vperm.slane %v1409, 0
    %v1458 = vmul.f32 %v1453, %v1456
    %v1459 = vmul.f32 %v1454, %v1456
    %v1461 = vperm.slane %v1410, 0
    %v1463 = vadd.f32 %v1458, %v1461
    %v1464 = vadd.f32 %v1459, %v1461
    %v1465 = vpack.c.bf16 %v1464, %v1463
    %v1466 = vld [vmem:[%s10] sm:$0xff]
    %v1467 = vld [vmem:[%s10 + $0x8] sm:$0xff]
    %v1468 = vld [vmem:[%s10 + $0x10] sm:$0xff]
    %v1469 = vld [vmem:[%s10 + $0x18] sm:$0xff]
    %v1470 = vld [vmem:[%s10 + $0x20] sm:$0xff]
    %v1471 = vld [vmem:[%s10 + $0x28] sm:$0xff]
    %v1472 = vld [vmem:[%s10 + $0x30] sm:$0xff]
    %v1473 = vld [vmem:[%s10 + $0x38] sm:$0xff]
    %v1474 = vld [vmem:[%s11] sm:$0x3]
    %v1476 = vperm.slane %v1474, 0
    %v1477 = vperm.slane %v1474, 1
    %v1488 = vunpack.c.l.b16 %v1466
    %v1489 = vunpack.c.h.b16 %v1466
    %v1490 = vunpack.c.l.b16 %v1467
    %v1491 = vunpack.c.h.b16 %v1467
    %v1492 = vunpack.c.l.b16 %v1468
    %v1493 = vunpack.c.h.b16 %v1468
    %v1494 = vunpack.c.l.b16 %v1469
    %v1495 = vunpack.c.h.b16 %v1469
    %v1496 = vunpack.c.l.b16 %v1470
    %v1497 = vunpack.c.h.b16 %v1470
    %v1498 = vunpack.c.l.b16 %v1471
    %v1499 = vunpack.c.h.b16 %v1471
    %v1500 = vunpack.c.l.b16 %v1472
    %v1501 = vunpack.c.h.b16 %v1472
    %v1502 = vunpack.c.l.b16 %v1473
    %v1503 = vunpack.c.h.b16 %v1473
    %v1504 = vpack.c.b16 %v1490, %v1488
    %v1505 = vpack.c.b16 %v1491, %v1489
    %v1506 = vpack.c.b16 %v1494, %v1492
    %v1507 = vpack.c.b16 %v1495, %v1493
    %v1508 = vpack.c.b16 %v1498, %v1496
    %v1509 = vpack.c.b16 %v1499, %v1497
    %v1510 = vpack.c.b16 %v1502, %v1500
    %v1511 = vpack.c.b16 %v1503, %v1501
    %v1521 = vsel %vm124, %v1465, 0
    %1523 = vmatpush.bf16.msra.mxu0 0
    %1524 = vmatpush.bf16.msra.mxu0 0
    %1525 = vmatpush.bf16.msra.mxu0 0
    %1526 = vmatpush.bf16.msra.mxu0 0
    %1527 = vmatpush.bf16.msra.mxu0 %v1510
    %1528 = vmatpush.bf16.msra.mxu0 %v1508
    %1529 = vmatpush.bf16.msra.mxu0 %v1506
    %1530 = vmatpush.bf16.msra.mxu0 %v1504
    %1531 = vmatmul.bf16.gmra.mxu0 %v1521
    %v1532 = vpop.f32.mrf.mxu0
    %v1533 = vadd.f32 %v1476, %v1532
    %v1534 = vpop.f32.mrf.mxu0
    %v1535 = vadd.f32 %v1476, %v1534
    %1536 = vdwg.mxu0
    %1537 = vmatpush.bf16.msra.mxu0 0
    %1538 = vmatpush.bf16.msra.mxu0 0
    %1539 = vmatpush.bf16.msra.mxu0 0
    %1540 = vmatpush.bf16.msra.mxu0 0
    %1541 = vmatpush.bf16.msra.mxu0 %v1511
    %1542 = vmatpush.bf16.msra.mxu0 %v1509
    %1543 = vmatpush.bf16.msra.mxu0 %v1507
    %1544 = vmatpush.bf16.msra.mxu0 %v1505
    %1545 = vmatmul.bf16.gmra.mxu0 %v1521
    %v1546 = vpop.f32.mrf.mxu0
    %v1547 = vadd.f32 %v1477, %v1546
    %v1548 = vpop.f32.mrf.mxu0
    %v1549 = vadd.f32 %v1477, %v1548
    %1550 = vdwg.mxu0
    %v1551 = vmax.f32 %v1533, 0.0
    %v1552 = vmax.f32 %v1547, 0.0
    %v1553 = vmax.f32 %v1535, 0.0
    %v1554 = vmax.f32 %v1549, 0.0
    %v1555 = vpack.c.bf16 %v1553, %v1551
    %v1556 = vpack.c.bf16 %v1554, %v1552
    %v1557 = vld [vmem:[%s12] sm:$0xf]
    %v1558 = vld [vmem:[%s12 + $0x4] sm:$0xf]
    %v1559 = vld [vmem:[%s12 + $0x8] sm:$0xf]
    %v1560 = vld [vmem:[%s12 + $0xc] sm:$0xf]
    %v1561 = vld [vmem:[%s12 + $0x10] sm:$0xf]
    %v1562 = vld [vmem:[%s12 + $0x14] sm:$0xf]
    %v1563 = vld [vmem:[%s12 + $0x18] sm:$0xf]
    %v1564 = vld [vmem:[%s12 + $0x1c] sm:$0xf]
    %v1565 = vld [vmem:[%s12 + $0x20] sm:$0xf]
    %v1566 = vld [vmem:[%s12 + $0x24] sm:$0xf]
    %v1567 = vld [vmem:[%s12 + $0x28] sm:$0xf]
    %v1568 = vld [vmem:[%s12 + $0x2c] sm:$0xf]
    %v1569 = vld [vmem:[%s12 + $0x30] sm:$0xf]
    %v1570 = vld [vmem:[%s12 + $0x34] sm:$0xf]
    %v1571 = vld [vmem:[%s12 + $0x38] sm:$0xf]
    %v1572 = vld [vmem:[%s12 + $0x3c] sm:$0xf]
    %v1573 = vld [vmem:[%s12 + $0x40] sm:$0xf]
    %v1574 = vld [vmem:[%s12 + $0x44] sm:$0xf]
    %v1575 = vld [vmem:[%s12 + $0x48] sm:$0xf]
    %v1576 = vld [vmem:[%s12 + $0x4c] sm:$0xf]
    %v1577 = vld [vmem:[%s12 + $0x50] sm:$0xf]
    %v1578 = vld [vmem:[%s12 + $0x54] sm:$0xf]
    %v1579 = vld [vmem:[%s12 + $0x58] sm:$0xf]
    %v1580 = vld [vmem:[%s12 + $0x5c] sm:$0xf]
    %v1581 = vld [vmem:[%s12 + $0x60] sm:$0xf]
    %v1582 = vld [vmem:[%s12 + $0x64] sm:$0xf]
    %v1583 = vld [vmem:[%s12 + $0x68] sm:$0xf]
    %v1584 = vld [vmem:[%s12 + $0x6c] sm:$0xf]
    %v1585 = vld [vmem:[%s12 + $0x70] sm:$0xf]
    %v1586 = vld [vmem:[%s12 + $0x74] sm:$0xf]
    %v1587 = vld [vmem:[%s12 + $0x78] sm:$0xf]
    %v1588 = vld [vmem:[%s12 + $0x7c] sm:$0xf]
    %v1589 = vld [vmem:[%s13] sm:$0x1]
    %v1591 = vperm.slane %v1589, 0
    %v1625 = vunpack.c.l.b16 %v1557
    %v1626 = vunpack.c.l.b16 %v1558
    %v1627 = vunpack.c.l.b16 %v1559
    %v1628 = vunpack.c.l.b16 %v1560
    %v1629 = vunpack.c.l.b16 %v1561
    %v1630 = vunpack.c.l.b16 %v1562
    %v1631 = vunpack.c.l.b16 %v1563
    %v1632 = vunpack.c.l.b16 %v1564
    %v1633 = vunpack.c.l.b16 %v1565
    %v1634 = vunpack.c.l.b16 %v1566
    %v1635 = vunpack.c.l.b16 %v1567
    %v1636 = vunpack.c.l.b16 %v1568
    %v1637 = vunpack.c.l.b16 %v1569
    %v1638 = vunpack.c.l.b16 %v1570
    %v1639 = vunpack.c.l.b16 %v1571
    %v1640 = vunpack.c.l.b16 %v1572
    %v1641 = vunpack.c.l.b16 %v1573
    %v1642 = vunpack.c.l.b16 %v1574
    %v1643 = vunpack.c.l.b16 %v1575
    %v1644 = vunpack.c.l.b16 %v1576
    %v1645 = vunpack.c.l.b16 %v1577
    %v1646 = vunpack.c.l.b16 %v1578
    %v1647 = vunpack.c.l.b16 %v1579
    %v1648 = vunpack.c.l.b16 %v1580
    %v1649 = vunpack.c.l.b16 %v1581
    %v1650 = vunpack.c.l.b16 %v1582
    %v1651 = vunpack.c.l.b16 %v1583
    %v1652 = vunpack.c.l.b16 %v1584
    %v1653 = vunpack.c.l.b16 %v1585
    %v1654 = vunpack.c.l.b16 %v1586
    %v1655 = vunpack.c.l.b16 %v1587
    %v1656 = vunpack.c.l.b16 %v1588
    %v1657 = vpack.c.b16 %v1626, %v1625
    %v1658 = vpack.c.b16 %v1628, %v1627
    %v1659 = vpack.c.b16 %v1630, %v1629
    %v1660 = vpack.c.b16 %v1632, %v1631
    %v1661 = vpack.c.b16 %v1634, %v1633
    %v1662 = vpack.c.b16 %v1636, %v1635
    %v1663 = vpack.c.b16 %v1638, %v1637
    %v1664 = vpack.c.b16 %v1640, %v1639
    %v1665 = vpack.c.b16 %v1642, %v1641
    %v1666 = vpack.c.b16 %v1644, %v1643
    %v1667 = vpack.c.b16 %v1646, %v1645
    %v1668 = vpack.c.b16 %v1648, %v1647
    %v1669 = vpack.c.b16 %v1650, %v1649
    %v1670 = vpack.c.b16 %v1652, %v1651
    %v1671 = vpack.c.b16 %v1654, %v1653
    %v1672 = vpack.c.b16 %v1656, %v1655
    %1689 = vmatpush.bf16.msra.mxu0 %v1664
    %1690 = vmatpush.bf16.msra.mxu0 %v1663
    %1691 = vmatpush.bf16.msra.mxu0 %v1662
    %1692 = vmatpush.bf16.msra.mxu0 %v1661
    %1693 = vmatpush.bf16.msra.mxu0 %v1660
    %1694 = vmatpush.bf16.msra.mxu0 %v1659
    %1695 = vmatpush.bf16.msra.mxu0 %v1658
    %1696 = vmatpush.bf16.msra.mxu0 %v1657
    %1697 = vmatmul.bf16.gmra.mxu0 %v1555
    %v1698 = vpop.f32.mrf.mxu0
    %v1699 = vadd.f32 %v1591, %v1698
    %v1700 = vpop.f32.mrf.mxu0
    %v1701 = vadd.f32 %v1591, %v1700
    %1702 = vdwg.mxu0
    %1703 = vmatpush.bf16.msra.mxu0 %v1672
    %1704 = vmatpush.bf16.msra.mxu0 %v1671
    %1705 = vmatpush.bf16.msra.mxu0 %v1670
    %1706 = vmatpush.bf16.msra.mxu0 %v1669
    %1707 = vmatpush.bf16.msra.mxu0 %v1668
    %1708 = vmatpush.bf16.msra.mxu0 %v1667
    %1709 = vmatpush.bf16.msra.mxu0 %v1666
    %1710 = vmatpush.bf16.msra.mxu0 %v1665
    %1711 = vmatmul.bf16.gmra.mxu0 %v1556
    %v1712 = vpop.f32.mrf.mxu0
    %v1713 = vadd.f32 %v1699, %v1712
    %v1714 = vpop.f32.mrf.mxu0
    %v1715 = vadd.f32 %v1701, %v1714
    %1716 = vdwg.mxu0
    %v1717 = vadd.f32 %v1407, %v1713
    %v1718 = vadd.f32 %v1408, %v1715
    %s1719 = scalar_lea.vmem %s6, 1
    %v1720 = vld [vmem:[%s1719] sm:$0x1]
    %s1721 = scalar_lea.vmem %s7, 1
    %v1722 = vld [vmem:[%s1721] sm:$0x1]
    %v1723 = vsel %vm124, %v1717, 0.0
    %1724 = vadd.xlane.f32.xlu0 %v1723
    %v1725 = vpop.xlane.xlu0 %1724
    %v1726 = vsel %vm124, %v1718, 0.0
    %1727 = vadd.xlane.f32.xlu0 %v1726
    %v1728 = vpop.xlane.xlu0 %1727
    %v1729 = vmul.f32 %v1725, %v137
    %v1730 = vmul.f32 %v1728, %v137
    %v1731 = vsub.f32 %v1717, %v1729
    %v1732 = vsub.f32 %v1718, %v1730
    %v1733 = vmul.f32 %v1731, %v1731
    %v1734 = vmul.f32 %v1732, %v1732
    %v1735 = vsel %vm124, %v1733, 0.0
    %1736 = vadd.xlane.f32.xlu0 %v1735
    %v1737 = vpop.xlane.xlu0 %1736
    %v1738 = vsel %vm124, %v1734, 0.0
    %1739 = vadd.xlane.f32.xlu0 %v1738
    %v1740 = vpop.xlane.xlu0 %1739
    %v1741 = vmul.f32 %v1737, %v137
    %v1742 = vmul.f32 %v1740, %v137
    %v1743 = vadd.f32 %v1741, 1e-05
    %v1744 = vadd.f32 %v1742, 1e-05
    %v1745 = vrsqrt.pop %v1743
    %v1746 = vmul.f32 %v1745, %v1743
    %v1747 = vmul.f32 %v1746, %v1745
    %v1748 = vmul.f32 0.5, %v1747
    %v1749 = vsub.f32 1.5, %v1748
    %v1750 = vmul.f32 %v1745, %v1749
    %vm1751 = vweird.f32 %v1743
    %vm1752 = vweird.f32 %v1745
    %vm1753 = vmor %vm1751, %vm1752
    %v1754 = vsel %vm1753, %v1745, %v1750
    %v1755 = vrsqrt.pop %v1744
    %v1756 = vmul.f32 %v1755, %v1744
    %v1757 = vmul.f32 %v1756, %v1755
    %v1758 = vmul.f32 0.5, %v1757
    %v1759 = vsub.f32 1.5, %v1758
    %v1760 = vmul.f32 %v1755, %v1759
    %vm1761 = vweird.f32 %v1744
    %vm1762 = vweird.f32 %v1755
    %vm1763 = vmor %vm1761, %vm1762
    %v1764 = vsel %vm1763, %v1755, %v1760
    %v1765 = vmul.f32 %v1731, %v1754
    %v1766 = vmul.f32 %v1732, %v1764
    %v1768 = vperm.slane %v1720, 0
    %v1770 = vmul.f32 %v1765, %v1768
    %v1771 = vmul.f32 %v1766, %v1768
    %v1773 = vperm.slane %v1722, 0
    %v1775 = vadd.f32 %v1770, %v1773
    %v1776 = vadd.f32 %v1771, %v1773
    %v1777 = vpack.c.bf16 %v1776, %v1775
    %s1778 = scalar_lea.vmem %s3, 96
    %v1779 = vld [vmem:[%s1778] sm:$0xff]
    %v1780 = vld [vmem:[%s1778 + $0x8] sm:$0xf]
    %v1781 = vld [vmem:[%s1778 + $0xc] sm:$0xff]
    %v1782 = vld [vmem:[%s1778 + $0x14] sm:$0xf]
    %v1783 = vld [vmem:[%s1778 + $0x18] sm:$0xff]
    %v1784 = vld [vmem:[%s1778 + $0x20] sm:$0xf]
    %v1785 = vld [vmem:[%s1778 + $0x24] sm:$0xff]
    %v1786 = vld [vmem:[%s1778 + $0x2c] sm:$0xf]
    %v1787 = vld [vmem:[%s1778 + $0x30] sm:$0xff]
    %v1788 = vld [vmem:[%s1778 + $0x38] sm:$0xf]
    %v1789 = vld [vmem:[%s1778 + $0x3c] sm:$0xff]
    %v1790 = vld [vmem:[%s1778 + $0x44] sm:$0xf]
    %v1791 = vld [vmem:[%s1778 + $0x48] sm:$0xff]
    %v1792 = vld [vmem:[%s1778 + $0x50] sm:$0xf]
    %v1793 = vld [vmem:[%s1778 + $0x54] sm:$0xff]
    %v1794 = vld [vmem:[%s1778 + $0x5c] sm:$0xf]
    %v1811 = vunpack.c.l.b16 %v1779
    %v1812 = vunpack.c.h.b16 %v1779
    %v1813 = vunpack.c.l.b16 %v1780
    %v1814 = vunpack.c.l.b16 %v1781
    %v1815 = vunpack.c.h.b16 %v1781
    %v1816 = vunpack.c.l.b16 %v1782
    %v1817 = vunpack.c.l.b16 %v1783
    %v1818 = vunpack.c.h.b16 %v1783
    %v1819 = vunpack.c.l.b16 %v1784
    %v1820 = vunpack.c.l.b16 %v1785
    %v1821 = vunpack.c.h.b16 %v1785
    %v1822 = vunpack.c.l.b16 %v1786
    %v1823 = vunpack.c.l.b16 %v1787
    %v1824 = vunpack.c.h.b16 %v1787
    %v1825 = vunpack.c.l.b16 %v1788
    %v1826 = vunpack.c.l.b16 %v1789
    %v1827 = vunpack.c.h.b16 %v1789
    %v1828 = vunpack.c.l.b16 %v1790
    %v1829 = vunpack.c.l.b16 %v1791
    %v1830 = vunpack.c.h.b16 %v1791
    %v1831 = vunpack.c.l.b16 %v1792
    %v1832 = vunpack.c.l.b16 %v1793
    %v1833 = vunpack.c.h.b16 %v1793
    %v1834 = vunpack.c.l.b16 %v1794
    %v1835 = vpack.c.b16 %v1814, %v1811
    %v1836 = vpack.c.b16 %v1815, %v1812
    %v1837 = vpack.c.b16 %v1816, %v1813
    %v1838 = vpack.c.b16 %v1820, %v1817
    %v1839 = vpack.c.b16 %v1821, %v1818
    %v1840 = vpack.c.b16 %v1822, %v1819
    %v1841 = vpack.c.b16 %v1826, %v1823
    %v1842 = vpack.c.b16 %v1827, %v1824
    %v1843 = vpack.c.b16 %v1828, %v1825
    %v1844 = vpack.c.b16 %v1832, %v1829
    %v1845 = vpack.c.b16 %v1833, %v1830
    %v1846 = vpack.c.b16 %v1834, %v1831
    %v1860 = vsel %vm124, %v1777, 0
    %1862 = vmatpush.bf16.msra.mxu0 0
    %1863 = vmatpush.bf16.msra.mxu0 0
    %1864 = vmatpush.bf16.msra.mxu0 0
    %1865 = vmatpush.bf16.msra.mxu0 0
    %1866 = vmatpush.bf16.msra.mxu0 %v1844
    %1867 = vmatpush.bf16.msra.mxu0 %v1841
    %1868 = vmatpush.bf16.msra.mxu0 %v1838
    %1869 = vmatpush.bf16.msra.mxu0 %v1835
    %1870 = vmatmul.bf16.gmra.mxu0 %v1860
    %v1871 = vpop.f32.mrf.mxu0
    %v1872 = vadd.f32 0.0, %v1871
    %v1873 = vpop.f32.mrf.mxu0
    %v1874 = vadd.f32 0.0, %v1873
    %1875 = vdwg.mxu0
    %1876 = vmatpush.bf16.msra.mxu0 0
    %1877 = vmatpush.bf16.msra.mxu0 0
    %1878 = vmatpush.bf16.msra.mxu0 0
    %1879 = vmatpush.bf16.msra.mxu0 0
    %1880 = vmatpush.bf16.msra.mxu0 %v1845
    %1881 = vmatpush.bf16.msra.mxu0 %v1842
    %1882 = vmatpush.bf16.msra.mxu0 %v1839
    %1883 = vmatpush.bf16.msra.mxu0 %v1836
    %1884 = vmatmul.bf16.gmra.mxu0 %v1860
    %v1885 = vpop.f32.mrf.mxu0
    %v1886 = vadd.f32 0.0, %v1885
    %v1887 = vpop.f32.mrf.mxu0
    %v1888 = vadd.f32 0.0, %v1887
    %1889 = vdwg.mxu0
    %1890 = vmatpush.bf16.msra.mxu0 0
    %1891 = vmatpush.bf16.msra.mxu0 0
    %1892 = vmatpush.bf16.msra.mxu0 0
    %1893 = vmatpush.bf16.msra.mxu0 0
    %1894 = vmatpush.bf16.msra.mxu0 %v1846
    %1895 = vmatpush.bf16.msra.mxu0 %v1843
    %1896 = vmatpush.bf16.msra.mxu0 %v1840
    %1897 = vmatpush.bf16.msra.mxu0 %v1837
    %1898 = vmatmul.bf16.gmra.mxu0 %v1860
    %v1899 = vpop.f32.mrf.mxu0
    %v1900 = vadd.f32 0.0, %v1899
    %v1901 = vpop.f32.mrf.mxu0
    %v1902 = vadd.f32 0.0, %v1901
    %1903 = vdwg.mxu0
    %v1904 = vpack.c.bf16 %v1886, %v1872
    %v1905 = vpack.c.bf16 %v1900, %v1900
    %v1906 = vpack.c.bf16 %v1888, %v1874
    %v1907 = vpack.c.bf16 %v1902, %v1902
    %v1909 = vrot.slane %v1904, 4
    %v1911 = vsel %vm318, %v1904, 0
    %v1914 = vsel %vm318, %v1909, 0
    %1916 = vmatpush.bf16.xpose.msra.mxu0 0
    %1917 = vmatpush.bf16.xpose.msra.mxu0 0
    %1918 = vmatpush.bf16.xpose.msra.mxu0 0
    %1919 = vmatpush.bf16.xpose.msra.mxu0 0
    %1920 = vmatpush.bf16.xpose.msra.mxu0 0
    %1921 = vmatpush.bf16.xpose.msra.mxu0 0
    %1922 = vmatpush.bf16.xpose.msra.mxu0 0
    %1923 = vmatpush.bf16.xpose.msra.mxu0 %v1914
    %1924 = vmatmul.bf16.gmra.mxu0 %v1911
    %v1925 = vpop.f32.mrf.mxu0
    %v1926 = vadd.f32 0.0, %v1925
    %v1927 = vpop.f32.mrf.mxu0
    %1928 = vdwg.mxu0
    %v1930 = vrot.slane %v1906, 4
    %v1932 = vsel %vm318, %v1906, 0
    %v1935 = vsel %vm318, %v1930, 0
    %1937 = vmatpush.bf16.xpose.msra.mxu0 0
    %1938 = vmatpush.bf16.xpose.msra.mxu0 0
    %1939 = vmatpush.bf16.xpose.msra.mxu0 0
    %1940 = vmatpush.bf16.xpose.msra.mxu0 0
    %1941 = vmatpush.bf16.xpose.msra.mxu0 0
    %1942 = vmatpush.bf16.xpose.msra.mxu0 0
    %1943 = vmatpush.bf16.xpose.msra.mxu0 0
    %1944 = vmatpush.bf16.xpose.msra.mxu0 %v1935
    %1945 = vmatmul.bf16.gmra.mxu0 %v1932
    %v1946 = vpop.f32.mrf.mxu0
    %v1947 = vadd.f32 0.0, %v1946
    %v1948 = vpop.f32.mrf.mxu0
    %1949 = vdwg.mxu0
    %v1950 = vsel %vm360, %v1926, -1e+30
    %v1951 = vsel %vm360, %v1947, -1e+30
    %v1952 = vsel %vm363, %v1950, -inf
    %1953 = vmax.xlane.f32.xlu0 %v1952
    %v1954 = vpop.xlane.xlu0 %1953
    %v1955 = vsel %vm363, %v1951, -inf
    %1956 = vmax.xlane.f32.xlu0 %v1955
    %v1957 = vpop.xlane.xlu0 %1956
    %v1958 = vsub.f32 %v1950, %v1954
    %v1959 = vsub.f32 %v1951, %v1957
    %v1960 = vmul.f32 %v1958, 1.442695
    %v1961 = vpow.pop %v1960
    %v1962 = vmul.f32 %v1959, 1.442695
    %v1963 = vpow.pop %v1962
    %v1964 = vsel %vm363, %v1961, 0.0
    %1965 = vadd.xlane.f32.xlu0 %v1964
    %v1966 = vpop.xlane.xlu0 %1965
    %v1967 = vsel %vm363, %v1963, 0.0
    %1968 = vadd.xlane.f32.xlu0 %v1967
    %v1969 = vpop.xlane.xlu0 %1968
    %v1970 = vrcp.pop %v1966
    %v1971 = vrcp.pop %v1969
    %v1972 = vmul.f32 %v1961, %v1970
    %v1973 = vmul.f32 %v1963, %v1971
    %v1974 = vpack.c.bf16 %v1972, %v1972
    %v1975 = vpack.c.bf16 %v1973, %v1973
    %v1977 = vsel %vm363, %v1974, 0
    %v1980 = vsel %vm391, %v1905, 0
    %1982 = vmatpush.bf16.msra.mxu0 0
    %1983 = vmatpush.bf16.msra.mxu0 0
    %1984 = vmatpush.bf16.msra.mxu0 0
    %1985 = vmatpush.bf16.msra.mxu0 0
    %1986 = vmatpush.bf16.msra.mxu0 0
    %1987 = vmatpush.bf16.msra.mxu0 0
    %1988 = vmatpush.bf16.msra.mxu0 0
    %1989 = vmatpush.bf16.msra.mxu0 %v1980
    %1990 = vmatmul.bf16.gmra.mxu0 %v1977
    %v1991 = vpop.f32.mrf.mxu0
    %v1992 = vadd.f32 0.0, %v1991
    %v1993 = vpop.f32.mrf.mxu0
    %1994 = vdwg.mxu0
    %v1996 = vsel %vm363, %v1975, 0
    %v1999 = vsel %vm391, %v1907, 0
    %2001 = vmatpush.bf16.msra.mxu0 0
    %2002 = vmatpush.bf16.msra.mxu0 0
    %2003 = vmatpush.bf16.msra.mxu0 0
    %2004 = vmatpush.bf16.msra.mxu0 0
    %2005 = vmatpush.bf16.msra.mxu0 0
    %2006 = vmatpush.bf16.msra.mxu0 0
    %2007 = vmatpush.bf16.msra.mxu0 0
    %2008 = vmatpush.bf16.msra.mxu0 %v1999
    %2009 = vmatmul.bf16.gmra.mxu0 %v1996
    %v2010 = vpop.f32.mrf.mxu0
    %v2011 = vadd.f32 0.0, %v2010
    %v2012 = vpop.f32.mrf.mxu0
    %2013 = vdwg.mxu0
    %2014 = vrot.lane.b32.xlu0 %v1904, 112
    %v2015 = vpop.permute.xlu0 %2014
    %v2016 = vrot.slane %v2015, 4
    %v2017 = vunpack.c.l.b16 %v1904
    %v2018 = vpack.c.b16 %v2017, %v2017
    %2019 = vrot.lane.b32.xlu0 %v2018, 112
    %v2020 = vpop.permute.xlu0 %2019
    %v2022 = vsel %vm318, %v2020, 0
    %v2025 = vsel %vm318, %v2016, 0
    %2027 = vmatpush.bf16.xpose.msra.mxu0 0
    %2028 = vmatpush.bf16.xpose.msra.mxu0 0
    %2029 = vmatpush.bf16.xpose.msra.mxu0 0
    %2030 = vmatpush.bf16.xpose.msra.mxu0 0
    %2031 = vmatpush.bf16.xpose.msra.mxu0 0
    %2032 = vmatpush.bf16.xpose.msra.mxu0 0
    %2033 = vmatpush.bf16.xpose.msra.mxu0 0
    %2034 = vmatpush.bf16.xpose.msra.mxu0 %v2025
    %2035 = vmatmul.bf16.gmra.mxu0 %v2022
    %v2036 = vpop.f32.mrf.mxu0
    %v2037 = vadd.f32 0.0, %v2036
    %v2038 = vpop.f32.mrf.mxu0
    %2039 = vdwg.mxu0
    %2040 = vrot.lane.b32.xlu0 %v1906, 112
    %v2041 = vpop.permute.xlu0 %2040
    %v2042 = vrot.slane %v2041, 4
    %v2043 = vunpack.c.l.b16 %v1906
    %v2044 = vpack.c.b16 %v2043, %v2043
    %2045 = vrot.lane.b32.xlu0 %v2044, 112
    %v2046 = vpop.permute.xlu0 %2045
    %v2048 = vsel %vm318, %v2046, 0
    %v2051 = vsel %vm318, %v2042, 0
    %2053 = vmatpush.bf16.xpose.msra.mxu0 0
    %2054 = vmatpush.bf16.xpose.msra.mxu0 0
    %2055 = vmatpush.bf16.xpose.msra.mxu0 0
    %2056 = vmatpush.bf16.xpose.msra.mxu0 0
    %2057 = vmatpush.bf16.xpose.msra.mxu0 0
    %2058 = vmatpush.bf16.xpose.msra.mxu0 0
    %2059 = vmatpush.bf16.xpose.msra.mxu0 0
    %2060 = vmatpush.bf16.xpose.msra.mxu0 %v2051
    %2061 = vmatmul.bf16.gmra.mxu0 %v2048
    %v2062 = vpop.f32.mrf.mxu0
    %v2063 = vadd.f32 0.0, %v2062
    %v2064 = vpop.f32.mrf.mxu0
    %2065 = vdwg.mxu0
    %v2066 = vsel %vm360, %v2037, -1e+30
    %v2067 = vsel %vm360, %v2063, -1e+30
    %v2068 = vsel %vm363, %v2066, -inf
    %2069 = vmax.xlane.f32.xlu0 %v2068
    %v2070 = vpop.xlane.xlu0 %2069
    %v2071 = vsel %vm363, %v2067, -inf
    %2072 = vmax.xlane.f32.xlu0 %v2071
    %v2073 = vpop.xlane.xlu0 %2072
    %v2074 = vsub.f32 %v2066, %v2070
    %v2075 = vsub.f32 %v2067, %v2073
    %v2076 = vmul.f32 %v2074, 1.442695
    %v2077 = vpow.pop %v2076
    %v2078 = vmul.f32 %v2075, 1.442695
    %v2079 = vpow.pop %v2078
    %v2080 = vsel %vm363, %v2077, 0.0
    %2081 = vadd.xlane.f32.xlu0 %v2080
    %v2082 = vpop.xlane.xlu0 %2081
    %v2083 = vsel %vm363, %v2079, 0.0
    %2084 = vadd.xlane.f32.xlu0 %v2083
    %v2085 = vpop.xlane.xlu0 %2084
    %v2086 = vrcp.pop %v2082
    %v2087 = vrcp.pop %v2085
    %v2088 = vmul.f32 %v2077, %v2086
    %v2089 = vmul.f32 %v2079, %v2087
    %v2090 = vpack.c.bf16 %v2088, %v2088
    %v2091 = vpack.c.bf16 %v2089, %v2089
    %v2093 = vunpack.c.l.b16 %v1905
    %v2094 = vpack.c.b16 %v2093, %v2093
    %2095 = vrot.lane.b32.xlu0 %v2094, 112
    %v2096 = vpop.permute.xlu0 %2095
    %v2098 = vsel %vm363, %v2090, 0
    %v2101 = vsel %vm391, %v2096, 0
    %2103 = vmatpush.bf16.msra.mxu0 0
    %2104 = vmatpush.bf16.msra.mxu0 0
    %2105 = vmatpush.bf16.msra.mxu0 0
    %2106 = vmatpush.bf16.msra.mxu0 0
    %2107 = vmatpush.bf16.msra.mxu0 0
    %2108 = vmatpush.bf16.msra.mxu0 0
    %2109 = vmatpush.bf16.msra.mxu0 0
    %2110 = vmatpush.bf16.msra.mxu0 %v2101
    %2111 = vmatmul.bf16.gmra.mxu0 %v2098
    %v2112 = vpop.f32.mrf.mxu0
    %v2113 = vadd.f32 0.0, %v2112
    %v2114 = vpop.f32.mrf.mxu0
    %2115 = vdwg.mxu0
    %v2117 = vunpack.c.l.b16 %v1907
    %v2118 = vpack.c.b16 %v2117, %v2117
    %2119 = vrot.lane.b32.xlu0 %v2118, 112
    %v2120 = vpop.permute.xlu0 %2119
    %v2122 = vsel %vm363, %v2091, 0
    %v2125 = vsel %vm391, %v2120, 0
    %2127 = vmatpush.bf16.msra.mxu0 0
    %2128 = vmatpush.bf16.msra.mxu0 0
    %2129 = vmatpush.bf16.msra.mxu0 0
    %2130 = vmatpush.bf16.msra.mxu0 0
    %2131 = vmatpush.bf16.msra.mxu0 0
    %2132 = vmatpush.bf16.msra.mxu0 0
    %2133 = vmatpush.bf16.msra.mxu0 0
    %2134 = vmatpush.bf16.msra.mxu0 %v2125
    %2135 = vmatmul.bf16.gmra.mxu0 %v2122
    %v2136 = vpop.f32.mrf.mxu0
    %v2137 = vadd.f32 0.0, %v2136
    %v2138 = vpop.f32.mrf.mxu0
    %2139 = vdwg.mxu0
    %2140 = vrot.lane.b32.xlu0 %v1904, 96
    %v2141 = vpop.permute.xlu0 %2140
    %v2142 = vrot.slane %v2141, 4
    %2143 = vrot.lane.b32.xlu0 %v2018, 96
    %v2144 = vpop.permute.xlu0 %2143
    %v2146 = vsel %vm318, %v2144, 0
    %v2149 = vsel %vm318, %v2142, 0
    %2151 = vmatpush.bf16.xpose.msra.mxu0 0
    %2152 = vmatpush.bf16.xpose.msra.mxu0 0
    %2153 = vmatpush.bf16.xpose.msra.mxu0 0
    %2154 = vmatpush.bf16.xpose.msra.mxu0 0
    %2155 = vmatpush.bf16.xpose.msra.mxu0 0
    %2156 = vmatpush.bf16.xpose.msra.mxu0 0
    %2157 = vmatpush.bf16.xpose.msra.mxu0 0
    %2158 = vmatpush.bf16.xpose.msra.mxu0 %v2149
    %2159 = vmatmul.bf16.gmra.mxu0 %v2146
    %v2160 = vpop.f32.mrf.mxu0
    %v2161 = vadd.f32 0.0, %v2160
    %v2162 = vpop.f32.mrf.mxu0
    %2163 = vdwg.mxu0
    %2164 = vrot.lane.b32.xlu0 %v1906, 96
    %v2165 = vpop.permute.xlu0 %2164
    %v2166 = vrot.slane %v2165, 4
    %2167 = vrot.lane.b32.xlu0 %v2044, 96
    %v2168 = vpop.permute.xlu0 %2167
    %v2170 = vsel %vm318, %v2168, 0
    %v2173 = vsel %vm318, %v2166, 0
    %2175 = vmatpush.bf16.xpose.msra.mxu0 0
    %2176 = vmatpush.bf16.xpose.msra.mxu0 0
    %2177 = vmatpush.bf16.xpose.msra.mxu0 0
    %2178 = vmatpush.bf16.xpose.msra.mxu0 0
    %2179 = vmatpush.bf16.xpose.msra.mxu0 0
    %2180 = vmatpush.bf16.xpose.msra.mxu0 0
    %2181 = vmatpush.bf16.xpose.msra.mxu0 0
    %2182 = vmatpush.bf16.xpose.msra.mxu0 %v2173
    %2183 = vmatmul.bf16.gmra.mxu0 %v2170
    %v2184 = vpop.f32.mrf.mxu0
    %v2185 = vadd.f32 0.0, %v2184
    %v2186 = vpop.f32.mrf.mxu0
    %2187 = vdwg.mxu0
    %v2188 = vsel %vm360, %v2161, -1e+30
    %v2189 = vsel %vm360, %v2185, -1e+30
    %v2190 = vsel %vm363, %v2188, -inf
    %2191 = vmax.xlane.f32.xlu0 %v2190
    %v2192 = vpop.xlane.xlu0 %2191
    %v2193 = vsel %vm363, %v2189, -inf
    %2194 = vmax.xlane.f32.xlu0 %v2193
    %v2195 = vpop.xlane.xlu0 %2194
    %v2196 = vsub.f32 %v2188, %v2192
    %v2197 = vsub.f32 %v2189, %v2195
    %v2198 = vmul.f32 %v2196, 1.442695
    %v2199 = vpow.pop %v2198
    %v2200 = vmul.f32 %v2197, 1.442695
    %v2201 = vpow.pop %v2200
    %v2202 = vsel %vm363, %v2199, 0.0
    %2203 = vadd.xlane.f32.xlu0 %v2202
    %v2204 = vpop.xlane.xlu0 %2203
    %v2205 = vsel %vm363, %v2201, 0.0
    %2206 = vadd.xlane.f32.xlu0 %v2205
    %v2207 = vpop.xlane.xlu0 %2206
    %v2208 = vrcp.pop %v2204
    %v2209 = vrcp.pop %v2207
    %v2210 = vmul.f32 %v2199, %v2208
    %v2211 = vmul.f32 %v2201, %v2209
    %v2212 = vpack.c.bf16 %v2210, %v2210
    %v2213 = vpack.c.bf16 %v2211, %v2211
    %2214 = vrot.lane.b32.xlu0 %v2094, 96
    %v2215 = vpop.permute.xlu0 %2214
    %v2217 = vsel %vm363, %v2212, 0
    %v2220 = vsel %vm391, %v2215, 0
    %2222 = vmatpush.bf16.msra.mxu0 0
    %2223 = vmatpush.bf16.msra.mxu0 0
    %2224 = vmatpush.bf16.msra.mxu0 0
    %2225 = vmatpush.bf16.msra.mxu0 0
    %2226 = vmatpush.bf16.msra.mxu0 0
    %2227 = vmatpush.bf16.msra.mxu0 0
    %2228 = vmatpush.bf16.msra.mxu0 0
    %2229 = vmatpush.bf16.msra.mxu0 %v2220
    %2230 = vmatmul.bf16.gmra.mxu0 %v2217
    %v2231 = vpop.f32.mrf.mxu0
    %v2232 = vadd.f32 0.0, %v2231
    %v2233 = vpop.f32.mrf.mxu0
    %2234 = vdwg.mxu0
    %2235 = vrot.lane.b32.xlu0 %v2118, 96
    %v2236 = vpop.permute.xlu0 %2235
    %v2238 = vsel %vm363, %v2213, 0
    %v2241 = vsel %vm391, %v2236, 0
    %2243 = vmatpush.bf16.msra.mxu0 0
    %2244 = vmatpush.bf16.msra.mxu0 0
    %2245 = vmatpush.bf16.msra.mxu0 0
    %2246 = vmatpush.bf16.msra.mxu0 0
    %2247 = vmatpush.bf16.msra.mxu0 0
    %2248 = vmatpush.bf16.msra.mxu0 0
    %2249 = vmatpush.bf16.msra.mxu0 0
    %2250 = vmatpush.bf16.msra.mxu0 %v2241
    %2251 = vmatmul.bf16.gmra.mxu0 %v2238
    %v2252 = vpop.f32.mrf.mxu0
    %v2253 = vadd.f32 0.0, %v2252
    %v2254 = vpop.f32.mrf.mxu0
    %2255 = vdwg.mxu0
    %2256 = vrot.lane.b32.xlu0 %v1904, 80
    %v2257 = vpop.permute.xlu0 %2256
    %v2258 = vrot.slane %v2257, 4
    %2259 = vrot.lane.b32.xlu0 %v2018, 80
    %v2260 = vpop.permute.xlu0 %2259
    %v2262 = vsel %vm318, %v2260, 0
    %v2265 = vsel %vm318, %v2258, 0
    %2267 = vmatpush.bf16.xpose.msra.mxu0 0
    %2268 = vmatpush.bf16.xpose.msra.mxu0 0
    %2269 = vmatpush.bf16.xpose.msra.mxu0 0
    %2270 = vmatpush.bf16.xpose.msra.mxu0 0
    %2271 = vmatpush.bf16.xpose.msra.mxu0 0
    %2272 = vmatpush.bf16.xpose.msra.mxu0 0
    %2273 = vmatpush.bf16.xpose.msra.mxu0 0
    %2274 = vmatpush.bf16.xpose.msra.mxu0 %v2265
    %2275 = vmatmul.bf16.gmra.mxu0 %v2262
    %v2276 = vpop.f32.mrf.mxu0
    %v2277 = vadd.f32 0.0, %v2276
    %v2278 = vpop.f32.mrf.mxu0
    %2279 = vdwg.mxu0
    %2280 = vrot.lane.b32.xlu0 %v1906, 80
    %v2281 = vpop.permute.xlu0 %2280
    %v2282 = vrot.slane %v2281, 4
    %2283 = vrot.lane.b32.xlu0 %v2044, 80
    %v2284 = vpop.permute.xlu0 %2283
    %v2286 = vsel %vm318, %v2284, 0
    %v2289 = vsel %vm318, %v2282, 0
    %2291 = vmatpush.bf16.xpose.msra.mxu0 0
    %2292 = vmatpush.bf16.xpose.msra.mxu0 0
    %2293 = vmatpush.bf16.xpose.msra.mxu0 0
    %2294 = vmatpush.bf16.xpose.msra.mxu0 0
    %2295 = vmatpush.bf16.xpose.msra.mxu0 0
    %2296 = vmatpush.bf16.xpose.msra.mxu0 0
    %2297 = vmatpush.bf16.xpose.msra.mxu0 0
    %2298 = vmatpush.bf16.xpose.msra.mxu0 %v2289
    %2299 = vmatmul.bf16.gmra.mxu0 %v2286
    %v2300 = vpop.f32.mrf.mxu0
    %v2301 = vadd.f32 0.0, %v2300
    %v2302 = vpop.f32.mrf.mxu0
    %2303 = vdwg.mxu0
    %v2304 = vsel %vm360, %v2277, -1e+30
    %v2305 = vsel %vm360, %v2301, -1e+30
    %v2306 = vsel %vm363, %v2304, -inf
    %2307 = vmax.xlane.f32.xlu0 %v2306
    %v2308 = vpop.xlane.xlu0 %2307
    %v2309 = vsel %vm363, %v2305, -inf
    %2310 = vmax.xlane.f32.xlu0 %v2309
    %v2311 = vpop.xlane.xlu0 %2310
    %v2312 = vsub.f32 %v2304, %v2308
    %v2313 = vsub.f32 %v2305, %v2311
    %v2314 = vmul.f32 %v2312, 1.442695
    %v2315 = vpow.pop %v2314
    %v2316 = vmul.f32 %v2313, 1.442695
    %v2317 = vpow.pop %v2316
    %v2318 = vsel %vm363, %v2315, 0.0
    %2319 = vadd.xlane.f32.xlu0 %v2318
    %v2320 = vpop.xlane.xlu0 %2319
    %v2321 = vsel %vm363, %v2317, 0.0
    %2322 = vadd.xlane.f32.xlu0 %v2321
    %v2323 = vpop.xlane.xlu0 %2322
    %v2324 = vrcp.pop %v2320
    %v2325 = vrcp.pop %v2323
    %v2326 = vmul.f32 %v2315, %v2324
    %v2327 = vmul.f32 %v2317, %v2325
    %v2328 = vpack.c.bf16 %v2326, %v2326
    %v2329 = vpack.c.bf16 %v2327, %v2327
    %2330 = vrot.lane.b32.xlu0 %v2094, 80
    %v2331 = vpop.permute.xlu0 %2330
    %v2333 = vsel %vm363, %v2328, 0
    %v2336 = vsel %vm391, %v2331, 0
    %2338 = vmatpush.bf16.msra.mxu0 0
    %2339 = vmatpush.bf16.msra.mxu0 0
    %2340 = vmatpush.bf16.msra.mxu0 0
    %2341 = vmatpush.bf16.msra.mxu0 0
    %2342 = vmatpush.bf16.msra.mxu0 0
    %2343 = vmatpush.bf16.msra.mxu0 0
    %2344 = vmatpush.bf16.msra.mxu0 0
    %2345 = vmatpush.bf16.msra.mxu0 %v2336
    %2346 = vmatmul.bf16.gmra.mxu0 %v2333
    %v2347 = vpop.f32.mrf.mxu0
    %v2348 = vadd.f32 0.0, %v2347
    %v2349 = vpop.f32.mrf.mxu0
    %2350 = vdwg.mxu0
    %2351 = vrot.lane.b32.xlu0 %v2118, 80
    %v2352 = vpop.permute.xlu0 %2351
    %v2354 = vsel %vm363, %v2329, 0
    %v2357 = vsel %vm391, %v2352, 0
    %2359 = vmatpush.bf16.msra.mxu0 0
    %2360 = vmatpush.bf16.msra.mxu0 0
    %2361 = vmatpush.bf16.msra.mxu0 0
    %2362 = vmatpush.bf16.msra.mxu0 0
    %2363 = vmatpush.bf16.msra.mxu0 0
    %2364 = vmatpush.bf16.msra.mxu0 0
    %2365 = vmatpush.bf16.msra.mxu0 0
    %2366 = vmatpush.bf16.msra.mxu0 %v2357
    %2367 = vmatmul.bf16.gmra.mxu0 %v2354
    %v2368 = vpop.f32.mrf.mxu0
    %v2369 = vadd.f32 0.0, %v2368
    %v2370 = vpop.f32.mrf.mxu0
    %2371 = vdwg.mxu0
    %2372 = vrot.lane.b32.xlu0 %v1904, 64
    %v2373 = vpop.permute.xlu0 %2372
    %v2374 = vrot.slane %v2373, 4
    %2375 = vrot.lane.b32.xlu0 %v2018, 64
    %v2376 = vpop.permute.xlu0 %2375
    %v2378 = vsel %vm318, %v2376, 0
    %v2381 = vsel %vm318, %v2374, 0
    %2383 = vmatpush.bf16.xpose.msra.mxu0 0
    %2384 = vmatpush.bf16.xpose.msra.mxu0 0
    %2385 = vmatpush.bf16.xpose.msra.mxu0 0
    %2386 = vmatpush.bf16.xpose.msra.mxu0 0
    %2387 = vmatpush.bf16.xpose.msra.mxu0 0
    %2388 = vmatpush.bf16.xpose.msra.mxu0 0
    %2389 = vmatpush.bf16.xpose.msra.mxu0 0
    %2390 = vmatpush.bf16.xpose.msra.mxu0 %v2381
    %2391 = vmatmul.bf16.gmra.mxu0 %v2378
    %v2392 = vpop.f32.mrf.mxu0
    %v2393 = vadd.f32 0.0, %v2392
    %v2394 = vpop.f32.mrf.mxu0
    %2395 = vdwg.mxu0
    %2396 = vrot.lane.b32.xlu0 %v1906, 64
    %v2397 = vpop.permute.xlu0 %2396
    %v2398 = vrot.slane %v2397, 4
    %2399 = vrot.lane.b32.xlu0 %v2044, 64
    %v2400 = vpop.permute.xlu0 %2399
    %v2402 = vsel %vm318, %v2400, 0
    %v2405 = vsel %vm318, %v2398, 0
    %2407 = vmatpush.bf16.xpose.msra.mxu0 0
    %2408 = vmatpush.bf16.xpose.msra.mxu0 0
    %2409 = vmatpush.bf16.xpose.msra.mxu0 0
    %2410 = vmatpush.bf16.xpose.msra.mxu0 0
    %2411 = vmatpush.bf16.xpose.msra.mxu0 0
    %2412 = vmatpush.bf16.xpose.msra.mxu0 0
    %2413 = vmatpush.bf16.xpose.msra.mxu0 0
    %2414 = vmatpush.bf16.xpose.msra.mxu0 %v2405
    %2415 = vmatmul.bf16.gmra.mxu0 %v2402
    %v2416 = vpop.f32.mrf.mxu0
    %v2417 = vadd.f32 0.0, %v2416
    %v2418 = vpop.f32.mrf.mxu0
    %2419 = vdwg.mxu0
    %v2420 = vsel %vm360, %v2393, -1e+30
    %v2421 = vsel %vm360, %v2417, -1e+30
    %v2422 = vsel %vm363, %v2420, -inf
    %2423 = vmax.xlane.f32.xlu0 %v2422
    %v2424 = vpop.xlane.xlu0 %2423
    %v2425 = vsel %vm363, %v2421, -inf
    %2426 = vmax.xlane.f32.xlu0 %v2425
    %v2427 = vpop.xlane.xlu0 %2426
    %v2428 = vsub.f32 %v2420, %v2424
    %v2429 = vsub.f32 %v2421, %v2427
    %v2430 = vmul.f32 %v2428, 1.442695
    %v2431 = vpow.pop %v2430
    %v2432 = vmul.f32 %v2429, 1.442695
    %v2433 = vpow.pop %v2432
    %v2434 = vsel %vm363, %v2431, 0.0
    %2435 = vadd.xlane.f32.xlu0 %v2434
    %v2436 = vpop.xlane.xlu0 %2435
    %v2437 = vsel %vm363, %v2433, 0.0
    %2438 = vadd.xlane.f32.xlu0 %v2437
    %v2439 = vpop.xlane.xlu0 %2438
    %v2440 = vrcp.pop %v2436
    %v2441 = vrcp.pop %v2439
    %v2442 = vmul.f32 %v2431, %v2440
    %v2443 = vmul.f32 %v2433, %v2441
    %v2444 = vpack.c.bf16 %v2442, %v2442
    %v2445 = vpack.c.bf16 %v2443, %v2443
    %2446 = vrot.lane.b32.xlu0 %v2094, 64
    %v2447 = vpop.permute.xlu0 %2446
    %v2449 = vsel %vm363, %v2444, 0
    %v2452 = vsel %vm391, %v2447, 0
    %2454 = vmatpush.bf16.msra.mxu0 0
    %2455 = vmatpush.bf16.msra.mxu0 0
    %2456 = vmatpush.bf16.msra.mxu0 0
    %2457 = vmatpush.bf16.msra.mxu0 0
    %2458 = vmatpush.bf16.msra.mxu0 0
    %2459 = vmatpush.bf16.msra.mxu0 0
    %2460 = vmatpush.bf16.msra.mxu0 0
    %2461 = vmatpush.bf16.msra.mxu0 %v2452
    %2462 = vmatmul.bf16.gmra.mxu0 %v2449
    %v2463 = vpop.f32.mrf.mxu0
    %v2464 = vadd.f32 0.0, %v2463
    %v2465 = vpop.f32.mrf.mxu0
    %2466 = vdwg.mxu0
    %2467 = vrot.lane.b32.xlu0 %v2118, 64
    %v2468 = vpop.permute.xlu0 %2467
    %v2470 = vsel %vm363, %v2445, 0
    %v2473 = vsel %vm391, %v2468, 0
    %2475 = vmatpush.bf16.msra.mxu0 0
    %2476 = vmatpush.bf16.msra.mxu0 0
    %2477 = vmatpush.bf16.msra.mxu0 0
    %2478 = vmatpush.bf16.msra.mxu0 0
    %2479 = vmatpush.bf16.msra.mxu0 0
    %2480 = vmatpush.bf16.msra.mxu0 0
    %2481 = vmatpush.bf16.msra.mxu0 0
    %2482 = vmatpush.bf16.msra.mxu0 %v2473
    %2483 = vmatmul.bf16.gmra.mxu0 %v2470
    %v2484 = vpop.f32.mrf.mxu0
    %v2485 = vadd.f32 0.0, %v2484
    %v2486 = vpop.f32.mrf.mxu0
    %2487 = vdwg.mxu0
    %2488 = vrot.lane.b32.xlu0 %v1904, 48
    %v2489 = vpop.permute.xlu0 %2488
    %v2490 = vrot.slane %v2489, 4
    %2491 = vrot.lane.b32.xlu0 %v2018, 48
    %v2492 = vpop.permute.xlu0 %2491
    %v2494 = vsel %vm318, %v2492, 0
    %v2497 = vsel %vm318, %v2490, 0
    %2499 = vmatpush.bf16.xpose.msra.mxu0 0
    %2500 = vmatpush.bf16.xpose.msra.mxu0 0
    %2501 = vmatpush.bf16.xpose.msra.mxu0 0
    %2502 = vmatpush.bf16.xpose.msra.mxu0 0
    %2503 = vmatpush.bf16.xpose.msra.mxu0 0
    %2504 = vmatpush.bf16.xpose.msra.mxu0 0
    %2505 = vmatpush.bf16.xpose.msra.mxu0 0
    %2506 = vmatpush.bf16.xpose.msra.mxu0 %v2497
    %2507 = vmatmul.bf16.gmra.mxu0 %v2494
    %v2508 = vpop.f32.mrf.mxu0
    %v2509 = vadd.f32 0.0, %v2508
    %v2510 = vpop.f32.mrf.mxu0
    %2511 = vdwg.mxu0
    %2512 = vrot.lane.b32.xlu0 %v1906, 48
    %v2513 = vpop.permute.xlu0 %2512
    %v2514 = vrot.slane %v2513, 4
    %2515 = vrot.lane.b32.xlu0 %v2044, 48
    %v2516 = vpop.permute.xlu0 %2515
    %v2518 = vsel %vm318, %v2516, 0
    %v2521 = vsel %vm318, %v2514, 0
    %2523 = vmatpush.bf16.xpose.msra.mxu0 0
    %2524 = vmatpush.bf16.xpose.msra.mxu0 0
    %2525 = vmatpush.bf16.xpose.msra.mxu0 0
    %2526 = vmatpush.bf16.xpose.msra.mxu0 0
    %2527 = vmatpush.bf16.xpose.msra.mxu0 0
    %2528 = vmatpush.bf16.xpose.msra.mxu0 0
    %2529 = vmatpush.bf16.xpose.msra.mxu0 0
    %2530 = vmatpush.bf16.xpose.msra.mxu0 %v2521
    %2531 = vmatmul.bf16.gmra.mxu0 %v2518
    %v2532 = vpop.f32.mrf.mxu0
    %v2533 = vadd.f32 0.0, %v2532
    %v2534 = vpop.f32.mrf.mxu0
    %2535 = vdwg.mxu0
    %v2536 = vsel %vm360, %v2509, -1e+30
    %v2537 = vsel %vm360, %v2533, -1e+30
    %v2538 = vsel %vm363, %v2536, -inf
    %2539 = vmax.xlane.f32.xlu0 %v2538
    %v2540 = vpop.xlane.xlu0 %2539
    %v2541 = vsel %vm363, %v2537, -inf
    %2542 = vmax.xlane.f32.xlu0 %v2541
    %v2543 = vpop.xlane.xlu0 %2542
    %v2544 = vsub.f32 %v2536, %v2540
    %v2545 = vsub.f32 %v2537, %v2543
    %v2546 = vmul.f32 %v2544, 1.442695
    %v2547 = vpow.pop %v2546
    %v2548 = vmul.f32 %v2545, 1.442695
    %v2549 = vpow.pop %v2548
    %v2550 = vsel %vm363, %v2547, 0.0
    %2551 = vadd.xlane.f32.xlu0 %v2550
    %v2552 = vpop.xlane.xlu0 %2551
    %v2553 = vsel %vm363, %v2549, 0.0
    %2554 = vadd.xlane.f32.xlu0 %v2553
    %v2555 = vpop.xlane.xlu0 %2554
    %v2556 = vrcp.pop %v2552
    %v2557 = vrcp.pop %v2555
    %v2558 = vmul.f32 %v2547, %v2556
    %v2559 = vmul.f32 %v2549, %v2557
    %v2560 = vpack.c.bf16 %v2558, %v2558
    %v2561 = vpack.c.bf16 %v2559, %v2559
    %2562 = vrot.lane.b32.xlu0 %v2094, 48
    %v2563 = vpop.permute.xlu0 %2562
    %v2565 = vsel %vm363, %v2560, 0
    %v2568 = vsel %vm391, %v2563, 0
    %2570 = vmatpush.bf16.msra.mxu0 0
    %2571 = vmatpush.bf16.msra.mxu0 0
    %2572 = vmatpush.bf16.msra.mxu0 0
    %2573 = vmatpush.bf16.msra.mxu0 0
    %2574 = vmatpush.bf16.msra.mxu0 0
    %2575 = vmatpush.bf16.msra.mxu0 0
    %2576 = vmatpush.bf16.msra.mxu0 0
    %2577 = vmatpush.bf16.msra.mxu0 %v2568
    %2578 = vmatmul.bf16.gmra.mxu0 %v2565
    %v2579 = vpop.f32.mrf.mxu0
    %v2580 = vadd.f32 0.0, %v2579
    %v2581 = vpop.f32.mrf.mxu0
    %2582 = vdwg.mxu0
    %2583 = vrot.lane.b32.xlu0 %v2118, 48
    %v2584 = vpop.permute.xlu0 %2583
    %v2586 = vsel %vm363, %v2561, 0
    %v2589 = vsel %vm391, %v2584, 0
    %2591 = vmatpush.bf16.msra.mxu0 0
    %2592 = vmatpush.bf16.msra.mxu0 0
    %2593 = vmatpush.bf16.msra.mxu0 0
    %2594 = vmatpush.bf16.msra.mxu0 0
    %2595 = vmatpush.bf16.msra.mxu0 0
    %2596 = vmatpush.bf16.msra.mxu0 0
    %2597 = vmatpush.bf16.msra.mxu0 0
    %2598 = vmatpush.bf16.msra.mxu0 %v2589
    %2599 = vmatmul.bf16.gmra.mxu0 %v2586
    %v2600 = vpop.f32.mrf.mxu0
    %v2601 = vadd.f32 0.0, %v2600
    %v2602 = vpop.f32.mrf.mxu0
    %2603 = vdwg.mxu0
    %2604 = vrot.lane.b32.xlu0 %v1904, 32
    %v2605 = vpop.permute.xlu0 %2604
    %v2606 = vrot.slane %v2605, 4
    %2607 = vrot.lane.b32.xlu0 %v2018, 32
    %v2608 = vpop.permute.xlu0 %2607
    %v2610 = vsel %vm318, %v2608, 0
    %v2613 = vsel %vm318, %v2606, 0
    %2615 = vmatpush.bf16.xpose.msra.mxu0 0
    %2616 = vmatpush.bf16.xpose.msra.mxu0 0
    %2617 = vmatpush.bf16.xpose.msra.mxu0 0
    %2618 = vmatpush.bf16.xpose.msra.mxu0 0
    %2619 = vmatpush.bf16.xpose.msra.mxu0 0
    %2620 = vmatpush.bf16.xpose.msra.mxu0 0
    %2621 = vmatpush.bf16.xpose.msra.mxu0 0
    %2622 = vmatpush.bf16.xpose.msra.mxu0 %v2613
    %2623 = vmatmul.bf16.gmra.mxu0 %v2610
    %v2624 = vpop.f32.mrf.mxu0
    %v2625 = vadd.f32 0.0, %v2624
    %v2626 = vpop.f32.mrf.mxu0
    %2627 = vdwg.mxu0
    %2628 = vrot.lane.b32.xlu0 %v1906, 32
    %v2629 = vpop.permute.xlu0 %2628
    %v2630 = vrot.slane %v2629, 4
    %2631 = vrot.lane.b32.xlu0 %v2044, 32
    %v2632 = vpop.permute.xlu0 %2631
    %v2634 = vsel %vm318, %v2632, 0
    %v2637 = vsel %vm318, %v2630, 0
    %2639 = vmatpush.bf16.xpose.msra.mxu0 0
    %2640 = vmatpush.bf16.xpose.msra.mxu0 0
    %2641 = vmatpush.bf16.xpose.msra.mxu0 0
    %2642 = vmatpush.bf16.xpose.msra.mxu0 0
    %2643 = vmatpush.bf16.xpose.msra.mxu0 0
    %2644 = vmatpush.bf16.xpose.msra.mxu0 0
    %2645 = vmatpush.bf16.xpose.msra.mxu0 0
    %2646 = vmatpush.bf16.xpose.msra.mxu0 %v2637
    %2647 = vmatmul.bf16.gmra.mxu0 %v2634
    %v2648 = vpop.f32.mrf.mxu0
    %v2649 = vadd.f32 0.0, %v2648
    %v2650 = vpop.f32.mrf.mxu0
    %2651 = vdwg.mxu0
    %v2652 = vsel %vm360, %v2625, -1e+30
    %v2653 = vsel %vm360, %v2649, -1e+30
    %v2654 = vsel %vm363, %v2652, -inf
    %2655 = vmax.xlane.f32.xlu0 %v2654
    %v2656 = vpop.xlane.xlu0 %2655
    %v2657 = vsel %vm363, %v2653, -inf
    %2658 = vmax.xlane.f32.xlu0 %v2657
    %v2659 = vpop.xlane.xlu0 %2658
    %v2660 = vsub.f32 %v2652, %v2656
    %v2661 = vsub.f32 %v2653, %v2659
    %v2662 = vmul.f32 %v2660, 1.442695
    %v2663 = vpow.pop %v2662
    %v2664 = vmul.f32 %v2661, 1.442695
    %v2665 = vpow.pop %v2664
    %v2666 = vsel %vm363, %v2663, 0.0
    %2667 = vadd.xlane.f32.xlu0 %v2666
    %v2668 = vpop.xlane.xlu0 %2667
    %v2669 = vsel %vm363, %v2665, 0.0
    %2670 = vadd.xlane.f32.xlu0 %v2669
    %v2671 = vpop.xlane.xlu0 %2670
    %v2672 = vrcp.pop %v2668
    %v2673 = vrcp.pop %v2671
    %v2674 = vmul.f32 %v2663, %v2672
    %v2675 = vmul.f32 %v2665, %v2673
    %v2676 = vpack.c.bf16 %v2674, %v2674
    %v2677 = vpack.c.bf16 %v2675, %v2675
    %2678 = vrot.lane.b32.xlu0 %v2094, 32
    %v2679 = vpop.permute.xlu0 %2678
    %v2681 = vsel %vm363, %v2676, 0
    %v2684 = vsel %vm391, %v2679, 0
    %2686 = vmatpush.bf16.msra.mxu0 0
    %2687 = vmatpush.bf16.msra.mxu0 0
    %2688 = vmatpush.bf16.msra.mxu0 0
    %2689 = vmatpush.bf16.msra.mxu0 0
    %2690 = vmatpush.bf16.msra.mxu0 0
    %2691 = vmatpush.bf16.msra.mxu0 0
    %2692 = vmatpush.bf16.msra.mxu0 0
    %2693 = vmatpush.bf16.msra.mxu0 %v2684
    %2694 = vmatmul.bf16.gmra.mxu0 %v2681
    %v2695 = vpop.f32.mrf.mxu0
    %v2696 = vadd.f32 0.0, %v2695
    %v2697 = vpop.f32.mrf.mxu0
    %2698 = vdwg.mxu0
    %2699 = vrot.lane.b32.xlu0 %v2118, 32
    %v2700 = vpop.permute.xlu0 %2699
    %v2702 = vsel %vm363, %v2677, 0
    %v2705 = vsel %vm391, %v2700, 0
    %2707 = vmatpush.bf16.msra.mxu0 0
    %2708 = vmatpush.bf16.msra.mxu0 0
    %2709 = vmatpush.bf16.msra.mxu0 0
    %2710 = vmatpush.bf16.msra.mxu0 0
    %2711 = vmatpush.bf16.msra.mxu0 0
    %2712 = vmatpush.bf16.msra.mxu0 0
    %2713 = vmatpush.bf16.msra.mxu0 0
    %2714 = vmatpush.bf16.msra.mxu0 %v2705
    %2715 = vmatmul.bf16.gmra.mxu0 %v2702
    %v2716 = vpop.f32.mrf.mxu0
    %v2717 = vadd.f32 0.0, %v2716
    %v2718 = vpop.f32.mrf.mxu0
    %2719 = vdwg.mxu0
    %2720 = vrot.lane.b32.xlu0 %v1904, 16
    %v2721 = vpop.permute.xlu0 %2720
    %v2722 = vrot.slane %v2721, 4
    %2723 = vrot.lane.b32.xlu0 %v2018, 16
    %v2724 = vpop.permute.xlu0 %2723
    %v2726 = vsel %vm318, %v2724, 0
    %v2729 = vsel %vm318, %v2722, 0
    %2731 = vmatpush.bf16.xpose.msra.mxu0 0
    %2732 = vmatpush.bf16.xpose.msra.mxu0 0
    %2733 = vmatpush.bf16.xpose.msra.mxu0 0
    %2734 = vmatpush.bf16.xpose.msra.mxu0 0
    %2735 = vmatpush.bf16.xpose.msra.mxu0 0
    %2736 = vmatpush.bf16.xpose.msra.mxu0 0
    %2737 = vmatpush.bf16.xpose.msra.mxu0 0
    %2738 = vmatpush.bf16.xpose.msra.mxu0 %v2729
    %2739 = vmatmul.bf16.gmra.mxu0 %v2726
    %v2740 = vpop.f32.mrf.mxu0
    %v2741 = vadd.f32 0.0, %v2740
    %v2742 = vpop.f32.mrf.mxu0
    %2743 = vdwg.mxu0
    %2744 = vrot.lane.b32.xlu0 %v1906, 16
    %v2745 = vpop.permute.xlu0 %2744
    %v2746 = vrot.slane %v2745, 4
    %2747 = vrot.lane.b32.xlu0 %v2044, 16
    %v2748 = vpop.permute.xlu0 %2747
    %v2750 = vsel %vm318, %v2748, 0
    %v2753 = vsel %vm318, %v2746, 0
    %2755 = vmatpush.bf16.xpose.msra.mxu0 0
    %2756 = vmatpush.bf16.xpose.msra.mxu0 0
    %2757 = vmatpush.bf16.xpose.msra.mxu0 0
    %2758 = vmatpush.bf16.xpose.msra.mxu0 0
    %2759 = vmatpush.bf16.xpose.msra.mxu0 0
    %2760 = vmatpush.bf16.xpose.msra.mxu0 0
    %2761 = vmatpush.bf16.xpose.msra.mxu0 0
    %2762 = vmatpush.bf16.xpose.msra.mxu0 %v2753
    %2763 = vmatmul.bf16.gmra.mxu0 %v2750
    %v2764 = vpop.f32.mrf.mxu0
    %v2765 = vadd.f32 0.0, %v2764
    %v2766 = vpop.f32.mrf.mxu0
    %2767 = vdwg.mxu0
    %v2768 = vsel %vm360, %v2741, -1e+30
    %v2769 = vsel %vm360, %v2765, -1e+30
    %v2770 = vsel %vm363, %v2768, -inf
    %2771 = vmax.xlane.f32.xlu0 %v2770
    %v2772 = vpop.xlane.xlu0 %2771
    %v2773 = vsel %vm363, %v2769, -inf
    %2774 = vmax.xlane.f32.xlu0 %v2773
    %v2775 = vpop.xlane.xlu0 %2774
    %v2776 = vsub.f32 %v2768, %v2772
    %v2777 = vsub.f32 %v2769, %v2775
    %v2778 = vmul.f32 %v2776, 1.442695
    %v2779 = vpow.pop %v2778
    %v2780 = vmul.f32 %v2777, 1.442695
    %v2781 = vpow.pop %v2780
    %v2782 = vsel %vm363, %v2779, 0.0
    %2783 = vadd.xlane.f32.xlu0 %v2782
    %v2784 = vpop.xlane.xlu0 %2783
    %v2785 = vsel %vm363, %v2781, 0.0
    %2786 = vadd.xlane.f32.xlu0 %v2785
    %v2787 = vpop.xlane.xlu0 %2786
    %v2788 = vrcp.pop %v2784
    %v2789 = vrcp.pop %v2787
    %v2790 = vmul.f32 %v2779, %v2788
    %v2791 = vmul.f32 %v2781, %v2789
    %v2792 = vpack.c.bf16 %v2790, %v2790
    %v2793 = vpack.c.bf16 %v2791, %v2791
    %2794 = vrot.lane.b32.xlu0 %v2094, 16
    %v2795 = vpop.permute.xlu0 %2794
    %v2797 = vsel %vm363, %v2792, 0
    %v2800 = vsel %vm391, %v2795, 0
    %2802 = vmatpush.bf16.msra.mxu0 0
    %2803 = vmatpush.bf16.msra.mxu0 0
    %2804 = vmatpush.bf16.msra.mxu0 0
    %2805 = vmatpush.bf16.msra.mxu0 0
    %2806 = vmatpush.bf16.msra.mxu0 0
    %2807 = vmatpush.bf16.msra.mxu0 0
    %2808 = vmatpush.bf16.msra.mxu0 0
    %2809 = vmatpush.bf16.msra.mxu0 %v2800
    %2810 = vmatmul.bf16.gmra.mxu0 %v2797
    %v2811 = vpop.f32.mrf.mxu0
    %v2812 = vadd.f32 0.0, %v2811
    %v2813 = vpop.f32.mrf.mxu0
    %2814 = vdwg.mxu0
    %2815 = vrot.lane.b32.xlu0 %v2118, 16
    %v2816 = vpop.permute.xlu0 %2815
    %v2818 = vsel %vm363, %v2793, 0
    %v2821 = vsel %vm391, %v2816, 0
    %2823 = vmatpush.bf16.msra.mxu0 0
    %2824 = vmatpush.bf16.msra.mxu0 0
    %2825 = vmatpush.bf16.msra.mxu0 0
    %2826 = vmatpush.bf16.msra.mxu0 0
    %2827 = vmatpush.bf16.msra.mxu0 0
    %2828 = vmatpush.bf16.msra.mxu0 0
    %2829 = vmatpush.bf16.msra.mxu0 0
    %2830 = vmatpush.bf16.msra.mxu0 %v2821
    %2831 = vmatmul.bf16.gmra.mxu0 %v2818
    %v2832 = vpop.f32.mrf.mxu0
    %v2833 = vadd.f32 0.0, %v2832
    %v2834 = vpop.f32.mrf.mxu0
    %2835 = vdwg.mxu0
    %2838 = vrot.lane.b32.xlu0 %v2113, 16
    %v2839 = vpop.permute.xlu0 %2838
    %2840 = vrot.lane.b32.xlu0 %v2137, 16
    %v2841 = vpop.permute.xlu0 %2840
    %2846 = vrot.lane.b32.xlu0 %v2232, 32
    %v2847 = vpop.permute.xlu0 %2846
    %2848 = vrot.lane.b32.xlu0 %v2253, 32
    %v2849 = vpop.permute.xlu0 %2848
    %2854 = vrot.lane.b32.xlu0 %v2348, 48
    %v2855 = vpop.permute.xlu0 %2854
    %2856 = vrot.lane.b32.xlu0 %v2369, 48
    %v2857 = vpop.permute.xlu0 %2856
    %2862 = vrot.lane.b32.xlu0 %v2464, 64
    %v2863 = vpop.permute.xlu0 %2862
    %2864 = vrot.lane.b32.xlu0 %v2485, 64
    %v2865 = vpop.permute.xlu0 %2864
    %2870 = vrot.lane.b32.xlu0 %v2580, 80
    %v2871 = vpop.permute.xlu0 %2870
    %2872 = vrot.lane.b32.xlu0 %v2601, 80
    %v2873 = vpop.permute.xlu0 %2872
    %2878 = vrot.lane.b32.xlu0 %v2696, 96
    %v2879 = vpop.permute.xlu0 %2878
    %2880 = vrot.lane.b32.xlu0 %v2717, 96
    %v2881 = vpop.permute.xlu0 %2880
    %2886 = vrot.lane.b32.xlu0 %v2812, 112
    %v2887 = vpop.permute.xlu0 %2886
    %2888 = vrot.lane.b32.xlu0 %v2833, 112
    %v2889 = vpop.permute.xlu0 %2888
    %v2892 = vsel %vm318, %v1992, %v2839
    %v2893 = vsel %vm318, %v2011, %v2841
    %v2894 = vsel %vm1307, %v2892, %v2847
    %v2895 = vsel %vm1307, %v2893, %v2849
    %v2896 = vsel %vm1310, %v2894, %v2855
    %v2897 = vsel %vm1310, %v2895, %v2857
    %v2898 = vsel %vm124, %v2896, %v2863
    %v2899 = vsel %vm124, %v2897, %v2865
    %v2900 = vsel %vm1315, %v2898, %v2871
    %v2901 = vsel %vm1315, %v2899, %v2873
    %v2902 = vsel %vm1318, %v2900, %v2879
    %v2903 = vsel %vm1318, %v2901, %v2881
    %v2904 = vsel %vm1321, %v2902, %v2887
    %v2905 = vsel %vm1321, %v2903, %v2889
    %v2906 = vpack.c.bf16 %v2905, %v2904
    %s2907 = scalar_lea.vmem %s4, 64
    %v2908 = vld [vmem:[%s2907] sm:$0xf]
    %v2909 = vld [vmem:[%s2907 + $0x4] sm:$0xf]
    %v2910 = vld [vmem:[%s2907 + $0x8] sm:$0xf]
    %v2911 = vld [vmem:[%s2907 + $0xc] sm:$0xf]
    %v2912 = vld [vmem:[%s2907 + $0x10] sm:$0xf]
    %v2913 = vld [vmem:[%s2907 + $0x14] sm:$0xf]
    %v2914 = vld [vmem:[%s2907 + $0x18] sm:$0xf]
    %v2915 = vld [vmem:[%s2907 + $0x1c] sm:$0xf]
    %v2916 = vld [vmem:[%s2907 + $0x20] sm:$0xf]
    %v2917 = vld [vmem:[%s2907 + $0x24] sm:$0xf]
    %v2918 = vld [vmem:[%s2907 + $0x28] sm:$0xf]
    %v2919 = vld [vmem:[%s2907 + $0x2c] sm:$0xf]
    %v2920 = vld [vmem:[%s2907 + $0x30] sm:$0xf]
    %v2921 = vld [vmem:[%s2907 + $0x34] sm:$0xf]
    %v2922 = vld [vmem:[%s2907 + $0x38] sm:$0xf]
    %v2923 = vld [vmem:[%s2907 + $0x3c] sm:$0xf]
    %s2924 = scalar_lea.vmem %s5, 1
    %v2925 = vld [vmem:[%s2924] sm:$0x1]
    %v2927 = vperm.slane %v2925, 0
    %v2945 = vunpack.c.l.b16 %v2908
    %v2946 = vunpack.c.l.b16 %v2909
    %v2947 = vunpack.c.l.b16 %v2910
    %v2948 = vunpack.c.l.b16 %v2911
    %v2949 = vunpack.c.l.b16 %v2912
    %v2950 = vunpack.c.l.b16 %v2913
    %v2951 = vunpack.c.l.b16 %v2914
    %v2952 = vunpack.c.l.b16 %v2915
    %v2953 = vunpack.c.l.b16 %v2916
    %v2954 = vunpack.c.l.b16 %v2917
    %v2955 = vunpack.c.l.b16 %v2918
    %v2956 = vunpack.c.l.b16 %v2919
    %v2957 = vunpack.c.l.b16 %v2920
    %v2958 = vunpack.c.l.b16 %v2921
    %v2959 = vunpack.c.l.b16 %v2922
    %v2960 = vunpack.c.l.b16 %v2923
    %v2961 = vpack.c.b16 %v2946, %v2945
    %v2962 = vpack.c.b16 %v2948, %v2947
    %v2963 = vpack.c.b16 %v2950, %v2949
    %v2964 = vpack.c.b16 %v2952, %v2951
    %v2965 = vpack.c.b16 %v2954, %v2953
    %v2966 = vpack.c.b16 %v2956, %v2955
    %v2967 = vpack.c.b16 %v2958, %v2957
    %v2968 = vpack.c.b16 %v2960, %v2959
    %2977 = vmatpush.bf16.msra.mxu0 %v2968
    %2978 = vmatpush.bf16.msra.mxu0 %v2967
    %2979 = vmatpush.bf16.msra.mxu0 %v2966
    %2980 = vmatpush.bf16.msra.mxu0 %v2965
    %2981 = vmatpush.bf16.msra.mxu0 %v2964
    %2982 = vmatpush.bf16.msra.mxu0 %v2963
    %2983 = vmatpush.bf16.msra.mxu0 %v2962
    %2984 = vmatpush.bf16.msra.mxu0 %v2961
    %2985 = vmatmul.bf16.gmra.mxu0 %v2906
    %v2986 = vpop.f32.mrf.mxu0
    %v2987 = vadd.f32 %v2927, %v2986
    %v2988 = vpop.f32.mrf.mxu0
    %v2989 = vadd.f32 %v2927, %v2988
    %2990 = vdwg.mxu0
    %v2991 = vadd.f32 %v1717, %v2987
    %v2992 = vadd.f32 %v1718, %v2989
    %s2993 = scalar_lea.vmem %s8, 1
    %v2994 = vld [vmem:[%s2993] sm:$0x1]
    %s2995 = scalar_lea.vmem %s9, 1
    %v2996 = vld [vmem:[%s2995] sm:$0x1]
    %v2997 = vsel %vm124, %v2991, 0.0
    %2998 = vadd.xlane.f32.xlu0 %v2997
    %v2999 = vpop.xlane.xlu0 %2998
    %v3000 = vsel %vm124, %v2992, 0.0
    %3001 = vadd.xlane.f32.xlu0 %v3000
    %v3002 = vpop.xlane.xlu0 %3001
    %v3003 = vmul.f32 %v2999, %v137
    %v3004 = vmul.f32 %v3002, %v137
    %v3005 = vsub.f32 %v2991, %v3003
    %v3006 = vsub.f32 %v2992, %v3004
    %v3007 = vmul.f32 %v3005, %v3005
    %v3008 = vmul.f32 %v3006, %v3006
    %v3009 = vsel %vm124, %v3007, 0.0
    %3010 = vadd.xlane.f32.xlu0 %v3009
    %v3011 = vpop.xlane.xlu0 %3010
    %v3012 = vsel %vm124, %v3008, 0.0
    %3013 = vadd.xlane.f32.xlu0 %v3012
    %v3014 = vpop.xlane.xlu0 %3013
    %v3015 = vmul.f32 %v3011, %v137
    %v3016 = vmul.f32 %v3014, %v137
    %v3017 = vadd.f32 %v3015, 1e-05
    %v3018 = vadd.f32 %v3016, 1e-05
    %v3019 = vrsqrt.pop %v3017
    %v3020 = vmul.f32 %v3019, %v3017
    %v3021 = vmul.f32 %v3020, %v3019
    %v3022 = vmul.f32 0.5, %v3021
    %v3023 = vsub.f32 1.5, %v3022
    %v3024 = vmul.f32 %v3019, %v3023
    %vm3025 = vweird.f32 %v3017
    %vm3026 = vweird.f32 %v3019
    %vm3027 = vmor %vm3025, %vm3026
    %v3028 = vsel %vm3027, %v3019, %v3024
    %v3029 = vrsqrt.pop %v3018
    %v3030 = vmul.f32 %v3029, %v3018
    %v3031 = vmul.f32 %v3030, %v3029
    %v3032 = vmul.f32 0.5, %v3031
    %v3033 = vsub.f32 1.5, %v3032
    %v3034 = vmul.f32 %v3029, %v3033
    %vm3035 = vweird.f32 %v3018
    %vm3036 = vweird.f32 %v3029
    %vm3037 = vmor %vm3035, %vm3036
    %v3038 = vsel %vm3037, %v3029, %v3034
    %v3039 = vmul.f32 %v3005, %v3028
    %v3040 = vmul.f32 %v3006, %v3038
    %v3042 = vperm.slane %v2994, 0
    %v3044 = vmul.f32 %v3039, %v3042
    %v3045 = vmul.f32 %v3040, %v3042
    %v3047 = vperm.slane %v2996, 0
    %v3049 = vadd.f32 %v3044, %v3047
    %v3050 = vadd.f32 %v3045, %v3047
    %v3051 = vpack.c.bf16 %v3050, %v3049
    %s3052 = scalar_lea.vmem %s10, 64
    %v3053 = vld [vmem:[%s3052] sm:$0xff]
    %v3054 = vld [vmem:[%s3052 + $0x8] sm:$0xff]
    %v3055 = vld [vmem:[%s3052 + $0x10] sm:$0xff]
    %v3056 = vld [vmem:[%s3052 + $0x18] sm:$0xff]
    %v3057 = vld [vmem:[%s3052 + $0x20] sm:$0xff]
    %v3058 = vld [vmem:[%s3052 + $0x28] sm:$0xff]
    %v3059 = vld [vmem:[%s3052 + $0x30] sm:$0xff]
    %v3060 = vld [vmem:[%s3052 + $0x38] sm:$0xff]
    %s3061 = scalar_lea.vmem %s11, 2
    %v3062 = vld [vmem:[%s3061] sm:$0x3]
    %v3064 = vperm.slane %v3062, 0
    %v3065 = vperm.slane %v3062, 1
    %v3076 = vunpack.c.l.b16 %v3053
    %v3077 = vunpack.c.h.b16 %v3053
    %v3078 = vunpack.c.l.b16 %v3054
    %v3079 = vunpack.c.h.b16 %v3054
    %v3080 = vunpack.c.l.b16 %v3055
    %v3081 = vunpack.c.h.b16 %v3055
    %v3082 = vunpack.c.l.b16 %v3056
    %v3083 = vunpack.c.h.b16 %v3056
    %v3084 = vunpack.c.l.b16 %v3057
    %v3085 = vunpack.c.h.b16 %v3057
    %v3086 = vunpack.c.l.b16 %v3058
    %v3087 = vunpack.c.h.b16 %v3058
    %v3088 = vunpack.c.l.b16 %v3059
    %v3089 = vunpack.c.h.b16 %v3059
    %v3090 = vunpack.c.l.b16 %v3060
    %v3091 = vunpack.c.h.b16 %v3060
    %v3092 = vpack.c.b16 %v3078, %v3076
    %v3093 = vpack.c.b16 %v3079, %v3077
    %v3094 = vpack.c.b16 %v3082, %v3080
    %v3095 = vpack.c.b16 %v3083, %v3081
    %v3096 = vpack.c.b16 %v3086, %v3084
    %v3097 = vpack.c.b16 %v3087, %v3085
    %v3098 = vpack.c.b16 %v3090, %v3088
    %v3099 = vpack.c.b16 %v3091, %v3089
    %v3109 = vsel %vm124, %v3051, 0
    %3111 = vmatpush.bf16.msra.mxu0 0
    %3112 = vmatpush.bf16.msra.mxu0 0
    %3113 = vmatpush.bf16.msra.mxu0 0
    %3114 = vmatpush.bf16.msra.mxu0 0
    %3115 = vmatpush.bf16.msra.mxu0 %v3098
    %3116 = vmatpush.bf16.msra.mxu0 %v3096
    %3117 = vmatpush.bf16.msra.mxu0 %v3094
    %3118 = vmatpush.bf16.msra.mxu0 %v3092
    %3119 = vmatmul.bf16.gmra.mxu0 %v3109
    %v3120 = vpop.f32.mrf.mxu0
    %v3121 = vadd.f32 %v3064, %v3120
    %v3122 = vpop.f32.mrf.mxu0
    %v3123 = vadd.f32 %v3064, %v3122
    %3124 = vdwg.mxu0
    %3125 = vmatpush.bf16.msra.mxu0 0
    %3126 = vmatpush.bf16.msra.mxu0 0
    %3127 = vmatpush.bf16.msra.mxu0 0
    %3128 = vmatpush.bf16.msra.mxu0 0
    %3129 = vmatpush.bf16.msra.mxu0 %v3099
    %3130 = vmatpush.bf16.msra.mxu0 %v3097
    %3131 = vmatpush.bf16.msra.mxu0 %v3095
    %3132 = vmatpush.bf16.msra.mxu0 %v3093
    %3133 = vmatmul.bf16.gmra.mxu0 %v3109
    %v3134 = vpop.f32.mrf.mxu0
    %v3135 = vadd.f32 %v3065, %v3134
    %v3136 = vpop.f32.mrf.mxu0
    %v3137 = vadd.f32 %v3065, %v3136
    %3138 = vdwg.mxu0
    %v3139 = vmax.f32 %v3121, 0.0
    %v3140 = vmax.f32 %v3135, 0.0
    %v3141 = vmax.f32 %v3123, 0.0
    %v3142 = vmax.f32 %v3137, 0.0
    %v3143 = vpack.c.bf16 %v3141, %v3139
    %v3144 = vpack.c.bf16 %v3142, %v3140
    %s3145 = scalar_lea.vmem %s12, 128
    %v3146 = vld [vmem:[%s3145] sm:$0xf]
    %v3147 = vld [vmem:[%s3145 + $0x4] sm:$0xf]
    %v3148 = vld [vmem:[%s3145 + $0x8] sm:$0xf]
    %v3149 = vld [vmem:[%s3145 + $0xc] sm:$0xf]
    %v3150 = vld [vmem:[%s3145 + $0x10] sm:$0xf]
    %v3151 = vld [vmem:[%s3145 + $0x14] sm:$0xf]
    %v3152 = vld [vmem:[%s3145 + $0x18] sm:$0xf]
    %v3153 = vld [vmem:[%s3145 + $0x1c] sm:$0xf]
    %v3154 = vld [vmem:[%s3145 + $0x20] sm:$0xf]
    %v3155 = vld [vmem:[%s3145 + $0x24] sm:$0xf]
    %v3156 = vld [vmem:[%s3145 + $0x28] sm:$0xf]
    %v3157 = vld [vmem:[%s3145 + $0x2c] sm:$0xf]
    %v3158 = vld [vmem:[%s3145 + $0x30] sm:$0xf]
    %v3159 = vld [vmem:[%s3145 + $0x34] sm:$0xf]
    %v3160 = vld [vmem:[%s3145 + $0x38] sm:$0xf]
    %v3161 = vld [vmem:[%s3145 + $0x3c] sm:$0xf]
    %v3162 = vld [vmem:[%s3145 + $0x40] sm:$0xf]
    %v3163 = vld [vmem:[%s3145 + $0x44] sm:$0xf]
    %v3164 = vld [vmem:[%s3145 + $0x48] sm:$0xf]
    %v3165 = vld [vmem:[%s3145 + $0x4c] sm:$0xf]
    %v3166 = vld [vmem:[%s3145 + $0x50] sm:$0xf]
    %v3167 = vld [vmem:[%s3145 + $0x54] sm:$0xf]
    %v3168 = vld [vmem:[%s3145 + $0x58] sm:$0xf]
    %v3169 = vld [vmem:[%s3145 + $0x5c] sm:$0xf]
    %v3170 = vld [vmem:[%s3145 + $0x60] sm:$0xf]
    %v3171 = vld [vmem:[%s3145 + $0x64] sm:$0xf]
    %v3172 = vld [vmem:[%s3145 + $0x68] sm:$0xf]
    %v3173 = vld [vmem:[%s3145 + $0x6c] sm:$0xf]
    %v3174 = vld [vmem:[%s3145 + $0x70] sm:$0xf]
    %v3175 = vld [vmem:[%s3145 + $0x74] sm:$0xf]
    %v3176 = vld [vmem:[%s3145 + $0x78] sm:$0xf]
    %v3177 = vld [vmem:[%s3145 + $0x7c] sm:$0xf]
    %s3178 = scalar_lea.vmem %s13, 1
    %v3179 = vld [vmem:[%s3178] sm:$0x1]
    %v3181 = vperm.slane %v3179, 0
    %v3215 = vunpack.c.l.b16 %v3146
    %v3216 = vunpack.c.l.b16 %v3147
    %v3217 = vunpack.c.l.b16 %v3148
    %v3218 = vunpack.c.l.b16 %v3149
    %v3219 = vunpack.c.l.b16 %v3150
    %v3220 = vunpack.c.l.b16 %v3151
    %v3221 = vunpack.c.l.b16 %v3152
    %v3222 = vunpack.c.l.b16 %v3153
    %v3223 = vunpack.c.l.b16 %v3154
    %v3224 = vunpack.c.l.b16 %v3155
    %v3225 = vunpack.c.l.b16 %v3156
    %v3226 = vunpack.c.l.b16 %v3157
    %v3227 = vunpack.c.l.b16 %v3158
    %v3228 = vunpack.c.l.b16 %v3159
    %v3229 = vunpack.c.l.b16 %v3160
    %v3230 = vunpack.c.l.b16 %v3161
    %v3231 = vunpack.c.l.b16 %v3162
    %v3232 = vunpack.c.l.b16 %v3163
    %v3233 = vunpack.c.l.b16 %v3164
    %v3234 = vunpack.c.l.b16 %v3165
    %v3235 = vunpack.c.l.b16 %v3166
    %v3236 = vunpack.c.l.b16 %v3167
    %v3237 = vunpack.c.l.b16 %v3168
    %v3238 = vunpack.c.l.b16 %v3169
    %v3239 = vunpack.c.l.b16 %v3170
    %v3240 = vunpack.c.l.b16 %v3171
    %v3241 = vunpack.c.l.b16 %v3172
    %v3242 = vunpack.c.l.b16 %v3173
    %v3243 = vunpack.c.l.b16 %v3174
    %v3244 = vunpack.c.l.b16 %v3175
    %v3245 = vunpack.c.l.b16 %v3176
    %v3246 = vunpack.c.l.b16 %v3177
    %v3247 = vpack.c.b16 %v3216, %v3215
    %v3248 = vpack.c.b16 %v3218, %v3217
    %v3249 = vpack.c.b16 %v3220, %v3219
    %v3250 = vpack.c.b16 %v3222, %v3221
    %v3251 = vpack.c.b16 %v3224, %v3223
    %v3252 = vpack.c.b16 %v3226, %v3225
    %v3253 = vpack.c.b16 %v3228, %v3227
    %v3254 = vpack.c.b16 %v3230, %v3229
    %v3255 = vpack.c.b16 %v3232, %v3231
    %v3256 = vpack.c.b16 %v3234, %v3233
    %v3257 = vpack.c.b16 %v3236, %v3235
    %v3258 = vpack.c.b16 %v3238, %v3237
    %v3259 = vpack.c.b16 %v3240, %v3239
    %v3260 = vpack.c.b16 %v3242, %v3241
    %v3261 = vpack.c.b16 %v3244, %v3243
    %v3262 = vpack.c.b16 %v3246, %v3245
    %3279 = vmatpush.bf16.msra.mxu0 %v3254
    %3280 = vmatpush.bf16.msra.mxu0 %v3253
    %3281 = vmatpush.bf16.msra.mxu0 %v3252
    %3282 = vmatpush.bf16.msra.mxu0 %v3251
    %3283 = vmatpush.bf16.msra.mxu0 %v3250
    %3284 = vmatpush.bf16.msra.mxu0 %v3249
    %3285 = vmatpush.bf16.msra.mxu0 %v3248
    %3286 = vmatpush.bf16.msra.mxu0 %v3247
    %3287 = vmatmul.bf16.gmra.mxu0 %v3143
    %v3288 = vpop.f32.mrf.mxu0
    %v3289 = vadd.f32 %v3181, %v3288
    %v3290 = vpop.f32.mrf.mxu0
    %v3291 = vadd.f32 %v3181, %v3290
    %3292 = vdwg.mxu0
    %3293 = vmatpush.bf16.msra.mxu0 %v3262
    %3294 = vmatpush.bf16.msra.mxu0 %v3261
    %3295 = vmatpush.bf16.msra.mxu0 %v3260
    %3296 = vmatpush.bf16.msra.mxu0 %v3259
    %3297 = vmatpush.bf16.msra.mxu0 %v3258
    %3298 = vmatpush.bf16.msra.mxu0 %v3257
    %3299 = vmatpush.bf16.msra.mxu0 %v3256
    %3300 = vmatpush.bf16.msra.mxu0 %v3255
    %3301 = vmatmul.bf16.gmra.mxu0 %v3144
    %v3302 = vpop.f32.mrf.mxu0
    %v3303 = vadd.f32 %v3289, %v3302
    %v3304 = vpop.f32.mrf.mxu0
    %v3305 = vadd.f32 %v3291, %v3304
    %3306 = vdwg.mxu0
    %v3307 = vadd.f32 %v2991, %v3303
    %v3308 = vadd.f32 %v2992, %v3305
    %s3309 = scalar_lea.vmem %s6, 2
    %v3310 = vld [vmem:[%s3309] sm:$0x1]
    %s3311 = scalar_lea.vmem %s7, 2
    %v3312 = vld [vmem:[%s3311] sm:$0x1]
    %v3313 = vsel %vm124, %v3307, 0.0
    %3314 = vadd.xlane.f32.xlu0 %v3313
    %v3315 = vpop.xlane.xlu0 %3314
    %v3316 = vsel %vm124, %v3308, 0.0
    %3317 = vadd.xlane.f32.xlu0 %v3316
    %v3318 = vpop.xlane.xlu0 %3317
    %v3319 = vmul.f32 %v3315, %v137
    %v3320 = vmul.f32 %v3318, %v137
    %v3321 = vsub.f32 %v3307, %v3319
    %v3322 = vsub.f32 %v3308, %v3320
    %v3323 = vmul.f32 %v3321, %v3321
    %v3324 = vmul.f32 %v3322, %v3322
    %v3325 = vsel %vm124, %v3323, 0.0
    %3326 = vadd.xlane.f32.xlu0 %v3325
    %v3327 = vpop.xlane.xlu0 %3326
    %v3328 = vsel %vm124, %v3324, 0.0
    %3329 = vadd.xlane.f32.xlu0 %v3328
    %v3330 = vpop.xlane.xlu0 %3329
    %v3331 = vmul.f32 %v3327, %v137
    %v3332 = vmul.f32 %v3330, %v137
    %v3333 = vadd.f32 %v3331, 1e-05
    %v3334 = vadd.f32 %v3332, 1e-05
    %v3335 = vrsqrt.pop %v3333
    %v3336 = vmul.f32 %v3335, %v3333
    %v3337 = vmul.f32 %v3336, %v3335
    %v3338 = vmul.f32 0.5, %v3337
    %v3339 = vsub.f32 1.5, %v3338
    %v3340 = vmul.f32 %v3335, %v3339
    %vm3341 = vweird.f32 %v3333
    %vm3342 = vweird.f32 %v3335
    %vm3343 = vmor %vm3341, %vm3342
    %v3344 = vsel %vm3343, %v3335, %v3340
    %v3345 = vrsqrt.pop %v3334
    %v3346 = vmul.f32 %v3345, %v3334
    %v3347 = vmul.f32 %v3346, %v3345
    %v3348 = vmul.f32 0.5, %v3347
    %v3349 = vsub.f32 1.5, %v3348
    %v3350 = vmul.f32 %v3345, %v3349
    %vm3351 = vweird.f32 %v3334
    %vm3352 = vweird.f32 %v3345
    %vm3353 = vmor %vm3351, %vm3352
    %v3354 = vsel %vm3353, %v3345, %v3350
    %v3355 = vmul.f32 %v3321, %v3344
    %v3356 = vmul.f32 %v3322, %v3354
    %v3358 = vperm.slane %v3310, 0
    %v3360 = vmul.f32 %v3355, %v3358
    %v3361 = vmul.f32 %v3356, %v3358
    %v3363 = vperm.slane %v3312, 0
    %v3365 = vadd.f32 %v3360, %v3363
    %v3366 = vadd.f32 %v3361, %v3363
    %v3367 = vpack.c.bf16 %v3366, %v3365
    %s3368 = scalar_lea.vmem %s3, 192
    %v3369 = vld [vmem:[%s3368] sm:$0xff]
    %v3370 = vld [vmem:[%s3368 + $0x8] sm:$0xf]
    %v3371 = vld [vmem:[%s3368 + $0xc] sm:$0xff]
    %v3372 = vld [vmem:[%s3368 + $0x14] sm:$0xf]
    %v3373 = vld [vmem:[%s3368 + $0x18] sm:$0xff]
    %v3374 = vld [vmem:[%s3368 + $0x20] sm:$0xf]
    %v3375 = vld [vmem:[%s3368 + $0x24] sm:$0xff]
    %v3376 = vld [vmem:[%s3368 + $0x2c] sm:$0xf]
    %v3377 = vld [vmem:[%s3368 + $0x30] sm:$0xff]
    %v3378 = vld [vmem:[%s3368 + $0x38] sm:$0xf]
    %v3379 = vld [vmem:[%s3368 + $0x3c] sm:$0xff]
    %v3380 = vld [vmem:[%s3368 + $0x44] sm:$0xf]
    %v3381 = vld [vmem:[%s3368 + $0x48] sm:$0xff]
    %v3382 = vld [vmem:[%s3368 + $0x50] sm:$0xf]
    %v3383 = vld [vmem:[%s3368 + $0x54] sm:$0xff]
    %v3384 = vld [vmem:[%s3368 + $0x5c] sm:$0xf]
    %v3401 = vunpack.c.l.b16 %v3369
    %v3402 = vunpack.c.h.b16 %v3369
    %v3403 = vunpack.c.l.b16 %v3370
    %v3404 = vunpack.c.l.b16 %v3371
    %v3405 = vunpack.c.h.b16 %v3371
    %v3406 = vunpack.c.l.b16 %v3372
    %v3407 = vunpack.c.l.b16 %v3373
    %v3408 = vunpack.c.h.b16 %v3373
    %v3409 = vunpack.c.l.b16 %v3374
    %v3410 = vunpack.c.l.b16 %v3375
    %v3411 = vunpack.c.h.b16 %v3375
    %v3412 = vunpack.c.l.b16 %v3376
    %v3413 = vunpack.c.l.b16 %v3377
    %v3414 = vunpack.c.h.b16 %v3377
    %v3415 = vunpack.c.l.b16 %v3378
    %v3416 = vunpack.c.l.b16 %v3379
    %v3417 = vunpack.c.h.b16 %v3379
    %v3418 = vunpack.c.l.b16 %v3380
    %v3419 = vunpack.c.l.b16 %v3381
    %v3420 = vunpack.c.h.b16 %v3381
    %v3421 = vunpack.c.l.b16 %v3382
    %v3422 = vunpack.c.l.b16 %v3383
    %v3423 = vunpack.c.h.b16 %v3383
    %v3424 = vunpack.c.l.b16 %v3384
    %v3425 = vpack.c.b16 %v3404, %v3401
    %v3426 = vpack.c.b16 %v3405, %v3402
    %v3427 = vpack.c.b16 %v3406, %v3403
    %v3428 = vpack.c.b16 %v3410, %v3407
    %v3429 = vpack.c.b16 %v3411, %v3408
    %v3430 = vpack.c.b16 %v3412, %v3409
    %v3431 = vpack.c.b16 %v3416, %v3413
    %v3432 = vpack.c.b16 %v3417, %v3414
    %v3433 = vpack.c.b16 %v3418, %v3415
    %v3434 = vpack.c.b16 %v3422, %v3419
    %v3435 = vpack.c.b16 %v3423, %v3420
    %v3436 = vpack.c.b16 %v3424, %v3421
    %v3450 = vsel %vm124, %v3367, 0
    %3452 = vmatpush.bf16.msra.mxu0 0
    %3453 = vmatpush.bf16.msra.mxu0 0
    %3454 = vmatpush.bf16.msra.mxu0 0
    %3455 = vmatpush.bf16.msra.mxu0 0
    %3456 = vmatpush.bf16.msra.mxu0 %v3434
    %3457 = vmatpush.bf16.msra.mxu0 %v3431
    %3458 = vmatpush.bf16.msra.mxu0 %v3428
    %3459 = vmatpush.bf16.msra.mxu0 %v3425
    %3460 = vmatmul.bf16.gmra.mxu0 %v3450
    %v3461 = vpop.f32.mrf.mxu0
    %v3462 = vadd.f32 0.0, %v3461
    %v3463 = vpop.f32.mrf.mxu0
    %v3464 = vadd.f32 0.0, %v3463
    %3465 = vdwg.mxu0
    %3466 = vmatpush.bf16.msra.mxu0 0
    %3467 = vmatpush.bf16.msra.mxu0 0
    %3468 = vmatpush.bf16.msra.mxu0 0
    %3469 = vmatpush.bf16.msra.mxu0 0
    %3470 = vmatpush.bf16.msra.mxu0 %v3435
    %3471 = vmatpush.bf16.msra.mxu0 %v3432
    %3472 = vmatpush.bf16.msra.mxu0 %v3429
    %3473 = vmatpush.bf16.msra.mxu0 %v3426
    %3474 = vmatmul.bf16.gmra.mxu0 %v3450
    %v3475 = vpop.f32.mrf.mxu0
    %v3476 = vadd.f32 0.0, %v3475
    %v3477 = vpop.f32.mrf.mxu0
    %v3478 = vadd.f32 0.0, %v3477
    %3479 = vdwg.mxu0
    %3480 = vmatpush.bf16.msra.mxu0 0
    %3481 = vmatpush.bf16.msra.mxu0 0
    %3482 = vmatpush.bf16.msra.mxu0 0
    %3483 = vmatpush.bf16.msra.mxu0 0
    %3484 = vmatpush.bf16.msra.mxu0 %v3436
    %3485 = vmatpush.bf16.msra.mxu0 %v3433
    %3486 = vmatpush.bf16.msra.mxu0 %v3430
    %3487 = vmatpush.bf16.msra.mxu0 %v3427
    %3488 = vmatmul.bf16.gmra.mxu0 %v3450
    %v3489 = vpop.f32.mrf.mxu0
    %v3490 = vadd.f32 0.0, %v3489
    %v3491 = vpop.f32.mrf.mxu0
    %v3492 = vadd.f32 0.0, %v3491
    %3493 = vdwg.mxu0
    %v3494 = vpack.c.bf16 %v3476, %v3462
    %v3495 = vpack.c.bf16 %v3490, %v3490
    %v3496 = vpack.c.bf16 %v3478, %v3464
    %v3497 = vpack.c.bf16 %v3492, %v3492
    %v3499 = vrot.slane %v3494, 4
    %v3501 = vsel %vm318, %v3494, 0
    %v3504 = vsel %vm318, %v3499, 0
    %3506 = vmatpush.bf16.xpose.msra.mxu0 0
    %3507 = vmatpush.bf16.xpose.msra.mxu0 0
    %3508 = vmatpush.bf16.xpose.msra.mxu0 0
    %3509 = vmatpush.bf16.xpose.msra.mxu0 0
    %3510 = vmatpush.bf16.xpose.msra.mxu0 0
    %3511 = vmatpush.bf16.xpose.msra.mxu0 0
    %3512 = vmatpush.bf16.xpose.msra.mxu0 0
    %3513 = vmatpush.bf16.xpose.msra.mxu0 %v3504
    %3514 = vmatmul.bf16.gmra.mxu0 %v3501
    %v3515 = vpop.f32.mrf.mxu0
    %v3516 = vadd.f32 0.0, %v3515
    %v3517 = vpop.f32.mrf.mxu0
    %3518 = vdwg.mxu0
    %v3520 = vrot.slane %v3496, 4
    %v3522 = vsel %vm318, %v3496, 0
    %v3525 = vsel %vm318, %v3520, 0
    %3527 = vmatpush.bf16.xpose.msra.mxu0 0
    %3528 = vmatpush.bf16.xpose.msra.mxu0 0
    %3529 = vmatpush.bf16.xpose.msra.mxu0 0
    %3530 = vmatpush.bf16.xpose.msra.mxu0 0
    %3531 = vmatpush.bf16.xpose.msra.mxu0 0
    %3532 = vmatpush.bf16.xpose.msra.mxu0 0
    %3533 = vmatpush.bf16.xpose.msra.mxu0 0
    %3534 = vmatpush.bf16.xpose.msra.mxu0 %v3525
    %3535 = vmatmul.bf16.gmra.mxu0 %v3522
    %v3536 = vpop.f32.mrf.mxu0
    %v3537 = vadd.f32 0.0, %v3536
    %v3538 = vpop.f32.mrf.mxu0
    %3539 = vdwg.mxu0
    %v3540 = vsel %vm360, %v3516, -1e+30
    %v3541 = vsel %vm360, %v3537, -1e+30
    %v3542 = vsel %vm363, %v3540, -inf
    %3543 = vmax.xlane.f32.xlu0 %v3542
    %v3544 = vpop.xlane.xlu0 %3543
    %v3545 = vsel %vm363, %v3541, -inf
    %3546 = vmax.xlane.f32.xlu0 %v3545
    %v3547 = vpop.xlane.xlu0 %3546
    %v3548 = vsub.f32 %v3540, %v3544
    %v3549 = vsub.f32 %v3541, %v3547
    %v3550 = vmul.f32 %v3548, 1.442695
    %v3551 = vpow.pop %v3550
    %v3552 = vmul.f32 %v3549, 1.442695
    %v3553 = vpow.pop %v3552
    %v3554 = vsel %vm363, %v3551, 0.0
    %3555 = vadd.xlane.f32.xlu0 %v3554
    %v3556 = vpop.xlane.xlu0 %3555
    %v3557 = vsel %vm363, %v3553, 0.0
    %3558 = vadd.xlane.f32.xlu0 %v3557
    %v3559 = vpop.xlane.xlu0 %3558
    %v3560 = vrcp.pop %v3556
    %v3561 = vrcp.pop %v3559
    %v3562 = vmul.f32 %v3551, %v3560
    %v3563 = vmul.f32 %v3553, %v3561
    %v3564 = vpack.c.bf16 %v3562, %v3562
    %v3565 = vpack.c.bf16 %v3563, %v3563
    %v3567 = vsel %vm363, %v3564, 0
    %v3570 = vsel %vm391, %v3495, 0
    %3572 = vmatpush.bf16.msra.mxu0 0
    %3573 = vmatpush.bf16.msra.mxu0 0
    %3574 = vmatpush.bf16.msra.mxu0 0
    %3575 = vmatpush.bf16.msra.mxu0 0
    %3576 = vmatpush.bf16.msra.mxu0 0
    %3577 = vmatpush.bf16.msra.mxu0 0
    %3578 = vmatpush.bf16.msra.mxu0 0
    %3579 = vmatpush.bf16.msra.mxu0 %v3570
    %3580 = vmatmul.bf16.gmra.mxu0 %v3567
    %v3581 = vpop.f32.mrf.mxu0
    %v3582 = vadd.f32 0.0, %v3581
    %v3583 = vpop.f32.mrf.mxu0
    %3584 = vdwg.mxu0
    %v3586 = vsel %vm363, %v3565, 0
    %v3589 = vsel %vm391, %v3497, 0
    %3591 = vmatpush.bf16.msra.mxu0 0
    %3592 = vmatpush.bf16.msra.mxu0 0
    %3593 = vmatpush.bf16.msra.mxu0 0
    %3594 = vmatpush.bf16.msra.mxu0 0
    %3595 = vmatpush.bf16.msra.mxu0 0
    %3596 = vmatpush.bf16.msra.mxu0 0
    %3597 = vmatpush.bf16.msra.mxu0 0
    %3598 = vmatpush.bf16.msra.mxu0 %v3589
    %3599 = vmatmul.bf16.gmra.mxu0 %v3586
    %v3600 = vpop.f32.mrf.mxu0
    %v3601 = vadd.f32 0.0, %v3600
    %v3602 = vpop.f32.mrf.mxu0
    %3603 = vdwg.mxu0
    %3604 = vrot.lane.b32.xlu0 %v3494, 112
    %v3605 = vpop.permute.xlu0 %3604
    %v3606 = vrot.slane %v3605, 4
    %v3607 = vunpack.c.l.b16 %v3494
    %v3608 = vpack.c.b16 %v3607, %v3607
    %3609 = vrot.lane.b32.xlu0 %v3608, 112
    %v3610 = vpop.permute.xlu0 %3609
    %v3612 = vsel %vm318, %v3610, 0
    %v3615 = vsel %vm318, %v3606, 0
    %3617 = vmatpush.bf16.xpose.msra.mxu0 0
    %3618 = vmatpush.bf16.xpose.msra.mxu0 0
    %3619 = vmatpush.bf16.xpose.msra.mxu0 0
    %3620 = vmatpush.bf16.xpose.msra.mxu0 0
    %3621 = vmatpush.bf16.xpose.msra.mxu0 0
    %3622 = vmatpush.bf16.xpose.msra.mxu0 0
    %3623 = vmatpush.bf16.xpose.msra.mxu0 0
    %3624 = vmatpush.bf16.xpose.msra.mxu0 %v3615
    %3625 = vmatmul.bf16.gmra.mxu0 %v3612
    %v3626 = vpop.f32.mrf.mxu0
    %v3627 = vadd.f32 0.0, %v3626
    %v3628 = vpop.f32.mrf.mxu0
    %3629 = vdwg.mxu0
    %3630 = vrot.lane.b32.xlu0 %v3496, 112
    %v3631 = vpop.permute.xlu0 %3630
    %v3632 = vrot.slane %v3631, 4
    %v3633 = vunpack.c.l.b16 %v3496
    %v3634 = vpack.c.b16 %v3633, %v3633
    %3635 = vrot.lane.b32.xlu0 %v3634, 112
    %v3636 = vpop.permute.xlu0 %3635
    %v3638 = vsel %vm318, %v3636, 0
    %v3641 = vsel %vm318, %v3632, 0
    %3643 = vmatpush.bf16.xpose.msra.mxu0 0
    %3644 = vmatpush.bf16.xpose.msra.mxu0 0
    %3645 = vmatpush.bf16.xpose.msra.mxu0 0
    %3646 = vmatpush.bf16.xpose.msra.mxu0 0
    %3647 = vmatpush.bf16.xpose.msra.mxu0 0
    %3648 = vmatpush.bf16.xpose.msra.mxu0 0
    %3649 = vmatpush.bf16.xpose.msra.mxu0 0
    %3650 = vmatpush.bf16.xpose.msra.mxu0 %v3641
    %3651 = vmatmul.bf16.gmra.mxu0 %v3638
    %v3652 = vpop.f32.mrf.mxu0
    %v3653 = vadd.f32 0.0, %v3652
    %v3654 = vpop.f32.mrf.mxu0
    %3655 = vdwg.mxu0
    %v3656 = vsel %vm360, %v3627, -1e+30
    %v3657 = vsel %vm360, %v3653, -1e+30
    %v3658 = vsel %vm363, %v3656, -inf
    %3659 = vmax.xlane.f32.xlu0 %v3658
    %v3660 = vpop.xlane.xlu0 %3659
    %v3661 = vsel %vm363, %v3657, -inf
    %3662 = vmax.xlane.f32.xlu0 %v3661
    %v3663 = vpop.xlane.xlu0 %3662
    %v3664 = vsub.f32 %v3656, %v3660
    %v3665 = vsub.f32 %v3657, %v3663
    %v3666 = vmul.f32 %v3664, 1.442695
    %v3667 = vpow.pop %v3666
    %v3668 = vmul.f32 %v3665, 1.442695
    %v3669 = vpow.pop %v3668
    %v3670 = vsel %vm363, %v3667, 0.0
    %3671 = vadd.xlane.f32.xlu0 %v3670
    %v3672 = vpop.xlane.xlu0 %3671
    %v3673 = vsel %vm363, %v3669, 0.0
    %3674 = vadd.xlane.f32.xlu0 %v3673
    %v3675 = vpop.xlane.xlu0 %3674
    %v3676 = vrcp.pop %v3672
    %v3677 = vrcp.pop %v3675
    %v3678 = vmul.f32 %v3667, %v3676
    %v3679 = vmul.f32 %v3669, %v3677
    %v3680 = vpack.c.bf16 %v3678, %v3678
    %v3681 = vpack.c.bf16 %v3679, %v3679
    %v3683 = vunpack.c.l.b16 %v3495
    %v3684 = vpack.c.b16 %v3683, %v3683
    %3685 = vrot.lane.b32.xlu0 %v3684, 112
    %v3686 = vpop.permute.xlu0 %3685
    %v3688 = vsel %vm363, %v3680, 0
    %v3691 = vsel %vm391, %v3686, 0
    %3693 = vmatpush.bf16.msra.mxu0 0
    %3694 = vmatpush.bf16.msra.mxu0 0
    %3695 = vmatpush.bf16.msra.mxu0 0
    %3696 = vmatpush.bf16.msra.mxu0 0
    %3697 = vmatpush.bf16.msra.mxu0 0
    %3698 = vmatpush.bf16.msra.mxu0 0
    %3699 = vmatpush.bf16.msra.mxu0 0
    %3700 = vmatpush.bf16.msra.mxu0 %v3691
    %3701 = vmatmul.bf16.gmra.mxu0 %v3688
    %v3702 = vpop.f32.mrf.mxu0
    %v3703 = vadd.f32 0.0, %v3702
    %v3704 = vpop.f32.mrf.mxu0
    %3705 = vdwg.mxu0
    %v3707 = vunpack.c.l.b16 %v3497
    %v3708 = vpack.c.b16 %v3707, %v3707
    %3709 = vrot.lane.b32.xlu0 %v3708, 112
    %v3710 = vpop.permute.xlu0 %3709
    %v3712 = vsel %vm363, %v3681, 0
    %v3715 = vsel %vm391, %v3710, 0
    %3717 = vmatpush.bf16.msra.mxu0 0
    %3718 = vmatpush.bf16.msra.mxu0 0
    %3719 = vmatpush.bf16.msra.mxu0 0
    %3720 = vmatpush.bf16.msra.mxu0 0
    %3721 = vmatpush.bf16.msra.mxu0 0
    %3722 = vmatpush.bf16.msra.mxu0 0
    %3723 = vmatpush.bf16.msra.mxu0 0
    %3724 = vmatpush.bf16.msra.mxu0 %v3715
    %3725 = vmatmul.bf16.gmra.mxu0 %v3712
    %v3726 = vpop.f32.mrf.mxu0
    %v3727 = vadd.f32 0.0, %v3726
    %v3728 = vpop.f32.mrf.mxu0
    %3729 = vdwg.mxu0
    %3730 = vrot.lane.b32.xlu0 %v3494, 96
    %v3731 = vpop.permute.xlu0 %3730
    %v3732 = vrot.slane %v3731, 4
    %3733 = vrot.lane.b32.xlu0 %v3608, 96
    %v3734 = vpop.permute.xlu0 %3733
    %v3736 = vsel %vm318, %v3734, 0
    %v3739 = vsel %vm318, %v3732, 0
    %3741 = vmatpush.bf16.xpose.msra.mxu0 0
    %3742 = vmatpush.bf16.xpose.msra.mxu0 0
    %3743 = vmatpush.bf16.xpose.msra.mxu0 0
    %3744 = vmatpush.bf16.xpose.msra.mxu0 0
    %3745 = vmatpush.bf16.xpose.msra.mxu0 0
    %3746 = vmatpush.bf16.xpose.msra.mxu0 0
    %3747 = vmatpush.bf16.xpose.msra.mxu0 0
    %3748 = vmatpush.bf16.xpose.msra.mxu0 %v3739
    %3749 = vmatmul.bf16.gmra.mxu0 %v3736
    %v3750 = vpop.f32.mrf.mxu0
    %v3751 = vadd.f32 0.0, %v3750
    %v3752 = vpop.f32.mrf.mxu0
    %3753 = vdwg.mxu0
    %3754 = vrot.lane.b32.xlu0 %v3496, 96
    %v3755 = vpop.permute.xlu0 %3754
    %v3756 = vrot.slane %v3755, 4
    %3757 = vrot.lane.b32.xlu0 %v3634, 96
    %v3758 = vpop.permute.xlu0 %3757
    %v3760 = vsel %vm318, %v3758, 0
    %v3763 = vsel %vm318, %v3756, 0
    %3765 = vmatpush.bf16.xpose.msra.mxu0 0
    %3766 = vmatpush.bf16.xpose.msra.mxu0 0
    %3767 = vmatpush.bf16.xpose.msra.mxu0 0
    %3768 = vmatpush.bf16.xpose.msra.mxu0 0
    %3769 = vmatpush.bf16.xpose.msra.mxu0 0
    %3770 = vmatpush.bf16.xpose.msra.mxu0 0
    %3771 = vmatpush.bf16.xpose.msra.mxu0 0
    %3772 = vmatpush.bf16.xpose.msra.mxu0 %v3763
    %3773 = vmatmul.bf16.gmra.mxu0 %v3760
    %v3774 = vpop.f32.mrf.mxu0
    %v3775 = vadd.f32 0.0, %v3774
    %v3776 = vpop.f32.mrf.mxu0
    %3777 = vdwg.mxu0
    %v3778 = vsel %vm360, %v3751, -1e+30
    %v3779 = vsel %vm360, %v3775, -1e+30
    %v3780 = vsel %vm363, %v3778, -inf
    %3781 = vmax.xlane.f32.xlu0 %v3780
    %v3782 = vpop.xlane.xlu0 %3781
    %v3783 = vsel %vm363, %v3779, -inf
    %3784 = vmax.xlane.f32.xlu0 %v3783
    %v3785 = vpop.xlane.xlu0 %3784
    %v3786 = vsub.f32 %v3778, %v3782
    %v3787 = vsub.f32 %v3779, %v3785
    %v3788 = vmul.f32 %v3786, 1.442695
    %v3789 = vpow.pop %v3788
    %v3790 = vmul.f32 %v3787, 1.442695
    %v3791 = vpow.pop %v3790
    %v3792 = vsel %vm363, %v3789, 0.0
    %3793 = vadd.xlane.f32.xlu0 %v3792
    %v3794 = vpop.xlane.xlu0 %3793
    %v3795 = vsel %vm363, %v3791, 0.0
    %3796 = vadd.xlane.f32.xlu0 %v3795
    %v3797 = vpop.xlane.xlu0 %3796
    %v3798 = vrcp.pop %v3794
    %v3799 = vrcp.pop %v3797
    %v3800 = vmul.f32 %v3789, %v3798
    %v3801 = vmul.f32 %v3791, %v3799
    %v3802 = vpack.c.bf16 %v3800, %v3800
    %v3803 = vpack.c.bf16 %v3801, %v3801
    %3804 = vrot.lane.b32.xlu0 %v3684, 96
    %v3805 = vpop.permute.xlu0 %3804
    %v3807 = vsel %vm363, %v3802, 0
    %v3810 = vsel %vm391, %v3805, 0
    %3812 = vmatpush.bf16.msra.mxu0 0
    %3813 = vmatpush.bf16.msra.mxu0 0
    %3814 = vmatpush.bf16.msra.mxu0 0
    %3815 = vmatpush.bf16.msra.mxu0 0
    %3816 = vmatpush.bf16.msra.mxu0 0
    %3817 = vmatpush.bf16.msra.mxu0 0
    %3818 = vmatpush.bf16.msra.mxu0 0
    %3819 = vmatpush.bf16.msra.mxu0 %v3810
    %3820 = vmatmul.bf16.gmra.mxu0 %v3807
    %v3821 = vpop.f32.mrf.mxu0
    %v3822 = vadd.f32 0.0, %v3821
    %v3823 = vpop.f32.mrf.mxu0
    %3824 = vdwg.mxu0
    %3825 = vrot.lane.b32.xlu0 %v3708, 96
    %v3826 = vpop.permute.xlu0 %3825
    %v3828 = vsel %vm363, %v3803, 0
    %v3831 = vsel %vm391, %v3826, 0
    %3833 = vmatpush.bf16.msra.mxu0 0
    %3834 = vmatpush.bf16.msra.mxu0 0
    %3835 = vmatpush.bf16.msra.mxu0 0
    %3836 = vmatpush.bf16.msra.mxu0 0
    %3837 = vmatpush.bf16.msra.mxu0 0
    %3838 = vmatpush.bf16.msra.mxu0 0
    %3839 = vmatpush.bf16.msra.mxu0 0
    %3840 = vmatpush.bf16.msra.mxu0 %v3831
    %3841 = vmatmul.bf16.gmra.mxu0 %v3828
    %v3842 = vpop.f32.mrf.mxu0
    %v3843 = vadd.f32 0.0, %v3842
    %v3844 = vpop.f32.mrf.mxu0
    %3845 = vdwg.mxu0
    %3846 = vrot.lane.b32.xlu0 %v3494, 80
    %v3847 = vpop.permute.xlu0 %3846
    %v3848 = vrot.slane %v3847, 4
    %3849 = vrot.lane.b32.xlu0 %v3608, 80
    %v3850 = vpop.permute.xlu0 %3849
    %v3852 = vsel %vm318, %v3850, 0
    %v3855 = vsel %vm318, %v3848, 0
    %3857 = vmatpush.bf16.xpose.msra.mxu0 0
    %3858 = vmatpush.bf16.xpose.msra.mxu0 0
    %3859 = vmatpush.bf16.xpose.msra.mxu0 0
    %3860 = vmatpush.bf16.xpose.msra.mxu0 0
    %3861 = vmatpush.bf16.xpose.msra.mxu0 0
    %3862 = vmatpush.bf16.xpose.msra.mxu0 0
    %3863 = vmatpush.bf16.xpose.msra.mxu0 0
    %3864 = vmatpush.bf16.xpose.msra.mxu0 %v3855
    %3865 = vmatmul.bf16.gmra.mxu0 %v3852
    %v3866 = vpop.f32.mrf.mxu0
    %v3867 = vadd.f32 0.0, %v3866
    %v3868 = vpop.f32.mrf.mxu0
    %3869 = vdwg.mxu0
    %3870 = vrot.lane.b32.xlu0 %v3496, 80
    %v3871 = vpop.permute.xlu0 %3870
    %v3872 = vrot.slane %v3871, 4
    %3873 = vrot.lane.b32.xlu0 %v3634, 80
    %v3874 = vpop.permute.xlu0 %3873
    %v3876 = vsel %vm318, %v3874, 0
    %v3879 = vsel %vm318, %v3872, 0
    %3881 = vmatpush.bf16.xpose.msra.mxu0 0
    %3882 = vmatpush.bf16.xpose.msra.mxu0 0
    %3883 = vmatpush.bf16.xpose.msra.mxu0 0
    %3884 = vmatpush.bf16.xpose.msra.mxu0 0
    %3885 = vmatpush.bf16.xpose.msra.mxu0 0
    %3886 = vmatpush.bf16.xpose.msra.mxu0 0
    %3887 = vmatpush.bf16.xpose.msra.mxu0 0
    %3888 = vmatpush.bf16.xpose.msra.mxu0 %v3879
    %3889 = vmatmul.bf16.gmra.mxu0 %v3876
    %v3890 = vpop.f32.mrf.mxu0
    %v3891 = vadd.f32 0.0, %v3890
    %v3892 = vpop.f32.mrf.mxu0
    %3893 = vdwg.mxu0
    %v3894 = vsel %vm360, %v3867, -1e+30
    %v3895 = vsel %vm360, %v3891, -1e+30
    %v3896 = vsel %vm363, %v3894, -inf
    %3897 = vmax.xlane.f32.xlu0 %v3896
    %v3898 = vpop.xlane.xlu0 %3897
    %v3899 = vsel %vm363, %v3895, -inf
    %3900 = vmax.xlane.f32.xlu0 %v3899
    %v3901 = vpop.xlane.xlu0 %3900
    %v3902 = vsub.f32 %v3894, %v3898
    %v3903 = vsub.f32 %v3895, %v3901
    %v3904 = vmul.f32 %v3902, 1.442695
    %v3905 = vpow.pop %v3904
    %v3906 = vmul.f32 %v3903, 1.442695
    %v3907 = vpow.pop %v3906
    %v3908 = vsel %vm363, %v3905, 0.0
    %3909 = vadd.xlane.f32.xlu0 %v3908
    %v3910 = vpop.xlane.xlu0 %3909
    %v3911 = vsel %vm363, %v3907, 0.0
    %3912 = vadd.xlane.f32.xlu0 %v3911
    %v3913 = vpop.xlane.xlu0 %3912
    %v3914 = vrcp.pop %v3910
    %v3915 = vrcp.pop %v3913
    %v3916 = vmul.f32 %v3905, %v3914
    %v3917 = vmul.f32 %v3907, %v3915
    %v3918 = vpack.c.bf16 %v3916, %v3916
    %v3919 = vpack.c.bf16 %v3917, %v3917
    %3920 = vrot.lane.b32.xlu0 %v3684, 80
    %v3921 = vpop.permute.xlu0 %3920
    %v3923 = vsel %vm363, %v3918, 0
    %v3926 = vsel %vm391, %v3921, 0
    %3928 = vmatpush.bf16.msra.mxu0 0
    %3929 = vmatpush.bf16.msra.mxu0 0
    %3930 = vmatpush.bf16.msra.mxu0 0
    %3931 = vmatpush.bf16.msra.mxu0 0
    %3932 = vmatpush.bf16.msra.mxu0 0
    %3933 = vmatpush.bf16.msra.mxu0 0
    %3934 = vmatpush.bf16.msra.mxu0 0
    %3935 = vmatpush.bf16.msra.mxu0 %v3926
    %3936 = vmatmul.bf16.gmra.mxu0 %v3923
    %v3937 = vpop.f32.mrf.mxu0
    %v3938 = vadd.f32 0.0, %v3937
    %v3939 = vpop.f32.mrf.mxu0
    %3940 = vdwg.mxu0
    %3941 = vrot.lane.b32.xlu0 %v3708, 80
    %v3942 = vpop.permute.xlu0 %3941
    %v3944 = vsel %vm363, %v3919, 0
    %v3947 = vsel %vm391, %v3942, 0
    %3949 = vmatpush.bf16.msra.mxu0 0
    %3950 = vmatpush.bf16.msra.mxu0 0
    %3951 = vmatpush.bf16.msra.mxu0 0
    %3952 = vmatpush.bf16.msra.mxu0 0
    %3953 = vmatpush.bf16.msra.mxu0 0
    %3954 = vmatpush.bf16.msra.mxu0 0
    %3955 = vmatpush.bf16.msra.mxu0 0
    %3956 = vmatpush.bf16.msra.mxu0 %v3947
    %3957 = vmatmul.bf16.gmra.mxu0 %v3944
    %v3958 = vpop.f32.mrf.mxu0
    %v3959 = vadd.f32 0.0, %v3958
    %v3960 = vpop.f32.mrf.mxu0
    %3961 = vdwg.mxu0
    %3962 = vrot.lane.b32.xlu0 %v3494, 64
    %v3963 = vpop.permute.xlu0 %3962
    %v3964 = vrot.slane %v3963, 4
    %3965 = vrot.lane.b32.xlu0 %v3608, 64
    %v3966 = vpop.permute.xlu0 %3965
    %v3968 = vsel %vm318, %v3966, 0
    %v3971 = vsel %vm318, %v3964, 0
    %3973 = vmatpush.bf16.xpose.msra.mxu0 0
    %3974 = vmatpush.bf16.xpose.msra.mxu0 0
    %3975 = vmatpush.bf16.xpose.msra.mxu0 0
    %3976 = vmatpush.bf16.xpose.msra.mxu0 0
    %3977 = vmatpush.bf16.xpose.msra.mxu0 0
    %3978 = vmatpush.bf16.xpose.msra.mxu0 0
    %3979 = vmatpush.bf16.xpose.msra.mxu0 0
    %3980 = vmatpush.bf16.xpose.msra.mxu0 %v3971
    %3981 = vmatmul.bf16.gmra.mxu0 %v3968
    %v3982 = vpop.f32.mrf.mxu0
    %v3983 = vadd.f32 0.0, %v3982
    %v3984 = vpop.f32.mrf.mxu0
    %3985 = vdwg.mxu0
    %3986 = vrot.lane.b32.xlu0 %v3496, 64
    %v3987 = vpop.permute.xlu0 %3986
    %v3988 = vrot.slane %v3987, 4
    %3989 = vrot.lane.b32.xlu0 %v3634, 64
    %v3990 = vpop.permute.xlu0 %3989
    %v3992 = vsel %vm318, %v3990, 0
    %v3995 = vsel %vm318, %v3988, 0
    %3997 = vmatpush.bf16.xpose.msra.mxu0 0
    %3998 = vmatpush.bf16.xpose.msra.mxu0 0
    %3999 = vmatpush.bf16.xpose.msra.mxu0 0
    %4000 = vmatpush.bf16.xpose.msra.mxu0 0
    %4001 = vmatpush.bf16.xpose.msra.mxu0 0
    %4002 = vmatpush.bf16.xpose.msra.mxu0 0
    %4003 = vmatpush.bf16.xpose.msra.mxu0 0
    %4004 = vmatpush.bf16.xpose.msra.mxu0 %v3995
    %4005 = vmatmul.bf16.gmra.mxu0 %v3992
    %v4006 = vpop.f32.mrf.mxu0
    %v4007 = vadd.f32 0.0, %v4006
    %v4008 = vpop.f32.mrf.mxu0
    %4009 = vdwg.mxu0
    %v4010 = vsel %vm360, %v3983, -1e+30
    %v4011 = vsel %vm360, %v4007, -1e+30
    %v4012 = vsel %vm363, %v4010, -inf
    %4013 = vmax.xlane.f32.xlu0 %v4012
    %v4014 = vpop.xlane.xlu0 %4013
    %v4015 = vsel %vm363, %v4011, -inf
    %4016 = vmax.xlane.f32.xlu0 %v4015
    %v4017 = vpop.xlane.xlu0 %4016
    %v4018 = vsub.f32 %v4010, %v4014
    %v4019 = vsub.f32 %v4011, %v4017
    %v4020 = vmul.f32 %v4018, 1.442695
    %v4021 = vpow.pop %v4020
    %v4022 = vmul.f32 %v4019, 1.442695
    %v4023 = vpow.pop %v4022
    %v4024 = vsel %vm363, %v4021, 0.0
    %4025 = vadd.xlane.f32.xlu0 %v4024
    %v4026 = vpop.xlane.xlu0 %4025
    %v4027 = vsel %vm363, %v4023, 0.0
    %4028 = vadd.xlane.f32.xlu0 %v4027
    %v4029 = vpop.xlane.xlu0 %4028
    %v4030 = vrcp.pop %v4026
    %v4031 = vrcp.pop %v4029
    %v4032 = vmul.f32 %v4021, %v4030
    %v4033 = vmul.f32 %v4023, %v4031
    %v4034 = vpack.c.bf16 %v4032, %v4032
    %v4035 = vpack.c.bf16 %v4033, %v4033
    %4036 = vrot.lane.b32.xlu0 %v3684, 64
    %v4037 = vpop.permute.xlu0 %4036
    %v4039 = vsel %vm363, %v4034, 0
    %v4042 = vsel %vm391, %v4037, 0
    %4044 = vmatpush.bf16.msra.mxu0 0
    %4045 = vmatpush.bf16.msra.mxu0 0
    %4046 = vmatpush.bf16.msra.mxu0 0
    %4047 = vmatpush.bf16.msra.mxu0 0
    %4048 = vmatpush.bf16.msra.mxu0 0
    %4049 = vmatpush.bf16.msra.mxu0 0
    %4050 = vmatpush.bf16.msra.mxu0 0
    %4051 = vmatpush.bf16.msra.mxu0 %v4042
    %4052 = vmatmul.bf16.gmra.mxu0 %v4039
    %v4053 = vpop.f32.mrf.mxu0
    %v4054 = vadd.f32 0.0, %v4053
    %v4055 = vpop.f32.mrf.mxu0
    %4056 = vdwg.mxu0
    %4057 = vrot.lane.b32.xlu0 %v3708, 64
    %v4058 = vpop.permute.xlu0 %4057
    %v4060 = vsel %vm363, %v4035, 0
    %v4063 = vsel %vm391, %v4058, 0
    %4065 = vmatpush.bf16.msra.mxu0 0
    %4066 = vmatpush.bf16.msra.mxu0 0
    %4067 = vmatpush.bf16.msra.mxu0 0
    %4068 = vmatpush.bf16.msra.mxu0 0
    %4069 = vmatpush.bf16.msra.mxu0 0
    %4070 = vmatpush.bf16.msra.mxu0 0
    %4071 = vmatpush.bf16.msra.mxu0 0
    %4072 = vmatpush.bf16.msra.mxu0 %v4063
    %4073 = vmatmul.bf16.gmra.mxu0 %v4060
    %v4074 = vpop.f32.mrf.mxu0
    %v4075 = vadd.f32 0.0, %v4074
    %v4076 = vpop.f32.mrf.mxu0
    %4077 = vdwg.mxu0
    %4078 = vrot.lane.b32.xlu0 %v3494, 48
    %v4079 = vpop.permute.xlu0 %4078
    %v4080 = vrot.slane %v4079, 4
    %4081 = vrot.lane.b32.xlu0 %v3608, 48
    %v4082 = vpop.permute.xlu0 %4081
    %v4084 = vsel %vm318, %v4082, 0
    %v4087 = vsel %vm318, %v4080, 0
    %4089 = vmatpush.bf16.xpose.msra.mxu0 0
    %4090 = vmatpush.bf16.xpose.msra.mxu0 0
    %4091 = vmatpush.bf16.xpose.msra.mxu0 0
    %4092 = vmatpush.bf16.xpose.msra.mxu0 0
    %4093 = vmatpush.bf16.xpose.msra.mxu0 0
    %4094 = vmatpush.bf16.xpose.msra.mxu0 0
    %4095 = vmatpush.bf16.xpose.msra.mxu0 0
    %4096 = vmatpush.bf16.xpose.msra.mxu0 %v4087
    %4097 = vmatmul.bf16.gmra.mxu0 %v4084
    %v4098 = vpop.f32.mrf.mxu0
    %v4099 = vadd.f32 0.0, %v4098
    %v4100 = vpop.f32.mrf.mxu0
    %4101 = vdwg.mxu0
    %4102 = vrot.lane.b32.xlu0 %v3496, 48
    %v4103 = vpop.permute.xlu0 %4102
    %v4104 = vrot.slane %v4103, 4
    %4105 = vrot.lane.b32.xlu0 %v3634, 48
    %v4106 = vpop.permute.xlu0 %4105
    %v4108 = vsel %vm318, %v4106, 0
    %v4111 = vsel %vm318, %v4104, 0
    %4113 = vmatpush.bf16.xpose.msra.mxu0 0
    %4114 = vmatpush.bf16.xpose.msra.mxu0 0
    %4115 = vmatpush.bf16.xpose.msra.mxu0 0
    %4116 = vmatpush.bf16.xpose.msra.mxu0 0
    %4117 = vmatpush.bf16.xpose.msra.mxu0 0
    %4118 = vmatpush.bf16.xpose.msra.mxu0 0
    %4119 = vmatpush.bf16.xpose.msra.mxu0 0
    %4120 = vmatpush.bf16.xpose.msra.mxu0 %v4111
    %4121 = vmatmul.bf16.gmra.mxu0 %v4108
    %v4122 = vpop.f32.mrf.mxu0
    %v4123 = vadd.f32 0.0, %v4122
    %v4124 = vpop.f32.mrf.mxu0
    %4125 = vdwg.mxu0
    %v4126 = vsel %vm360, %v4099, -1e+30
    %v4127 = vsel %vm360, %v4123, -1e+30
    %v4128 = vsel %vm363, %v4126, -inf
    %4129 = vmax.xlane.f32.xlu0 %v4128
    %v4130 = vpop.xlane.xlu0 %4129
    %v4131 = vsel %vm363, %v4127, -inf
    %4132 = vmax.xlane.f32.xlu0 %v4131
    %v4133 = vpop.xlane.xlu0 %4132
    %v4134 = vsub.f32 %v4126, %v4130
    %v4135 = vsub.f32 %v4127, %v4133
    %v4136 = vmul.f32 %v4134, 1.442695
    %v4137 = vpow.pop %v4136
    %v4138 = vmul.f32 %v4135, 1.442695
    %v4139 = vpow.pop %v4138
    %v4140 = vsel %vm363, %v4137, 0.0
    %4141 = vadd.xlane.f32.xlu0 %v4140
    %v4142 = vpop.xlane.xlu0 %4141
    %v4143 = vsel %vm363, %v4139, 0.0
    %4144 = vadd.xlane.f32.xlu0 %v4143
    %v4145 = vpop.xlane.xlu0 %4144
    %v4146 = vrcp.pop %v4142
    %v4147 = vrcp.pop %v4145
    %v4148 = vmul.f32 %v4137, %v4146
    %v4149 = vmul.f32 %v4139, %v4147
    %v4150 = vpack.c.bf16 %v4148, %v4148
    %v4151 = vpack.c.bf16 %v4149, %v4149
    %4152 = vrot.lane.b32.xlu0 %v3684, 48
    %v4153 = vpop.permute.xlu0 %4152
    %v4155 = vsel %vm363, %v4150, 0
    %v4158 = vsel %vm391, %v4153, 0
    %4160 = vmatpush.bf16.msra.mxu0 0
    %4161 = vmatpush.bf16.msra.mxu0 0
    %4162 = vmatpush.bf16.msra.mxu0 0
    %4163 = vmatpush.bf16.msra.mxu0 0
    %4164 = vmatpush.bf16.msra.mxu0 0
    %4165 = vmatpush.bf16.msra.mxu0 0
    %4166 = vmatpush.bf16.msra.mxu0 0
    %4167 = vmatpush.bf16.msra.mxu0 %v4158
    %4168 = vmatmul.bf16.gmra.mxu0 %v4155
    %v4169 = vpop.f32.mrf.mxu0
    %v4170 = vadd.f32 0.0, %v4169
    %v4171 = vpop.f32.mrf.mxu0
    %4172 = vdwg.mxu0
    %4173 = vrot.lane.b32.xlu0 %v3708, 48
    %v4174 = vpop.permute.xlu0 %4173
    %v4176 = vsel %vm363, %v4151, 0
    %v4179 = vsel %vm391, %v4174, 0
    %4181 = vmatpush.bf16.msra.mxu0 0
    %4182 = vmatpush.bf16.msra.mxu0 0
    %4183 = vmatpush.bf16.msra.mxu0 0
    %4184 = vmatpush.bf16.msra.mxu0 0
    %4185 = vmatpush.bf16.msra.mxu0 0
    %4186 = vmatpush.bf16.msra.mxu0 0
    %4187 = vmatpush.bf16.msra.mxu0 0
    %4188 = vmatpush.bf16.msra.mxu0 %v4179
    %4189 = vmatmul.bf16.gmra.mxu0 %v4176
    %v4190 = vpop.f32.mrf.mxu0
    %v4191 = vadd.f32 0.0, %v4190
    %v4192 = vpop.f32.mrf.mxu0
    %4193 = vdwg.mxu0
    %4194 = vrot.lane.b32.xlu0 %v3494, 32
    %v4195 = vpop.permute.xlu0 %4194
    %v4196 = vrot.slane %v4195, 4
    %4197 = vrot.lane.b32.xlu0 %v3608, 32
    %v4198 = vpop.permute.xlu0 %4197
    %v4200 = vsel %vm318, %v4198, 0
    %v4203 = vsel %vm318, %v4196, 0
    %4205 = vmatpush.bf16.xpose.msra.mxu0 0
    %4206 = vmatpush.bf16.xpose.msra.mxu0 0
    %4207 = vmatpush.bf16.xpose.msra.mxu0 0
    %4208 = vmatpush.bf16.xpose.msra.mxu0 0
    %4209 = vmatpush.bf16.xpose.msra.mxu0 0
    %4210 = vmatpush.bf16.xpose.msra.mxu0 0
    %4211 = vmatpush.bf16.xpose.msra.mxu0 0
    %4212 = vmatpush.bf16.xpose.msra.mxu0 %v4203
    %4213 = vmatmul.bf16.gmra.mxu0 %v4200
    %v4214 = vpop.f32.mrf.mxu0
    %v4215 = vadd.f32 0.0, %v4214
    %v4216 = vpop.f32.mrf.mxu0
    %4217 = vdwg.mxu0
    %4218 = vrot.lane.b32.xlu0 %v3496, 32
    %v4219 = vpop.permute.xlu0 %4218
    %v4220 = vrot.slane %v4219, 4
    %4221 = vrot.lane.b32.xlu0 %v3634, 32
    %v4222 = vpop.permute.xlu0 %4221
    %v4224 = vsel %vm318, %v4222, 0
    %v4227 = vsel %vm318, %v4220, 0
    %4229 = vmatpush.bf16.xpose.msra.mxu0 0
    %4230 = vmatpush.bf16.xpose.msra.mxu0 0
    %4231 = vmatpush.bf16.xpose.msra.mxu0 0
    %4232 = vmatpush.bf16.xpose.msra.mxu0 0
    %4233 = vmatpush.bf16.xpose.msra.mxu0 0
    %4234 = vmatpush.bf16.xpose.msra.mxu0 0
    %4235 = vmatpush.bf16.xpose.msra.mxu0 0
    %4236 = vmatpush.bf16.xpose.msra.mxu0 %v4227
    %4237 = vmatmul.bf16.gmra.mxu0 %v4224
    %v4238 = vpop.f32.mrf.mxu0
    %v4239 = vadd.f32 0.0, %v4238
    %v4240 = vpop.f32.mrf.mxu0
    %4241 = vdwg.mxu0
    %v4242 = vsel %vm360, %v4215, -1e+30
    %v4243 = vsel %vm360, %v4239, -1e+30
    %v4244 = vsel %vm363, %v4242, -inf
    %4245 = vmax.xlane.f32.xlu0 %v4244
    %v4246 = vpop.xlane.xlu0 %4245
    %v4247 = vsel %vm363, %v4243, -inf
    %4248 = vmax.xlane.f32.xlu0 %v4247
    %v4249 = vpop.xlane.xlu0 %4248
    %v4250 = vsub.f32 %v4242, %v4246
    %v4251 = vsub.f32 %v4243, %v4249
    %v4252 = vmul.f32 %v4250, 1.442695
    %v4253 = vpow.pop %v4252
    %v4254 = vmul.f32 %v4251, 1.442695
    %v4255 = vpow.pop %v4254
    %v4256 = vsel %vm363, %v4253, 0.0
    %4257 = vadd.xlane.f32.xlu0 %v4256
    %v4258 = vpop.xlane.xlu0 %4257
    %v4259 = vsel %vm363, %v4255, 0.0
    %4260 = vadd.xlane.f32.xlu0 %v4259
    %v4261 = vpop.xlane.xlu0 %4260
    %v4262 = vrcp.pop %v4258
    %v4263 = vrcp.pop %v4261
    %v4264 = vmul.f32 %v4253, %v4262
    %v4265 = vmul.f32 %v4255, %v4263
    %v4266 = vpack.c.bf16 %v4264, %v4264
    %v4267 = vpack.c.bf16 %v4265, %v4265
    %4268 = vrot.lane.b32.xlu0 %v3684, 32
    %v4269 = vpop.permute.xlu0 %4268
    %v4271 = vsel %vm363, %v4266, 0
    %v4274 = vsel %vm391, %v4269, 0
    %4276 = vmatpush.bf16.msra.mxu0 0
    %4277 = vmatpush.bf16.msra.mxu0 0
    %4278 = vmatpush.bf16.msra.mxu0 0
    %4279 = vmatpush.bf16.msra.mxu0 0
    %4280 = vmatpush.bf16.msra.mxu0 0
    %4281 = vmatpush.bf16.msra.mxu0 0
    %4282 = vmatpush.bf16.msra.mxu0 0
    %4283 = vmatpush.bf16.msra.mxu0 %v4274
    %4284 = vmatmul.bf16.gmra.mxu0 %v4271
    %v4285 = vpop.f32.mrf.mxu0
    %v4286 = vadd.f32 0.0, %v4285
    %v4287 = vpop.f32.mrf.mxu0
    %4288 = vdwg.mxu0
    %4289 = vrot.lane.b32.xlu0 %v3708, 32
    %v4290 = vpop.permute.xlu0 %4289
    %v4292 = vsel %vm363, %v4267, 0
    %v4295 = vsel %vm391, %v4290, 0
    %4297 = vmatpush.bf16.msra.mxu0 0
    %4298 = vmatpush.bf16.msra.mxu0 0
    %4299 = vmatpush.bf16.msra.mxu0 0
    %4300 = vmatpush.bf16.msra.mxu0 0
    %4301 = vmatpush.bf16.msra.mxu0 0
    %4302 = vmatpush.bf16.msra.mxu0 0
    %4303 = vmatpush.bf16.msra.mxu0 0
    %4304 = vmatpush.bf16.msra.mxu0 %v4295
    %4305 = vmatmul.bf16.gmra.mxu0 %v4292
    %v4306 = vpop.f32.mrf.mxu0
    %v4307 = vadd.f32 0.0, %v4306
    %v4308 = vpop.f32.mrf.mxu0
    %4309 = vdwg.mxu0
    %4310 = vrot.lane.b32.xlu0 %v3494, 16
    %v4311 = vpop.permute.xlu0 %4310
    %v4312 = vrot.slane %v4311, 4
    %4313 = vrot.lane.b32.xlu0 %v3608, 16
    %v4314 = vpop.permute.xlu0 %4313
    %v4316 = vsel %vm318, %v4314, 0
    %v4319 = vsel %vm318, %v4312, 0
    %4321 = vmatpush.bf16.xpose.msra.mxu0 0
    %4322 = vmatpush.bf16.xpose.msra.mxu0 0
    %4323 = vmatpush.bf16.xpose.msra.mxu0 0
    %4324 = vmatpush.bf16.xpose.msra.mxu0 0
    %4325 = vmatpush.bf16.xpose.msra.mxu0 0
    %4326 = vmatpush.bf16.xpose.msra.mxu0 0
    %4327 = vmatpush.bf16.xpose.msra.mxu0 0
    %4328 = vmatpush.bf16.xpose.msra.mxu0 %v4319
    %4329 = vmatmul.bf16.gmra.mxu0 %v4316
    %v4330 = vpop.f32.mrf.mxu0
    %v4331 = vadd.f32 0.0, %v4330
    %v4332 = vpop.f32.mrf.mxu0
    %4333 = vdwg.mxu0
    %4334 = vrot.lane.b32.xlu0 %v3496, 16
    %v4335 = vpop.permute.xlu0 %4334
    %v4336 = vrot.slane %v4335, 4
    %4337 = vrot.lane.b32.xlu0 %v3634, 16
    %v4338 = vpop.permute.xlu0 %4337
    %v4340 = vsel %vm318, %v4338, 0
    %v4343 = vsel %vm318, %v4336, 0
    %4345 = vmatpush.bf16.xpose.msra.mxu0 0
    %4346 = vmatpush.bf16.xpose.msra.mxu0 0
    %4347 = vmatpush.bf16.xpose.msra.mxu0 0
    %4348 = vmatpush.bf16.xpose.msra.mxu0 0
    %4349 = vmatpush.bf16.xpose.msra.mxu0 0
    %4350 = vmatpush.bf16.xpose.msra.mxu0 0
    %4351 = vmatpush.bf16.xpose.msra.mxu0 0
    %4352 = vmatpush.bf16.xpose.msra.mxu0 %v4343
    %4353 = vmatmul.bf16.gmra.mxu0 %v4340
    %v4354 = vpop.f32.mrf.mxu0
    %v4355 = vadd.f32 0.0, %v4354
    %v4356 = vpop.f32.mrf.mxu0
    %4357 = vdwg.mxu0
    %v4358 = vsel %vm360, %v4331, -1e+30
    %v4359 = vsel %vm360, %v4355, -1e+30
    %v4360 = vsel %vm363, %v4358, -inf
    %4361 = vmax.xlane.f32.xlu0 %v4360
    %v4362 = vpop.xlane.xlu0 %4361
    %v4363 = vsel %vm363, %v4359, -inf
    %4364 = vmax.xlane.f32.xlu0 %v4363
    %v4365 = vpop.xlane.xlu0 %4364
    %v4366 = vsub.f32 %v4358, %v4362
    %v4367 = vsub.f32 %v4359, %v4365
    %v4368 = vmul.f32 %v4366, 1.442695
    %v4369 = vpow.pop %v4368
    %v4370 = vmul.f32 %v4367, 1.442695
    %v4371 = vpow.pop %v4370
    %v4372 = vsel %vm363, %v4369, 0.0
    %4373 = vadd.xlane.f32.xlu0 %v4372
    %v4374 = vpop.xlane.xlu0 %4373
    %v4375 = vsel %vm363, %v4371, 0.0
    %4376 = vadd.xlane.f32.xlu0 %v4375
    %v4377 = vpop.xlane.xlu0 %4376
    %v4378 = vrcp.pop %v4374
    %v4379 = vrcp.pop %v4377
    %v4380 = vmul.f32 %v4369, %v4378
    %v4381 = vmul.f32 %v4371, %v4379
    %v4382 = vpack.c.bf16 %v4380, %v4380
    %v4383 = vpack.c.bf16 %v4381, %v4381
    %4384 = vrot.lane.b32.xlu0 %v3684, 16
    %v4385 = vpop.permute.xlu0 %4384
    %v4387 = vsel %vm363, %v4382, 0
    %v4390 = vsel %vm391, %v4385, 0
    %4392 = vmatpush.bf16.msra.mxu0 0
    %4393 = vmatpush.bf16.msra.mxu0 0
    %4394 = vmatpush.bf16.msra.mxu0 0
    %4395 = vmatpush.bf16.msra.mxu0 0
    %4396 = vmatpush.bf16.msra.mxu0 0
    %4397 = vmatpush.bf16.msra.mxu0 0
    %4398 = vmatpush.bf16.msra.mxu0 0
    %4399 = vmatpush.bf16.msra.mxu0 %v4390
    %4400 = vmatmul.bf16.gmra.mxu0 %v4387
    %v4401 = vpop.f32.mrf.mxu0
    %v4402 = vadd.f32 0.0, %v4401
    %v4403 = vpop.f32.mrf.mxu0
    %4404 = vdwg.mxu0
    %4405 = vrot.lane.b32.xlu0 %v3708, 16
    %v4406 = vpop.permute.xlu0 %4405
    %v4408 = vsel %vm363, %v4383, 0
    %v4411 = vsel %vm391, %v4406, 0
    %4413 = vmatpush.bf16.msra.mxu0 0
    %4414 = vmatpush.bf16.msra.mxu0 0
    %4415 = vmatpush.bf16.msra.mxu0 0
    %4416 = vmatpush.bf16.msra.mxu0 0
    %4417 = vmatpush.bf16.msra.mxu0 0
    %4418 = vmatpush.bf16.msra.mxu0 0
    %4419 = vmatpush.bf16.msra.mxu0 0
    %4420 = vmatpush.bf16.msra.mxu0 %v4411
    %4421 = vmatmul.bf16.gmra.mxu0 %v4408
    %v4422 = vpop.f32.mrf.mxu0
    %v4423 = vadd.f32 0.0, %v4422
    %v4424 = vpop.f32.mrf.mxu0
    %4425 = vdwg.mxu0
    %4428 = vrot.lane.b32.xlu0 %v3703, 16
    %v4429 = vpop.permute.xlu0 %4428
    %4430 = vrot.lane.b32.xlu0 %v3727, 16
    %v4431 = vpop.permute.xlu0 %4430
    %4436 = vrot.lane.b32.xlu0 %v3822, 32
    %v4437 = vpop.permute.xlu0 %4436
    %4438 = vrot.lane.b32.xlu0 %v3843, 32
    %v4439 = vpop.permute.xlu0 %4438
    %4444 = vrot.lane.b32.xlu0 %v3938, 48
    %v4445 = vpop.permute.xlu0 %4444
    %4446 = vrot.lane.b32.xlu0 %v3959, 48
    %v4447 = vpop.permute.xlu0 %4446
    %4452 = vrot.lane.b32.xlu0 %v4054, 64
    %v4453 = vpop.permute.xlu0 %4452
    %4454 = vrot.lane.b32.xlu0 %v4075, 64
    %v4455 = vpop.permute.xlu0 %4454
    %4460 = vrot.lane.b32.xlu0 %v4170, 80
    %v4461 = vpop.permute.xlu0 %4460
    %4462 = vrot.lane.b32.xlu0 %v4191, 80
    %v4463 = vpop.permute.xlu0 %4462
    %4468 = vrot.lane.b32.xlu0 %v4286, 96
    %v4469 = vpop.permute.xlu0 %4468
    %4470 = vrot.lane.b32.xlu0 %v4307, 96
    %v4471 = vpop.permute.xlu0 %4470
    %4476 = vrot.lane.b32.xlu0 %v4402, 112
    %v4477 = vpop.permute.xlu0 %4476
    %4478 = vrot.lane.b32.xlu0 %v4423, 112
    %v4479 = vpop.permute.xlu0 %4478
    %v4482 = vsel %vm318, %v3582, %v4429
    %v4483 = vsel %vm318, %v3601, %v4431
    %v4484 = vsel %vm1307, %v4482, %v4437
    %v4485 = vsel %vm1307, %v4483, %v4439
    %v4486 = vsel %vm1310, %v4484, %v4445
    %v4487 = vsel %vm1310, %v4485, %v4447
    %v4488 = vsel %vm124, %v4486, %v4453
    %v4489 = vsel %vm124, %v4487, %v4455
    %v4490 = vsel %vm1315, %v4488, %v4461
    %v4491 = vsel %vm1315, %v4489, %v4463
    %v4492 = vsel %vm1318, %v4490, %v4469
    %v4493 = vsel %vm1318, %v4491, %v4471
    %v4494 = vsel %vm1321, %v4492, %v4477
    %v4495 = vsel %vm1321, %v4493, %v4479
    %v4496 = vpack.c.bf16 %v4495, %v4494
    %s4497 = scalar_lea.vmem %s4, 128
    %v4498 = vld [vmem:[%s4497] sm:$0xf]
    %v4499 = vld [vmem:[%s4497 + $0x4] sm:$0xf]
    %v4500 = vld [vmem:[%s4497 + $0x8] sm:$0xf]
    %v4501 = vld [vmem:[%s4497 + $0xc] sm:$0xf]
    %v4502 = vld [vmem:[%s4497 + $0x10] sm:$0xf]
    %v4503 = vld [vmem:[%s4497 + $0x14] sm:$0xf]
    %v4504 = vld [vmem:[%s4497 + $0x18] sm:$0xf]
    %v4505 = vld [vmem:[%s4497 + $0x1c] sm:$0xf]
    %v4506 = vld [vmem:[%s4497 + $0x20] sm:$0xf]
    %v4507 = vld [vmem:[%s4497 + $0x24] sm:$0xf]
    %v4508 = vld [vmem:[%s4497 + $0x28] sm:$0xf]
    %v4509 = vld [vmem:[%s4497 + $0x2c] sm:$0xf]
    %v4510 = vld [vmem:[%s4497 + $0x30] sm:$0xf]
    %v4511 = vld [vmem:[%s4497 + $0x34] sm:$0xf]
    %v4512 = vld [vmem:[%s4497 + $0x38] sm:$0xf]
    %v4513 = vld [vmem:[%s4497 + $0x3c] sm:$0xf]
    %s4514 = scalar_lea.vmem %s5, 2
    %v4515 = vld [vmem:[%s4514] sm:$0x1]
    %v4517 = vperm.slane %v4515, 0
    %v4535 = vunpack.c.l.b16 %v4498
    %v4536 = vunpack.c.l.b16 %v4499
    %v4537 = vunpack.c.l.b16 %v4500
    %v4538 = vunpack.c.l.b16 %v4501
    %v4539 = vunpack.c.l.b16 %v4502
    %v4540 = vunpack.c.l.b16 %v4503
    %v4541 = vunpack.c.l.b16 %v4504
    %v4542 = vunpack.c.l.b16 %v4505
    %v4543 = vunpack.c.l.b16 %v4506
    %v4544 = vunpack.c.l.b16 %v4507
    %v4545 = vunpack.c.l.b16 %v4508
    %v4546 = vunpack.c.l.b16 %v4509
    %v4547 = vunpack.c.l.b16 %v4510
    %v4548 = vunpack.c.l.b16 %v4511
    %v4549 = vunpack.c.l.b16 %v4512
    %v4550 = vunpack.c.l.b16 %v4513
    %v4551 = vpack.c.b16 %v4536, %v4535
    %v4552 = vpack.c.b16 %v4538, %v4537
    %v4553 = vpack.c.b16 %v4540, %v4539
    %v4554 = vpack.c.b16 %v4542, %v4541
    %v4555 = vpack.c.b16 %v4544, %v4543
    %v4556 = vpack.c.b16 %v4546, %v4545
    %v4557 = vpack.c.b16 %v4548, %v4547
    %v4558 = vpack.c.b16 %v4550, %v4549
    %4567 = vmatpush.bf16.msra.mxu0 %v4558
    %4568 = vmatpush.bf16.msra.mxu0 %v4557
    %4569 = vmatpush.bf16.msra.mxu0 %v4556
    %4570 = vmatpush.bf16.msra.mxu0 %v4555
    %4571 = vmatpush.bf16.msra.mxu0 %v4554
    %4572 = vmatpush.bf16.msra.mxu0 %v4553
    %4573 = vmatpush.bf16.msra.mxu0 %v4552
    %4574 = vmatpush.bf16.msra.mxu0 %v4551
    %4575 = vmatmul.bf16.gmra.mxu0 %v4496
    %v4576 = vpop.f32.mrf.mxu0
    %v4577 = vadd.f32 %v4517, %v4576
    %v4578 = vpop.f32.mrf.mxu0
    %v4579 = vadd.f32 %v4517, %v4578
    %4580 = vdwg.mxu0
    %v4581 = vadd.f32 %v3307, %v4577
    %v4582 = vadd.f32 %v3308, %v4579
    %s4583 = scalar_lea.vmem %s8, 2
    %v4584 = vld [vmem:[%s4583] sm:$0x1]
    %s4585 = scalar_lea.vmem %s9, 2
    %v4586 = vld [vmem:[%s4585] sm:$0x1]
    %v4587 = vsel %vm124, %v4581, 0.0
    %4588 = vadd.xlane.f32.xlu0 %v4587
    %v4589 = vpop.xlane.xlu0 %4588
    %v4590 = vsel %vm124, %v4582, 0.0
    %4591 = vadd.xlane.f32.xlu0 %v4590
    %v4592 = vpop.xlane.xlu0 %4591
    %v4593 = vmul.f32 %v4589, %v137
    %v4594 = vmul.f32 %v4592, %v137
    %v4595 = vsub.f32 %v4581, %v4593
    %v4596 = vsub.f32 %v4582, %v4594
    %v4597 = vmul.f32 %v4595, %v4595
    %v4598 = vmul.f32 %v4596, %v4596
    %v4599 = vsel %vm124, %v4597, 0.0
    %4600 = vadd.xlane.f32.xlu0 %v4599
    %v4601 = vpop.xlane.xlu0 %4600
    %v4602 = vsel %vm124, %v4598, 0.0
    %4603 = vadd.xlane.f32.xlu0 %v4602
    %v4604 = vpop.xlane.xlu0 %4603
    %v4605 = vmul.f32 %v4601, %v137
    %v4606 = vmul.f32 %v4604, %v137
    %v4607 = vadd.f32 %v4605, 1e-05
    %v4608 = vadd.f32 %v4606, 1e-05
    %v4609 = vrsqrt.pop %v4607
    %v4610 = vmul.f32 %v4609, %v4607
    %v4611 = vmul.f32 %v4610, %v4609
    %v4612 = vmul.f32 0.5, %v4611
    %v4613 = vsub.f32 1.5, %v4612
    %v4614 = vmul.f32 %v4609, %v4613
    %vm4615 = vweird.f32 %v4607
    %vm4616 = vweird.f32 %v4609
    %vm4617 = vmor %vm4615, %vm4616
    %v4618 = vsel %vm4617, %v4609, %v4614
    %v4619 = vrsqrt.pop %v4608
    %v4620 = vmul.f32 %v4619, %v4608
    %v4621 = vmul.f32 %v4620, %v4619
    %v4622 = vmul.f32 0.5, %v4621
    %v4623 = vsub.f32 1.5, %v4622
    %v4624 = vmul.f32 %v4619, %v4623
    %vm4625 = vweird.f32 %v4608
    %vm4626 = vweird.f32 %v4619
    %vm4627 = vmor %vm4625, %vm4626
    %v4628 = vsel %vm4627, %v4619, %v4624
    %v4629 = vmul.f32 %v4595, %v4618
    %v4630 = vmul.f32 %v4596, %v4628
    %v4632 = vperm.slane %v4584, 0
    %v4634 = vmul.f32 %v4629, %v4632
    %v4635 = vmul.f32 %v4630, %v4632
    %v4637 = vperm.slane %v4586, 0
    %v4639 = vadd.f32 %v4634, %v4637
    %v4640 = vadd.f32 %v4635, %v4637
    %v4641 = vpack.c.bf16 %v4640, %v4639
    %s4642 = scalar_lea.vmem %s10, 128
    %v4643 = vld [vmem:[%s4642] sm:$0xff]
    %v4644 = vld [vmem:[%s4642 + $0x8] sm:$0xff]
    %v4645 = vld [vmem:[%s4642 + $0x10] sm:$0xff]
    %v4646 = vld [vmem:[%s4642 + $0x18] sm:$0xff]
    %v4647 = vld [vmem:[%s4642 + $0x20] sm:$0xff]
    %v4648 = vld [vmem:[%s4642 + $0x28] sm:$0xff]
    %v4649 = vld [vmem:[%s4642 + $0x30] sm:$0xff]
    %v4650 = vld [vmem:[%s4642 + $0x38] sm:$0xff]
    %s4651 = scalar_lea.vmem %s11, 4
    %v4652 = vld [vmem:[%s4651] sm:$0x3]
    %v4654 = vperm.slane %v4652, 0
    %v4655 = vperm.slane %v4652, 1
    %v4666 = vunpack.c.l.b16 %v4643
    %v4667 = vunpack.c.h.b16 %v4643
    %v4668 = vunpack.c.l.b16 %v4644
    %v4669 = vunpack.c.h.b16 %v4644
    %v4670 = vunpack.c.l.b16 %v4645
    %v4671 = vunpack.c.h.b16 %v4645
    %v4672 = vunpack.c.l.b16 %v4646
    %v4673 = vunpack.c.h.b16 %v4646
    %v4674 = vunpack.c.l.b16 %v4647
    %v4675 = vunpack.c.h.b16 %v4647
    %v4676 = vunpack.c.l.b16 %v4648
    %v4677 = vunpack.c.h.b16 %v4648
    %v4678 = vunpack.c.l.b16 %v4649
    %v4679 = vunpack.c.h.b16 %v4649
    %v4680 = vunpack.c.l.b16 %v4650
    %v4681 = vunpack.c.h.b16 %v4650
    %v4682 = vpack.c.b16 %v4668, %v4666
    %v4683 = vpack.c.b16 %v4669, %v4667
    %v4684 = vpack.c.b16 %v4672, %v4670
    %v4685 = vpack.c.b16 %v4673, %v4671
    %v4686 = vpack.c.b16 %v4676, %v4674
    %v4687 = vpack.c.b16 %v4677, %v4675
    %v4688 = vpack.c.b16 %v4680, %v4678
    %v4689 = vpack.c.b16 %v4681, %v4679
    %v4699 = vsel %vm124, %v4641, 0
    %4701 = vmatpush.bf16.msra.mxu0 0
    %4702 = vmatpush.bf16.msra.mxu0 0
    %4703 = vmatpush.bf16.msra.mxu0 0
    %4704 = vmatpush.bf16.msra.mxu0 0
    %4705 = vmatpush.bf16.msra.mxu0 %v4688
    %4706 = vmatpush.bf16.msra.mxu0 %v4686
    %4707 = vmatpush.bf16.msra.mxu0 %v4684
    %4708 = vmatpush.bf16.msra.mxu0 %v4682
    %4709 = vmatmul.bf16.gmra.mxu0 %v4699
    %v4710 = vpop.f32.mrf.mxu0
    %v4711 = vadd.f32 %v4654, %v4710
    %v4712 = vpop.f32.mrf.mxu0
    %v4713 = vadd.f32 %v4654, %v4712
    %4714 = vdwg.mxu0
    %4715 = vmatpush.bf16.msra.mxu0 0
    %4716 = vmatpush.bf16.msra.mxu0 0
    %4717 = vmatpush.bf16.msra.mxu0 0
    %4718 = vmatpush.bf16.msra.mxu0 0
    %4719 = vmatpush.bf16.msra.mxu0 %v4689
    %4720 = vmatpush.bf16.msra.mxu0 %v4687
    %4721 = vmatpush.bf16.msra.mxu0 %v4685
    %4722 = vmatpush.bf16.msra.mxu0 %v4683
    %4723 = vmatmul.bf16.gmra.mxu0 %v4699
    %v4724 = vpop.f32.mrf.mxu0
    %v4725 = vadd.f32 %v4655, %v4724
    %v4726 = vpop.f32.mrf.mxu0
    %v4727 = vadd.f32 %v4655, %v4726
    %4728 = vdwg.mxu0
    %v4729 = vmax.f32 %v4711, 0.0
    %v4730 = vmax.f32 %v4725, 0.0
    %v4731 = vmax.f32 %v4713, 0.0
    %v4732 = vmax.f32 %v4727, 0.0
    %v4733 = vpack.c.bf16 %v4731, %v4729
    %v4734 = vpack.c.bf16 %v4732, %v4730
    %s4735 = scalar_lea.vmem %s12, 256
    %v4736 = vld [vmem:[%s4735] sm:$0xf]
    %v4737 = vld [vmem:[%s4735 + $0x4] sm:$0xf]
    %v4738 = vld [vmem:[%s4735 + $0x8] sm:$0xf]
    %v4739 = vld [vmem:[%s4735 + $0xc] sm:$0xf]
    %v4740 = vld [vmem:[%s4735 + $0x10] sm:$0xf]
    %v4741 = vld [vmem:[%s4735 + $0x14] sm:$0xf]
    %v4742 = vld [vmem:[%s4735 + $0x18] sm:$0xf]
    %v4743 = vld [vmem:[%s4735 + $0x1c] sm:$0xf]
    %v4744 = vld [vmem:[%s4735 + $0x20] sm:$0xf]
    %v4745 = vld [vmem:[%s4735 + $0x24] sm:$0xf]
    %v4746 = vld [vmem:[%s4735 + $0x28] sm:$0xf]
    %v4747 = vld [vmem:[%s4735 + $0x2c] sm:$0xf]
    %v4748 = vld [vmem:[%s4735 + $0x30] sm:$0xf]
    %v4749 = vld [vmem:[%s4735 + $0x34] sm:$0xf]
    %v4750 = vld [vmem:[%s4735 + $0x38] sm:$0xf]
    %v4751 = vld [vmem:[%s4735 + $0x3c] sm:$0xf]
    %v4752 = vld [vmem:[%s4735 + $0x40] sm:$0xf]
    %v4753 = vld [vmem:[%s4735 + $0x44] sm:$0xf]
    %v4754 = vld [vmem:[%s4735 + $0x48] sm:$0xf]
    %v4755 = vld [vmem:[%s4735 + $0x4c] sm:$0xf]
    %v4756 = vld [vmem:[%s4735 + $0x50] sm:$0xf]
    %v4757 = vld [vmem:[%s4735 + $0x54] sm:$0xf]
    %v4758 = vld [vmem:[%s4735 + $0x58] sm:$0xf]
    %v4759 = vld [vmem:[%s4735 + $0x5c] sm:$0xf]
    %v4760 = vld [vmem:[%s4735 + $0x60] sm:$0xf]
    %v4761 = vld [vmem:[%s4735 + $0x64] sm:$0xf]
    %v4762 = vld [vmem:[%s4735 + $0x68] sm:$0xf]
    %v4763 = vld [vmem:[%s4735 + $0x6c] sm:$0xf]
    %v4764 = vld [vmem:[%s4735 + $0x70] sm:$0xf]
    %v4765 = vld [vmem:[%s4735 + $0x74] sm:$0xf]
    %v4766 = vld [vmem:[%s4735 + $0x78] sm:$0xf]
    %v4767 = vld [vmem:[%s4735 + $0x7c] sm:$0xf]
    %s4768 = scalar_lea.vmem %s13, 2
    %v4769 = vld [vmem:[%s4768] sm:$0x1]
    %v4771 = vperm.slane %v4769, 0
    %v4805 = vunpack.c.l.b16 %v4736
    %v4806 = vunpack.c.l.b16 %v4737
    %v4807 = vunpack.c.l.b16 %v4738
    %v4808 = vunpack.c.l.b16 %v4739
    %v4809 = vunpack.c.l.b16 %v4740
    %v4810 = vunpack.c.l.b16 %v4741
    %v4811 = vunpack.c.l.b16 %v4742
    %v4812 = vunpack.c.l.b16 %v4743
    %v4813 = vunpack.c.l.b16 %v4744
    %v4814 = vunpack.c.l.b16 %v4745
    %v4815 = vunpack.c.l.b16 %v4746
    %v4816 = vunpack.c.l.b16 %v4747
    %v4817 = vunpack.c.l.b16 %v4748
    %v4818 = vunpack.c.l.b16 %v4749
    %v4819 = vunpack.c.l.b16 %v4750
    %v4820 = vunpack.c.l.b16 %v4751
    %v4821 = vunpack.c.l.b16 %v4752
    %v4822 = vunpack.c.l.b16 %v4753
    %v4823 = vunpack.c.l.b16 %v4754
    %v4824 = vunpack.c.l.b16 %v4755
    %v4825 = vunpack.c.l.b16 %v4756
    %v4826 = vunpack.c.l.b16 %v4757
    %v4827 = vunpack.c.l.b16 %v4758
    %v4828 = vunpack.c.l.b16 %v4759
    %v4829 = vunpack.c.l.b16 %v4760
    %v4830 = vunpack.c.l.b16 %v4761
    %v4831 = vunpack.c.l.b16 %v4762
    %v4832 = vunpack.c.l.b16 %v4763
    %v4833 = vunpack.c.l.b16 %v4764
    %v4834 = vunpack.c.l.b16 %v4765
    %v4835 = vunpack.c.l.b16 %v4766
    %v4836 = vunpack.c.l.b16 %v4767
    %v4837 = vpack.c.b16 %v4806, %v4805
    %v4838 = vpack.c.b16 %v4808, %v4807
    %v4839 = vpack.c.b16 %v4810, %v4809
    %v4840 = vpack.c.b16 %v4812, %v4811
    %v4841 = vpack.c.b16 %v4814, %v4813
    %v4842 = vpack.c.b16 %v4816, %v4815
    %v4843 = vpack.c.b16 %v4818, %v4817
    %v4844 = vpack.c.b16 %v4820, %v4819
    %v4845 = vpack.c.b16 %v4822, %v4821
    %v4846 = vpack.c.b16 %v4824, %v4823
    %v4847 = vpack.c.b16 %v4826, %v4825
    %v4848 = vpack.c.b16 %v4828, %v4827
    %v4849 = vpack.c.b16 %v4830, %v4829
    %v4850 = vpack.c.b16 %v4832, %v4831
    %v4851 = vpack.c.b16 %v4834, %v4833
    %v4852 = vpack.c.b16 %v4836, %v4835
    %4869 = vmatpush.bf16.msra.mxu0 %v4844
    %4870 = vmatpush.bf16.msra.mxu0 %v4843
    %4871 = vmatpush.bf16.msra.mxu0 %v4842
    %4872 = vmatpush.bf16.msra.mxu0 %v4841
    %4873 = vmatpush.bf16.msra.mxu0 %v4840
    %4874 = vmatpush.bf16.msra.mxu0 %v4839
    %4875 = vmatpush.bf16.msra.mxu0 %v4838
    %4876 = vmatpush.bf16.msra.mxu0 %v4837
    %4877 = vmatmul.bf16.gmra.mxu0 %v4733
    %v4878 = vpop.f32.mrf.mxu0
    %v4879 = vadd.f32 %v4771, %v4878
    %v4880 = vpop.f32.mrf.mxu0
    %v4881 = vadd.f32 %v4771, %v4880
    %4882 = vdwg.mxu0
    %4883 = vmatpush.bf16.msra.mxu0 %v4852
    %4884 = vmatpush.bf16.msra.mxu0 %v4851
    %4885 = vmatpush.bf16.msra.mxu0 %v4850
    %4886 = vmatpush.bf16.msra.mxu0 %v4849
    %4887 = vmatpush.bf16.msra.mxu0 %v4848
    %4888 = vmatpush.bf16.msra.mxu0 %v4847
    %4889 = vmatpush.bf16.msra.mxu0 %v4846
    %4890 = vmatpush.bf16.msra.mxu0 %v4845
    %4891 = vmatmul.bf16.gmra.mxu0 %v4734
    %v4892 = vpop.f32.mrf.mxu0
    %v4893 = vadd.f32 %v4879, %v4892
    %v4894 = vpop.f32.mrf.mxu0
    %v4895 = vadd.f32 %v4881, %v4894
    %4896 = vdwg.mxu0
    %v4897 = vadd.f32 %v4581, %v4893
    %v4898 = vadd.f32 %v4582, %v4895
    %s4899 = scalar_lea.vmem %s6, 3
    %v4900 = vld [vmem:[%s4899] sm:$0x1]
    %s4901 = scalar_lea.vmem %s7, 3
    %v4902 = vld [vmem:[%s4901] sm:$0x1]
    %v4903 = vsel %vm124, %v4897, 0.0
    %4904 = vadd.xlane.f32.xlu0 %v4903
    %v4905 = vpop.xlane.xlu0 %4904
    %v4906 = vsel %vm124, %v4898, 0.0
    %4907 = vadd.xlane.f32.xlu0 %v4906
    %v4908 = vpop.xlane.xlu0 %4907
    %v4909 = vmul.f32 %v4905, %v137
    %v4910 = vmul.f32 %v4908, %v137
    %v4911 = vsub.f32 %v4897, %v4909
    %v4912 = vsub.f32 %v4898, %v4910
    %v4913 = vmul.f32 %v4911, %v4911
    %v4914 = vmul.f32 %v4912, %v4912
    %v4915 = vsel %vm124, %v4913, 0.0
    %4916 = vadd.xlane.f32.xlu0 %v4915
    %v4917 = vpop.xlane.xlu0 %4916
    %v4918 = vsel %vm124, %v4914, 0.0
    %4919 = vadd.xlane.f32.xlu0 %v4918
    %v4920 = vpop.xlane.xlu0 %4919
    %v4921 = vmul.f32 %v4917, %v137
    %v4922 = vmul.f32 %v4920, %v137
    %v4923 = vadd.f32 %v4921, 1e-05
    %v4924 = vadd.f32 %v4922, 1e-05
    %v4925 = vrsqrt.pop %v4923
    %v4926 = vmul.f32 %v4925, %v4923
    %v4927 = vmul.f32 %v4926, %v4925
    %v4928 = vmul.f32 0.5, %v4927
    %v4929 = vsub.f32 1.5, %v4928
    %v4930 = vmul.f32 %v4925, %v4929
    %vm4931 = vweird.f32 %v4923
    %vm4932 = vweird.f32 %v4925
    %vm4933 = vmor %vm4931, %vm4932
    %v4934 = vsel %vm4933, %v4925, %v4930
    %v4935 = vrsqrt.pop %v4924
    %v4936 = vmul.f32 %v4935, %v4924
    %v4937 = vmul.f32 %v4936, %v4935
    %v4938 = vmul.f32 0.5, %v4937
    %v4939 = vsub.f32 1.5, %v4938
    %v4940 = vmul.f32 %v4935, %v4939
    %vm4941 = vweird.f32 %v4924
    %vm4942 = vweird.f32 %v4935
    %vm4943 = vmor %vm4941, %vm4942
    %v4944 = vsel %vm4943, %v4935, %v4940
    %v4945 = vmul.f32 %v4911, %v4934
    %v4946 = vmul.f32 %v4912, %v4944
    %v4948 = vperm.slane %v4900, 0
    %v4950 = vmul.f32 %v4945, %v4948
    %v4951 = vmul.f32 %v4946, %v4948
    %v4953 = vperm.slane %v4902, 0
    %v4955 = vadd.f32 %v4950, %v4953
    %v4956 = vadd.f32 %v4951, %v4953
    %v4957 = vpack.c.bf16 %v4956, %v4955
    %s4958 = scalar_lea.vmem %s3, 288
    %v4959 = vld [vmem:[%s4958] sm:$0xff]
    %v4960 = vld [vmem:[%s4958 + $0x8] sm:$0xf]
    %v4961 = vld [vmem:[%s4958 + $0xc] sm:$0xff]
    %v4962 = vld [vmem:[%s4958 + $0x14] sm:$0xf]
    %v4963 = vld [vmem:[%s4958 + $0x18] sm:$0xff]
    %v4964 = vld [vmem:[%s4958 + $0x20] sm:$0xf]
    %v4965 = vld [vmem:[%s4958 + $0x24] sm:$0xff]
    %v4966 = vld [vmem:[%s4958 + $0x2c] sm:$0xf]
    %v4967 = vld [vmem:[%s4958 + $0x30] sm:$0xff]
    %v4968 = vld [vmem:[%s4958 + $0x38] sm:$0xf]
    %v4969 = vld [vmem:[%s4958 + $0x3c] sm:$0xff]
    %v4970 = vld [vmem:[%s4958 + $0x44] sm:$0xf]
    %v4971 = vld [vmem:[%s4958 + $0x48] sm:$0xff]
    %v4972 = vld [vmem:[%s4958 + $0x50] sm:$0xf]
    %v4973 = vld [vmem:[%s4958 + $0x54] sm:$0xff]
    %v4974 = vld [vmem:[%s4958 + $0x5c] sm:$0xf]
    %v4991 = vunpack.c.l.b16 %v4959
    %v4992 = vunpack.c.h.b16 %v4959
    %v4993 = vunpack.c.l.b16 %v4960
    %v4994 = vunpack.c.l.b16 %v4961
    %v4995 = vunpack.c.h.b16 %v4961
    %v4996 = vunpack.c.l.b16 %v4962
    %v4997 = vunpack.c.l.b16 %v4963
    %v4998 = vunpack.c.h.b16 %v4963
    %v4999 = vunpack.c.l.b16 %v4964
    %v5000 = vunpack.c.l.b16 %v4965
    %v5001 = vunpack.c.h.b16 %v4965
    %v5002 = vunpack.c.l.b16 %v4966
    %v5003 = vunpack.c.l.b16 %v4967
    %v5004 = vunpack.c.h.b16 %v4967
    %v5005 = vunpack.c.l.b16 %v4968
    %v5006 = vunpack.c.l.b16 %v4969
    %v5007 = vunpack.c.h.b16 %v4969
    %v5008 = vunpack.c.l.b16 %v4970
    %v5009 = vunpack.c.l.b16 %v4971
    %v5010 = vunpack.c.h.b16 %v4971
    %v5011 = vunpack.c.l.b16 %v4972
    %v5012 = vunpack.c.l.b16 %v4973
    %v5013 = vunpack.c.h.b16 %v4973
    %v5014 = vunpack.c.l.b16 %v4974
    %v5015 = vpack.c.b16 %v4994, %v4991
    %v5016 = vpack.c.b16 %v4995, %v4992
    %v5017 = vpack.c.b16 %v4996, %v4993
    %v5018 = vpack.c.b16 %v5000, %v4997
    %v5019 = vpack.c.b16 %v5001, %v4998
    %v5020 = vpack.c.b16 %v5002, %v4999
    %v5021 = vpack.c.b16 %v5006, %v5003
    %v5022 = vpack.c.b16 %v5007, %v5004
    %v5023 = vpack.c.b16 %v5008, %v5005
    %v5024 = vpack.c.b16 %v5012, %v5009
    %v5025 = vpack.c.b16 %v5013, %v5010
    %v5026 = vpack.c.b16 %v5014, %v5011
    %v5040 = vsel %vm124, %v4957, 0
    %5042 = vmatpush.bf16.msra.mxu0 0
    %5043 = vmatpush.bf16.msra.mxu0 0
    %5044 = vmatpush.bf16.msra.mxu0 0
    %5045 = vmatpush.bf16.msra.mxu0 0
    %5046 = vmatpush.bf16.msra.mxu0 %v5024
    %5047 = vmatpush.bf16.msra.mxu0 %v5021
    %5048 = vmatpush.bf16.msra.mxu0 %v5018
    %5049 = vmatpush.bf16.msra.mxu0 %v5015
    %5050 = vmatmul.bf16.gmra.mxu0 %v5040
    %v5051 = vpop.f32.mrf.mxu0
    %v5052 = vadd.f32 0.0, %v5051
    %v5053 = vpop.f32.mrf.mxu0
    %v5054 = vadd.f32 0.0, %v5053
    %5055 = vdwg.mxu0
    %5056 = vmatpush.bf16.msra.mxu0 0
    %5057 = vmatpush.bf16.msra.mxu0 0
    %5058 = vmatpush.bf16.msra.mxu0 0
    %5059 = vmatpush.bf16.msra.mxu0 0
    %5060 = vmatpush.bf16.msra.mxu0 %v5025
    %5061 = vmatpush.bf16.msra.mxu0 %v5022
    %5062 = vmatpush.bf16.msra.mxu0 %v5019
    %5063 = vmatpush.bf16.msra.mxu0 %v5016
    %5064 = vmatmul.bf16.gmra.mxu0 %v5040
    %v5065 = vpop.f32.mrf.mxu0
    %v5066 = vadd.f32 0.0, %v5065
    %v5067 = vpop.f32.mrf.mxu0
    %v5068 = vadd.f32 0.0, %v5067
    %5069 = vdwg.mxu0
    %5070 = vmatpush.bf16.msra.mxu0 0
    %5071 = vmatpush.bf16.msra.mxu0 0
    %5072 = vmatpush.bf16.msra.mxu0 0
    %5073 = vmatpush.bf16.msra.mxu0 0
    %5074 = vmatpush.bf16.msra.mxu0 %v5026
    %5075 = vmatpush.bf16.msra.mxu0 %v5023
    %5076 = vmatpush.bf16.msra.mxu0 %v5020
    %5077 = vmatpush.bf16.msra.mxu0 %v5017
    %5078 = vmatmul.bf16.gmra.mxu0 %v5040
    %v5079 = vpop.f32.mrf.mxu0
    %v5080 = vadd.f32 0.0, %v5079
    %v5081 = vpop.f32.mrf.mxu0
    %v5082 = vadd.f32 0.0, %v5081
    %5083 = vdwg.mxu0
    %v5084 = vpack.c.bf16 %v5066, %v5052
    %v5085 = vpack.c.bf16 %v5080, %v5080
    %v5086 = vpack.c.bf16 %v5068, %v5054
    %v5087 = vpack.c.bf16 %v5082, %v5082
    %v5089 = vrot.slane %v5084, 4
    %v5091 = vsel %vm318, %v5084, 0
    %v5094 = vsel %vm318, %v5089, 0
    %5096 = vmatpush.bf16.xpose.msra.mxu0 0
    %5097 = vmatpush.bf16.xpose.msra.mxu0 0
    %5098 = vmatpush.bf16.xpose.msra.mxu0 0
    %5099 = vmatpush.bf16.xpose.msra.mxu0 0
    %5100 = vmatpush.bf16.xpose.msra.mxu0 0
    %5101 = vmatpush.bf16.xpose.msra.mxu0 0
    %5102 = vmatpush.bf16.xpose.msra.mxu0 0
    %5103 = vmatpush.bf16.xpose.msra.mxu0 %v5094
    %5104 = vmatmul.bf16.gmra.mxu0 %v5091
    %v5105 = vpop.f32.mrf.mxu0
    %v5106 = vadd.f32 0.0, %v5105
    %v5107 = vpop.f32.mrf.mxu0
    %5108 = vdwg.mxu0
    %v5110 = vrot.slane %v5086, 4
    %v5112 = vsel %vm318, %v5086, 0
    %v5115 = vsel %vm318, %v5110, 0
    %5117 = vmatpush.bf16.xpose.msra.mxu0 0
    %5118 = vmatpush.bf16.xpose.msra.mxu0 0
    %5119 = vmatpush.bf16.xpose.msra.mxu0 0
    %5120 = vmatpush.bf16.xpose.msra.mxu0 0
    %5121 = vmatpush.bf16.xpose.msra.mxu0 0
    %5122 = vmatpush.bf16.xpose.msra.mxu0 0
    %5123 = vmatpush.bf16.xpose.msra.mxu0 0
    %5124 = vmatpush.bf16.xpose.msra.mxu0 %v5115
    %5125 = vmatmul.bf16.gmra.mxu0 %v5112
    %v5126 = vpop.f32.mrf.mxu0
    %v5127 = vadd.f32 0.0, %v5126
    %v5128 = vpop.f32.mrf.mxu0
    %5129 = vdwg.mxu0
    %v5130 = vsel %vm360, %v5106, -1e+30
    %v5131 = vsel %vm360, %v5127, -1e+30
    %v5132 = vsel %vm363, %v5130, -inf
    %5133 = vmax.xlane.f32.xlu0 %v5132
    %v5134 = vpop.xlane.xlu0 %5133
    %v5135 = vsel %vm363, %v5131, -inf
    %5136 = vmax.xlane.f32.xlu0 %v5135
    %v5137 = vpop.xlane.xlu0 %5136
    %v5138 = vsub.f32 %v5130, %v5134
    %v5139 = vsub.f32 %v5131, %v5137
    %v5140 = vmul.f32 %v5138, 1.442695
    %v5141 = vpow.pop %v5140
    %v5142 = vmul.f32 %v5139, 1.442695
    %v5143 = vpow.pop %v5142
    %v5144 = vsel %vm363, %v5141, 0.0
    %5145 = vadd.xlane.f32.xlu0 %v5144
    %v5146 = vpop.xlane.xlu0 %5145
    %v5147 = vsel %vm363, %v5143, 0.0
    %5148 = vadd.xlane.f32.xlu0 %v5147
    %v5149 = vpop.xlane.xlu0 %5148
    %v5150 = vrcp.pop %v5146
    %v5151 = vrcp.pop %v5149
    %v5152 = vmul.f32 %v5141, %v5150
    %v5153 = vmul.f32 %v5143, %v5151
    %v5154 = vpack.c.bf16 %v5152, %v5152
    %v5155 = vpack.c.bf16 %v5153, %v5153
    %v5157 = vsel %vm363, %v5154, 0
    %v5160 = vsel %vm391, %v5085, 0
    %5162 = vmatpush.bf16.msra.mxu0 0
    %5163 = vmatpush.bf16.msra.mxu0 0
    %5164 = vmatpush.bf16.msra.mxu0 0
    %5165 = vmatpush.bf16.msra.mxu0 0
    %5166 = vmatpush.bf16.msra.mxu0 0
    %5167 = vmatpush.bf16.msra.mxu0 0
    %5168 = vmatpush.bf16.msra.mxu0 0
    %5169 = vmatpush.bf16.msra.mxu0 %v5160
    %5170 = vmatmul.bf16.gmra.mxu0 %v5157
    %v5171 = vpop.f32.mrf.mxu0
    %v5172 = vadd.f32 0.0, %v5171
    %v5173 = vpop.f32.mrf.mxu0
    %5174 = vdwg.mxu0
    %v5176 = vsel %vm363, %v5155, 0
    %v5179 = vsel %vm391, %v5087, 0
    %5181 = vmatpush.bf16.msra.mxu0 0
    %5182 = vmatpush.bf16.msra.mxu0 0
    %5183 = vmatpush.bf16.msra.mxu0 0
    %5184 = vmatpush.bf16.msra.mxu0 0
    %5185 = vmatpush.bf16.msra.mxu0 0
    %5186 = vmatpush.bf16.msra.mxu0 0
    %5187 = vmatpush.bf16.msra.mxu0 0
    %5188 = vmatpush.bf16.msra.mxu0 %v5179
    %5189 = vmatmul.bf16.gmra.mxu0 %v5176
    %v5190 = vpop.f32.mrf.mxu0
    %v5191 = vadd.f32 0.0, %v5190
    %v5192 = vpop.f32.mrf.mxu0
    %5193 = vdwg.mxu0
    %5194 = vrot.lane.b32.xlu0 %v5084, 112
    %v5195 = vpop.permute.xlu0 %5194
    %v5196 = vrot.slane %v5195, 4
    %v5197 = vunpack.c.l.b16 %v5084
    %v5198 = vpack.c.b16 %v5197, %v5197
    %5199 = vrot.lane.b32.xlu0 %v5198, 112
    %v5200 = vpop.permute.xlu0 %5199
    %v5202 = vsel %vm318, %v5200, 0
    %v5205 = vsel %vm318, %v5196, 0
    %5207 = vmatpush.bf16.xpose.msra.mxu0 0
    %5208 = vmatpush.bf16.xpose.msra.mxu0 0
    %5209 = vmatpush.bf16.xpose.msra.mxu0 0
    %5210 = vmatpush.bf16.xpose.msra.mxu0 0
    %5211 = vmatpush.bf16.xpose.msra.mxu0 0
    %5212 = vmatpush.bf16.xpose.msra.mxu0 0
    %5213 = vmatpush.bf16.xpose.msra.mxu0 0
    %5214 = vmatpush.bf16.xpose.msra.mxu0 %v5205
    %5215 = vmatmul.bf16.gmra.mxu0 %v5202
    %v5216 = vpop.f32.mrf.mxu0
    %v5217 = vadd.f32 0.0, %v5216
    %v5218 = vpop.f32.mrf.mxu0
    %5219 = vdwg.mxu0
    %5220 = vrot.lane.b32.xlu0 %v5086, 112
    %v5221 = vpop.permute.xlu0 %5220
    %v5222 = vrot.slane %v5221, 4
    %v5223 = vunpack.c.l.b16 %v5086
    %v5224 = vpack.c.b16 %v5223, %v5223
    %5225 = vrot.lane.b32.xlu0 %v5224, 112
    %v5226 = vpop.permute.xlu0 %5225
    %v5228 = vsel %vm318, %v5226, 0
    %v5231 = vsel %vm318, %v5222, 0
    %5233 = vmatpush.bf16.xpose.msra.mxu0 0
    %5234 = vmatpush.bf16.xpose.msra.mxu0 0
    %5235 = vmatpush.bf16.xpose.msra.mxu0 0
    %5236 = vmatpush.bf16.xpose.msra.mxu0 0
    %5237 = vmatpush.bf16.xpose.msra.mxu0 0
    %5238 = vmatpush.bf16.xpose.msra.mxu0 0
    %5239 = vmatpush.bf16.xpose.msra.mxu0 0
    %5240 = vmatpush.bf16.xpose.msra.mxu0 %v5231
    %5241 = vmatmul.bf16.gmra.mxu0 %v5228
    %v5242 = vpop.f32.mrf.mxu0
    %v5243 = vadd.f32 0.0, %v5242
    %v5244 = vpop.f32.mrf.mxu0
    %5245 = vdwg.mxu0
    %v5246 = vsel %vm360, %v5217, -1e+30
    %v5247 = vsel %vm360, %v5243, -1e+30
    %v5248 = vsel %vm363, %v5246, -inf
    %5249 = vmax.xlane.f32.xlu0 %v5248
    %v5250 = vpop.xlane.xlu0 %5249
    %v5251 = vsel %vm363, %v5247, -inf
    %5252 = vmax.xlane.f32.xlu0 %v5251
    %v5253 = vpop.xlane.xlu0 %5252
    %v5254 = vsub.f32 %v5246, %v5250
    %v5255 = vsub.f32 %v5247, %v5253
    %v5256 = vmul.f32 %v5254, 1.442695
    %v5257 = vpow.pop %v5256
    %v5258 = vmul.f32 %v5255, 1.442695
    %v5259 = vpow.pop %v5258
    %v5260 = vsel %vm363, %v5257, 0.0
    %5261 = vadd.xlane.f32.xlu0 %v5260
    %v5262 = vpop.xlane.xlu0 %5261
    %v5263 = vsel %vm363, %v5259, 0.0
    %5264 = vadd.xlane.f32.xlu0 %v5263
    %v5265 = vpop.xlane.xlu0 %5264
    %v5266 = vrcp.pop %v5262
    %v5267 = vrcp.pop %v5265
    %v5268 = vmul.f32 %v5257, %v5266
    %v5269 = vmul.f32 %v5259, %v5267
    %v5270 = vpack.c.bf16 %v5268, %v5268
    %v5271 = vpack.c.bf16 %v5269, %v5269
    %v5273 = vunpack.c.l.b16 %v5085
    %v5274 = vpack.c.b16 %v5273, %v5273
    %5275 = vrot.lane.b32.xlu0 %v5274, 112
    %v5276 = vpop.permute.xlu0 %5275
    %v5278 = vsel %vm363, %v5270, 0
    %v5281 = vsel %vm391, %v5276, 0
    %5283 = vmatpush.bf16.msra.mxu0 0
    %5284 = vmatpush.bf16.msra.mxu0 0
    %5285 = vmatpush.bf16.msra.mxu0 0
    %5286 = vmatpush.bf16.msra.mxu0 0
    %5287 = vmatpush.bf16.msra.mxu0 0
    %5288 = vmatpush.bf16.msra.mxu0 0
    %5289 = vmatpush.bf16.msra.mxu0 0
    %5290 = vmatpush.bf16.msra.mxu0 %v5281
    %5291 = vmatmul.bf16.gmra.mxu0 %v5278
    %v5292 = vpop.f32.mrf.mxu0
    %v5293 = vadd.f32 0.0, %v5292
    %v5294 = vpop.f32.mrf.mxu0
    %5295 = vdwg.mxu0
    %v5297 = vunpack.c.l.b16 %v5087
    %v5298 = vpack.c.b16 %v5297, %v5297
    %5299 = vrot.lane.b32.xlu0 %v5298, 112
    %v5300 = vpop.permute.xlu0 %5299
    %v5302 = vsel %vm363, %v5271, 0
    %v5305 = vsel %vm391, %v5300, 0
    %5307 = vmatpush.bf16.msra.mxu0 0
    %5308 = vmatpush.bf16.msra.mxu0 0
    %5309 = vmatpush.bf16.msra.mxu0 0
    %5310 = vmatpush.bf16.msra.mxu0 0
    %5311 = vmatpush.bf16.msra.mxu0 0
    %5312 = vmatpush.bf16.msra.mxu0 0
    %5313 = vmatpush.bf16.msra.mxu0 0
    %5314 = vmatpush.bf16.msra.mxu0 %v5305
    %5315 = vmatmul.bf16.gmra.mxu0 %v5302
    %v5316 = vpop.f32.mrf.mxu0
    %v5317 = vadd.f32 0.0, %v5316
    %v5318 = vpop.f32.mrf.mxu0
    %5319 = vdwg.mxu0
    %5320 = vrot.lane.b32.xlu0 %v5084, 96
    %v5321 = vpop.permute.xlu0 %5320
    %v5322 = vrot.slane %v5321, 4
    %5323 = vrot.lane.b32.xlu0 %v5198, 96
    %v5324 = vpop.permute.xlu0 %5323
    %v5326 = vsel %vm318, %v5324, 0
    %v5329 = vsel %vm318, %v5322, 0
    %5331 = vmatpush.bf16.xpose.msra.mxu0 0
    %5332 = vmatpush.bf16.xpose.msra.mxu0 0
    %5333 = vmatpush.bf16.xpose.msra.mxu0 0
    %5334 = vmatpush.bf16.xpose.msra.mxu0 0
    %5335 = vmatpush.bf16.xpose.msra.mxu0 0
    %5336 = vmatpush.bf16.xpose.msra.mxu0 0
    %5337 = vmatpush.bf16.xpose.msra.mxu0 0
    %5338 = vmatpush.bf16.xpose.msra.mxu0 %v5329
    %5339 = vmatmul.bf16.gmra.mxu0 %v5326
    %v5340 = vpop.f32.mrf.mxu0
    %v5341 = vadd.f32 0.0, %v5340
    %v5342 = vpop.f32.mrf.mxu0
    %5343 = vdwg.mxu0
    %5344 = vrot.lane.b32.xlu0 %v5086, 96
    %v5345 = vpop.permute.xlu0 %5344
    %v5346 = vrot.slane %v5345, 4
    %5347 = vrot.lane.b32.xlu0 %v5224, 96
    %v5348 = vpop.permute.xlu0 %5347
    %v5350 = vsel %vm318, %v5348, 0
    %v5353 = vsel %vm318, %v5346, 0
    %5355 = vmatpush.bf16.xpose.msra.mxu0 0
    %5356 = vmatpush.bf16.xpose.msra.mxu0 0
    %5357 = vmatpush.bf16.xpose.msra.mxu0 0
    %5358 = vmatpush.bf16.xpose.msra.mxu0 0
    %5359 = vmatpush.bf16.xpose.msra.mxu0 0
    %5360 = vmatpush.bf16.xpose.msra.mxu0 0
    %5361 = vmatpush.bf16.xpose.msra.mxu0 0
    %5362 = vmatpush.bf16.xpose.msra.mxu0 %v5353
    %5363 = vmatmul.bf16.gmra.mxu0 %v5350
    %v5364 = vpop.f32.mrf.mxu0
    %v5365 = vadd.f32 0.0, %v5364
    %v5366 = vpop.f32.mrf.mxu0
    %5367 = vdwg.mxu0
    %v5368 = vsel %vm360, %v5341, -1e+30
    %v5369 = vsel %vm360, %v5365, -1e+30
    %v5370 = vsel %vm363, %v5368, -inf
    %5371 = vmax.xlane.f32.xlu0 %v5370
    %v5372 = vpop.xlane.xlu0 %5371
    %v5373 = vsel %vm363, %v5369, -inf
    %5374 = vmax.xlane.f32.xlu0 %v5373
    %v5375 = vpop.xlane.xlu0 %5374
    %v5376 = vsub.f32 %v5368, %v5372
    %v5377 = vsub.f32 %v5369, %v5375
    %v5378 = vmul.f32 %v5376, 1.442695
    %v5379 = vpow.pop %v5378
    %v5380 = vmul.f32 %v5377, 1.442695
    %v5381 = vpow.pop %v5380
    %v5382 = vsel %vm363, %v5379, 0.0
    %5383 = vadd.xlane.f32.xlu0 %v5382
    %v5384 = vpop.xlane.xlu0 %5383
    %v5385 = vsel %vm363, %v5381, 0.0
    %5386 = vadd.xlane.f32.xlu0 %v5385
    %v5387 = vpop.xlane.xlu0 %5386
    %v5388 = vrcp.pop %v5384
    %v5389 = vrcp.pop %v5387
    %v5390 = vmul.f32 %v5379, %v5388
    %v5391 = vmul.f32 %v5381, %v5389
    %v5392 = vpack.c.bf16 %v5390, %v5390
    %v5393 = vpack.c.bf16 %v5391, %v5391
    %5394 = vrot.lane.b32.xlu0 %v5274, 96
    %v5395 = vpop.permute.xlu0 %5394
    %v5397 = vsel %vm363, %v5392, 0
    %v5400 = vsel %vm391, %v5395, 0
    %5402 = vmatpush.bf16.msra.mxu0 0
    %5403 = vmatpush.bf16.msra.mxu0 0
    %5404 = vmatpush.bf16.msra.mxu0 0
    %5405 = vmatpush.bf16.msra.mxu0 0
    %5406 = vmatpush.bf16.msra.mxu0 0
    %5407 = vmatpush.bf16.msra.mxu0 0
    %5408 = vmatpush.bf16.msra.mxu0 0
    %5409 = vmatpush.bf16.msra.mxu0 %v5400
    %5410 = vmatmul.bf16.gmra.mxu0 %v5397
    %v5411 = vpop.f32.mrf.mxu0
    %v5412 = vadd.f32 0.0, %v5411
    %v5413 = vpop.f32.mrf.mxu0
    %5414 = vdwg.mxu0
    %5415 = vrot.lane.b32.xlu0 %v5298, 96
    %v5416 = vpop.permute.xlu0 %5415
    %v5418 = vsel %vm363, %v5393, 0
    %v5421 = vsel %vm391, %v5416, 0
    %5423 = vmatpush.bf16.msra.mxu0 0
    %5424 = vmatpush.bf16.msra.mxu0 0
    %5425 = vmatpush.bf16.msra.mxu0 0
    %5426 = vmatpush.bf16.msra.mxu0 0
    %5427 = vmatpush.bf16.msra.mxu0 0
    %5428 = vmatpush.bf16.msra.mxu0 0
    %5429 = vmatpush.bf16.msra.mxu0 0
    %5430 = vmatpush.bf16.msra.mxu0 %v5421
    %5431 = vmatmul.bf16.gmra.mxu0 %v5418
    %v5432 = vpop.f32.mrf.mxu0
    %v5433 = vadd.f32 0.0, %v5432
    %v5434 = vpop.f32.mrf.mxu0
    %5435 = vdwg.mxu0
    %5436 = vrot.lane.b32.xlu0 %v5084, 80
    %v5437 = vpop.permute.xlu0 %5436
    %v5438 = vrot.slane %v5437, 4
    %5439 = vrot.lane.b32.xlu0 %v5198, 80
    %v5440 = vpop.permute.xlu0 %5439
    %v5442 = vsel %vm318, %v5440, 0
    %v5445 = vsel %vm318, %v5438, 0
    %5447 = vmatpush.bf16.xpose.msra.mxu0 0
    %5448 = vmatpush.bf16.xpose.msra.mxu0 0
    %5449 = vmatpush.bf16.xpose.msra.mxu0 0
    %5450 = vmatpush.bf16.xpose.msra.mxu0 0
    %5451 = vmatpush.bf16.xpose.msra.mxu0 0
    %5452 = vmatpush.bf16.xpose.msra.mxu0 0
    %5453 = vmatpush.bf16.xpose.msra.mxu0 0
    %5454 = vmatpush.bf16.xpose.msra.mxu0 %v5445
    %5455 = vmatmul.bf16.gmra.mxu0 %v5442
    %v5456 = vpop.f32.mrf.mxu0
    %v5457 = vadd.f32 0.0, %v5456
    %v5458 = vpop.f32.mrf.mxu0
    %5459 = vdwg.mxu0
    %5460 = vrot.lane.b32.xlu0 %v5086, 80
    %v5461 = vpop.permute.xlu0 %5460
    %v5462 = vrot.slane %v5461, 4
    %5463 = vrot.lane.b32.xlu0 %v5224, 80
    %v5464 = vpop.permute.xlu0 %5463
    %v5466 = vsel %vm318, %v5464, 0
    %v5469 = vsel %vm318, %v5462, 0
    %5471 = vmatpush.bf16.xpose.msra.mxu0 0
    %5472 = vmatpush.bf16.xpose.msra.mxu0 0
    %5473 = vmatpush.bf16.xpose.msra.mxu0 0
    %5474 = vmatpush.bf16.xpose.msra.mxu0 0
    %5475 = vmatpush.bf16.xpose.msra.mxu0 0
    %5476 = vmatpush.bf16.xpose.msra.mxu0 0
    %5477 = vmatpush.bf16.xpose.msra.mxu0 0
    %5478 = vmatpush.bf16.xpose.msra.mxu0 %v5469
    %5479 = vmatmul.bf16.gmra.mxu0 %v5466
    %v5480 = vpop.f32.mrf.mxu0
    %v5481 = vadd.f32 0.0, %v5480
    %v5482 = vpop.f32.mrf.mxu0
    %5483 = vdwg.mxu0
    %v5484 = vsel %vm360, %v5457, -1e+30
    %v5485 = vsel %vm360, %v5481, -1e+30
    %v5486 = vsel %vm363, %v5484, -inf
    %5487 = vmax.xlane.f32.xlu0 %v5486
    %v5488 = vpop.xlane.xlu0 %5487
    %v5489 = vsel %vm363, %v5485, -inf
    %5490 = vmax.xlane.f32.xlu0 %v5489
    %v5491 = vpop.xlane.xlu0 %5490
    %v5492 = vsub.f32 %v5484, %v5488
    %v5493 = vsub.f32 %v5485, %v5491
    %v5494 = vmul.f32 %v5492, 1.442695
    %v5495 = vpow.pop %v5494
    %v5496 = vmul.f32 %v5493, 1.442695
    %v5497 = vpow.pop %v5496
    %v5498 = vsel %vm363, %v5495, 0.0
    %5499 = vadd.xlane.f32.xlu0 %v5498
    %v5500 = vpop.xlane.xlu0 %5499
    %v5501 = vsel %vm363, %v5497, 0.0
    %5502 = vadd.xlane.f32.xlu0 %v5501
    %v5503 = vpop.xlane.xlu0 %5502
    %v5504 = vrcp.pop %v5500
    %v5505 = vrcp.pop %v5503
    %v5506 = vmul.f32 %v5495, %v5504
    %v5507 = vmul.f32 %v5497, %v5505
    %v5508 = vpack.c.bf16 %v5506, %v5506
    %v5509 = vpack.c.bf16 %v5507, %v5507
    %5510 = vrot.lane.b32.xlu0 %v5274, 80
    %v5511 = vpop.permute.xlu0 %5510
    %v5513 = vsel %vm363, %v5508, 0
    %v5516 = vsel %vm391, %v5511, 0
    %5518 = vmatpush.bf16.msra.mxu0 0
    %5519 = vmatpush.bf16.msra.mxu0 0
    %5520 = vmatpush.bf16.msra.mxu0 0
    %5521 = vmatpush.bf16.msra.mxu0 0
    %5522 = vmatpush.bf16.msra.mxu0 0
    %5523 = vmatpush.bf16.msra.mxu0 0
    %5524 = vmatpush.bf16.msra.mxu0 0
    %5525 = vmatpush.bf16.msra.mxu0 %v5516
    %5526 = vmatmul.bf16.gmra.mxu0 %v5513
    %v5527 = vpop.f32.mrf.mxu0
    %v5528 = vadd.f32 0.0, %v5527
    %v5529 = vpop.f32.mrf.mxu0
    %5530 = vdwg.mxu0
    %5531 = vrot.lane.b32.xlu0 %v5298, 80
    %v5532 = vpop.permute.xlu0 %5531
    %v5534 = vsel %vm363, %v5509, 0
    %v5537 = vsel %vm391, %v5532, 0
    %5539 = vmatpush.bf16.msra.mxu0 0
    %5540 = vmatpush.bf16.msra.mxu0 0
    %5541 = vmatpush.bf16.msra.mxu0 0
    %5542 = vmatpush.bf16.msra.mxu0 0
    %5543 = vmatpush.bf16.msra.mxu0 0
    %5544 = vmatpush.bf16.msra.mxu0 0
    %5545 = vmatpush.bf16.msra.mxu0 0
    %5546 = vmatpush.bf16.msra.mxu0 %v5537
    %5547 = vmatmul.bf16.gmra.mxu0 %v5534
    %v5548 = vpop.f32.mrf.mxu0
    %v5549 = vadd.f32 0.0, %v5548
    %v5550 = vpop.f32.mrf.mxu0
    %5551 = vdwg.mxu0
    %5552 = vrot.lane.b32.xlu0 %v5084, 64
    %v5553 = vpop.permute.xlu0 %5552
    %v5554 = vrot.slane %v5553, 4
    %5555 = vrot.lane.b32.xlu0 %v5198, 64
    %v5556 = vpop.permute.xlu0 %5555
    %v5558 = vsel %vm318, %v5556, 0
    %v5561 = vsel %vm318, %v5554, 0
    %5563 = vmatpush.bf16.xpose.msra.mxu0 0
    %5564 = vmatpush.bf16.xpose.msra.mxu0 0
    %5565 = vmatpush.bf16.xpose.msra.mxu0 0
    %5566 = vmatpush.bf16.xpose.msra.mxu0 0
    %5567 = vmatpush.bf16.xpose.msra.mxu0 0
    %5568 = vmatpush.bf16.xpose.msra.mxu0 0
    %5569 = vmatpush.bf16.xpose.msra.mxu0 0
    %5570 = vmatpush.bf16.xpose.msra.mxu0 %v5561
    %5571 = vmatmul.bf16.gmra.mxu0 %v5558
    %v5572 = vpop.f32.mrf.mxu0
    %v5573 = vadd.f32 0.0, %v5572
    %v5574 = vpop.f32.mrf.mxu0
    %5575 = vdwg.mxu0
    %5576 = vrot.lane.b32.xlu0 %v5086, 64
    %v5577 = vpop.permute.xlu0 %5576
    %v5578 = vrot.slane %v5577, 4
    %5579 = vrot.lane.b32.xlu0 %v5224, 64
    %v5580 = vpop.permute.xlu0 %5579
    %v5582 = vsel %vm318, %v5580, 0
    %v5585 = vsel %vm318, %v5578, 0
    %5587 = vmatpush.bf16.xpose.msra.mxu0 0
    %5588 = vmatpush.bf16.xpose.msra.mxu0 0
    %5589 = vmatpush.bf16.xpose.msra.mxu0 0
    %5590 = vmatpush.bf16.xpose.msra.mxu0 0
    %5591 = vmatpush.bf16.xpose.msra.mxu0 0
    %5592 = vmatpush.bf16.xpose.msra.mxu0 0
    %5593 = vmatpush.bf16.xpose.msra.mxu0 0
    %5594 = vmatpush.bf16.xpose.msra.mxu0 %v5585
    %5595 = vmatmul.bf16.gmra.mxu0 %v5582
    %v5596 = vpop.f32.mrf.mxu0
    %v5597 = vadd.f32 0.0, %v5596
    %v5598 = vpop.f32.mrf.mxu0
    %5599 = vdwg.mxu0
    %v5600 = vsel %vm360, %v5573, -1e+30
    %v5601 = vsel %vm360, %v5597, -1e+30
    %v5602 = vsel %vm363, %v5600, -inf
    %5603 = vmax.xlane.f32.xlu0 %v5602
    %v5604 = vpop.xlane.xlu0 %5603
    %v5605 = vsel %vm363, %v5601, -inf
    %5606 = vmax.xlane.f32.xlu0 %v5605
    %v5607 = vpop.xlane.xlu0 %5606
    %v5608 = vsub.f32 %v5600, %v5604
    %v5609 = vsub.f32 %v5601, %v5607
    %v5610 = vmul.f32 %v5608, 1.442695
    %v5611 = vpow.pop %v5610
    %v5612 = vmul.f32 %v5609, 1.442695
    %v5613 = vpow.pop %v5612
    %v5614 = vsel %vm363, %v5611, 0.0
    %5615 = vadd.xlane.f32.xlu0 %v5614
    %v5616 = vpop.xlane.xlu0 %5615
    %v5617 = vsel %vm363, %v5613, 0.0
    %5618 = vadd.xlane.f32.xlu0 %v5617
    %v5619 = vpop.xlane.xlu0 %5618
    %v5620 = vrcp.pop %v5616
    %v5621 = vrcp.pop %v5619
    %v5622 = vmul.f32 %v5611, %v5620
    %v5623 = vmul.f32 %v5613, %v5621
    %v5624 = vpack.c.bf16 %v5622, %v5622
    %v5625 = vpack.c.bf16 %v5623, %v5623
    %5626 = vrot.lane.b32.xlu0 %v5274, 64
    %v5627 = vpop.permute.xlu0 %5626
    %v5629 = vsel %vm363, %v5624, 0
    %v5632 = vsel %vm391, %v5627, 0
    %5634 = vmatpush.bf16.msra.mxu0 0
    %5635 = vmatpush.bf16.msra.mxu0 0
    %5636 = vmatpush.bf16.msra.mxu0 0
    %5637 = vmatpush.bf16.msra.mxu0 0
    %5638 = vmatpush.bf16.msra.mxu0 0
    %5639 = vmatpush.bf16.msra.mxu0 0
    %5640 = vmatpush.bf16.msra.mxu0 0
    %5641 = vmatpush.bf16.msra.mxu0 %v5632
    %5642 = vmatmul.bf16.gmra.mxu0 %v5629
    %v5643 = vpop.f32.mrf.mxu0
    %v5644 = vadd.f32 0.0, %v5643
    %v5645 = vpop.f32.mrf.mxu0
    %5646 = vdwg.mxu0
    %5647 = vrot.lane.b32.xlu0 %v5298, 64
    %v5648 = vpop.permute.xlu0 %5647
    %v5650 = vsel %vm363, %v5625, 0
    %v5653 = vsel %vm391, %v5648, 0
    %5655 = vmatpush.bf16.msra.mxu0 0
    %5656 = vmatpush.bf16.msra.mxu0 0
    %5657 = vmatpush.bf16.msra.mxu0 0
    %5658 = vmatpush.bf16.msra.mxu0 0
    %5659 = vmatpush.bf16.msra.mxu0 0
    %5660 = vmatpush.bf16.msra.mxu0 0
    %5661 = vmatpush.bf16.msra.mxu0 0
    %5662 = vmatpush.bf16.msra.mxu0 %v5653
    %5663 = vmatmul.bf16.gmra.mxu0 %v5650
    %v5664 = vpop.f32.mrf.mxu0
    %v5665 = vadd.f32 0.0, %v5664
    %v5666 = vpop.f32.mrf.mxu0
    %5667 = vdwg.mxu0
    %5668 = vrot.lane.b32.xlu0 %v5084, 48
    %v5669 = vpop.permute.xlu0 %5668
    %v5670 = vrot.slane %v5669, 4
    %5671 = vrot.lane.b32.xlu0 %v5198, 48
    %v5672 = vpop.permute.xlu0 %5671
    %v5674 = vsel %vm318, %v5672, 0
    %v5677 = vsel %vm318, %v5670, 0
    %5679 = vmatpush.bf16.xpose.msra.mxu0 0
    %5680 = vmatpush.bf16.xpose.msra.mxu0 0
    %5681 = vmatpush.bf16.xpose.msra.mxu0 0
    %5682 = vmatpush.bf16.xpose.msra.mxu0 0
    %5683 = vmatpush.bf16.xpose.msra.mxu0 0
    %5684 = vmatpush.bf16.xpose.msra.mxu0 0
    %5685 = vmatpush.bf16.xpose.msra.mxu0 0
    %5686 = vmatpush.bf16.xpose.msra.mxu0 %v5677
    %5687 = vmatmul.bf16.gmra.mxu0 %v5674
    %v5688 = vpop.f32.mrf.mxu0
    %v5689 = vadd.f32 0.0, %v5688
    %v5690 = vpop.f32.mrf.mxu0
    %5691 = vdwg.mxu0
    %5692 = vrot.lane.b32.xlu0 %v5086, 48
    %v5693 = vpop.permute.xlu0 %5692
    %v5694 = vrot.slane %v5693, 4
    %5695 = vrot.lane.b32.xlu0 %v5224, 48
    %v5696 = vpop.permute.xlu0 %5695
    %v5698 = vsel %vm318, %v5696, 0
    %v5701 = vsel %vm318, %v5694, 0
    %5703 = vmatpush.bf16.xpose.msra.mxu0 0
    %5704 = vmatpush.bf16.xpose.msra.mxu0 0
    %5705 = vmatpush.bf16.xpose.msra.mxu0 0
    %5706 = vmatpush.bf16.xpose.msra.mxu0 0
    %5707 = vmatpush.bf16.xpose.msra.mxu0 0
    %5708 = vmatpush.bf16.xpose.msra.mxu0 0
    %5709 = vmatpush.bf16.xpose.msra.mxu0 0
    %5710 = vmatpush.bf16.xpose.msra.mxu0 %v5701
    %5711 = vmatmul.bf16.gmra.mxu0 %v5698
    %v5712 = vpop.f32.mrf.mxu0
    %v5713 = vadd.f32 0.0, %v5712
    %v5714 = vpop.f32.mrf.mxu0
    %5715 = vdwg.mxu0
    %v5716 = vsel %vm360, %v5689, -1e+30
    %v5717 = vsel %vm360, %v5713, -1e+30
    %v5718 = vsel %vm363, %v5716, -inf
    %5719 = vmax.xlane.f32.xlu0 %v5718
    %v5720 = vpop.xlane.xlu0 %5719
    %v5721 = vsel %vm363, %v5717, -inf
    %5722 = vmax.xlane.f32.xlu0 %v5721
    %v5723 = vpop.xlane.xlu0 %5722
    %v5724 = vsub.f32 %v5716, %v5720
    %v5725 = vsub.f32 %v5717, %v5723
    %v5726 = vmul.f32 %v5724, 1.442695
    %v5727 = vpow.pop %v5726
    %v5728 = vmul.f32 %v5725, 1.442695
    %v5729 = vpow.pop %v5728
    %v5730 = vsel %vm363, %v5727, 0.0
    %5731 = vadd.xlane.f32.xlu0 %v5730
    %v5732 = vpop.xlane.xlu0 %5731
    %v5733 = vsel %vm363, %v5729, 0.0
    %5734 = vadd.xlane.f32.xlu0 %v5733
    %v5735 = vpop.xlane.xlu0 %5734
    %v5736 = vrcp.pop %v5732
    %v5737 = vrcp.pop %v5735
    %v5738 = vmul.f32 %v5727, %v5736
    %v5739 = vmul.f32 %v5729, %v5737
    %v5740 = vpack.c.bf16 %v5738, %v5738
    %v5741 = vpack.c.bf16 %v5739, %v5739
    %5742 = vrot.lane.b32.xlu0 %v5274, 48
    %v5743 = vpop.permute.xlu0 %5742
    %v5745 = vsel %vm363, %v5740, 0
    %v5748 = vsel %vm391, %v5743, 0
    %5750 = vmatpush.bf16.msra.mxu0 0
    %5751 = vmatpush.bf16.msra.mxu0 0
    %5752 = vmatpush.bf16.msra.mxu0 0
    %5753 = vmatpush.bf16.msra.mxu0 0
    %5754 = vmatpush.bf16.msra.mxu0 0
    %5755 = vmatpush.bf16.msra.mxu0 0
    %5756 = vmatpush.bf16.msra.mxu0 0
    %5757 = vmatpush.bf16.msra.mxu0 %v5748
    %5758 = vmatmul.bf16.gmra.mxu0 %v5745
    %v5759 = vpop.f32.mrf.mxu0
    %v5760 = vadd.f32 0.0, %v5759
    %v5761 = vpop.f32.mrf.mxu0
    %5762 = vdwg.mxu0
    %5763 = vrot.lane.b32.xlu0 %v5298, 48
    %v5764 = vpop.permute.xlu0 %5763
    %v5766 = vsel %vm363, %v5741, 0
    %v5769 = vsel %vm391, %v5764, 0
    %5771 = vmatpush.bf16.msra.mxu0 0
    %5772 = vmatpush.bf16.msra.mxu0 0
    %5773 = vmatpush.bf16.msra.mxu0 0
    %5774 = vmatpush.bf16.msra.mxu0 0
    %5775 = vmatpush.bf16.msra.mxu0 0
    %5776 = vmatpush.bf16.msra.mxu0 0
    %5777 = vmatpush.bf16.msra.mxu0 0
    %5778 = vmatpush.bf16.msra.mxu0 %v5769
    %5779 = vmatmul.bf16.gmra.mxu0 %v5766
    %v5780 = vpop.f32.mrf.mxu0
    %v5781 = vadd.f32 0.0, %v5780
    %v5782 = vpop.f32.mrf.mxu0
    %5783 = vdwg.mxu0
    %5784 = vrot.lane.b32.xlu0 %v5084, 32
    %v5785 = vpop.permute.xlu0 %5784
    %v5786 = vrot.slane %v5785, 4
    %5787 = vrot.lane.b32.xlu0 %v5198, 32
    %v5788 = vpop.permute.xlu0 %5787
    %v5790 = vsel %vm318, %v5788, 0
    %v5793 = vsel %vm318, %v5786, 0
    %5795 = vmatpush.bf16.xpose.msra.mxu0 0
    %5796 = vmatpush.bf16.xpose.msra.mxu0 0
    %5797 = vmatpush.bf16.xpose.msra.mxu0 0
    %5798 = vmatpush.bf16.xpose.msra.mxu0 0
    %5799 = vmatpush.bf16.xpose.msra.mxu0 0
    %5800 = vmatpush.bf16.xpose.msra.mxu0 0
    %5801 = vmatpush.bf16.xpose.msra.mxu0 0
    %5802 = vmatpush.bf16.xpose.msra.mxu0 %v5793
    %5803 = vmatmul.bf16.gmra.mxu0 %v5790
    %v5804 = vpop.f32.mrf.mxu0
    %v5805 = vadd.f32 0.0, %v5804
    %v5806 = vpop.f32.mrf.mxu0
    %5807 = vdwg.mxu0
    %5808 = vrot.lane.b32.xlu0 %v5086, 32
    %v5809 = vpop.permute.xlu0 %5808
    %v5810 = vrot.slane %v5809, 4
    %5811 = vrot.lane.b32.xlu0 %v5224, 32
    %v5812 = vpop.permute.xlu0 %5811
    %v5814 = vsel %vm318, %v5812, 0
    %v5817 = vsel %vm318, %v5810, 0
    %5819 = vmatpush.bf16.xpose.msra.mxu0 0
    %5820 = vmatpush.bf16.xpose.msra.mxu0 0
    %5821 = vmatpush.bf16.xpose.msra.mxu0 0
    %5822 = vmatpush.bf16.xpose.msra.mxu0 0
    %5823 = vmatpush.bf16.xpose.msra.mxu0 0
    %5824 = vmatpush.bf16.xpose.msra.mxu0 0
    %5825 = vmatpush.bf16.xpose.msra.mxu0 0
    %5826 = vmatpush.bf16.xpose.msra.mxu0 %v5817
    %5827 = vmatmul.bf16.gmra.mxu0 %v5814
    %v5828 = vpop.f32.mrf.mxu0
    %v5829 = vadd.f32 0.0, %v5828
    %v5830 = vpop.f32.mrf.mxu0
    %5831 = vdwg.mxu0
    %v5832 = vsel %vm360, %v5805, -1e+30
    %v5833 = vsel %vm360, %v5829, -1e+30
    %v5834 = vsel %vm363, %v5832, -inf
    %5835 = vmax.xlane.f32.xlu0 %v5834
    %v5836 = vpop.xlane.xlu0 %5835
    %v5837 = vsel %vm363, %v5833, -inf
    %5838 = vmax.xlane.f32.xlu0 %v5837
    %v5839 = vpop.xlane.xlu0 %5838
    %v5840 = vsub.f32 %v5832, %v5836
    %v5841 = vsub.f32 %v5833, %v5839
    %v5842 = vmul.f32 %v5840, 1.442695
    %v5843 = vpow.pop %v5842
    %v5844 = vmul.f32 %v5841, 1.442695
    %v5845 = vpow.pop %v5844
    %v5846 = vsel %vm363, %v5843, 0.0
    %5847 = vadd.xlane.f32.xlu0 %v5846
    %v5848 = vpop.xlane.xlu0 %5847
    %v5849 = vsel %vm363, %v5845, 0.0
    %5850 = vadd.xlane.f32.xlu0 %v5849
    %v5851 = vpop.xlane.xlu0 %5850
    %v5852 = vrcp.pop %v5848
    %v5853 = vrcp.pop %v5851
    %v5854 = vmul.f32 %v5843, %v5852
    %v5855 = vmul.f32 %v5845, %v5853
    %v5856 = vpack.c.bf16 %v5854, %v5854
    %v5857 = vpack.c.bf16 %v5855, %v5855
    %5858 = vrot.lane.b32.xlu0 %v5274, 32
    %v5859 = vpop.permute.xlu0 %5858
    %v5861 = vsel %vm363, %v5856, 0
    %v5864 = vsel %vm391, %v5859, 0
    %5866 = vmatpush.bf16.msra.mxu0 0
    %5867 = vmatpush.bf16.msra.mxu0 0
    %5868 = vmatpush.bf16.msra.mxu0 0
    %5869 = vmatpush.bf16.msra.mxu0 0
    %5870 = vmatpush.bf16.msra.mxu0 0
    %5871 = vmatpush.bf16.msra.mxu0 0
    %5872 = vmatpush.bf16.msra.mxu0 0
    %5873 = vmatpush.bf16.msra.mxu0 %v5864
    %5874 = vmatmul.bf16.gmra.mxu0 %v5861
    %v5875 = vpop.f32.mrf.mxu0
    %v5876 = vadd.f32 0.0, %v5875
    %v5877 = vpop.f32.mrf.mxu0
    %5878 = vdwg.mxu0
    %5879 = vrot.lane.b32.xlu0 %v5298, 32
    %v5880 = vpop.permute.xlu0 %5879
    %v5882 = vsel %vm363, %v5857, 0
    %v5885 = vsel %vm391, %v5880, 0
    %5887 = vmatpush.bf16.msra.mxu0 0
    %5888 = vmatpush.bf16.msra.mxu0 0
    %5889 = vmatpush.bf16.msra.mxu0 0
    %5890 = vmatpush.bf16.msra.mxu0 0
    %5891 = vmatpush.bf16.msra.mxu0 0
    %5892 = vmatpush.bf16.msra.mxu0 0
    %5893 = vmatpush.bf16.msra.mxu0 0
    %5894 = vmatpush.bf16.msra.mxu0 %v5885
    %5895 = vmatmul.bf16.gmra.mxu0 %v5882
    %v5896 = vpop.f32.mrf.mxu0
    %v5897 = vadd.f32 0.0, %v5896
    %v5898 = vpop.f32.mrf.mxu0
    %5899 = vdwg.mxu0
    %5900 = vrot.lane.b32.xlu0 %v5084, 16
    %v5901 = vpop.permute.xlu0 %5900
    %v5902 = vrot.slane %v5901, 4
    %5903 = vrot.lane.b32.xlu0 %v5198, 16
    %v5904 = vpop.permute.xlu0 %5903
    %v5906 = vsel %vm318, %v5904, 0
    %v5909 = vsel %vm318, %v5902, 0
    %5911 = vmatpush.bf16.xpose.msra.mxu0 0
    %5912 = vmatpush.bf16.xpose.msra.mxu0 0
    %5913 = vmatpush.bf16.xpose.msra.mxu0 0
    %5914 = vmatpush.bf16.xpose.msra.mxu0 0
    %5915 = vmatpush.bf16.xpose.msra.mxu0 0
    %5916 = vmatpush.bf16.xpose.msra.mxu0 0
    %5917 = vmatpush.bf16.xpose.msra.mxu0 0
    %5918 = vmatpush.bf16.xpose.msra.mxu0 %v5909
    %5919 = vmatmul.bf16.gmra.mxu0 %v5906
    %v5920 = vpop.f32.mrf.mxu0
    %v5921 = vadd.f32 0.0, %v5920
    %v5922 = vpop.f32.mrf.mxu0
    %5923 = vdwg.mxu0
    %5924 = vrot.lane.b32.xlu0 %v5086, 16
    %v5925 = vpop.permute.xlu0 %5924
    %v5926 = vrot.slane %v5925, 4
    %5927 = vrot.lane.b32.xlu0 %v5224, 16
    %v5928 = vpop.permute.xlu0 %5927
    %v5930 = vsel %vm318, %v5928, 0
    %v5933 = vsel %vm318, %v5926, 0
    %5935 = vmatpush.bf16.xpose.msra.mxu0 0
    %5936 = vmatpush.bf16.xpose.msra.mxu0 0
    %5937 = vmatpush.bf16.xpose.msra.mxu0 0
    %5938 = vmatpush.bf16.xpose.msra.mxu0 0
    %5939 = vmatpush.bf16.xpose.msra.mxu0 0
    %5940 = vmatpush.bf16.xpose.msra.mxu0 0
    %5941 = vmatpush.bf16.xpose.msra.mxu0 0
    %5942 = vmatpush.bf16.xpose.msra.mxu0 %v5933
    %5943 = vmatmul.bf16.gmra.mxu0 %v5930
    %v5944 = vpop.f32.mrf.mxu0
    %v5945 = vadd.f32 0.0, %v5944
    %v5946 = vpop.f32.mrf.mxu0
    %5947 = vdwg.mxu0
    %v5948 = vsel %vm360, %v5921, -1e+30
    %v5949 = vsel %vm360, %v5945, -1e+30
    %v5950 = vsel %vm363, %v5948, -inf
    %5951 = vmax.xlane.f32.xlu0 %v5950
    %v5952 = vpop.xlane.xlu0 %5951
    %v5953 = vsel %vm363, %v5949, -inf
    %5954 = vmax.xlane.f32.xlu0 %v5953
    %v5955 = vpop.xlane.xlu0 %5954
    %v5956 = vsub.f32 %v5948, %v5952
    %v5957 = vsub.f32 %v5949, %v5955
    %v5958 = vmul.f32 %v5956, 1.442695
    %v5959 = vpow.pop %v5958
    %v5960 = vmul.f32 %v5957, 1.442695
    %v5961 = vpow.pop %v5960
    %v5962 = vsel %vm363, %v5959, 0.0
    %5963 = vadd.xlane.f32.xlu0 %v5962
    %v5964 = vpop.xlane.xlu0 %5963
    %v5965 = vsel %vm363, %v5961, 0.0
    %5966 = vadd.xlane.f32.xlu0 %v5965
    %v5967 = vpop.xlane.xlu0 %5966
    %v5968 = vrcp.pop %v5964
    %v5969 = vrcp.pop %v5967
    %v5970 = vmul.f32 %v5959, %v5968
    %v5971 = vmul.f32 %v5961, %v5969
    %v5972 = vpack.c.bf16 %v5970, %v5970
    %v5973 = vpack.c.bf16 %v5971, %v5971
    %5974 = vrot.lane.b32.xlu0 %v5274, 16
    %v5975 = vpop.permute.xlu0 %5974
    %v5977 = vsel %vm363, %v5972, 0
    %v5980 = vsel %vm391, %v5975, 0
    %5982 = vmatpush.bf16.msra.mxu0 0
    %5983 = vmatpush.bf16.msra.mxu0 0
    %5984 = vmatpush.bf16.msra.mxu0 0
    %5985 = vmatpush.bf16.msra.mxu0 0
    %5986 = vmatpush.bf16.msra.mxu0 0
    %5987 = vmatpush.bf16.msra.mxu0 0
    %5988 = vmatpush.bf16.msra.mxu0 0
    %5989 = vmatpush.bf16.msra.mxu0 %v5980
    %5990 = vmatmul.bf16.gmra.mxu0 %v5977
    %v5991 = vpop.f32.mrf.mxu0
    %v5992 = vadd.f32 0.0, %v5991
    %v5993 = vpop.f32.mrf.mxu0
    %5994 = vdwg.mxu0
    %5995 = vrot.lane.b32.xlu0 %v5298, 16
    %v5996 = vpop.permute.xlu0 %5995
    %v5998 = vsel %vm363, %v5973, 0
    %v6001 = vsel %vm391, %v5996, 0
    %6003 = vmatpush.bf16.msra.mxu0 0
    %6004 = vmatpush.bf16.msra.mxu0 0
    %6005 = vmatpush.bf16.msra.mxu0 0
    %6006 = vmatpush.bf16.msra.mxu0 0
    %6007 = vmatpush.bf16.msra.mxu0 0
    %6008 = vmatpush.bf16.msra.mxu0 0
    %6009 = vmatpush.bf16.msra.mxu0 0
    %6010 = vmatpush.bf16.msra.mxu0 %v6001
    %6011 = vmatmul.bf16.gmra.mxu0 %v5998
    %v6012 = vpop.f32.mrf.mxu0
    %v6013 = vadd.f32 0.0, %v6012
    %v6014 = vpop.f32.mrf.mxu0
    %6015 = vdwg.mxu0
    %6018 = vrot.lane.b32.xlu0 %v5293, 16
    %v6019 = vpop.permute.xlu0 %6018
    %6020 = vrot.lane.b32.xlu0 %v5317, 16
    %v6021 = vpop.permute.xlu0 %6020
    %6026 = vrot.lane.b32.xlu0 %v5412, 32
    %v6027 = vpop.permute.xlu0 %6026
    %6028 = vrot.lane.b32.xlu0 %v5433, 32
    %v6029 = vpop.permute.xlu0 %6028
    %6034 = vrot.lane.b32.xlu0 %v5528, 48
    %v6035 = vpop.permute.xlu0 %6034
    %6036 = vrot.lane.b32.xlu0 %v5549, 48
    %v6037 = vpop.permute.xlu0 %6036
    %6042 = vrot.lane.b32.xlu0 %v5644, 64
    %v6043 = vpop.permute.xlu0 %6042
    %6044 = vrot.lane.b32.xlu0 %v5665, 64
    %v6045 = vpop.permute.xlu0 %6044
    %6050 = vrot.lane.b32.xlu0 %v5760, 80
    %v6051 = vpop.permute.xlu0 %6050
    %6052 = vrot.lane.b32.xlu0 %v5781, 80
    %v6053 = vpop.permute.xlu0 %6052
    %6058 = vrot.lane.b32.xlu0 %v5876, 96
    %v6059 = vpop.permute.xlu0 %6058
    %6060 = vrot.lane.b32.xlu0 %v5897, 96
    %v6061 = vpop.permute.xlu0 %6060
    %6066 = vrot.lane.b32.xlu0 %v5992, 112
    %v6067 = vpop.permute.xlu0 %6066
    %6068 = vrot.lane.b32.xlu0 %v6013, 112
    %v6069 = vpop.permute.xlu0 %6068
    %v6072 = vsel %vm318, %v5172, %v6019
    %v6073 = vsel %vm318, %v5191, %v6021
    %v6074 = vsel %vm1307, %v6072, %v6027
    %v6075 = vsel %vm1307, %v6073, %v6029
    %v6076 = vsel %vm1310, %v6074, %v6035
    %v6077 = vsel %vm1310, %v6075, %v6037
    %v6078 = vsel %vm124, %v6076, %v6043
    %v6079 = vsel %vm124, %v6077, %v6045
    %v6080 = vsel %vm1315, %v6078, %v6051
    %v6081 = vsel %vm1315, %v6079, %v6053
    %v6082 = vsel %vm1318, %v6080, %v6059
    %v6083 = vsel %vm1318, %v6081, %v6061
    %v6084 = vsel %vm1321, %v6082, %v6067
    %v6085 = vsel %vm1321, %v6083, %v6069
    %v6086 = vpack.c.bf16 %v6085, %v6084
    %s6087 = scalar_lea.vmem %s4, 192
    %v6088 = vld [vmem:[%s6087] sm:$0xf]
    %v6089 = vld [vmem:[%s6087 + $0x4] sm:$0xf]
    %v6090 = vld [vmem:[%s6087 + $0x8] sm:$0xf]
    %v6091 = vld [vmem:[%s6087 + $0xc] sm:$0xf]
    %v6092 = vld [vmem:[%s6087 + $0x10] sm:$0xf]
    %v6093 = vld [vmem:[%s6087 + $0x14] sm:$0xf]
    %v6094 = vld [vmem:[%s6087 + $0x18] sm:$0xf]
    %v6095 = vld [vmem:[%s6087 + $0x1c] sm:$0xf]
    %v6096 = vld [vmem:[%s6087 + $0x20] sm:$0xf]
    %v6097 = vld [vmem:[%s6087 + $0x24] sm:$0xf]
    %v6098 = vld [vmem:[%s6087 + $0x28] sm:$0xf]
    %v6099 = vld [vmem:[%s6087 + $0x2c] sm:$0xf]
    %v6100 = vld [vmem:[%s6087 + $0x30] sm:$0xf]
    %v6101 = vld [vmem:[%s6087 + $0x34] sm:$0xf]
    %v6102 = vld [vmem:[%s6087 + $0x38] sm:$0xf]
    %v6103 = vld [vmem:[%s6087 + $0x3c] sm:$0xf]
    %s6104 = scalar_lea.vmem %s5, 3
    %v6105 = vld [vmem:[%s6104] sm:$0x1]
    %v6107 = vperm.slane %v6105, 0
    %v6125 = vunpack.c.l.b16 %v6088
    %v6126 = vunpack.c.l.b16 %v6089
    %v6127 = vunpack.c.l.b16 %v6090
    %v6128 = vunpack.c.l.b16 %v6091
    %v6129 = vunpack.c.l.b16 %v6092
    %v6130 = vunpack.c.l.b16 %v6093
    %v6131 = vunpack.c.l.b16 %v6094
    %v6132 = vunpack.c.l.b16 %v6095
    %v6133 = vunpack.c.l.b16 %v6096
    %v6134 = vunpack.c.l.b16 %v6097
    %v6135 = vunpack.c.l.b16 %v6098
    %v6136 = vunpack.c.l.b16 %v6099
    %v6137 = vunpack.c.l.b16 %v6100
    %v6138 = vunpack.c.l.b16 %v6101
    %v6139 = vunpack.c.l.b16 %v6102
    %v6140 = vunpack.c.l.b16 %v6103
    %v6141 = vpack.c.b16 %v6126, %v6125
    %v6142 = vpack.c.b16 %v6128, %v6127
    %v6143 = vpack.c.b16 %v6130, %v6129
    %v6144 = vpack.c.b16 %v6132, %v6131
    %v6145 = vpack.c.b16 %v6134, %v6133
    %v6146 = vpack.c.b16 %v6136, %v6135
    %v6147 = vpack.c.b16 %v6138, %v6137
    %v6148 = vpack.c.b16 %v6140, %v6139
    %6157 = vmatpush.bf16.msra.mxu0 %v6148
    %6158 = vmatpush.bf16.msra.mxu0 %v6147
    %6159 = vmatpush.bf16.msra.mxu0 %v6146
    %6160 = vmatpush.bf16.msra.mxu0 %v6145
    %6161 = vmatpush.bf16.msra.mxu0 %v6144
    %6162 = vmatpush.bf16.msra.mxu0 %v6143
    %6163 = vmatpush.bf16.msra.mxu0 %v6142
    %6164 = vmatpush.bf16.msra.mxu0 %v6141
    %6165 = vmatmul.bf16.gmra.mxu0 %v6086
    %v6166 = vpop.f32.mrf.mxu0
    %v6167 = vadd.f32 %v6107, %v6166
    %v6168 = vpop.f32.mrf.mxu0
    %v6169 = vadd.f32 %v6107, %v6168
    %6170 = vdwg.mxu0
    %v6171 = vadd.f32 %v4897, %v6167
    %v6172 = vadd.f32 %v4898, %v6169
    %s6173 = scalar_lea.vmem %s8, 3
    %v6174 = vld [vmem:[%s6173] sm:$0x1]
    %s6175 = scalar_lea.vmem %s9, 3
    %v6176 = vld [vmem:[%s6175] sm:$0x1]
    %v6177 = vsel %vm124, %v6171, 0.0
    %6178 = vadd.xlane.f32.xlu0 %v6177
    %v6179 = vpop.xlane.xlu0 %6178
    %v6180 = vsel %vm124, %v6172, 0.0
    %6181 = vadd.xlane.f32.xlu0 %v6180
    %v6182 = vpop.xlane.xlu0 %6181
    %v6183 = vmul.f32 %v6179, %v137
    %v6184 = vmul.f32 %v6182, %v137
    %v6185 = vsub.f32 %v6171, %v6183
    %v6186 = vsub.f32 %v6172, %v6184
    %v6187 = vmul.f32 %v6185, %v6185
    %v6188 = vmul.f32 %v6186, %v6186
    %v6189 = vsel %vm124, %v6187, 0.0
    %6190 = vadd.xlane.f32.xlu0 %v6189
    %v6191 = vpop.xlane.xlu0 %6190
    %v6192 = vsel %vm124, %v6188, 0.0
    %6193 = vadd.xlane.f32.xlu0 %v6192
    %v6194 = vpop.xlane.xlu0 %6193
    %v6195 = vmul.f32 %v6191, %v137
    %v6196 = vmul.f32 %v6194, %v137
    %v6197 = vadd.f32 %v6195, 1e-05
    %v6198 = vadd.f32 %v6196, 1e-05
    %v6199 = vrsqrt.pop %v6197
    %v6200 = vmul.f32 %v6199, %v6197
    %v6201 = vmul.f32 %v6200, %v6199
    %v6202 = vmul.f32 0.5, %v6201
    %v6203 = vsub.f32 1.5, %v6202
    %v6204 = vmul.f32 %v6199, %v6203
    %vm6205 = vweird.f32 %v6197
    %vm6206 = vweird.f32 %v6199
    %vm6207 = vmor %vm6205, %vm6206
    %v6208 = vsel %vm6207, %v6199, %v6204
    %v6209 = vrsqrt.pop %v6198
    %v6210 = vmul.f32 %v6209, %v6198
    %v6211 = vmul.f32 %v6210, %v6209
    %v6212 = vmul.f32 0.5, %v6211
    %v6213 = vsub.f32 1.5, %v6212
    %v6214 = vmul.f32 %v6209, %v6213
    %vm6215 = vweird.f32 %v6198
    %vm6216 = vweird.f32 %v6209
    %vm6217 = vmor %vm6215, %vm6216
    %v6218 = vsel %vm6217, %v6209, %v6214
    %v6219 = vmul.f32 %v6185, %v6208
    %v6220 = vmul.f32 %v6186, %v6218
    %v6222 = vperm.slane %v6174, 0
    %v6224 = vmul.f32 %v6219, %v6222
    %v6225 = vmul.f32 %v6220, %v6222
    %v6227 = vperm.slane %v6176, 0
    %v6229 = vadd.f32 %v6224, %v6227
    %v6230 = vadd.f32 %v6225, %v6227
    %v6231 = vpack.c.bf16 %v6230, %v6229
    %s6232 = scalar_lea.vmem %s10, 192
    %v6233 = vld [vmem:[%s6232] sm:$0xff]
    %v6234 = vld [vmem:[%s6232 + $0x8] sm:$0xff]
    %v6235 = vld [vmem:[%s6232 + $0x10] sm:$0xff]
    %v6236 = vld [vmem:[%s6232 + $0x18] sm:$0xff]
    %v6237 = vld [vmem:[%s6232 + $0x20] sm:$0xff]
    %v6238 = vld [vmem:[%s6232 + $0x28] sm:$0xff]
    %v6239 = vld [vmem:[%s6232 + $0x30] sm:$0xff]
    %v6240 = vld [vmem:[%s6232 + $0x38] sm:$0xff]
    %s6241 = scalar_lea.vmem %s11, 6
    %v6242 = vld [vmem:[%s6241] sm:$0x3]
    %v6244 = vperm.slane %v6242, 0
    %v6245 = vperm.slane %v6242, 1
    %v6256 = vunpack.c.l.b16 %v6233
    %v6257 = vunpack.c.h.b16 %v6233
    %v6258 = vunpack.c.l.b16 %v6234
    %v6259 = vunpack.c.h.b16 %v6234
    %v6260 = vunpack.c.l.b16 %v6235
    %v6261 = vunpack.c.h.b16 %v6235
    %v6262 = vunpack.c.l.b16 %v6236
    %v6263 = vunpack.c.h.b16 %v6236
    %v6264 = vunpack.c.l.b16 %v6237
    %v6265 = vunpack.c.h.b16 %v6237
    %v6266 = vunpack.c.l.b16 %v6238
    %v6267 = vunpack.c.h.b16 %v6238
    %v6268 = vunpack.c.l.b16 %v6239
    %v6269 = vunpack.c.h.b16 %v6239
    %v6270 = vunpack.c.l.b16 %v6240
    %v6271 = vunpack.c.h.b16 %v6240
    %v6272 = vpack.c.b16 %v6258, %v6256
    %v6273 = vpack.c.b16 %v6259, %v6257
    %v6274 = vpack.c.b16 %v6262, %v6260
    %v6275 = vpack.c.b16 %v6263, %v6261
    %v6276 = vpack.c.b16 %v6266, %v6264
    %v6277 = vpack.c.b16 %v6267, %v6265
    %v6278 = vpack.c.b16 %v6270, %v6268
    %v6279 = vpack.c.b16 %v6271, %v6269
    %v6289 = vsel %vm124, %v6231, 0
    %6291 = vmatpush.bf16.msra.mxu0 0
    %6292 = vmatpush.bf16.msra.mxu0 0
    %6293 = vmatpush.bf16.msra.mxu0 0
    %6294 = vmatpush.bf16.msra.mxu0 0
    %6295 = vmatpush.bf16.msra.mxu0 %v6278
    %6296 = vmatpush.bf16.msra.mxu0 %v6276
    %6297 = vmatpush.bf16.msra.mxu0 %v6274
    %6298 = vmatpush.bf16.msra.mxu0 %v6272
    %6299 = vmatmul.bf16.gmra.mxu0 %v6289
    %v6300 = vpop.f32.mrf.mxu0
    %v6301 = vadd.f32 %v6244, %v6300
    %v6302 = vpop.f32.mrf.mxu0
    %v6303 = vadd.f32 %v6244, %v6302
    %6304 = vdwg.mxu0
    %6305 = vmatpush.bf16.msra.mxu0 0
    %6306 = vmatpush.bf16.msra.mxu0 0
    %6307 = vmatpush.bf16.msra.mxu0 0
    %6308 = vmatpush.bf16.msra.mxu0 0
    %6309 = vmatpush.bf16.msra.mxu0 %v6279
    %6310 = vmatpush.bf16.msra.mxu0 %v6277
    %6311 = vmatpush.bf16.msra.mxu0 %v6275
    %6312 = vmatpush.bf16.msra.mxu0 %v6273
    %6313 = vmatmul.bf16.gmra.mxu0 %v6289
    %v6314 = vpop.f32.mrf.mxu0
    %v6315 = vadd.f32 %v6245, %v6314
    %v6316 = vpop.f32.mrf.mxu0
    %v6317 = vadd.f32 %v6245, %v6316
    %6318 = vdwg.mxu0
    %v6319 = vmax.f32 %v6301, 0.0
    %v6320 = vmax.f32 %v6315, 0.0
    %v6321 = vmax.f32 %v6303, 0.0
    %v6322 = vmax.f32 %v6317, 0.0
    %v6323 = vpack.c.bf16 %v6321, %v6319
    %v6324 = vpack.c.bf16 %v6322, %v6320
    %s6325 = scalar_lea.vmem %s12, 384
    %v6326 = vld [vmem:[%s6325] sm:$0xf]
    %v6327 = vld [vmem:[%s6325 + $0x4] sm:$0xf]
    %v6328 = vld [vmem:[%s6325 + $0x8] sm:$0xf]
    %v6329 = vld [vmem:[%s6325 + $0xc] sm:$0xf]
    %v6330 = vld [vmem:[%s6325 + $0x10] sm:$0xf]
    %v6331 = vld [vmem:[%s6325 + $0x14] sm:$0xf]
    %v6332 = vld [vmem:[%s6325 + $0x18] sm:$0xf]
    %v6333 = vld [vmem:[%s6325 + $0x1c] sm:$0xf]
    %v6334 = vld [vmem:[%s6325 + $0x20] sm:$0xf]
    %v6335 = vld [vmem:[%s6325 + $0x24] sm:$0xf]
    %v6336 = vld [vmem:[%s6325 + $0x28] sm:$0xf]
    %v6337 = vld [vmem:[%s6325 + $0x2c] sm:$0xf]
    %v6338 = vld [vmem:[%s6325 + $0x30] sm:$0xf]
    %v6339 = vld [vmem:[%s6325 + $0x34] sm:$0xf]
    %v6340 = vld [vmem:[%s6325 + $0x38] sm:$0xf]
    %v6341 = vld [vmem:[%s6325 + $0x3c] sm:$0xf]
    %v6342 = vld [vmem:[%s6325 + $0x40] sm:$0xf]
    %v6343 = vld [vmem:[%s6325 + $0x44] sm:$0xf]
    %v6344 = vld [vmem:[%s6325 + $0x48] sm:$0xf]
    %v6345 = vld [vmem:[%s6325 + $0x4c] sm:$0xf]
    %v6346 = vld [vmem:[%s6325 + $0x50] sm:$0xf]
    %v6347 = vld [vmem:[%s6325 + $0x54] sm:$0xf]
    %v6348 = vld [vmem:[%s6325 + $0x58] sm:$0xf]
    %v6349 = vld [vmem:[%s6325 + $0x5c] sm:$0xf]
    %v6350 = vld [vmem:[%s6325 + $0x60] sm:$0xf]
    %v6351 = vld [vmem:[%s6325 + $0x64] sm:$0xf]
    %v6352 = vld [vmem:[%s6325 + $0x68] sm:$0xf]
    %v6353 = vld [vmem:[%s6325 + $0x6c] sm:$0xf]
    %v6354 = vld [vmem:[%s6325 + $0x70] sm:$0xf]
    %v6355 = vld [vmem:[%s6325 + $0x74] sm:$0xf]
    %v6356 = vld [vmem:[%s6325 + $0x78] sm:$0xf]
    %v6357 = vld [vmem:[%s6325 + $0x7c] sm:$0xf]
    %s6358 = scalar_lea.vmem %s13, 3
    %v6359 = vld [vmem:[%s6358] sm:$0x1]
    %v6361 = vperm.slane %v6359, 0
    %v6395 = vunpack.c.l.b16 %v6326
    %v6396 = vunpack.c.l.b16 %v6327
    %v6397 = vunpack.c.l.b16 %v6328
    %v6398 = vunpack.c.l.b16 %v6329
    %v6399 = vunpack.c.l.b16 %v6330
    %v6400 = vunpack.c.l.b16 %v6331
    %v6401 = vunpack.c.l.b16 %v6332
    %v6402 = vunpack.c.l.b16 %v6333
    %v6403 = vunpack.c.l.b16 %v6334
    %v6404 = vunpack.c.l.b16 %v6335
    %v6405 = vunpack.c.l.b16 %v6336
    %v6406 = vunpack.c.l.b16 %v6337
    %v6407 = vunpack.c.l.b16 %v6338
    %v6408 = vunpack.c.l.b16 %v6339
    %v6409 = vunpack.c.l.b16 %v6340
    %v6410 = vunpack.c.l.b16 %v6341
    %v6411 = vunpack.c.l.b16 %v6342
    %v6412 = vunpack.c.l.b16 %v6343
    %v6413 = vunpack.c.l.b16 %v6344
    %v6414 = vunpack.c.l.b16 %v6345
    %v6415 = vunpack.c.l.b16 %v6346
    %v6416 = vunpack.c.l.b16 %v6347
    %v6417 = vunpack.c.l.b16 %v6348
    %v6418 = vunpack.c.l.b16 %v6349
    %v6419 = vunpack.c.l.b16 %v6350
    %v6420 = vunpack.c.l.b16 %v6351
    %v6421 = vunpack.c.l.b16 %v6352
    %v6422 = vunpack.c.l.b16 %v6353
    %v6423 = vunpack.c.l.b16 %v6354
    %v6424 = vunpack.c.l.b16 %v6355
    %v6425 = vunpack.c.l.b16 %v6356
    %v6426 = vunpack.c.l.b16 %v6357
    %v6427 = vpack.c.b16 %v6396, %v6395
    %v6428 = vpack.c.b16 %v6398, %v6397
    %v6429 = vpack.c.b16 %v6400, %v6399
    %v6430 = vpack.c.b16 %v6402, %v6401
    %v6431 = vpack.c.b16 %v6404, %v6403
    %v6432 = vpack.c.b16 %v6406, %v6405
    %v6433 = vpack.c.b16 %v6408, %v6407
    %v6434 = vpack.c.b16 %v6410, %v6409
    %v6435 = vpack.c.b16 %v6412, %v6411
    %v6436 = vpack.c.b16 %v6414, %v6413
    %v6437 = vpack.c.b16 %v6416, %v6415
    %v6438 = vpack.c.b16 %v6418, %v6417
    %v6439 = vpack.c.b16 %v6420, %v6419
    %v6440 = vpack.c.b16 %v6422, %v6421
    %v6441 = vpack.c.b16 %v6424, %v6423
    %v6442 = vpack.c.b16 %v6426, %v6425
    %6459 = vmatpush.bf16.msra.mxu0 %v6434
    %6460 = vmatpush.bf16.msra.mxu0 %v6433
    %6461 = vmatpush.bf16.msra.mxu0 %v6432
    %6462 = vmatpush.bf16.msra.mxu0 %v6431
    %6463 = vmatpush.bf16.msra.mxu0 %v6430
    %6464 = vmatpush.bf16.msra.mxu0 %v6429
    %6465 = vmatpush.bf16.msra.mxu0 %v6428
    %6466 = vmatpush.bf16.msra.mxu0 %v6427
    %6467 = vmatmul.bf16.gmra.mxu0 %v6323
    %v6468 = vpop.f32.mrf.mxu0
    %v6469 = vadd.f32 %v6361, %v6468
    %v6470 = vpop.f32.mrf.mxu0
    %v6471 = vadd.f32 %v6361, %v6470
    %6472 = vdwg.mxu0
    %6473 = vmatpush.bf16.msra.mxu0 %v6442
    %6474 = vmatpush.bf16.msra.mxu0 %v6441
    %6475 = vmatpush.bf16.msra.mxu0 %v6440
    %6476 = vmatpush.bf16.msra.mxu0 %v6439
    %6477 = vmatpush.bf16.msra.mxu0 %v6438
    %6478 = vmatpush.bf16.msra.mxu0 %v6437
    %6479 = vmatpush.bf16.msra.mxu0 %v6436
    %6480 = vmatpush.bf16.msra.mxu0 %v6435
    %6481 = vmatmul.bf16.gmra.mxu0 %v6324
    %v6482 = vpop.f32.mrf.mxu0
    %v6483 = vadd.f32 %v6469, %v6482
    %v6484 = vpop.f32.mrf.mxu0
    %v6485 = vadd.f32 %v6471, %v6484
    %6486 = vdwg.mxu0
    %v6487 = vadd.f32 %v6171, %v6483
    %v6488 = vadd.f32 %v6172, %v6485
    %v6489 = vld [vmem:[%s14] sm:$0x1]
    %v6490 = vld [vmem:[%s15] sm:$0x1]
    %v6491 = vsel %vm124, %v6487, 0.0
    %6492 = vadd.xlane.f32.xlu0 %v6491
    %v6493 = vpop.xlane.xlu0 %6492
    %v6494 = vsel %vm124, %v6488, 0.0
    %6495 = vadd.xlane.f32.xlu0 %v6494
    %v6496 = vpop.xlane.xlu0 %6495
    %v6497 = vmul.f32 %v6493, %v137
    %v6498 = vmul.f32 %v6496, %v137
    %v6499 = vsub.f32 %v6487, %v6497
    %v6500 = vsub.f32 %v6488, %v6498
    %v6501 = vmul.f32 %v6499, %v6499
    %v6502 = vmul.f32 %v6500, %v6500
    %v6503 = vsel %vm124, %v6501, 0.0
    %6504 = vadd.xlane.f32.xlu0 %v6503
    %v6505 = vpop.xlane.xlu0 %6504
    %v6506 = vsel %vm124, %v6502, 0.0
    %6507 = vadd.xlane.f32.xlu0 %v6506
    %v6508 = vpop.xlane.xlu0 %6507
    %v6509 = vmul.f32 %v6505, %v137
    %v6510 = vmul.f32 %v6508, %v137
    %v6511 = vadd.f32 %v6509, 1e-05
    %v6512 = vadd.f32 %v6510, 1e-05
    %v6513 = vrsqrt.pop %v6511
    %v6514 = vmul.f32 %v6513, %v6511
    %v6515 = vmul.f32 %v6514, %v6513
    %v6516 = vmul.f32 0.5, %v6515
    %v6517 = vsub.f32 1.5, %v6516
    %v6518 = vmul.f32 %v6513, %v6517
    %vm6519 = vweird.f32 %v6511
    %vm6520 = vweird.f32 %v6513
    %vm6521 = vmor %vm6519, %vm6520
    %v6522 = vsel %vm6521, %v6513, %v6518
    %v6523 = vrsqrt.pop %v6512
    %v6524 = vmul.f32 %v6523, %v6512
    %v6525 = vmul.f32 %v6524, %v6523
    %v6526 = vmul.f32 0.5, %v6525
    %v6527 = vsub.f32 1.5, %v6526
    %v6528 = vmul.f32 %v6523, %v6527
    %vm6529 = vweird.f32 %v6512
    %vm6530 = vweird.f32 %v6523
    %vm6531 = vmor %vm6529, %vm6530
    %v6532 = vsel %vm6531, %v6523, %v6528
    %v6533 = vmul.f32 %v6499, %v6522
    %v6534 = vmul.f32 %v6500, %v6532
    %v6536 = vperm.slane %v6489, 0
    %v6538 = vmul.f32 %v6533, %v6536
    %v6539 = vmul.f32 %v6534, %v6536
    %v6541 = vperm.slane %v6490, 0
    %v6543 = vadd.f32 %v6538, %v6541
    %v6544 = vadd.f32 %v6539, %v6541
    %v6545 = vpack.c.bf16 %v6544, %v6543
    %v6546 = vld [vmem:[%s16] sm:$0xf]
    %v6547 = vld [vmem:[%s16 + $0x4] sm:$0xf]
    %v6548 = vld [vmem:[%s16 + $0x8] sm:$0xf]
    %v6549 = vld [vmem:[%s16 + $0xc] sm:$0xf]
    %v6550 = vld [vmem:[%s16 + $0x10] sm:$0xf]
    %v6551 = vld [vmem:[%s16 + $0x14] sm:$0xf]
    %v6552 = vld [vmem:[%s16 + $0x18] sm:$0xf]
    %v6553 = vld [vmem:[%s16 + $0x1c] sm:$0xf]
    %v6554 = vld [vmem:[%s17] sm:$0x1]
    %v6556 = vperm.slane %v6554, 0
    %v6566 = vunpack.c.l.b16 %v6546
    %v6567 = vunpack.c.l.b16 %v6547
    %v6568 = vunpack.c.l.b16 %v6548
    %v6569 = vunpack.c.l.b16 %v6549
    %v6570 = vunpack.c.l.b16 %v6550
    %v6571 = vunpack.c.l.b16 %v6551
    %v6572 = vunpack.c.l.b16 %v6552
    %v6573 = vunpack.c.l.b16 %v6553
    %v6574 = vpack.c.b16 %v6567, %v6566
    %v6575 = vpack.c.b16 %v6569, %v6568
    %v6576 = vpack.c.b16 %v6571, %v6570
    %v6577 = vpack.c.b16 %v6573, %v6572
    %v6583 = vsel %vm124, %v6545, 0
    %6585 = vmatpush.bf16.msra.mxu0 0
    %6586 = vmatpush.bf16.msra.mxu0 0
    %6587 = vmatpush.bf16.msra.mxu0 0
    %6588 = vmatpush.bf16.msra.mxu0 0
    %6589 = vmatpush.bf16.msra.mxu0 %v6577
    %6590 = vmatpush.bf16.msra.mxu0 %v6576
    %6591 = vmatpush.bf16.msra.mxu0 %v6575
    %6592 = vmatpush.bf16.msra.mxu0 %v6574
    %6593 = vmatmul.bf16.gmra.mxu0 %v6583
    %v6594 = vpop.f32.mrf.mxu0
    %v6595 = vadd.f32 %v6556, %v6594
    %v6596 = vpop.f32.mrf.mxu0
    %v6597 = vadd.f32 %v6556, %v6596
    %6598 = vdwg.mxu0
    %6599 = vst [vmem:[#allocation2] sm:$0xff] %v6595
    %6600 = vst [vmem:[#allocation2 + $0x8] sm:$0xff] %v6597
    // Predicated region
    $region74: #{tpu_custom_call.1} parent=1 // pred_check
      _
    $region75: #{tpu_custom_call.1} parent=1 // pred_check_branch
      %6602 = sbr.rel (0) target = $region77
    $region76: #{tpu_custom_call.1} parent=1 // pred_region
      %6604 = vsyncadd [#allocation3], 0
      %s6605 = sshll.u32 [#allocation2], 4
      %s6606 = int_to_ptr.vmem [resolvable:$true] %s6605
      %s6607 = sshll.u32 %s18, 4
      %s6608 = int_to_ptr.hbm [resolvable:$true] %s6607
      %6613 = dma.vmem_to_hbm [thread:$0]  %s6606, 256, %s6608, [#allocation3], 128, 128, 8
    $region77: #{tpu_custom_call.1} parent=1 // pred_fallthru
      _
    // Predicated region
    $region78: #{tpu_custom_call.1} parent=1 // pred_check
      _
    $region79: #{tpu_custom_call.1} parent=1 // pred_check_branch
      %6615 = sbr.rel (0) target = $region81
    $region80: #{tpu_custom_call.1} parent=1 // pred_region
      %6617 = dma.done [#allocation3], 256
    $region81: #{tpu_custom_call.1} parent=1 // pred_fallthru
      _
    %6618 = vsyncpa [#allocation3], 1

</llo_original>
